<compile_context>
chip_gen: v5e
topology: v5e:2x2
jax: 0.10.0
libtpu: 0.0.40
codegen_flags: <defaults>
</compile_context>

<pallas_src>
import jax
import jax.numpy as jnp
from jax import lax
from jax.experimental import pallas as pl
from jax.experimental.pallas import tpu as pltpu

EPS = 1e-5
LANE = 128
SUB = 8

# (out_ch, in_ch, kernel) exactly as in GlobalNetwork.__init__
CONV_CFGS = ((1024, 7, 3), (512, 1024, 3), (128, 512, 3), (64, 128, 2))


def _round_up(x, m):
    return (x + m - 1) // m * m


def _make_kernel(cfgs, N, los, m_cmp, m_pad, act_dtype):
    """cfgs: per-layer (K, Ci, Co_padded); los: per-layer valid length/sample."""
    (k1, ci1, co1), (k2, ci2, co2), (k3, ci3, co3), (k4, ci4, co4) = cfgs
    counts = [float(N * lo) for lo in los]     # true BN element counts

    def bn_relu(y, mask, gamma, beta, count):
        # y: (m_cmp, Co) f32   mask: (m_cmp, 1) f32 0/1   gamma/beta: (1, Co)
        ym = y * mask
        ssum = jnp.sum(ym, axis=0, keepdims=True)
        ssq = jnp.sum(ym * y, axis=0, keepdims=True)
        inv_count = 1.0 / count
        mean = ssum * inv_count
        var = jnp.maximum(ssq * inv_count - mean * mean, 0.0)
        inv_std = lax.rsqrt(var + EPS)
        scale = gamma * inv_std
        shift = beta - mean * scale
        z = jnp.maximum(y * scale + shift, 0.0)
        return z * mask                         # keep garbage rows exactly 0

    def conv_shifted(act_ref, w_ref, K):
        # act_ref: (m_pad, Ci) scratch slab; w_ref: (K, Ci, Co) VMEM weight.
        y = jnp.dot(act_ref[0:m_cmp, :], w_ref[0],
                    preferred_element_type=jnp.float32)
        for k in range(1, K):
            y = y + jnp.dot(act_ref[k:k + m_cmp, :], w_ref[k],
                            preferred_element_type=jnp.float32)
        return y

    def kernel(x_ref, m1_ref, m2_ref, m3_ref, m4_ref, w1_ref,
               w2_hbm, w3_hbm, w4_hbm,
               g1_ref, g2_ref, g3_ref, g4_ref,
               b1_ref, b2_ref, b3_ref, b4_ref,
               out_ref,
               w2_v, w3_v, w4_v, dma_sem, act1, act2, act3):
        # Kick off the layer-2..4 weight DMAs; they complete under compute.
        cp2 = pltpu.make_async_copy(w2_hbm, w2_v, dma_sem.at[0])
        cp3 = pltpu.make_async_copy(w3_hbm, w3_v, dma_sem.at[1])
        cp4 = pltpu.make_async_copy(w4_hbm, w4_v, dma_sem.at[2])
        cp2.start()
        cp3.start()
        cp4.start()

        # Zero the 8-row tails of the activation slabs so the shifted reads
        # for the last sample never touch uninitialized VMEM.
        tail = m_pad - m_cmp
        act1[m_cmp:m_pad, :] = jnp.zeros((tail, co1), act_dtype)
        act2[m_cmp:m_pad, :] = jnp.zeros((tail, co2), act_dtype)
        act3[m_cmp:m_pad, :] = jnp.zeros((tail, co3), act_dtype)

        # ---- Layer 1: micro-im2col'd input -> single MXU matmul. ----
        y1 = jnp.dot(x_ref[...], w1_ref[...],
                     preferred_element_type=jnp.float32)
        z1 = bn_relu(y1, m1_ref[...], g1_ref[...], b1_ref[...], counts[0])
        act1[0:m_cmp, :] = z1.astype(act_dtype)

        # ---- Layer 2 (waits only for its own weight DMA). ----
        cp2.wait()
        y2 = conv_shifted(act1, w2_v, k2)
        z2 = bn_relu(y2, m2_ref[...], g2_ref[...], b2_ref[...], counts[1])
        act2[0:m_cmp, :] = z2.astype(act_dtype)

        # ---- Layer 3. ----
        cp3.wait()
        y3 = conv_shifted(act2, w3_v, k3)
        z3 = bn_relu(y3, m3_ref[...], g3_ref[...], b3_ref[...], counts[2])
        act3[0:m_cmp, :] = z3.astype(act_dtype)

        # ---- Layer 4 (output channels lane-padded to 128, lane-dense store). ----
        cp4.wait()
        y4 = conv_shifted(act3, w4_v, k4)
        z4 = bn_relu(y4, m4_ref[...], g4_ref[...], b4_ref[...], counts[3])
        out_ref[...] = z4.astype(out_ref.dtype)

    return kernel


def prepare_params(params, matmul_dtype=jnp.bfloat16):
    """One-time weight preparation, hoisted out of the forward path.

    params: list of (w (Co,Ci,K), b (Co,), gamma (Co,), beta (Co,)), PyTorch
    layout.  The conv bias is dropped: training-mode BatchNorm subtracts the
    batch mean right after the conv, so a per-channel bias cancels exactly.
    Layer 1's weight is flattened to the (K*Ci, Co) im2col layout; the last
    layer's Co is zero-padded to a multiple of 128 lanes.
    """
    n_layers = len(params)
    ws, gs, bs, cfgs = [], [], [], []
    for i, (w, _b, g, bt) in enumerate(params):
        co, ci, k = w.shape
        w_kio = jnp.transpose(w, (2, 1, 0)).astype(jnp.float32)   # (K, Ci, Co)
        g_ = g.astype(jnp.float32)
        bt_ = bt.astype(jnp.float32)
        co_pad = co
        if i == n_layers - 1 and co % LANE != 0:
            co_pad = _round_up(co, LANE)
            w_kio = jnp.pad(w_kio, ((0, 0), (0, 0), (0, co_pad - co)))
            g_ = jnp.pad(g_, (0, co_pad - co))
            bt_ = jnp.pad(bt_, (0, co_pad - co))
        if i == 0:
            w_kio = w_kio.reshape(k * ci, co_pad)      # im2col weight, (21, 1024)
        ws.append(w_kio.astype(matmul_dtype))
        gs.append(g_.reshape(1, co_pad))
        bs.append(bt_.reshape(1, co_pad))
        cfgs.append((k, ci, co_pad))
    co_last_true = params[-1][0].shape[0]
    return ws, gs, bs, tuple(cfgs), matmul_dtype, co_last_true


def global_network_forward(x_ncl, prep):
    """x_ncl: (N, 7, L) f32, PyTorch NCL layout.  Returns (N * L_final, 64)."""
    ws, gs, bs, cfgs, matmul_dtype, co_out = prep
    N, ci0, L = x_ncl.shape
    assert ci0 == cfgs[0][1]

    # Per-layer valid output lengths of the VALID conv chain.
    los, lc = [], L
    for (k, _, _) in cfgs:
        lc = lc - k + 1
        los.append(lc)
    assert los[-1] >= 1, "input sequence too short for the conv chain"

    S = max(SUB, _round_up(L, SUB))      # fixed per-sample row stride
    m_cmp = N * S                        # matmul M dimension (batch folded in)
    m_pad = m_cmp + SUB                  # activation slabs carry an 8-row tail

    x_nlc = jnp.transpose(x_ncl, (0, 2, 1)).astype(jnp.float32)   # NCL -> NLC

    # Layer-1 micro-im2col: (N, lo1, K1*Ci), laid into a zero (N, S, K1*Ci) slab.
    k1, ci1, _ = cfgs[0]
    lo1 = los[0]
    win = jnp.concatenate([x_nlc[:, k:k + lo1, :] for k in range(k1)], axis=-1)
    x_slab = jnp.zeros((N, S, k1 * ci1), jnp.float32).at[:, :lo1, :].set(win)
    x_flat = x_slab.reshape(m_cmp, k1 * ci1).astype(matmul_dtype)

    # Per-layer valid-row masks: 1.0 on the first lo_i rows of every sample.
    def mk_mask(lo):
        m = (jnp.arange(S) < lo).astype(jnp.float32)
        return jnp.tile(m, (N,)).reshape(m_cmp, 1)
    masks = [mk_mask(lo) for lo in los]

    co_pad_last = cfgs[-1][2]
    kernel = _make_kernel(cfgs, N, los, m_cmp, m_pad, matmul_dtype)

    # Cost estimate (helps XLA schedule around the custom call).
    flops = sum(2 * m_cmp * k * ci * co for (k, ci, co) in cfgs)
    trans = sum(co for (_, _, co) in cfgs)
    in_arrays = (x_flat, *masks, ws[0], ws[1], ws[2], ws[3], *gs, *bs)
    bytes_accessed = sum(int(a.size) * a.dtype.itemsize for a in in_arrays)
    bytes_accessed += m_cmp * co_pad_last * 4

    vmem = pl.BlockSpec(memory_space=pltpu.MemorySpace.VMEM)
    hbm = pl.BlockSpec(memory_space=pl.ANY)        # manual DMA for big weights
    in_specs = [vmem] * 5 + [vmem] + [hbm, hbm, hbm] + [vmem] * 8

    out = pl.pallas_call(
        kernel,
        out_shape=jax.ShapeDtypeStruct((m_cmp, co_pad_last), jnp.float32),
        in_specs=in_specs,
        out_specs=vmem,
        scratch_shapes=[
            pltpu.VMEM(ws[1].shape, matmul_dtype),      # layer-2 weight buffer
            pltpu.VMEM(ws[2].shape, matmul_dtype),      # layer-3 weight buffer
            pltpu.VMEM(ws[3].shape, matmul_dtype),      # layer-4 weight buffer
            pltpu.SemaphoreType.DMA((3,)),
            pltpu.VMEM((m_pad, cfgs[0][2]), matmul_dtype),   # act slab 1
            pltpu.VMEM((m_pad, cfgs[1][2]), matmul_dtype),   # act slab 2
            pltpu.VMEM((m_pad, cfgs[2][2]), matmul_dtype),   # act slab 3
        ],
        # 32 MiB fits all generations incl. v7x (64 MiB physical / TC).
        compiler_params=pltpu.CompilerParams(vmem_limit_bytes=32 * 1024 * 1024),
        cost_estimate=pl.CostEstimate(flops=flops, transcendentals=trans,
                                      bytes_accessed=bytes_accessed),
    )(*in_arrays)

    # Drop lane padding + per-sample garbage rows, then reproduce the PyTorch
    # `.view(-1, 64)` applied to the (N, C, L_final) tensor.
    valid = out.reshape(N, S, co_pad_last)[:, :los[-1], :co_out]  # (N, lo4, 64)
    out_ncl = jnp.transpose(valid, (0, 2, 1))                     # (N, 64, lo4)
    return out_ncl.reshape(-1, co_out)


def make_params(key):
    params = []
    for i, (co, ci, k) in enumerate(CONV_CFGS):
        kw, kb, kg, kbe = jax.random.split(jax.random.fold_in(key, i), 4)
        w = 0.05 * jax.random.normal(kw, (co, ci, k), jnp.float32)
        b = 0.05 * jax.random.normal(kb, (co,), jnp.float32)
        g = 1.0 + 0.1 * jax.random.normal(kg, (co,), jnp.float32)
        bt = 0.1 * jax.random.normal(kbe, (co,), jnp.float32)
        params.append((w, b, g, bt))
    return params


def reference_forward(x_ncl, params):
    """Pure-JAX f32 reference (lax conv + bias + training-mode BN + ReLU)."""
    net = x_ncl
    for (w, b, g, bt) in params:
        y = lax.conv_general_dilated(net, w, window_strides=(1,),
                                     padding="VALID",
                                     dimension_numbers=("NCH", "OIH", "NCH"))
        y = y + b[None, :, None]
        mean = jnp.mean(y, axis=(0, 2), keepdims=True)
        var = jnp.mean((y - mean) ** 2, axis=(0, 2), keepdims=True)
        y = (y - mean) / jnp.sqrt(var + EPS)
        y = g[None, :, None] * y + bt[None, :, None]
        net = jnp.maximum(y, 0.0)
    return net.reshape(-1, 64)     # PyTorch .view(-1, 64) on the (N, C, L) tensor


if __name__ == "__main__":
    key = jax.random.PRNGKey(0)
    kx, kp = jax.random.split(key)

    # Small input consistent with the module: batch=2, 7 channels, seq len 8
    # (8 -> 6 -> 4 -> 2 -> 1 after the four valid convs).
    x = jax.random.normal(kx, (2, 7, 8), jnp.float32)
    params = make_params(kp)

    ref = jax.block_until_ready(reference_forward(x, params))

    # Exact-semantics path: f32 MXU inputs -> must match the PyTorch-style
    # reference tightly (bias drop / accumulation order only perturb ~1e-6).
    prep_f32 = prepare_params(params, matmul_dtype=jnp.float32)
    out_f32 = jax.block_until_ready(global_network_forward(x, prep_f32))
    assert out_f32.shape == (2, 64), out_f32.shape
    assert jnp.allclose(out_f32, ref, rtol=2e-3, atol=2e-3), \
        float(jnp.max(jnp.abs(out_f32 - ref)))

    # Production path: bf16 MXU inputs + bf16 activation slabs, f32 accumulation
    # and f32 BN math.  With this toy batch the last BN normalizes over only 2
    # positions (amplifies bf16 error), so it is sanity-checked only.
    prep_bf16 = prepare_params(params, matmul_dtype=jnp.bfloat16)
    out_bf16 = jax.block_until_ready(global_network_forward(x, prep_bf16))
    assert out_bf16.shape == (2, 64), out_bf16.shape
    assert bool(jnp.all(jnp.isfinite(out_bf16)))

    print("KERNEL_OK")
</pallas_src>

<mosaic_0001>
module attributes {stable_mosaic.version = 11 : i64} {
  func.func @kernel(%arg0: memref<16x21xf32, #tpu.memory_space<vmem>>, %arg1: memref<16x1xf32, #tpu.memory_space<vmem>>, %arg2: memref<16x1xf32, #tpu.memory_space<vmem>>, %arg3: memref<16x1xf32, #tpu.memory_space<vmem>>, %arg4: memref<16x1xf32, #tpu.memory_space<vmem>>, %arg5: memref<21x1024xf32, #tpu.memory_space<vmem>>, %arg6: memref<3x1024x512xf32, #tpu.memory_space<any>>, %arg7: memref<3x512x128xf32, #tpu.memory_space<any>>, %arg8: memref<2x128x128xf32, #tpu.memory_space<any>>, %arg9: memref<1x1024xf32, #tpu.memory_space<vmem>>, %arg10: memref<1x512xf32, #tpu.memory_space<vmem>>, %arg11: memref<1x128xf32, #tpu.memory_space<vmem>>, %arg12: memref<1x128xf32, #tpu.memory_space<vmem>>, %arg13: memref<1x1024xf32, #tpu.memory_space<vmem>>, %arg14: memref<1x512xf32, #tpu.memory_space<vmem>>, %arg15: memref<1x128xf32, #tpu.memory_space<vmem>>, %arg16: memref<1x128xf32, #tpu.memory_space<vmem>>, %arg17: memref<16x128xf32, #tpu.memory_space<vmem>>, %arg18: memref<3x1024x512xf32, #tpu.memory_space<vmem>>, %arg19: memref<3x512x128xf32, #tpu.memory_space<vmem>>, %arg20: memref<2x128x128xf32, #tpu.memory_space<vmem>>, %arg21: memref<3x!tpu.dma_semaphore, #tpu.memory_space<semaphore_mem>>, %arg22: memref<24x1024xf32, #tpu.memory_space<vmem>>, %arg23: memref<24x512xf32, #tpu.memory_space<vmem>>, %arg24: memref<24x128xf32, #tpu.memory_space<vmem>>) attributes {dimension_semantics = [], scalar_prefetch = 0 : i64, scratch_operands = 7 : i64, tpu.core_type = #tpu.core_type<tc>} {
    %c0_i32 = arith.constant 0 : i32
    %0 = tpu.memref_slice %arg21[%c0_i32] : memref<3x!tpu.dma_semaphore, #tpu.memory_space<semaphore_mem>> -> memref<1x!tpu.dma_semaphore, #tpu.memory_space<semaphore_mem>>
    %1 = tpu.memref_squeeze %0 : memref<1x!tpu.dma_semaphore, #tpu.memory_space<semaphore_mem>> -> memref<!tpu.dma_semaphore, #tpu.memory_space<semaphore_mem>>
    tpu.enqueue_dma source(%arg6 : memref<3x1024x512xf32, #tpu.memory_space<any>>) target(%arg18 : memref<3x1024x512xf32, #tpu.memory_space<vmem>>) target_semaphore(%1 : memref<!tpu.dma_semaphore, #tpu.memory_space<semaphore_mem>>)
    %c1_i32 = arith.constant 1 : i32
    %2 = tpu.memref_slice %arg21[%c1_i32] : memref<3x!tpu.dma_semaphore, #tpu.memory_space<semaphore_mem>> -> memref<1x!tpu.dma_semaphore, #tpu.memory_space<semaphore_mem>>
    %3 = tpu.memref_squeeze %2 : memref<1x!tpu.dma_semaphore, #tpu.memory_space<semaphore_mem>> -> memref<!tpu.dma_semaphore, #tpu.memory_space<semaphore_mem>>
    tpu.enqueue_dma source(%arg7 : memref<3x512x128xf32, #tpu.memory_space<any>>) target(%arg19 : memref<3x512x128xf32, #tpu.memory_space<vmem>>) target_semaphore(%3 : memref<!tpu.dma_semaphore, #tpu.memory_space<semaphore_mem>>)
    %c2_i32 = arith.constant 2 : i32
    %4 = tpu.memref_slice %arg21[%c2_i32] : memref<3x!tpu.dma_semaphore, #tpu.memory_space<semaphore_mem>> -> memref<1x!tpu.dma_semaphore, #tpu.memory_space<semaphore_mem>>
    %5 = tpu.memref_squeeze %4 : memref<1x!tpu.dma_semaphore, #tpu.memory_space<semaphore_mem>> -> memref<!tpu.dma_semaphore, #tpu.memory_space<semaphore_mem>>
    tpu.enqueue_dma source(%arg8 : memref<2x128x128xf32, #tpu.memory_space<any>>) target(%arg20 : memref<2x128x128xf32, #tpu.memory_space<vmem>>) target_semaphore(%5 : memref<!tpu.dma_semaphore, #tpu.memory_space<semaphore_mem>>)
    %cst = arith.constant 0.000000e+00 : f32
    %6 = vector.broadcast %cst : f32 to vector<8x1024xf32>
    %c16 = arith.constant 16 : index
    %c0 = arith.constant 0 : index
    %7 = vector.load %arg22[%c16, %c0] : memref<24x1024xf32, #tpu.memory_space<vmem>>, vector<8x1024xf32>
    tpu.vector_store %arg22[%c16, %c0], %6 {strides = array<i32>} : memref<24x1024xf32, #tpu.memory_space<vmem>>, vector<8x1024xf32>,
    %cst_0 = arith.constant 0.000000e+00 : f32
    %8 = vector.broadcast %cst_0 : f32 to vector<8x512xf32>
    %c16_1 = arith.constant 16 : index
    %c0_2 = arith.constant 0 : index
    %9 = vector.load %arg23[%c16_1, %c0_2] : memref<24x512xf32, #tpu.memory_space<vmem>>, vector<8x512xf32>
    tpu.vector_store %arg23[%c16_1, %c0_2], %8 {strides = array<i32>} : memref<24x512xf32, #tpu.memory_space<vmem>>, vector<8x512xf32>,
    %cst_3 = arith.constant 0.000000e+00 : f32
    %10 = vector.broadcast %cst_3 : f32 to vector<8x128xf32>
    %c16_4 = arith.constant 16 : index
    %c0_5 = arith.constant 0 : index
    %11 = vector.load %arg24[%c16_4, %c0_5] : memref<24x128xf32, #tpu.memory_space<vmem>>, vector<8x128xf32>
    tpu.vector_store %arg24[%c16_4, %c0_5], %10 {strides = array<i32>} : memref<24x128xf32, #tpu.memory_space<vmem>>, vector<8x128xf32>,
    %c0_6 = arith.constant 0 : index
    %c0_7 = arith.constant 0 : index
    %12 = vector.load %arg0[%c0_6, %c0_7] : memref<16x21xf32, #tpu.memory_space<vmem>>, vector<16x21xf32>
    %c0_8 = arith.constant 0 : index
    %c0_9 = arith.constant 0 : index
    %13 = vector.load %arg5[%c0_8, %c0_9] : memref<21x1024xf32, #tpu.memory_space<vmem>>, vector<21x1024xf32>
    %cst_10 = arith.constant dense<0.000000e+00> : vector<16x1024xf32>
    %14 = tpu.matmul %12, %13, %cst_10 {dimension_numbers = #tpu.dot_dimension_numbers<[1], [0], [0], [1], [0, 0, 1, 1], [], []>} : vector<16x21xf32>, vector<21x1024xf32>, vector<16x1024xf32> -> vector<16x1024xf32>
    %c0_11 = arith.constant 0 : index
    %c0_12 = arith.constant 0 : index
    %15 = vector.load %arg1[%c0_11, %c0_12] : memref<16x1xf32, #tpu.memory_space<vmem>>, vector<16x1xf32>
    %c0_13 = arith.constant 0 : index
    %c0_14 = arith.constant 0 : index
    %16 = vector.load %arg9[%c0_13, %c0_14] : memref<1x1024xf32, #tpu.memory_space<vmem>>, vector<1x1024xf32>
    %c0_15 = arith.constant 0 : index
    %c0_16 = arith.constant 0 : index
    %17 = vector.load %arg13[%c0_15, %c0_16] : memref<1x1024xf32, #tpu.memory_space<vmem>>, vector<1x1024xf32>
    %18 = vector.broadcast %15 : vector<16x1xf32> to vector<16x1024xf32>
    %19 = arith.mulf %14, %18 : vector<16x1024xf32>
    %cst_17 = arith.constant dense<0.000000e+00> : vector<1024xf32>
    %20 = vector.multi_reduction <add>, %19, %cst_17 [0] : vector<16x1024xf32> to vector<1024xf32>
    %21 = vector.shape_cast %20 : vector<1024xf32> to vector<1x1024xf32>
    %22 = arith.mulf %19, %14 : vector<16x1024xf32>
    %cst_18 = arith.constant dense<0.000000e+00> : vector<1024xf32>
    %23 = vector.multi_reduction <add>, %22, %cst_18 [0] : vector<16x1024xf32> to vector<1024xf32>
    %24 = vector.shape_cast %23 : vector<1024xf32> to vector<1x1024xf32>
    %cst_19 = arith.constant 0.0833333358 : f32
    %25 = vector.broadcast %cst_19 : f32 to vector<1x1024xf32>
    %26 = arith.mulf %21, %25 : vector<1x1024xf32>
    %cst_20 = arith.constant 0.0833333358 : f32
    %27 = vector.broadcast %cst_20 : f32 to vector<1x1024xf32>
    %28 = arith.mulf %24, %27 : vector<1x1024xf32>
    %29 = arith.mulf %26, %26 : vector<1x1024xf32>
    %30 = arith.subf %28, %29 : vector<1x1024xf32>
    %cst_21 = arith.constant 0.000000e+00 : f32
    %31 = vector.broadcast %cst_21 : f32 to vector<1x1024xf32>
    %32 = arith.maximumf %30, %31 : vector<1x1024xf32>
    %cst_22 = arith.constant 9.99999974E-6 : f32
    %33 = vector.broadcast %cst_22 : f32 to vector<1x1024xf32>
    %34 = arith.addf %32, %33 : vector<1x1024xf32>
    %35 = math.rsqrt %34 : vector<1x1024xf32>
    %36 = arith.mulf %16, %35 : vector<1x1024xf32>
    %37 = arith.mulf %26, %36 : vector<1x1024xf32>
    %38 = arith.subf %17, %37 : vector<1x1024xf32>
    %39 = vector.broadcast %36 : vector<1x1024xf32> to vector<16x1024xf32>
    %40 = arith.mulf %14, %39 : vector<16x1024xf32>
    %41 = vector.broadcast %38 : vector<1x1024xf32> to vector<16x1024xf32>
    %42 = arith.addf %40, %41 : vector<16x1024xf32>
    %cst_23 = arith.constant 0.000000e+00 : f32
    %43 = vector.broadcast %cst_23 : f32 to vector<16x1024xf32>
    %44 = arith.maximumf %42, %43 : vector<16x1024xf32>
    %45 = vector.broadcast %15 : vector<16x1xf32> to vector<16x1024xf32>
    %46 = arith.mulf %44, %45 : vector<16x1024xf32>
    %c0_24 = arith.constant 0 : index
    %c0_25 = arith.constant 0 : index
    %47 = vector.load %arg22[%c0_24, %c0_25] : memref<24x1024xf32, #tpu.memory_space<vmem>>, vector<16x1024xf32>
    tpu.vector_store %arg22[%c0_24, %c0_25], %46 {strides = array<i32>} : memref<24x1024xf32, #tpu.memory_space<vmem>>, vector<16x1024xf32>,
    %c0_i32_26 = arith.constant 0 : i32
    %48 = tpu.memref_slice %arg21[%c0_i32_26] : memref<3x!tpu.dma_semaphore, #tpu.memory_space<semaphore_mem>> -> memref<1x!tpu.dma_semaphore, #tpu.memory_space<semaphore_mem>>
    %49 = tpu.memref_squeeze %48 : memref<1x!tpu.dma_semaphore, #tpu.memory_space<semaphore_mem>> -> memref<!tpu.dma_semaphore, #tpu.memory_space<semaphore_mem>>
    tpu.wait_dma2 semaphore(%49 : memref<!tpu.dma_semaphore, #tpu.memory_space<semaphore_mem>>) src(%arg6 : memref<3x1024x512xf32, #tpu.memory_space<any>>) dst(%arg18 : memref<3x1024x512xf32, #tpu.memory_space<vmem>>)
    %c0_27 = arith.constant 0 : index
    %c0_28 = arith.constant 0 : index
    %50 = vector.load %arg22[%c0_27, %c0_28] : memref<24x1024xf32, #tpu.memory_space<vmem>>, vector<16x1024xf32>
    %c0_29 = arith.constant 0 : index
    %c0_30 = arith.constant 0 : index
    %c0_31 = arith.constant 0 : index
    %51 = vector.load %arg18[%c0_29, %c0_30, %c0_31] : memref<3x1024x512xf32, #tpu.memory_space<vmem>>, vector<1x1024x512xf32>
    %52 = vector.shape_cast %51 : vector<1x1024x512xf32> to vector<1024x512xf32>
    %cst_32 = arith.constant dense<0.000000e+00> : vector<16x512xf32>
    %53 = tpu.matmul %50, %52, %cst_32 {dimension_numbers = #tpu.dot_dimension_numbers<[1], [0], [0], [1], [0, 0, 1, 1], [], []>} : vector<16x1024xf32>, vector<1024x512xf32>, vector<16x512xf32> -> vector<16x512xf32>
    %c1 = arith.constant 1 : index
    %c0_33 = arith.constant 0 : index
    %54 = vector.load %arg22[%c1, %c0_33] : memref<24x1024xf32, #tpu.memory_space<vmem>>, vector<16x1024xf32>
    %c1_34 = arith.constant 1 : index
    %c0_35 = arith.constant 0 : index
    %c0_36 = arith.constant 0 : index
    %55 = vector.load %arg18[%c1_34, %c0_35, %c0_36] : memref<3x1024x512xf32, #tpu.memory_space<vmem>>, vector<1x1024x512xf32>
    %56 = vector.shape_cast %55 : vector<1x1024x512xf32> to vector<1024x512xf32>
    %cst_37 = arith.constant dense<0.000000e+00> : vector<16x512xf32>
    %57 = tpu.matmul %54, %56, %cst_37 {dimension_numbers = #tpu.dot_dimension_numbers<[1], [0], [0], [1], [0, 0, 1, 1], [], []>} : vector<16x1024xf32>, vector<1024x512xf32>, vector<16x512xf32> -> vector<16x512xf32>
    %58 = arith.addf %53, %57 : vector<16x512xf32>
    %c2 = arith.constant 2 : index
    %c0_38 = arith.constant 0 : index
    %59 = vector.load %arg22[%c2, %c0_38] : memref<24x1024xf32, #tpu.memory_space<vmem>>, vector<16x1024xf32>
    %c2_39 = arith.constant 2 : index
    %c0_40 = arith.constant 0 : index
    %c0_41 = arith.constant 0 : index
    %60 = vector.load %arg18[%c2_39, %c0_40, %c0_41] : memref<3x1024x512xf32, #tpu.memory_space<vmem>>, vector<1x1024x512xf32>
    %61 = vector.shape_cast %60 : vector<1x1024x512xf32> to vector<1024x512xf32>
    %cst_42 = arith.constant dense<0.000000e+00> : vector<16x512xf32>
    %62 = tpu.matmul %59, %61, %cst_42 {dimension_numbers = #tpu.dot_dimension_numbers<[1], [0], [0], [1], [0, 0, 1, 1], [], []>} : vector<16x1024xf32>, vector<1024x512xf32>, vector<16x512xf32> -> vector<16x512xf32>
    %63 = arith.addf %58, %62 : vector<16x512xf32>
    %c0_43 = arith.constant 0 : index
    %c0_44 = arith.constant 0 : index
    %64 = vector.load %arg2[%c0_43, %c0_44] : memref<16x1xf32, #tpu.memory_space<vmem>>, vector<16x1xf32>
    %c0_45 = arith.constant 0 : index
    %c0_46 = arith.constant 0 : index
    %65 = vector.load %arg10[%c0_45, %c0_46] : memref<1x512xf32, #tpu.memory_space<vmem>>, vector<1x512xf32>
    %c0_47 = arith.constant 0 : index
    %c0_48 = arith.constant 0 : index
    %66 = vector.load %arg14[%c0_47, %c0_48] : memref<1x512xf32, #tpu.memory_space<vmem>>, vector<1x512xf32>
    %67 = vector.broadcast %64 : vector<16x1xf32> to vector<16x512xf32>
    %68 = arith.mulf %63, %67 : vector<16x512xf32>
    %cst_49 = arith.constant dense<0.000000e+00> : vector<512xf32>
    %69 = vector.multi_reduction <add>, %68, %cst_49 [0] : vector<16x512xf32> to vector<512xf32>
    %70 = vector.shape_cast %69 : vector<512xf32> to vector<1x512xf32>
    %71 = arith.mulf %68, %63 : vector<16x512xf32>
    %cst_50 = arith.constant dense<0.000000e+00> : vector<512xf32>
    %72 = vector.multi_reduction <add>, %71, %cst_50 [0] : vector<16x512xf32> to vector<512xf32>
    %73 = vector.shape_cast %72 : vector<512xf32> to vector<1x512xf32>
    %cst_51 = arith.constant 1.250000e-01 : f32
    %74 = vector.broadcast %cst_51 : f32 to vector<1x512xf32>
    %75 = arith.mulf %70, %74 : vector<1x512xf32>
    %cst_52 = arith.constant 1.250000e-01 : f32
    %76 = vector.broadcast %cst_52 : f32 to vector<1x512xf32>
    %77 = arith.mulf %73, %76 : vector<1x512xf32>
    %78 = arith.mulf %75, %75 : vector<1x512xf32>
    %79 = arith.subf %77, %78 : vector<1x512xf32>
    %cst_53 = arith.constant 0.000000e+00 : f32
    %80 = vector.broadcast %cst_53 : f32 to vector<1x512xf32>
    %81 = arith.maximumf %79, %80 : vector<1x512xf32>
    %cst_54 = arith.constant 9.99999974E-6 : f32
    %82 = vector.broadcast %cst_54 : f32 to vector<1x512xf32>
    %83 = arith.addf %81, %82 : vector<1x512xf32>
    %84 = math.rsqrt %83 : vector<1x512xf32>
    %85 = arith.mulf %65, %84 : vector<1x512xf32>
    %86 = arith.mulf %75, %85 : vector<1x512xf32>
    %87 = arith.subf %66, %86 : vector<1x512xf32>
    %88 = vector.broadcast %85 : vector<1x512xf32> to vector<16x512xf32>
    %89 = arith.mulf %63, %88 : vector<16x512xf32>
    %90 = vector.broadcast %87 : vector<1x512xf32> to vector<16x512xf32>
    %91 = arith.addf %89, %90 : vector<16x512xf32>
    %cst_55 = arith.constant 0.000000e+00 : f32
    %92 = vector.broadcast %cst_55 : f32 to vector<16x512xf32>
    %93 = arith.maximumf %91, %92 : vector<16x512xf32>
    %94 = vector.broadcast %64 : vector<16x1xf32> to vector<16x512xf32>
    %95 = arith.mulf %93, %94 : vector<16x512xf32>
    %c0_56 = arith.constant 0 : index
    %c0_57 = arith.constant 0 : index
    %96 = vector.load %arg23[%c0_56, %c0_57] : memref<24x512xf32, #tpu.memory_space<vmem>>, vector<16x512xf32>
    tpu.vector_store %arg23[%c0_56, %c0_57], %95 {strides = array<i32>} : memref<24x512xf32, #tpu.memory_space<vmem>>, vector<16x512xf32>,
    %c1_i32_58 = arith.constant 1 : i32
    %97 = tpu.memref_slice %arg21[%c1_i32_58] : memref<3x!tpu.dma_semaphore, #tpu.memory_space<semaphore_mem>> -> memref<1x!tpu.dma_semaphore, #tpu.memory_space<semaphore_mem>>
    %98 = tpu.memref_squeeze %97 : memref<1x!tpu.dma_semaphore, #tpu.memory_space<semaphore_mem>> -> memref<!tpu.dma_semaphore, #tpu.memory_space<semaphore_mem>>
    tpu.wait_dma2 semaphore(%98 : memref<!tpu.dma_semaphore, #tpu.memory_space<semaphore_mem>>) src(%arg7 : memref<3x512x128xf32, #tpu.memory_space<any>>) dst(%arg19 : memref<3x512x128xf32, #tpu.memory_space<vmem>>)
    %c0_59 = arith.constant 0 : index
    %c0_60 = arith.constant 0 : index
    %99 = vector.load %arg23[%c0_59, %c0_60] : memref<24x512xf32, #tpu.memory_space<vmem>>, vector<16x512xf32>
    %c0_61 = arith.constant 0 : index
    %c0_62 = arith.constant 0 : index
    %c0_63 = arith.constant 0 : index
    %100 = vector.load %arg19[%c0_61, %c0_62, %c0_63] : memref<3x512x128xf32, #tpu.memory_space<vmem>>, vector<1x512x128xf32>
    %101 = vector.shape_cast %100 : vector<1x512x128xf32> to vector<512x128xf32>
    %cst_64 = arith.constant dense<0.000000e+00> : vector<16x128xf32>
    %102 = tpu.matmul %99, %101, %cst_64 {dimension_numbers = #tpu.dot_dimension_numbers<[1], [0], [0], [1], [0, 0, 1, 1], [], []>} : vector<16x512xf32>, vector<512x128xf32>, vector<16x128xf32> -> vector<16x128xf32>
    %c1_65 = arith.constant 1 : index
    %c0_66 = arith.constant 0 : index
    %103 = vector.load %arg23[%c1_65, %c0_66] : memref<24x512xf32, #tpu.memory_space<vmem>>, vector<16x512xf32>
    %c1_67 = arith.constant 1 : index
    %c0_68 = arith.constant 0 : index
    %c0_69 = arith.constant 0 : index
    %104 = vector.load %arg19[%c1_67, %c0_68, %c0_69] : memref<3x512x128xf32, #tpu.memory_space<vmem>>, vector<1x512x128xf32>
    %105 = vector.shape_cast %104 : vector<1x512x128xf32> to vector<512x128xf32>
    %cst_70 = arith.constant dense<0.000000e+00> : vector<16x128xf32>
    %106 = tpu.matmul %103, %105, %cst_70 {dimension_numbers = #tpu.dot_dimension_numbers<[1], [0], [0], [1], [0, 0, 1, 1], [], []>} : vector<16x512xf32>, vector<512x128xf32>, vector<16x128xf32> -> vector<16x128xf32>
    %107 = arith.addf %102, %106 : vector<16x128xf32>
    %c2_71 = arith.constant 2 : index
    %c0_72 = arith.constant 0 : index
    %108 = vector.load %arg23[%c2_71, %c0_72] : memref<24x512xf32, #tpu.memory_space<vmem>>, vector<16x512xf32>
    %c2_73 = arith.constant 2 : index
    %c0_74 = arith.constant 0 : index
    %c0_75 = arith.constant 0 : index
    %109 = vector.load %arg19[%c2_73, %c0_74, %c0_75] : memref<3x512x128xf32, #tpu.memory_space<vmem>>, vector<1x512x128xf32>
    %110 = vector.shape_cast %109 : vector<1x512x128xf32> to vector<512x128xf32>
    %cst_76 = arith.constant dense<0.000000e+00> : vector<16x128xf32>
    %111 = tpu.matmul %108, %110, %cst_76 {dimension_numbers = #tpu.dot_dimension_numbers<[1], [0], [0], [1], [0, 0, 1, 1], [], []>} : vector<16x512xf32>, vector<512x128xf32>, vector<16x128xf32> -> vector<16x128xf32>
    %112 = arith.addf %107, %111 : vector<16x128xf32>
    %c0_77 = arith.constant 0 : index
    %c0_78 = arith.constant 0 : index
    %113 = vector.load %arg3[%c0_77, %c0_78] : memref<16x1xf32, #tpu.memory_space<vmem>>, vector<16x1xf32>
    %c0_79 = arith.constant 0 : index
    %c0_80 = arith.constant 0 : index
    %114 = vector.load %arg11[%c0_79, %c0_80] : memref<1x128xf32, #tpu.memory_space<vmem>>, vector<1x128xf32>
    %c0_81 = arith.constant 0 : index
    %c0_82 = arith.constant 0 : index
    %115 = vector.load %arg15[%c0_81, %c0_82] : memref<1x128xf32, #tpu.memory_space<vmem>>, vector<1x128xf32>
    %116 = vector.broadcast %113 : vector<16x1xf32> to vector<16x128xf32>
    %117 = arith.mulf %112, %116 : vector<16x128xf32>
    %cst_83 = arith.constant dense<0.000000e+00> : vector<128xf32>
    %118 = vector.multi_reduction <add>, %117, %cst_83 [0] : vector<16x128xf32> to vector<128xf32>
    %119 = vector.shape_cast %118 : vector<128xf32> to vector<1x128xf32>
    %120 = arith.mulf %117, %112 : vector<16x128xf32>
    %cst_84 = arith.constant dense<0.000000e+00> : vector<128xf32>
    %121 = vector.multi_reduction <add>, %120, %cst_84 [0] : vector<16x128xf32> to vector<128xf32>
    %122 = vector.shape_cast %121 : vector<128xf32> to vector<1x128xf32>
    %cst_85 = arith.constant 2.500000e-01 : f32
    %123 = vector.broadcast %cst_85 : f32 to vector<1x128xf32>
    %124 = arith.mulf %119, %123 : vector<1x128xf32>
    %cst_86 = arith.constant 2.500000e-01 : f32
    %125 = vector.broadcast %cst_86 : f32 to vector<1x128xf32>
    %126 = arith.mulf %122, %125 : vector<1x128xf32>
    %127 = arith.mulf %124, %124 : vector<1x128xf32>
    %128 = arith.subf %126, %127 : vector<1x128xf32>
    %cst_87 = arith.constant 0.000000e+00 : f32
    %129 = vector.broadcast %cst_87 : f32 to vector<1x128xf32>
    %130 = arith.maximumf %128, %129 : vector<1x128xf32>
    %cst_88 = arith.constant 9.99999974E-6 : f32
    %131 = vector.broadcast %cst_88 : f32 to vector<1x128xf32>
    %132 = arith.addf %130, %131 : vector<1x128xf32>
    %133 = math.rsqrt %132 : vector<1x128xf32>
    %134 = arith.mulf %114, %133 : vector<1x128xf32>
    %135 = arith.mulf %124, %134 : vector<1x128xf32>
    %136 = arith.subf %115, %135 : vector<1x128xf32>
    %137 = vector.broadcast %134 : vector<1x128xf32> to vector<16x128xf32>
    %138 = arith.mulf %112, %137 : vector<16x128xf32>
    %139 = vector.broadcast %136 : vector<1x128xf32> to vector<16x128xf32>
    %140 = arith.addf %138, %139 : vector<16x128xf32>
    %cst_89 = arith.constant 0.000000e+00 : f32
    %141 = vector.broadcast %cst_89 : f32 to vector<16x128xf32>
    %142 = arith.maximumf %140, %141 : vector<16x128xf32>
    %143 = vector.broadcast %113 : vector<16x1xf32> to vector<16x128xf32>
    %144 = arith.mulf %142, %143 : vector<16x128xf32>
    %c0_90 = arith.constant 0 : index
    %c0_91 = arith.constant 0 : index
    %145 = vector.load %arg24[%c0_90, %c0_91] : memref<24x128xf32, #tpu.memory_space<vmem>>, vector<16x128xf32>
    tpu.vector_store %arg24[%c0_90, %c0_91], %144 {strides = array<i32>} : memref<24x128xf32, #tpu.memory_space<vmem>>, vector<16x128xf32>,
    %c2_i32_92 = arith.constant 2 : i32
    %146 = tpu.memref_slice %arg21[%c2_i32_92] : memref<3x!tpu.dma_semaphore, #tpu.memory_space<semaphore_mem>> -> memref<1x!tpu.dma_semaphore, #tpu.memory_space<semaphore_mem>>
    %147 = tpu.memref_squeeze %146 : memref<1x!tpu.dma_semaphore, #tpu.memory_space<semaphore_mem>> -> memref<!tpu.dma_semaphore, #tpu.memory_space<semaphore_mem>>
    tpu.wait_dma2 semaphore(%147 : memref<!tpu.dma_semaphore, #tpu.memory_space<semaphore_mem>>) src(%arg8 : memref<2x128x128xf32, #tpu.memory_space<any>>) dst(%arg20 : memref<2x128x128xf32, #tpu.memory_space<vmem>>)
    %c0_93 = arith.constant 0 : index
    %c0_94 = arith.constant 0 : index
    %148 = vector.load %arg24[%c0_93, %c0_94] : memref<24x128xf32, #tpu.memory_space<vmem>>, vector<16x128xf32>
    %c0_95 = arith.constant 0 : index
    %c0_96 = arith.constant 0 : index
    %c0_97 = arith.constant 0 : index
    %149 = vector.load %arg20[%c0_95, %c0_96, %c0_97] : memref<2x128x128xf32, #tpu.memory_space<vmem>>, vector<1x128x128xf32>
    %150 = vector.shape_cast %149 : vector<1x128x128xf32> to vector<128x128xf32>
    %cst_98 = arith.constant dense<0.000000e+00> : vector<16x128xf32>
    %151 = tpu.matmul %148, %150, %cst_98 {dimension_numbers = #tpu.dot_dimension_numbers<[1], [0], [0], [1], [0, 0, 1, 1], [], []>} : vector<16x128xf32>, vector<128x128xf32>, vector<16x128xf32> -> vector<16x128xf32>
    %c1_99 = arith.constant 1 : index
    %c0_100 = arith.constant 0 : index
    %152 = vector.load %arg24[%c1_99, %c0_100] : memref<24x128xf32, #tpu.memory_space<vmem>>, vector<16x128xf32>
    %c1_101 = arith.constant 1 : index
    %c0_102 = arith.constant 0 : index
    %c0_103 = arith.constant 0 : index
    %153 = vector.load %arg20[%c1_101, %c0_102, %c0_103] : memref<2x128x128xf32, #tpu.memory_space<vmem>>, vector<1x128x128xf32>
    %154 = vector.shape_cast %153 : vector<1x128x128xf32> to vector<128x128xf32>
    %cst_104 = arith.constant dense<0.000000e+00> : vector<16x128xf32>
    %155 = tpu.matmul %152, %154, %cst_104 {dimension_numbers = #tpu.dot_dimension_numbers<[1], [0], [0], [1], [0, 0, 1, 1], [], []>} : vector<16x128xf32>, vector<128x128xf32>, vector<16x128xf32> -> vector<16x128xf32>
    %156 = arith.addf %151, %155 : vector<16x128xf32>
    %c0_105 = arith.constant 0 : index
    %c0_106 = arith.constant 0 : index
    %157 = vector.load %arg4[%c0_105, %c0_106] : memref<16x1xf32, #tpu.memory_space<vmem>>, vector<16x1xf32>
    %c0_107 = arith.constant 0 : index
    %c0_108 = arith.constant 0 : index
    %158 = vector.load %arg12[%c0_107, %c0_108] : memref<1x128xf32, #tpu.memory_space<vmem>>, vector<1x128xf32>
    %c0_109 = arith.constant 0 : index
    %c0_110 = arith.constant 0 : index
    %159 = vector.load %arg16[%c0_109, %c0_110] : memref<1x128xf32, #tpu.memory_space<vmem>>, vector<1x128xf32>
    %160 = vector.broadcast %157 : vector<16x1xf32> to vector<16x128xf32>
    %161 = arith.mulf %156, %160 : vector<16x128xf32>
    %cst_111 = arith.constant dense<0.000000e+00> : vector<128xf32>
    %162 = vector.multi_reduction <add>, %161, %cst_111 [0] : vector<16x128xf32> to vector<128xf32>
    %163 = vector.shape_cast %162 : vector<128xf32> to vector<1x128xf32>
    %164 = arith.mulf %161, %156 : vector<16x128xf32>
    %cst_112 = arith.constant dense<0.000000e+00> : vector<128xf32>
    %165 = vector.multi_reduction <add>, %164, %cst_112 [0] : vector<16x128xf32> to vector<128xf32>
    %166 = vector.shape_cast %165 : vector<128xf32> to vector<1x128xf32>
    %cst_113 = arith.constant 5.000000e-01 : f32
    %167 = vector.broadcast %cst_113 : f32 to vector<1x128xf32>
    %168 = arith.mulf %163, %167 : vector<1x128xf32>
    %cst_114 = arith.constant 5.000000e-01 : f32
    %169 = vector.broadcast %cst_114 : f32 to vector<1x128xf32>
    %170 = arith.mulf %166, %169 : vector<1x128xf32>
    %171 = arith.mulf %168, %168 : vector<1x128xf32>
    %172 = arith.subf %170, %171 : vector<1x128xf32>
    %cst_115 = arith.constant 0.000000e+00 : f32
    %173 = vector.broadcast %cst_115 : f32 to vector<1x128xf32>
    %174 = arith.maximumf %172, %173 : vector<1x128xf32>
    %cst_116 = arith.constant 9.99999974E-6 : f32
    %175 = vector.broadcast %cst_116 : f32 to vector<1x128xf32>
    %176 = arith.addf %174, %175 : vector<1x128xf32>
    %177 = math.rsqrt %176 : vector<1x128xf32>
    %178 = arith.mulf %158, %177 : vector<1x128xf32>
    %179 = arith.mulf %168, %178 : vector<1x128xf32>
    %180 = arith.subf %159, %179 : vector<1x128xf32>
    %181 = vector.broadcast %178 : vector<1x128xf32> to vector<16x128xf32>
    %182 = arith.mulf %156, %181 : vector<16x128xf32>
    %183 = vector.broadcast %180 : vector<1x128xf32> to vector<16x128xf32>
    %184 = arith.addf %182, %183 : vector<16x128xf32>
    %cst_117 = arith.constant 0.000000e+00 : f32
    %185 = vector.broadcast %cst_117 : f32 to vector<16x128xf32>
    %186 = arith.maximumf %184, %185 : vector<16x128xf32>
    %187 = vector.broadcast %157 : vector<16x1xf32> to vector<16x128xf32>
    %188 = arith.mulf %186, %187 : vector<16x128xf32>
    %c0_118 = arith.constant 0 : index
    %c0_119 = arith.constant 0 : index
    %189 = vector.load %arg17[%c0_118, %c0_119] : memref<16x128xf32, #tpu.memory_space<vmem>>, vector<16x128xf32>
    tpu.vector_store %arg17[%c0_118, %c0_119], %188 {strides = array<i32>} : memref<16x128xf32, #tpu.memory_space<vmem>>, vector<16x128xf32>,
    return
  }
}

</mosaic_0001>

<llo_original>
// kernel: tpu_custom_call.1
$region0: #{tpu_custom_call.1}
  #allocation0 [shape = 'u32[]', space=smem, size = 0x4, offset = 0x4, fixed_abs, tag = 'smem constant byte address 0x4 - core index']
  #allocation1 [shape = 'u32[72,128]{1,0:T(1,128)}', space=vmem, size = 0x9000, scoped, tag = 'internal scratch']
  #allocation2 [shape = 'f32[3,1024,512]{2,1,0:T(8,128)}', space=vmem, size = 0x600000, scoped, tag = 'scratch operand']
  #allocation3 [shape = 'f32[3,512,128]{2,1,0:T(8,128)}', space=vmem, size = 0xc0000, scoped, tag = 'scratch operand']
  #allocation4 [shape = 'f32[2,128,128]{2,1,0:T(8,128)}', space=vmem, size = 0x20000, scoped, tag = 'scratch operand']
  #allocation5 [shape = 's32[3]{0}', space=sflag, size = 0xc, scoped, tag = 'scratch operand']
  #allocation6 [shape = 'f32[24,1024]{1,0:T(8,128)}', space=vmem, size = 0x18000, scoped, tag = 'scratch operand']
  #allocation7 [shape = 'f32[24,512]{1,0:T(8,128)}', space=vmem, size = 0xc000, scoped, tag = 'scratch operand']
  #allocation8 [shape = 'f32[24,128]{1,0:T(8,128)}', space=vmem, size = 0x3000, scoped, tag = 'scratch operand']
  #allocation27 [shape = 's32[]', space=sflag, size = 0x4, offset = 0, fixed_abs, tag = 'sflag constant byte address 0x0 - dummy sync flag']
  #allocation28 [shape = 's32[]', space=sflag, size = 0x4, offset = 0, fixed_abs, tag = 'sflag constant byte address 0x0 - dummy sync flag']
  #allocation29 [shape = 'u32[]', space=smem, size = 0x4, offset = 0x44, fixed_abs, tag = 'smem constant byte address 0x44 - assertion arg 0']
  #allocation30 [shape = 'u32[]', space=smem, size = 0x4, offset = 0x48, fixed_abs, tag = 'smem constant byte address 0x48 - assertion arg 1']
  #allocation31 [shape = 's32[]', space=sflag, size = 0x4, offset = 0, fixed_abs, tag = 'sflag constant byte address 0x0 - dummy sync flag']
  #allocation32 [shape = 's32[]', space=sflag, size = 0x4, offset = 0, fixed_abs, tag = 'sflag constant byte address 0x0 - dummy sync flag']
  #allocation33 [shape = 's32[]', space=sflag, size = 0x4, offset = 0, fixed_abs, tag = 'sflag constant byte address 0x0 - dummy sync flag']
  #allocation34 [shape = 's32[]', space=sflag, size = 0x4, offset = 0, fixed_abs, tag = 'sflag constant byte address 0x0 - dummy sync flag']
  %s0 = inlined_call_operand.hbm [shape: f32[16,21], index: 0, kind: input, shape index: {}]
  %s1 = inlined_call_operand.vmem [shape: f32[16,1], index: 1, kind: input, shape index: {}]
  %s2 = inlined_call_operand.vmem [shape: f32[16,1], index: 2, kind: input, shape index: {}]
  %s3 = inlined_call_operand.vmem [shape: f32[16,1], index: 3, kind: input, shape index: {}]
  %s4 = inlined_call_operand.vmem [shape: f32[16,1], index: 4, kind: input, shape index: {}]
  %s5 = inlined_call_operand.hbm [shape: f32[21,1024], index: 5, kind: input, shape index: {}]
  %s6 = inlined_call_operand.hbm [shape: f32[3,1024,512], index: 6, kind: input, shape index: {}]
  %s7 = inlined_call_operand.hbm [shape: f32[3,512,128], index: 7, kind: input, shape index: {}]
  %s8 = inlined_call_operand.hbm [shape: f32[2,128,128], index: 8, kind: input, shape index: {}]
  %s9 = inlined_call_operand.hbm [shape: f32[1,1024], index: 9, kind: input, shape index: {}]
  %s10 = inlined_call_operand.hbm [shape: f32[1,512], index: 10, kind: input, shape index: {}]
  %s11 = inlined_call_operand.hbm [shape: f32[1,128], index: 11, kind: input, shape index: {}]
  %s12 = inlined_call_operand.hbm [shape: f32[1,128], index: 12, kind: input, shape index: {}]
  %s13 = inlined_call_operand.hbm [shape: f32[1,1024], index: 13, kind: input, shape index: {}]
  %s14 = inlined_call_operand.hbm [shape: f32[1,512], index: 14, kind: input, shape index: {}]
  %s15 = inlined_call_operand.hbm [shape: f32[1,128], index: 15, kind: input, shape index: {}]
  %s16 = inlined_call_operand.hbm [shape: f32[1,128], index: 16, kind: input, shape index: {}]
  %s17 = inlined_call_operand.hbm [shape: f32[16,128], index: 17, kind: output, shape index: {}]
  %s18 = sld [smem:[#allocation0]]
  $region118: #{tpu_custom_call.1} parent=0
    _
  %s20 = ssub.s32 1, %s18
  %s21 = scalar_select 0, %s20, %s18
  $region1: #{tpu_custom_call.1} parent=0
    #allocation9 [shape = 'u8[8192]{0}', space=vmem, size = 0x2000, scoped, tag = 'input window, operand 0, single buffered']
    #allocation10 [shape = 's32[1]{0}', space=sflag, size = 0x4, scoped, tag = 'scoped memory for tpu_custom_call.1']
    #allocation11 [shape = 's32[1]{0}', space=sflag, size = 0x4, scoped, tag = 'scoped memory for tpu_custom_call.1']
    #allocation12 [shape = 'u8[98304]{0}', space=vmem, size = 0x18000, scoped, tag = 'input window, operand 5, single buffered']
    #allocation13 [shape = 's32[1]{0}', space=sflag, size = 0x4, scoped, tag = 'scoped memory for tpu_custom_call.1']
    #allocation14 [shape = 'u8[4096]{0}', space=vmem, size = 0x1000, scoped, tag = 'input window, operand 9, single buffered']
    #allocation15 [shape = 'u8[2048]{0}', space=vmem, size = 0x800, scoped, tag = 'input window, operand 10, single buffered']
    #allocation16 [shape = 's32[1]{0}', space=sflag, size = 0x4, scoped, tag = 'scoped memory for tpu_custom_call.1']
    #allocation17 [shape = 'u8[512]{0}', space=vmem, size = 0x400, scoped, tag = 'input window, operand 11, single buffered']
    #allocation18 [shape = 'u8[512]{0}', space=vmem, size = 0x400, scoped, tag = 'input window, operand 12, single buffered']
    #allocation19 [shape = 's32[1]{0}', space=sflag, size = 0x4, scoped, tag = 'scoped memory for tpu_custom_call.1']
    #allocation20 [shape = 'u8[4096]{0}', space=vmem, size = 0x1000, scoped, tag = 'input window, operand 13, single buffered']
    #allocation21 [shape = 'u8[2048]{0}', space=vmem, size = 0x800, scoped, tag = 'input window, operand 14, single buffered']
    #allocation22 [shape = 's32[1]{0}', space=sflag, size = 0x4, scoped, tag = 'scoped memory for tpu_custom_call.1']
    #allocation23 [shape = 'u8[512]{0}', space=vmem, size = 0x400, scoped, tag = 'input window, operand 15, single buffered']
    #allocation24 [shape = 'u8[512]{0}', space=vmem, size = 0x400, scoped, tag = 'input window, operand 16, single buffered']
    #allocation25 [shape = 's32[1]{0}', space=sflag, size = 0x4, scoped, tag = 'scoped memory for tpu_custom_call.1']
    #allocation26 [shape = 'u8[8192]{0}', space=vmem, size = 0x2000, scoped, tag = 'output window, operand 0, single buffered']
    %22 = vsyncpa [#allocation10], 0
    %23 = vsyncpa [#allocation13], 0
    %24 = vsyncpa [#allocation16], 0
    %25 = vsyncpa [#allocation19], 0
    %26 = vsyncpa [#allocation22], 0
    %27 = vsyncpa [#allocation25], 0
    %28 = vsyncpa [#allocation11], 0
    // Predicated region
    $region2: #{tpu_custom_call.1} parent=1 // pred_check
      _
    $region3: #{tpu_custom_call.1} parent=1 // pred_check_branch
      %30 = sbr.rel (0) target = $region5
    $region4: #{tpu_custom_call.1} parent=1 // pred_region
      %32 = vsyncadd [#allocation10], 0
      %s33 = sshll.u32 %s0, 4
      %s34 = int_to_ptr.hbm [resolvable:$true] %s33
      %s35 = sshll.u32 [#allocation9], 4
      %s36 = int_to_ptr.vmem [resolvable:$true] %s35
      %41 = dma.hbm_to_vmem [thread:$0]  %s34, 256, %s36, [#allocation10], 128, 128, 8
    $region5: #{tpu_custom_call.1} parent=1 // pred_fallthru
      _
    // Predicated region
    $region6: #{tpu_custom_call.1} parent=1 // pred_check
      _
    $region7: #{tpu_custom_call.1} parent=1 // pred_check_branch
      %43 = sbr.rel (0) target = $region9
    $region8: #{tpu_custom_call.1} parent=1 // pred_region
      _
    $region9: #{tpu_custom_call.1} parent=1 // pred_fallthru
      _
    // Predicated region
    $region10: #{tpu_custom_call.1} parent=1 // pred_check
      _
    $region11: #{tpu_custom_call.1} parent=1 // pred_check_branch
      %45 = sbr.rel (0) target = $region13
    $region12: #{tpu_custom_call.1} parent=1 // pred_region
      _
    $region13: #{tpu_custom_call.1} parent=1 // pred_fallthru
      _
    // Predicated region
    $region14: #{tpu_custom_call.1} parent=1 // pred_check
      _
    $region15: #{tpu_custom_call.1} parent=1 // pred_check_branch
      %47 = sbr.rel (0) target = $region17
    $region16: #{tpu_custom_call.1} parent=1 // pred_region
      _
    $region17: #{tpu_custom_call.1} parent=1 // pred_fallthru
      _
    // Predicated region
    $region18: #{tpu_custom_call.1} parent=1 // pred_check
      _
    $region19: #{tpu_custom_call.1} parent=1 // pred_check_branch
      %49 = sbr.rel (0) target = $region21
    $region20: #{tpu_custom_call.1} parent=1 // pred_region
      _
    $region21: #{tpu_custom_call.1} parent=1 // pred_fallthru
      _
    // Predicated region
    $region22: #{tpu_custom_call.1} parent=1 // pred_check
      _
    $region23: #{tpu_custom_call.1} parent=1 // pred_check_branch
      %51 = sbr.rel (0) target = $region25
    $region24: #{tpu_custom_call.1} parent=1 // pred_region
      %53 = vsyncadd [#allocation13], 0
      %s54 = sshll.u32 %s5, 4
      %s55 = int_to_ptr.hbm [resolvable:$true] %s54
      %s56 = sshll.u32 [#allocation12], 4
      %s57 = int_to_ptr.vmem [resolvable:$true] %s56
      %62 = dma.hbm_to_vmem [thread:$0]  %s55, 3072, %s57, [#allocation13], 1024, 1024, 64
    $region25: #{tpu_custom_call.1} parent=1 // pred_fallthru
      _
    // Predicated region
    $region26: #{tpu_custom_call.1} parent=1 // pred_check
      _
    $region27: #{tpu_custom_call.1} parent=1 // pred_check_branch
      %64 = sbr.rel (0) target = $region29
    $region28: #{tpu_custom_call.1} parent=1 // pred_region
      %66 = vsyncadd [#allocation13], 0
      %s68 = sshll.u32 %s9, 4
      %s69 = int_to_ptr.hbm [resolvable:$true] %s68
      %s70 = sshll.u32 [#allocation14], 4
      %s71 = int_to_ptr.vmem [resolvable:$true] %s70
      %73 = dma.hbm_to_vmem [thread:$0]  %s69, 128, %s71, [#allocation13]
    $region29: #{tpu_custom_call.1} parent=1 // pred_fallthru
      _
    // Predicated region
    $region30: #{tpu_custom_call.1} parent=1 // pred_check
      _
    $region31: #{tpu_custom_call.1} parent=1 // pred_check_branch
      %75 = sbr.rel (0) target = $region33
    $region32: #{tpu_custom_call.1} parent=1 // pred_region
      %77 = vsyncadd [#allocation16], 0
      %s79 = sshll.u32 %s10, 4
      %s80 = int_to_ptr.hbm [resolvable:$true] %s79
      %s81 = sshll.u32 [#allocation15], 4
      %s82 = int_to_ptr.vmem [resolvable:$true] %s81
      %84 = dma.hbm_to_vmem [thread:$0]  %s80, 64, %s82, [#allocation16]
    $region33: #{tpu_custom_call.1} parent=1 // pred_fallthru
      _
    // Predicated region
    $region34: #{tpu_custom_call.1} parent=1 // pred_check
      _
    $region35: #{tpu_custom_call.1} parent=1 // pred_check_branch
      %86 = sbr.rel (0) target = $region37
    $region36: #{tpu_custom_call.1} parent=1 // pred_region
      %88 = vsyncadd [#allocation16], 0
      %s90 = sshll.u32 %s11, 4
      %s91 = int_to_ptr.hbm [resolvable:$true] %s90
      %s92 = sshll.u32 [#allocation17], 4
      %s93 = int_to_ptr.vmem [resolvable:$true] %s92
      %95 = dma.hbm_to_vmem [thread:$0]  %s91, 16, %s93, [#allocation16]
    $region37: #{tpu_custom_call.1} parent=1 // pred_fallthru
      _
    // Predicated region
    $region38: #{tpu_custom_call.1} parent=1 // pred_check
      _
    $region39: #{tpu_custom_call.1} parent=1 // pred_check_branch
      %97 = sbr.rel (0) target = $region41
    $region40: #{tpu_custom_call.1} parent=1 // pred_region
      %99 = vsyncadd [#allocation19], 0
      %s101 = sshll.u32 %s12, 4
      %s102 = int_to_ptr.hbm [resolvable:$true] %s101
      %s103 = sshll.u32 [#allocation18], 4
      %s104 = int_to_ptr.vmem [resolvable:$true] %s103
      %106 = dma.hbm_to_vmem [thread:$0]  %s102, 16, %s104, [#allocation19]
    $region41: #{tpu_custom_call.1} parent=1 // pred_fallthru
      _
    // Predicated region
    $region42: #{tpu_custom_call.1} parent=1 // pred_check
      _
    $region43: #{tpu_custom_call.1} parent=1 // pred_check_branch
      %108 = sbr.rel (0) target = $region45
    $region44: #{tpu_custom_call.1} parent=1 // pred_region
      %110 = vsyncadd [#allocation19], 0
      %s112 = sshll.u32 %s13, 4
      %s113 = int_to_ptr.hbm [resolvable:$true] %s112
      %s114 = sshll.u32 [#allocation20], 4
      %s115 = int_to_ptr.vmem [resolvable:$true] %s114
      %117 = dma.hbm_to_vmem [thread:$0]  %s113, 128, %s115, [#allocation19]
    $region45: #{tpu_custom_call.1} parent=1 // pred_fallthru
      _
    // Predicated region
    $region46: #{tpu_custom_call.1} parent=1 // pred_check
      _
    $region47: #{tpu_custom_call.1} parent=1 // pred_check_branch
      %119 = sbr.rel (0) target = $region49
    $region48: #{tpu_custom_call.1} parent=1 // pred_region
      %121 = vsyncadd [#allocation22], 0
      %s123 = sshll.u32 %s14, 4
      %s124 = int_to_ptr.hbm [resolvable:$true] %s123
      %s125 = sshll.u32 [#allocation21], 4
      %s126 = int_to_ptr.vmem [resolvable:$true] %s125
      %128 = dma.hbm_to_vmem [thread:$0]  %s124, 64, %s126, [#allocation22]
    $region49: #{tpu_custom_call.1} parent=1 // pred_fallthru
      _
    // Predicated region
    $region50: #{tpu_custom_call.1} parent=1 // pred_check
      _
    $region51: #{tpu_custom_call.1} parent=1 // pred_check_branch
      %130 = sbr.rel (0) target = $region53
    $region52: #{tpu_custom_call.1} parent=1 // pred_region
      %132 = vsyncadd [#allocation22], 0
      %s134 = sshll.u32 %s15, 4
      %s135 = int_to_ptr.hbm [resolvable:$true] %s134
      %s136 = sshll.u32 [#allocation23], 4
      %s137 = int_to_ptr.vmem [resolvable:$true] %s136
      %139 = dma.hbm_to_vmem [thread:$0]  %s135, 16, %s137, [#allocation22]
    $region53: #{tpu_custom_call.1} parent=1 // pred_fallthru
      _
    // Predicated region
    $region54: #{tpu_custom_call.1} parent=1 // pred_check
      _
    $region55: #{tpu_custom_call.1} parent=1 // pred_check_branch
      %141 = sbr.rel (0) target = $region57
    $region56: #{tpu_custom_call.1} parent=1 // pred_region
      %143 = vsyncadd [#allocation25], 0
      %s145 = sshll.u32 %s16, 4
      %s146 = int_to_ptr.hbm [resolvable:$true] %s145
      %s147 = sshll.u32 [#allocation24], 4
      %s148 = int_to_ptr.vmem [resolvable:$true] %s147
      %150 = dma.hbm_to_vmem [thread:$0]  %s146, 16, %s148, [#allocation25]
    $region57: #{tpu_custom_call.1} parent=1 // pred_fallthru
      _
    // Predicated region
    $region58: #{tpu_custom_call.1} parent=1 // pred_check
      _
    $region59: #{tpu_custom_call.1} parent=1 // pred_check_branch
      %152 = sbr.rel (0) target = $region61
    $region60: #{tpu_custom_call.1} parent=1 // pred_region
      %154 = dma.done [#allocation10], 256
    $region61: #{tpu_custom_call.1} parent=1 // pred_fallthru
      _
    // Predicated region
    $region62: #{tpu_custom_call.1} parent=1 // pred_check
      _
    $region63: #{tpu_custom_call.1} parent=1 // pred_check_branch
      %156 = sbr.rel (0) target = $region65
    $region64: #{tpu_custom_call.1} parent=1 // pred_region
      %158 = dma.done [#allocation13], 3072
    $region65: #{tpu_custom_call.1} parent=1 // pred_fallthru
      _
    // Predicated region
    $region66: #{tpu_custom_call.1} parent=1 // pred_check
      _
    $region67: #{tpu_custom_call.1} parent=1 // pred_check_branch
      %160 = sbr.rel (0) target = $region69
    $region68: #{tpu_custom_call.1} parent=1 // pred_region
      %162 = dma.done [#allocation13], 128
    $region69: #{tpu_custom_call.1} parent=1 // pred_fallthru
      _
    // Predicated region
    $region70: #{tpu_custom_call.1} parent=1 // pred_check
      _
    $region71: #{tpu_custom_call.1} parent=1 // pred_check_branch
      %164 = sbr.rel (0) target = $region73
    $region72: #{tpu_custom_call.1} parent=1 // pred_region
      %166 = dma.done [#allocation16], 64
    $region73: #{tpu_custom_call.1} parent=1 // pred_fallthru
      _
    // Predicated region
    $region74: #{tpu_custom_call.1} parent=1 // pred_check
      _
    $region75: #{tpu_custom_call.1} parent=1 // pred_check_branch
      %168 = sbr.rel (0) target = $region77
    $region76: #{tpu_custom_call.1} parent=1 // pred_region
      %170 = dma.done [#allocation16], 16
    $region77: #{tpu_custom_call.1} parent=1 // pred_fallthru
      _
    // Predicated region
    $region78: #{tpu_custom_call.1} parent=1 // pred_check
      _
    $region79: #{tpu_custom_call.1} parent=1 // pred_check_branch
      %172 = sbr.rel (0) target = $region81
    $region80: #{tpu_custom_call.1} parent=1 // pred_region
      %174 = dma.done [#allocation19], 16
    $region81: #{tpu_custom_call.1} parent=1 // pred_fallthru
      _
    // Predicated region
    $region82: #{tpu_custom_call.1} parent=1 // pred_check
      _
    $region83: #{tpu_custom_call.1} parent=1 // pred_check_branch
      %176 = sbr.rel (0) target = $region85
    $region84: #{tpu_custom_call.1} parent=1 // pred_region
      %178 = dma.done [#allocation19], 128
    $region85: #{tpu_custom_call.1} parent=1 // pred_fallthru
      _
    // Predicated region
    $region86: #{tpu_custom_call.1} parent=1 // pred_check
      _
    $region87: #{tpu_custom_call.1} parent=1 // pred_check_branch
      %180 = sbr.rel (0) target = $region89
    $region88: #{tpu_custom_call.1} parent=1 // pred_region
      %182 = dma.done [#allocation22], 64
    $region89: #{tpu_custom_call.1} parent=1 // pred_fallthru
      _
    // Predicated region
    $region90: #{tpu_custom_call.1} parent=1 // pred_check
      _
    $region91: #{tpu_custom_call.1} parent=1 // pred_check_branch
      %184 = sbr.rel (0) target = $region93
    $region92: #{tpu_custom_call.1} parent=1 // pred_region
      %186 = dma.done [#allocation22], 16
    $region93: #{tpu_custom_call.1} parent=1 // pred_fallthru
      _
    // Predicated region
    $region94: #{tpu_custom_call.1} parent=1 // pred_check
      _
    $region95: #{tpu_custom_call.1} parent=1 // pred_check_branch
      %188 = sbr.rel (0) target = $region97
    $region96: #{tpu_custom_call.1} parent=1 // pred_region
      %190 = dma.done [#allocation25], 16
    $region97: #{tpu_custom_call.1} parent=1 // pred_fallthru
      _
    // Predicated region
    $region98: #{tpu_custom_call.1} parent=1 // pred_check
      _
    $region99: #{tpu_custom_call.1} parent=1 // pred_check_branch
      %192 = sbr.rel target = $region101
    $region100: #{tpu_custom_call.1} parent=1 // pred_region
      %193 = sst [smem:[#allocation29]] [#allocation28]
      %194 = sst [smem:[#allocation30]] [#allocation27]
    $region101: #{tpu_custom_call.1} parent=1 // pred_fallthru
      _
    %196 = shalt.err (0)
    %s198 = sshll.u32 %s6, 4
    %s199 = int_to_ptr.hbm [resolvable:$true] %s198
    %s200 = sshll.u32 [#allocation2], 4
    %s201 = int_to_ptr.vmem [resolvable:$true] %s200
    %203 = dma.hbm_to_vmem [thread:$0]  %s199, 196608, %s201, [#allocation5]
    %s204 = scalar_lea.sflag [#allocation5], 1
    // Predicated region
    $region102: #{tpu_custom_call.1} parent=1 // pred_check
      _
    $region103: #{tpu_custom_call.1} parent=1 // pred_check_branch
      %206 = sbr.rel target = $region105
    $region104: #{tpu_custom_call.1} parent=1 // pred_region
      %207 = sst [smem:[#allocation29]] [#allocation32]
      %208 = sst [smem:[#allocation30]] [#allocation31]
    $region105: #{tpu_custom_call.1} parent=1 // pred_fallthru
      _
    %210 = shalt.err (0)
    %s212 = sshll.u32 %s7, 4
    %s213 = int_to_ptr.hbm [resolvable:$true] %s212
    %s214 = sshll.u32 [#allocation3], 4
    %s215 = int_to_ptr.vmem [resolvable:$true] %s214
    %217 = dma.hbm_to_vmem [thread:$0]  %s213, 24576, %s215, %s204
    %s218 = scalar_lea.sflag [#allocation5], 2
    // Predicated region
    $region106: #{tpu_custom_call.1} parent=1 // pred_check
      _
    $region107: #{tpu_custom_call.1} parent=1 // pred_check_branch
      %220 = sbr.rel target = $region109
    $region108: #{tpu_custom_call.1} parent=1 // pred_region
      %221 = sst [smem:[#allocation29]] [#allocation34]
      %222 = sst [smem:[#allocation30]] [#allocation33]
    $region109: #{tpu_custom_call.1} parent=1 // pred_fallthru
      _
    %224 = shalt.err (0)
    %s226 = sshll.u32 %s8, 4
    %s227 = int_to_ptr.hbm [resolvable:$true] %s226
    %s228 = sshll.u32 [#allocation4], 4
    %s229 = int_to_ptr.vmem [resolvable:$true] %s228
    %231 = dma.hbm_to_vmem [thread:$0]  %s227, 4096, %s229, %s218
    %232 = vst [vmem:[#allocation6 + $0x80] sm:$0xff] 0.0
    %233 = vst [vmem:[#allocation6 + $0x88] sm:$0xff] 0.0
    %234 = vst [vmem:[#allocation6 + $0x90] sm:$0xff] 0.0
    %235 = vst [vmem:[#allocation6 + $0x98] sm:$0xff] 0.0
    %236 = vst [vmem:[#allocation6 + $0xa0] sm:$0xff] 0.0
    %237 = vst [vmem:[#allocation6 + $0xa8] sm:$0xff] 0.0
    %238 = vst [vmem:[#allocation6 + $0xb0] sm:$0xff] 0.0
    %239 = vst [vmem:[#allocation6 + $0xb8] sm:$0xff] 0.0
    %240 = vst [vmem:[#allocation7 + $0x40] sm:$0xff] 0.0
    %241 = vst [vmem:[#allocation7 + $0x48] sm:$0xff] 0.0
    %242 = vst [vmem:[#allocation7 + $0x50] sm:$0xff] 0.0
    %243 = vst [vmem:[#allocation7 + $0x58] sm:$0xff] 0.0
    %244 = vst [vmem:[#allocation8 + $0x10] sm:$0xff] 0.0
    %v245 = vld [vmem:[#allocation9] sm:$0xff]
    %v246 = vld [vmem:[#allocation9 + $0x8] sm:$0xff]
    %v247 = vld [vmem:[#allocation12] sm:$0xff]
    %v248 = vld [vmem:[#allocation12 + $0x8] sm:$0xff]
    %v249 = vld [vmem:[#allocation12 + $0x10] sm:$0xff]
    %v250 = vld [vmem:[#allocation12 + $0x18] sm:$0xff]
    %v251 = vld [vmem:[#allocation12 + $0x20] sm:$0xff]
    %v252 = vld [vmem:[#allocation12 + $0x28] sm:$0xff]
    %v253 = vld [vmem:[#allocation12 + $0x30] sm:$0xff]
    %v254 = vld [vmem:[#allocation12 + $0x38] sm:$0xff]
    %v255 = vld [vmem:[#allocation12 + $0x40] sm:$0xff]
    %v256 = vld [vmem:[#allocation12 + $0x48] sm:$0xff]
    %v257 = vld [vmem:[#allocation12 + $0x50] sm:$0xff]
    %v258 = vld [vmem:[#allocation12 + $0x58] sm:$0xff]
    %v259 = vld [vmem:[#allocation12 + $0x60] sm:$0xff]
    %v260 = vld [vmem:[#allocation12 + $0x68] sm:$0xff]
    %v261 = vld [vmem:[#allocation12 + $0x70] sm:$0xff]
    %v262 = vld [vmem:[#allocation12 + $0x78] sm:$0xff]
    %v263 = vld [vmem:[#allocation12 + $0x80] sm:$0x1f]
    %v264 = vld [vmem:[#allocation12 + $0x88] sm:$0x1f]
    %v265 = vld [vmem:[#allocation12 + $0x90] sm:$0x1f]
    %v266 = vld [vmem:[#allocation12 + $0x98] sm:$0x1f]
    %v267 = vld [vmem:[#allocation12 + $0xa0] sm:$0x1f]
    %v268 = vld [vmem:[#allocation12 + $0xa8] sm:$0x1f]
    %v269 = vld [vmem:[#allocation12 + $0xb0] sm:$0x1f]
    %v270 = vld [vmem:[#allocation12 + $0xb8] sm:$0x1f]
    %vm271 = vcmask 171008
    %v273 = vsel %vm271, %v245, 0
    %v276 = vsel %vm271, %v246, 0
    %vm278 = vcmask 1044480
    %v280 = vsel %vm278, %v263, 0
    %v283 = vsel %vm278, %v264, 0
    %v286 = vsel %vm278, %v265, 0
    %v289 = vsel %vm278, %v266, 0
    %v292 = vsel %vm278, %v267, 0
    %v295 = vsel %vm278, %v268, 0
    %v298 = vsel %vm278, %v269, 0
    %v301 = vsel %vm278, %v270, 0
    %303 = vmatpush.msra.mxu0 0.0
    %304 = vmatpush.msra.mxu0 0.0
    %305 = vmatpush.msra.mxu0 0.0
    %306 = vmatpush.msra.mxu0 0.0
    %307 = vmatpush.msra.mxu0 0.0
    %308 = vmatpush.msra.mxu0 0.0
    %309 = vmatpush.msra.mxu0 0.0
    %310 = vmatpush.msra.mxu0 0.0
    %311 = vmatpush.msra.mxu0 0.0
    %312 = vmatpush.msra.mxu0 0.0
    %313 = vmatpush.msra.mxu0 0.0
    %314 = vmatpush.msra.mxu0 0.0
    %315 = vmatpush.msra.mxu0 0.0
    %316 = vmatpush.msra.mxu0 %v280
    %317 = vmatpush.msra.mxu0 %v255
    %318 = vmatpush.msra.mxu0 %v247
    %319 = vmatmul.f32.gmra.mxu0 %v273
    %v320 = vpop.f32.mrf.mxu0
    %v321 = vadd.f32 0.0, %v320
    %322 = vmatmul.f32.gmra.mxu0 %v276
    %v323 = vpop.f32.mrf.mxu0
    %v324 = vadd.f32 0.0, %v323
    %325 = vdwg.mxu0
    %326 = vmatpush.msra.mxu0 0.0
    %327 = vmatpush.msra.mxu0 0.0
    %328 = vmatpush.msra.mxu0 0.0
    %329 = vmatpush.msra.mxu0 0.0
    %330 = vmatpush.msra.mxu0 0.0
    %331 = vmatpush.msra.mxu0 0.0
    %332 = vmatpush.msra.mxu0 0.0
    %333 = vmatpush.msra.mxu0 0.0
    %334 = vmatpush.msra.mxu0 0.0
    %335 = vmatpush.msra.mxu0 0.0
    %336 = vmatpush.msra.mxu0 0.0
    %337 = vmatpush.msra.mxu0 0.0
    %338 = vmatpush.msra.mxu0 0.0
    %339 = vmatpush.msra.mxu0 %v283
    %340 = vmatpush.msra.mxu0 %v256
    %341 = vmatpush.msra.mxu0 %v248
    %342 = vmatmul.f32.gmra.mxu0 %v273
    %v343 = vpop.f32.mrf.mxu0
    %v344 = vadd.f32 0.0, %v343
    %345 = vmatmul.f32.gmra.mxu0 %v276
    %v346 = vpop.f32.mrf.mxu0
    %v347 = vadd.f32 0.0, %v346
    %348 = vdwg.mxu0
    %349 = vmatpush.msra.mxu0 0.0
    %350 = vmatpush.msra.mxu0 0.0
    %351 = vmatpush.msra.mxu0 0.0
    %352 = vmatpush.msra.mxu0 0.0
    %353 = vmatpush.msra.mxu0 0.0
    %354 = vmatpush.msra.mxu0 0.0
    %355 = vmatpush.msra.mxu0 0.0
    %356 = vmatpush.msra.mxu0 0.0
    %357 = vmatpush.msra.mxu0 0.0
    %358 = vmatpush.msra.mxu0 0.0
    %359 = vmatpush.msra.mxu0 0.0
    %360 = vmatpush.msra.mxu0 0.0
    %361 = vmatpush.msra.mxu0 0.0
    %362 = vmatpush.msra.mxu0 %v286
    %363 = vmatpush.msra.mxu0 %v257
    %364 = vmatpush.msra.mxu0 %v249
    %365 = vmatmul.f32.gmra.mxu0 %v273
    %v366 = vpop.f32.mrf.mxu0
    %v367 = vadd.f32 0.0, %v366
    %368 = vmatmul.f32.gmra.mxu0 %v276
    %v369 = vpop.f32.mrf.mxu0
    %v370 = vadd.f32 0.0, %v369
    %371 = vdwg.mxu0
    %372 = vmatpush.msra.mxu0 0.0
    %373 = vmatpush.msra.mxu0 0.0
    %374 = vmatpush.msra.mxu0 0.0
    %375 = vmatpush.msra.mxu0 0.0
    %376 = vmatpush.msra.mxu0 0.0
    %377 = vmatpush.msra.mxu0 0.0
    %378 = vmatpush.msra.mxu0 0.0
    %379 = vmatpush.msra.mxu0 0.0
    %380 = vmatpush.msra.mxu0 0.0
    %381 = vmatpush.msra.mxu0 0.0
    %382 = vmatpush.msra.mxu0 0.0
    %383 = vmatpush.msra.mxu0 0.0
    %384 = vmatpush.msra.mxu0 0.0
    %385 = vmatpush.msra.mxu0 %v289
    %386 = vmatpush.msra.mxu0 %v258
    %387 = vmatpush.msra.mxu0 %v250
    %388 = vmatmul.f32.gmra.mxu0 %v273
    %v389 = vpop.f32.mrf.mxu0
    %v390 = vadd.f32 0.0, %v389
    %391 = vmatmul.f32.gmra.mxu0 %v276
    %v392 = vpop.f32.mrf.mxu0
    %v393 = vadd.f32 0.0, %v392
    %394 = vdwg.mxu0
    %395 = vmatpush.msra.mxu0 0.0
    %396 = vmatpush.msra.mxu0 0.0
    %397 = vmatpush.msra.mxu0 0.0
    %398 = vmatpush.msra.mxu0 0.0
    %399 = vmatpush.msra.mxu0 0.0
    %400 = vmatpush.msra.mxu0 0.0
    %401 = vmatpush.msra.mxu0 0.0
    %402 = vmatpush.msra.mxu0 0.0
    %403 = vmatpush.msra.mxu0 0.0
    %404 = vmatpush.msra.mxu0 0.0
    %405 = vmatpush.msra.mxu0 0.0
    %406 = vmatpush.msra.mxu0 0.0
    %407 = vmatpush.msra.mxu0 0.0
    %408 = vmatpush.msra.mxu0 %v292
    %409 = vmatpush.msra.mxu0 %v259
    %410 = vmatpush.msra.mxu0 %v251
    %411 = vmatmul.f32.gmra.mxu0 %v273
    %v412 = vpop.f32.mrf.mxu0
    %v413 = vadd.f32 0.0, %v412
    %414 = vmatmul.f32.gmra.mxu0 %v276
    %v415 = vpop.f32.mrf.mxu0
    %v416 = vadd.f32 0.0, %v415
    %417 = vdwg.mxu0
    %418 = vmatpush.msra.mxu0 0.0
    %419 = vmatpush.msra.mxu0 0.0
    %420 = vmatpush.msra.mxu0 0.0
    %421 = vmatpush.msra.mxu0 0.0
    %422 = vmatpush.msra.mxu0 0.0
    %423 = vmatpush.msra.mxu0 0.0
    %424 = vmatpush.msra.mxu0 0.0
    %425 = vmatpush.msra.mxu0 0.0
    %426 = vmatpush.msra.mxu0 0.0
    %427 = vmatpush.msra.mxu0 0.0
    %428 = vmatpush.msra.mxu0 0.0
    %429 = vmatpush.msra.mxu0 0.0
    %430 = vmatpush.msra.mxu0 0.0
    %431 = vmatpush.msra.mxu0 %v295
    %432 = vmatpush.msra.mxu0 %v260
    %433 = vmatpush.msra.mxu0 %v252
    %434 = vmatmul.f32.gmra.mxu0 %v273
    %v435 = vpop.f32.mrf.mxu0
    %v436 = vadd.f32 0.0, %v435
    %437 = vmatmul.f32.gmra.mxu0 %v276
    %v438 = vpop.f32.mrf.mxu0
    %v439 = vadd.f32 0.0, %v438
    %440 = vdwg.mxu0
    %441 = vmatpush.msra.mxu0 0.0
    %442 = vmatpush.msra.mxu0 0.0
    %443 = vmatpush.msra.mxu0 0.0
    %444 = vmatpush.msra.mxu0 0.0
    %445 = vmatpush.msra.mxu0 0.0
    %446 = vmatpush.msra.mxu0 0.0
    %447 = vmatpush.msra.mxu0 0.0
    %448 = vmatpush.msra.mxu0 0.0
    %449 = vmatpush.msra.mxu0 0.0
    %450 = vmatpush.msra.mxu0 0.0
    %451 = vmatpush.msra.mxu0 0.0
    %452 = vmatpush.msra.mxu0 0.0
    %453 = vmatpush.msra.mxu0 0.0
    %454 = vmatpush.msra.mxu0 %v298
    %455 = vmatpush.msra.mxu0 %v261
    %456 = vmatpush.msra.mxu0 %v253
    %457 = vmatmul.f32.gmra.mxu0 %v273
    %v458 = vpop.f32.mrf.mxu0
    %v459 = vadd.f32 0.0, %v458
    %460 = vmatmul.f32.gmra.mxu0 %v276
    %v461 = vpop.f32.mrf.mxu0
    %v462 = vadd.f32 0.0, %v461
    %463 = vdwg.mxu0
    %464 = vmatpush.msra.mxu0 0.0
    %465 = vmatpush.msra.mxu0 0.0
    %466 = vmatpush.msra.mxu0 0.0
    %467 = vmatpush.msra.mxu0 0.0
    %468 = vmatpush.msra.mxu0 0.0
    %469 = vmatpush.msra.mxu0 0.0
    %470 = vmatpush.msra.mxu0 0.0
    %471 = vmatpush.msra.mxu0 0.0
    %472 = vmatpush.msra.mxu0 0.0
    %473 = vmatpush.msra.mxu0 0.0
    %474 = vmatpush.msra.mxu0 0.0
    %475 = vmatpush.msra.mxu0 0.0
    %476 = vmatpush.msra.mxu0 0.0
    %477 = vmatpush.msra.mxu0 %v301
    %478 = vmatpush.msra.mxu0 %v262
    %479 = vmatpush.msra.mxu0 %v254
    %480 = vmatmul.f32.gmra.mxu0 %v273
    %v481 = vpop.f32.mrf.mxu0
    %v482 = vadd.f32 0.0, %v481
    %483 = vmatmul.f32.gmra.mxu0 %v276
    %v484 = vpop.f32.mrf.mxu0
    %v485 = vadd.f32 0.0, %v484
    %486 = vdwg.mxu0
    %v487 = vld [vmem:[%s1] sm:$0xff]
    %v488 = vld [vmem:[%s1 + $0x8] sm:$0xff]
    %v489 = vld [vmem:[#allocation14] sm:$0xff]
    %v490 = vld [vmem:[#allocation20] sm:$0xff]
    %492 = vset.pattern.permute.xlu0 0
    %493 = vperm.xlu0 %492, %v487
    %v494 = vpop.permute.xlu0 %493
    %497 = vset.pattern.permute.xlu0 0
    %498 = vperm.xlu0 %497, %v488
    %v499 = vpop.permute.xlu0 %498
    %v501 = vmul.f32 %v321, %v494
    %v502 = vmul.f32 %v344, %v494
    %v503 = vmul.f32 %v367, %v494
    %v504 = vmul.f32 %v390, %v494
    %v505 = vmul.f32 %v413, %v494
    %v506 = vmul.f32 %v436, %v494
    %v507 = vmul.f32 %v459, %v494
    %v508 = vmul.f32 %v482, %v494
    %v509 = vmul.f32 %v324, %v499
    %v510 = vmul.f32 %v347, %v499
    %v511 = vmul.f32 %v370, %v499
    %v512 = vmul.f32 %v393, %v499
    %v513 = vmul.f32 %v416, %v499
    %v514 = vmul.f32 %v439, %v499
    %v515 = vmul.f32 %v462, %v499
    %v516 = vmul.f32 %v485, %v499
    %v517 = vadd.f32 %v501, %v509
    %v518 = vrot.slane %v517, 4
    %v519 = vadd.f32 %v517, %v518
    %v520 = vrot.slane %v519, 2
    %v521 = vadd.f32 %v519, %v520
    %v522 = vrot.slane %v521, 1
    %v523 = vadd.f32 %v521, %v522
    %v524 = vadd.f32 %v502, %v510
    %v525 = vrot.slane %v524, 4
    %v526 = vadd.f32 %v524, %v525
    %v527 = vrot.slane %v526, 2
    %v528 = vadd.f32 %v526, %v527
    %v529 = vrot.slane %v528, 1
    %v530 = vadd.f32 %v528, %v529
    %v531 = vadd.f32 %v503, %v511
    %v532 = vrot.slane %v531, 4
    %v533 = vadd.f32 %v531, %v532
    %v534 = vrot.slane %v533, 2
    %v535 = vadd.f32 %v533, %v534
    %v536 = vrot.slane %v535, 1
    %v537 = vadd.f32 %v535, %v536
    %v538 = vadd.f32 %v504, %v512
    %v539 = vrot.slane %v538, 4
    %v540 = vadd.f32 %v538, %v539
    %v541 = vrot.slane %v540, 2
    %v542 = vadd.f32 %v540, %v541
    %v543 = vrot.slane %v542, 1
    %v544 = vadd.f32 %v542, %v543
    %v545 = vadd.f32 %v505, %v513
    %v546 = vrot.slane %v545, 4
    %v547 = vadd.f32 %v545, %v546
    %v548 = vrot.slane %v547, 2
    %v549 = vadd.f32 %v547, %v548
    %v550 = vrot.slane %v549, 1
    %v551 = vadd.f32 %v549, %v550
    %v552 = vadd.f32 %v506, %v514
    %v553 = vrot.slane %v552, 4
    %v554 = vadd.f32 %v552, %v553
    %v555 = vrot.slane %v554, 2
    %v556 = vadd.f32 %v554, %v555
    %v557 = vrot.slane %v556, 1
    %v558 = vadd.f32 %v556, %v557
    %v559 = vadd.f32 %v507, %v515
    %v560 = vrot.slane %v559, 4
    %v561 = vadd.f32 %v559, %v560
    %v562 = vrot.slane %v561, 2
    %v563 = vadd.f32 %v561, %v562
    %v564 = vrot.slane %v563, 1
    %v565 = vadd.f32 %v563, %v564
    %v566 = vadd.f32 %v508, %v516
    %v567 = vrot.slane %v566, 4
    %v568 = vadd.f32 %v566, %v567
    %v569 = vrot.slane %v568, 2
    %v570 = vadd.f32 %v568, %v569
    %v571 = vrot.slane %v570, 1
    %v572 = vadd.f32 %v570, %v571
    %v573 = vmul.f32 %v501, %v321
    %v574 = vmul.f32 %v502, %v344
    %v575 = vmul.f32 %v503, %v367
    %v576 = vmul.f32 %v504, %v390
    %v577 = vmul.f32 %v505, %v413
    %v578 = vmul.f32 %v506, %v436
    %v579 = vmul.f32 %v507, %v459
    %v580 = vmul.f32 %v508, %v482
    %v581 = vmul.f32 %v509, %v324
    %v582 = vmul.f32 %v510, %v347
    %v583 = vmul.f32 %v511, %v370
    %v584 = vmul.f32 %v512, %v393
    %v585 = vmul.f32 %v513, %v416
    %v586 = vmul.f32 %v514, %v439
    %v587 = vmul.f32 %v515, %v462
    %v588 = vmul.f32 %v516, %v485
    %v589 = vadd.f32 %v573, %v581
    %v590 = vrot.slane %v589, 4
    %v591 = vadd.f32 %v589, %v590
    %v592 = vrot.slane %v591, 2
    %v593 = vadd.f32 %v591, %v592
    %v594 = vrot.slane %v593, 1
    %v595 = vadd.f32 %v593, %v594
    %v596 = vadd.f32 %v574, %v582
    %v597 = vrot.slane %v596, 4
    %v598 = vadd.f32 %v596, %v597
    %v599 = vrot.slane %v598, 2
    %v600 = vadd.f32 %v598, %v599
    %v601 = vrot.slane %v600, 1
    %v602 = vadd.f32 %v600, %v601
    %v603 = vadd.f32 %v575, %v583
    %v604 = vrot.slane %v603, 4
    %v605 = vadd.f32 %v603, %v604
    %v606 = vrot.slane %v605, 2
    %v607 = vadd.f32 %v605, %v606
    %v608 = vrot.slane %v607, 1
    %v609 = vadd.f32 %v607, %v608
    %v610 = vadd.f32 %v576, %v584
    %v611 = vrot.slane %v610, 4
    %v612 = vadd.f32 %v610, %v611
    %v613 = vrot.slane %v612, 2
    %v614 = vadd.f32 %v612, %v613
    %v615 = vrot.slane %v614, 1
    %v616 = vadd.f32 %v614, %v615
    %v617 = vadd.f32 %v577, %v585
    %v618 = vrot.slane %v617, 4
    %v619 = vadd.f32 %v617, %v618
    %v620 = vrot.slane %v619, 2
    %v621 = vadd.f32 %v619, %v620
    %v622 = vrot.slane %v621, 1
    %v623 = vadd.f32 %v621, %v622
    %v624 = vadd.f32 %v578, %v586
    %v625 = vrot.slane %v624, 4
    %v626 = vadd.f32 %v624, %v625
    %v627 = vrot.slane %v626, 2
    %v628 = vadd.f32 %v626, %v627
    %v629 = vrot.slane %v628, 1
    %v630 = vadd.f32 %v628, %v629
    %v631 = vadd.f32 %v579, %v587
    %v632 = vrot.slane %v631, 4
    %v633 = vadd.f32 %v631, %v632
    %v634 = vrot.slane %v633, 2
    %v635 = vadd.f32 %v633, %v634
    %v636 = vrot.slane %v635, 1
    %v637 = vadd.f32 %v635, %v636
    %v638 = vadd.f32 %v580, %v588
    %v639 = vrot.slane %v638, 4
    %v640 = vadd.f32 %v638, %v639
    %v641 = vrot.slane %v640, 2
    %v642 = vadd.f32 %v640, %v641
    %v643 = vrot.slane %v642, 1
    %v644 = vadd.f32 %v642, %v643
    %v645 = vmul.f32 %v523, 0.083333336
    %v646 = vmul.f32 %v530, 0.083333336
    %v647 = vmul.f32 %v537, 0.083333336
    %v648 = vmul.f32 %v544, 0.083333336
    %v649 = vmul.f32 %v551, 0.083333336
    %v650 = vmul.f32 %v558, 0.083333336
    %v651 = vmul.f32 %v565, 0.083333336
    %v652 = vmul.f32 %v572, 0.083333336
    %v653 = vmul.f32 %v595, 0.083333336
    %v654 = vmul.f32 %v602, 0.083333336
    %v655 = vmul.f32 %v609, 0.083333336
    %v656 = vmul.f32 %v616, 0.083333336
    %v657 = vmul.f32 %v623, 0.083333336
    %v658 = vmul.f32 %v630, 0.083333336
    %v659 = vmul.f32 %v637, 0.083333336
    %v660 = vmul.f32 %v644, 0.083333336
    %v661 = vmul.f32 %v645, %v645
    %v662 = vmul.f32 %v646, %v646
    %v663 = vmul.f32 %v647, %v647
    %v664 = vmul.f32 %v648, %v648
    %v665 = vmul.f32 %v649, %v649
    %v666 = vmul.f32 %v650, %v650
    %v667 = vmul.f32 %v651, %v651
    %v668 = vmul.f32 %v652, %v652
    %v669 = vsub.f32 %v653, %v661
    %v670 = vsub.f32 %v654, %v662
    %v671 = vsub.f32 %v655, %v663
    %v672 = vsub.f32 %v656, %v664
    %v673 = vsub.f32 %v657, %v665
    %v674 = vsub.f32 %v658, %v666
    %v675 = vsub.f32 %v659, %v667
    %v676 = vsub.f32 %v660, %v668
    %v677 = vmax.f32 %v669, 0.0
    %v678 = vmax.f32 %v670, 0.0
    %v679 = vmax.f32 %v671, 0.0
    %v680 = vmax.f32 %v672, 0.0
    %v681 = vmax.f32 %v673, 0.0
    %v682 = vmax.f32 %v674, 0.0
    %v683 = vmax.f32 %v675, 0.0
    %v684 = vmax.f32 %v676, 0.0
    %v685 = vadd.f32 %v677, 1e-05
    %v686 = vadd.f32 %v678, 1e-05
    %v687 = vadd.f32 %v679, 1e-05
    %v688 = vadd.f32 %v680, 1e-05
    %v689 = vadd.f32 %v681, 1e-05
    %v690 = vadd.f32 %v682, 1e-05
    %v691 = vadd.f32 %v683, 1e-05
    %v692 = vadd.f32 %v684, 1e-05
    %v693 = vrsqrt.pop %v685
    %v694 = vmul.f32 %v693, %v685
    %v695 = vmul.f32 %v694, %v693
    %v696 = vmul.f32 0.5, %v695
    %v697 = vsub.f32 1.5, %v696
    %v698 = vmul.f32 %v693, %v697
    %vm699 = vweird.f32 %v685
    %vm700 = vweird.f32 %v693
    %vm701 = vmor %vm699, %vm700
    %v702 = vsel %vm701, %v693, %v698
    %v703 = vrsqrt.pop %v686
    %v704 = vmul.f32 %v703, %v686
    %v705 = vmul.f32 %v704, %v703
    %v706 = vmul.f32 0.5, %v705
    %v707 = vsub.f32 1.5, %v706
    %v708 = vmul.f32 %v703, %v707
    %vm709 = vweird.f32 %v686
    %vm710 = vweird.f32 %v703
    %vm711 = vmor %vm709, %vm710
    %v712 = vsel %vm711, %v703, %v708
    %v713 = vrsqrt.pop %v687
    %v714 = vmul.f32 %v713, %v687
    %v715 = vmul.f32 %v714, %v713
    %v716 = vmul.f32 0.5, %v715
    %v717 = vsub.f32 1.5, %v716
    %v718 = vmul.f32 %v713, %v717
    %vm719 = vweird.f32 %v687
    %vm720 = vweird.f32 %v713
    %vm721 = vmor %vm719, %vm720
    %v722 = vsel %vm721, %v713, %v718
    %v723 = vrsqrt.pop %v688
    %v724 = vmul.f32 %v723, %v688
    %v725 = vmul.f32 %v724, %v723
    %v726 = vmul.f32 0.5, %v725
    %v727 = vsub.f32 1.5, %v726
    %v728 = vmul.f32 %v723, %v727
    %vm729 = vweird.f32 %v688
    %vm730 = vweird.f32 %v723
    %vm731 = vmor %vm729, %vm730
    %v732 = vsel %vm731, %v723, %v728
    %v733 = vrsqrt.pop %v689
    %v734 = vmul.f32 %v733, %v689
    %v735 = vmul.f32 %v734, %v733
    %v736 = vmul.f32 0.5, %v735
    %v737 = vsub.f32 1.5, %v736
    %v738 = vmul.f32 %v733, %v737
    %vm739 = vweird.f32 %v689
    %vm740 = vweird.f32 %v733
    %vm741 = vmor %vm739, %vm740
    %v742 = vsel %vm741, %v733, %v738
    %v743 = vrsqrt.pop %v690
    %v744 = vmul.f32 %v743, %v690
    %v745 = vmul.f32 %v744, %v743
    %v746 = vmul.f32 0.5, %v745
    %v747 = vsub.f32 1.5, %v746
    %v748 = vmul.f32 %v743, %v747
    %vm749 = vweird.f32 %v690
    %vm750 = vweird.f32 %v743
    %vm751 = vmor %vm749, %vm750
    %v752 = vsel %vm751, %v743, %v748
    %v753 = vrsqrt.pop %v691
    %v754 = vmul.f32 %v753, %v691
    %v755 = vmul.f32 %v754, %v753
    %v756 = vmul.f32 0.5, %v755
    %v757 = vsub.f32 1.5, %v756
    %v758 = vmul.f32 %v753, %v757
    %vm759 = vweird.f32 %v691
    %vm760 = vweird.f32 %v753
    %vm761 = vmor %vm759, %vm760
    %v762 = vsel %vm761, %v753, %v758
    %v763 = vrsqrt.pop %v692
    %v764 = vmul.f32 %v763, %v692
    %v765 = vmul.f32 %v764, %v763
    %v766 = vmul.f32 0.5, %v765
    %v767 = vsub.f32 1.5, %v766
    %v768 = vmul.f32 %v763, %v767
    %vm769 = vweird.f32 %v692
    %vm770 = vweird.f32 %v763
    %vm771 = vmor %vm769, %vm770
    %v772 = vsel %vm771, %v763, %v768
    %v781 = vrot.slane %v712, 7
    %v782 = vrot.slane %v722, 6
    %v783 = vrot.slane %v732, 5
    %v784 = vrot.slane %v742, 4
    %v785 = vrot.slane %v752, 3
    %v786 = vrot.slane %v762, 2
    %v787 = vrot.slane %v772, 1
    %vm788 = vcmask 1040384
    %v789 = vsel %vm788, %v702, %v781
    %vm790 = vcmask 1042434
    %v791 = vsel %vm790, %v782, %v783
    %vm792 = vcmask 1041408
    %v793 = vsel %vm792, %v789, %v791
    %vm794 = vcmask 1044484
    %v795 = vsel %vm794, %v784, %v785
    %vm796 = vcmask 1046534
    %v797 = vsel %vm796, %v786, %v787
    %vm798 = vcmask 1045508
    %v799 = vsel %vm798, %v795, %v797
    %vm800 = vcmask 1043456
    %v801 = vsel %vm800, %v793, %v799
    %v803 = vmul.f32 %v489, %v801
    %v805 = vperm.slane %v803, 0
    %v806 = vperm.slane %v803, 1
    %v807 = vperm.slane %v803, 2
    %v808 = vperm.slane %v803, 3
    %v809 = vperm.slane %v803, 4
    %v810 = vperm.slane %v803, 5
    %v811 = vperm.slane %v803, 6
    %v812 = vperm.slane %v803, 7
    %v821 = vmul.f32 %v645, %v805
    %v822 = vmul.f32 %v646, %v806
    %v823 = vmul.f32 %v647, %v807
    %v824 = vmul.f32 %v648, %v808
    %v825 = vmul.f32 %v649, %v809
    %v826 = vmul.f32 %v650, %v810
    %v827 = vmul.f32 %v651, %v811
    %v828 = vmul.f32 %v652, %v812
    %v837 = vrot.slane %v822, 7
    %v838 = vrot.slane %v823, 6
    %v839 = vrot.slane %v824, 5
    %v840 = vrot.slane %v825, 4
    %v841 = vrot.slane %v826, 3
    %v842 = vrot.slane %v827, 2
    %v843 = vrot.slane %v828, 1
    %v844 = vsel %vm788, %v821, %v837
    %v845 = vsel %vm790, %v838, %v839
    %v846 = vsel %vm792, %v844, %v845
    %v847 = vsel %vm794, %v840, %v841
    %v848 = vsel %vm796, %v842, %v843
    %v849 = vsel %vm798, %v847, %v848
    %v850 = vsel %vm800, %v846, %v849
    %v852 = vsub.f32 %v490, %v850
    %v853 = vmul.f32 %v321, %v805
    %v854 = vmul.f32 %v344, %v806
    %v855 = vmul.f32 %v367, %v807
    %v856 = vmul.f32 %v390, %v808
    %v857 = vmul.f32 %v413, %v809
    %v858 = vmul.f32 %v436, %v810
    %v859 = vmul.f32 %v459, %v811
    %v860 = vmul.f32 %v482, %v812
    %v861 = vmul.f32 %v324, %v805
    %v862 = vmul.f32 %v347, %v806
    %v863 = vmul.f32 %v370, %v807
    %v864 = vmul.f32 %v393, %v808
    %v865 = vmul.f32 %v416, %v809
    %v866 = vmul.f32 %v439, %v810
    %v867 = vmul.f32 %v462, %v811
    %v868 = vmul.f32 %v485, %v812
    %v870 = vperm.slane %v852, 0
    %v871 = vperm.slane %v852, 1
    %v872 = vperm.slane %v852, 2
    %v873 = vperm.slane %v852, 3
    %v874 = vperm.slane %v852, 4
    %v875 = vperm.slane %v852, 5
    %v876 = vperm.slane %v852, 6
    %v877 = vperm.slane %v852, 7
    %v886 = vadd.f32 %v853, %v870
    %v887 = vadd.f32 %v854, %v871
    %v888 = vadd.f32 %v855, %v872
    %v889 = vadd.f32 %v856, %v873
    %v890 = vadd.f32 %v857, %v874
    %v891 = vadd.f32 %v858, %v875
    %v892 = vadd.f32 %v859, %v876
    %v893 = vadd.f32 %v860, %v877
    %v894 = vadd.f32 %v861, %v870
    %v895 = vadd.f32 %v862, %v871
    %v896 = vadd.f32 %v863, %v872
    %v897 = vadd.f32 %v864, %v873
    %v898 = vadd.f32 %v865, %v874
    %v899 = vadd.f32 %v866, %v875
    %v900 = vadd.f32 %v867, %v876
    %v901 = vadd.f32 %v868, %v877
    %v902 = vmax.f32 %v886, 0.0
    %v903 = vmax.f32 %v887, 0.0
    %v904 = vmax.f32 %v888, 0.0
    %v905 = vmax.f32 %v889, 0.0
    %v906 = vmax.f32 %v890, 0.0
    %v907 = vmax.f32 %v891, 0.0
    %v908 = vmax.f32 %v892, 0.0
    %v909 = vmax.f32 %v893, 0.0
    %v910 = vmax.f32 %v894, 0.0
    %v911 = vmax.f32 %v895, 0.0
    %v912 = vmax.f32 %v896, 0.0
    %v913 = vmax.f32 %v897, 0.0
    %v914 = vmax.f32 %v898, 0.0
    %v915 = vmax.f32 %v899, 0.0
    %v916 = vmax.f32 %v900, 0.0
    %v917 = vmax.f32 %v901, 0.0
    %v918 = vmul.f32 %v902, %v494
    %v919 = vmul.f32 %v903, %v494
    %v920 = vmul.f32 %v904, %v494
    %v921 = vmul.f32 %v905, %v494
    %v922 = vmul.f32 %v906, %v494
    %v923 = vmul.f32 %v907, %v494
    %v924 = vmul.f32 %v908, %v494
    %v925 = vmul.f32 %v909, %v494
    %v926 = vmul.f32 %v910, %v499
    %v927 = vmul.f32 %v911, %v499
    %v928 = vmul.f32 %v912, %v499
    %v929 = vmul.f32 %v913, %v499
    %v930 = vmul.f32 %v914, %v499
    %v931 = vmul.f32 %v915, %v499
    %v932 = vmul.f32 %v916, %v499
    %v933 = vmul.f32 %v917, %v499
    %934 = vst [vmem:[#allocation6] sm:$0xff] %v918
    %935 = vst [vmem:[#allocation6 + $0x8] sm:$0xff] %v919
    %936 = vst [vmem:[#allocation6 + $0x10] sm:$0xff] %v920
    %937 = vst [vmem:[#allocation6 + $0x18] sm:$0xff] %v921
    %938 = vst [vmem:[#allocation6 + $0x20] sm:$0xff] %v922
    %939 = vst [vmem:[#allocation6 + $0x28] sm:$0xff] %v923
    %940 = vst [vmem:[#allocation6 + $0x30] sm:$0xff] %v924
    %941 = vst [vmem:[#allocation6 + $0x38] sm:$0xff] %v925
    %942 = vst [vmem:[#allocation6 + $0x40] sm:$0xff] %v926
    %943 = vst [vmem:[#allocation6 + $0x48] sm:$0xff] %v927
    %944 = vst [vmem:[#allocation6 + $0x50] sm:$0xff] %v928
    %945 = vst [vmem:[#allocation6 + $0x58] sm:$0xff] %v929
    %946 = vst [vmem:[#allocation6 + $0x60] sm:$0xff] %v930
    %947 = vst [vmem:[#allocation6 + $0x68] sm:$0xff] %v931
    %948 = vst [vmem:[#allocation6 + $0x70] sm:$0xff] %v932
    %949 = vst [vmem:[#allocation6 + $0x78] sm:$0xff] %v933
    %s950 = smul.u32 8, 3
    %s951 = smul.u32 %s950, 128
    %s952 = smul.u32 %s951, 4
    %s953 = sshll.u32 %s952, 4
    %954 = dma.done [#allocation5], %s953
    %v955 = vld [vmem:[#allocation6] sm:$0xff]
    %v956 = vld [vmem:[#allocation6 + $0x8] sm:$0xff]
    %v957 = vld [vmem:[#allocation6 + $0x10] sm:$0xff]
    %v958 = vld [vmem:[#allocation6 + $0x18] sm:$0xff]
    %v959 = vld [vmem:[#allocation6 + $0x20] sm:$0xff]
    %v960 = vld [vmem:[#allocation6 + $0x28] sm:$0xff]
    %v961 = vld [vmem:[#allocation6 + $0x30] sm:$0xff]
    %v962 = vld [vmem:[#allocation6 + $0x38] sm:$0xff]
    %v963 = vld [vmem:[#allocation6 + $0x40] sm:$0xff]
    %v964 = vld [vmem:[#allocation6 + $0x48] sm:$0xff]
    %v965 = vld [vmem:[#allocation6 + $0x50] sm:$0xff]
    %v966 = vld [vmem:[#allocation6 + $0x58] sm:$0xff]
    %v967 = vld [vmem:[#allocation6 + $0x60] sm:$0xff]
    %v968 = vld [vmem:[#allocation6 + $0x68] sm:$0xff]
    %v969 = vld [vmem:[#allocation6 + $0x70] sm:$0xff]
    %v970 = vld [vmem:[#allocation6 + $0x78] sm:$0xff]
    %v971 = vld [vmem:[#allocation2] sm:$0xff]
    %v972 = vld [vmem:[#allocation2 + $0x8] sm:$0xff]
    %v973 = vld [vmem:[#allocation2 + $0x10] sm:$0xff]
    %v974 = vld [vmem:[#allocation2 + $0x18] sm:$0xff]
    %v975 = vld [vmem:[#allocation2 + $0x20] sm:$0xff]
    %v976 = vld [vmem:[#allocation2 + $0x28] sm:$0xff]
    %v977 = vld [vmem:[#allocation2 + $0x30] sm:$0xff]
    %v978 = vld [vmem:[#allocation2 + $0x38] sm:$0xff]
    %v979 = vld [vmem:[#allocation2 + $0x40] sm:$0xff]
    %v980 = vld [vmem:[#allocation2 + $0x48] sm:$0xff]
    %v981 = vld [vmem:[#allocation2 + $0x50] sm:$0xff]
    %v982 = vld [vmem:[#allocation2 + $0x58] sm:$0xff]
    %v983 = vld [vmem:[#allocation2 + $0x60] sm:$0xff]
    %v984 = vld [vmem:[#allocation2 + $0x68] sm:$0xff]
    %v985 = vld [vmem:[#allocation2 + $0x70] sm:$0xff]
    %v986 = vld [vmem:[#allocation2 + $0x78] sm:$0xff]
    %v987 = vld [vmem:[#allocation2 + $0x80] sm:$0xff]
    %v988 = vld [vmem:[#allocation2 + $0x88] sm:$0xff]
    %v989 = vld [vmem:[#allocation2 + $0x90] sm:$0xff]
    %v990 = vld [vmem:[#allocation2 + $0x98] sm:$0xff]
    %v991 = vld [vmem:[#allocation2 + $0xa0] sm:$0xff]
    %v992 = vld [vmem:[#allocation2 + $0xa8] sm:$0xff]
    %v993 = vld [vmem:[#allocation2 + $0xb0] sm:$0xff]
    %v994 = vld [vmem:[#allocation2 + $0xb8] sm:$0xff]
    %v995 = vld [vmem:[#allocation2 + $0xc0] sm:$0xff]
    %v996 = vld [vmem:[#allocation2 + $0xc8] sm:$0xff]
    %v997 = vld [vmem:[#allocation2 + $0xd0] sm:$0xff]
    %v998 = vld [vmem:[#allocation2 + $0xd8] sm:$0xff]
    %v999 = vld [vmem:[#allocation2 + $0xe0] sm:$0xff]
    %v1000 = vld [vmem:[#allocation2 + $0xe8] sm:$0xff]
    %v1001 = vld [vmem:[#allocation2 + $0xf0] sm:$0xff]
    %v1002 = vld [vmem:[#allocation2 + $0xf8] sm:$0xff]
    %v1003 = vld [vmem:[#allocation2 + $0x100] sm:$0xff]
    %v1004 = vld [vmem:[#allocation2 + $0x108] sm:$0xff]
    %v1005 = vld [vmem:[#allocation2 + $0x110] sm:$0xff]
    %v1006 = vld [vmem:[#allocation2 + $0x118] sm:$0xff]
    %v1007 = vld [vmem:[#allocation2 + $0x120] sm:$0xff]
    %v1008 = vld [vmem:[#allocation2 + $0x128] sm:$0xff]
    %v1009 = vld [vmem:[#allocation2 + $0x130] sm:$0xff]
    %v1010 = vld [vmem:[#allocation2 + $0x138] sm:$0xff]
    %v1011 = vld [vmem:[#allocation2 + $0x140] sm:$0xff]
    %v1012 = vld [vmem:[#allocation2 + $0x148] sm:$0xff]
    %v1013 = vld [vmem:[#allocation2 + $0x150] sm:$0xff]
    %v1014 = vld [vmem:[#allocation2 + $0x158] sm:$0xff]
    %v1015 = vld [vmem:[#allocation2 + $0x160] sm:$0xff]
    %v1016 = vld [vmem:[#allocation2 + $0x168] sm:$0xff]
    %v1017 = vld [vmem:[#allocation2 + $0x170] sm:$0xff]
    %v1018 = vld [vmem:[#allocation2 + $0x178] sm:$0xff]
    %v1019 = vld [vmem:[#allocation2 + $0x180] sm:$0xff]
    %v1020 = vld [vmem:[#allocation2 + $0x188] sm:$0xff]
    %v1021 = vld [vmem:[#allocation2 + $0x190] sm:$0xff]
    %v1022 = vld [vmem:[#allocation2 + $0x198] sm:$0xff]
    %v1023 = vld [vmem:[#allocation2 + $0x1a0] sm:$0xff]
    %v1024 = vld [vmem:[#allocation2 + $0x1a8] sm:$0xff]
    %v1025 = vld [vmem:[#allocation2 + $0x1b0] sm:$0xff]
    %v1026 = vld [vmem:[#allocation2 + $0x1b8] sm:$0xff]
    %v1027 = vld [vmem:[#allocation2 + $0x1c0] sm:$0xff]
    %v1028 = vld [vmem:[#allocation2 + $0x1c8] sm:$0xff]
    %v1029 = vld [vmem:[#allocation2 + $0x1d0] sm:$0xff]
    %v1030 = vld [vmem:[#allocation2 + $0x1d8] sm:$0xff]
    %v1031 = vld [vmem:[#allocation2 + $0x1e0] sm:$0xff]
    %v1032 = vld [vmem:[#allocation2 + $0x1e8] sm:$0xff]
    %v1033 = vld [vmem:[#allocation2 + $0x1f0] sm:$0xff]
    %v1034 = vld [vmem:[#allocation2 + $0x1f8] sm:$0xff]
    %v1035 = vld [vmem:[#allocation2 + $0x200] sm:$0xff]
    %v1036 = vld [vmem:[#allocation2 + $0x208] sm:$0xff]
    %v1037 = vld [vmem:[#allocation2 + $0x210] sm:$0xff]
    %v1038 = vld [vmem:[#allocation2 + $0x218] sm:$0xff]
    %v1039 = vld [vmem:[#allocation2 + $0x220] sm:$0xff]
    %v1040 = vld [vmem:[#allocation2 + $0x228] sm:$0xff]
    %v1041 = vld [vmem:[#allocation2 + $0x230] sm:$0xff]
    %v1042 = vld [vmem:[#allocation2 + $0x238] sm:$0xff]
    %v1043 = vld [vmem:[#allocation2 + $0x240] sm:$0xff]
    %v1044 = vld [vmem:[#allocation2 + $0x248] sm:$0xff]
    %v1045 = vld [vmem:[#allocation2 + $0x250] sm:$0xff]
    %v1046 = vld [vmem:[#allocation2 + $0x258] sm:$0xff]
    %v1047 = vld [vmem:[#allocation2 + $0x260] sm:$0xff]
    %v1048 = vld [vmem:[#allocation2 + $0x268] sm:$0xff]
    %v1049 = vld [vmem:[#allocation2 + $0x270] sm:$0xff]
    %v1050 = vld [vmem:[#allocation2 + $0x278] sm:$0xff]
    %v1051 = vld [vmem:[#allocation2 + $0x280] sm:$0xff]
    %v1052 = vld [vmem:[#allocation2 + $0x288] sm:$0xff]
    %v1053 = vld [vmem:[#allocation2 + $0x290] sm:$0xff]
    %v1054 = vld [vmem:[#allocation2 + $0x298] sm:$0xff]
    %v1055 = vld [vmem:[#allocation2 + $0x2a0] sm:$0xff]
    %v1056 = vld [vmem:[#allocation2 + $0x2a8] sm:$0xff]
    %v1057 = vld [vmem:[#allocation2 + $0x2b0] sm:$0xff]
    %v1058 = vld [vmem:[#allocation2 + $0x2b8] sm:$0xff]
    %v1059 = vld [vmem:[#allocation2 + $0x2c0] sm:$0xff]
    %v1060 = vld [vmem:[#allocation2 + $0x2c8] sm:$0xff]
    %v1061 = vld [vmem:[#allocation2 + $0x2d0] sm:$0xff]
    %v1062 = vld [vmem:[#allocation2 + $0x2d8] sm:$0xff]
    %v1063 = vld [vmem:[#allocation2 + $0x2e0] sm:$0xff]
    %v1064 = vld [vmem:[#allocation2 + $0x2e8] sm:$0xff]
    %v1065 = vld [vmem:[#allocation2 + $0x2f0] sm:$0xff]
    %v1066 = vld [vmem:[#allocation2 + $0x2f8] sm:$0xff]
    %v1067 = vld [vmem:[#allocation2 + $0x300] sm:$0xff]
    %v1068 = vld [vmem:[#allocation2 + $0x308] sm:$0xff]
    %v1069 = vld [vmem:[#allocation2 + $0x310] sm:$0xff]
    %v1070 = vld [vmem:[#allocation2 + $0x318] sm:$0xff]
    %v1071 = vld [vmem:[#allocation2 + $0x320] sm:$0xff]
    %v1072 = vld [vmem:[#allocation2 + $0x328] sm:$0xff]
    %v1073 = vld [vmem:[#allocation2 + $0x330] sm:$0xff]
    %v1074 = vld [vmem:[#allocation2 + $0x338] sm:$0xff]
    %v1075 = vld [vmem:[#allocation2 + $0x340] sm:$0xff]
    %v1076 = vld [vmem:[#allocation2 + $0x348] sm:$0xff]
    %v1077 = vld [vmem:[#allocation2 + $0x350] sm:$0xff]
    %v1078 = vld [vmem:[#allocation2 + $0x358] sm:$0xff]
    %v1079 = vld [vmem:[#allocation2 + $0x360] sm:$0xff]
    %v1080 = vld [vmem:[#allocation2 + $0x368] sm:$0xff]
    %v1081 = vld [vmem:[#allocation2 + $0x370] sm:$0xff]
    %v1082 = vld [vmem:[#allocation2 + $0x378] sm:$0xff]
    %v1083 = vld [vmem:[#allocation2 + $0x380] sm:$0xff]
    %v1084 = vld [vmem:[#allocation2 + $0x388] sm:$0xff]
    %v1085 = vld [vmem:[#allocation2 + $0x390] sm:$0xff]
    %v1086 = vld [vmem:[#allocation2 + $0x398] sm:$0xff]
    %v1087 = vld [vmem:[#allocation2 + $0x3a0] sm:$0xff]
    %v1088 = vld [vmem:[#allocation2 + $0x3a8] sm:$0xff]
    %v1089 = vld [vmem:[#allocation2 + $0x3b0] sm:$0xff]
    %v1090 = vld [vmem:[#allocation2 + $0x3b8] sm:$0xff]
    %v1091 = vld [vmem:[#allocation2 + $0x3c0] sm:$0xff]
    %v1092 = vld [vmem:[#allocation2 + $0x3c8] sm:$0xff]
    %v1093 = vld [vmem:[#allocation2 + $0x3d0] sm:$0xff]
    %v1094 = vld [vmem:[#allocation2 + $0x3d8] sm:$0xff]
    %v1095 = vld [vmem:[#allocation2 + $0x3e0] sm:$0xff]
    %v1096 = vld [vmem:[#allocation2 + $0x3e8] sm:$0xff]
    %v1097 = vld [vmem:[#allocation2 + $0x3f0] sm:$0xff]
    %v1098 = vld [vmem:[#allocation2 + $0x3f8] sm:$0xff]
    %v1099 = vld [vmem:[#allocation2 + $0x400] sm:$0xff]
    %v1100 = vld [vmem:[#allocation2 + $0x408] sm:$0xff]
    %v1101 = vld [vmem:[#allocation2 + $0x410] sm:$0xff]
    %v1102 = vld [vmem:[#allocation2 + $0x418] sm:$0xff]
    %v1103 = vld [vmem:[#allocation2 + $0x420] sm:$0xff]
    %v1104 = vld [vmem:[#allocation2 + $0x428] sm:$0xff]
    %v1105 = vld [vmem:[#allocation2 + $0x430] sm:$0xff]
    %v1106 = vld [vmem:[#allocation2 + $0x438] sm:$0xff]
    %v1107 = vld [vmem:[#allocation2 + $0x440] sm:$0xff]
    %v1108 = vld [vmem:[#allocation2 + $0x448] sm:$0xff]
    %v1109 = vld [vmem:[#allocation2 + $0x450] sm:$0xff]
    %v1110 = vld [vmem:[#allocation2 + $0x458] sm:$0xff]
    %v1111 = vld [vmem:[#allocation2 + $0x460] sm:$0xff]
    %v1112 = vld [vmem:[#allocation2 + $0x468] sm:$0xff]
    %v1113 = vld [vmem:[#allocation2 + $0x470] sm:$0xff]
    %v1114 = vld [vmem:[#allocation2 + $0x478] sm:$0xff]
    %v1115 = vld [vmem:[#allocation2 + $0x480] sm:$0xff]
    %v1116 = vld [vmem:[#allocation2 + $0x488] sm:$0xff]
    %v1117 = vld [vmem:[#allocation2 + $0x490] sm:$0xff]
    %v1118 = vld [vmem:[#allocation2 + $0x498] sm:$0xff]
    %v1119 = vld [vmem:[#allocation2 + $0x4a0] sm:$0xff]
    %v1120 = vld [vmem:[#allocation2 + $0x4a8] sm:$0xff]
    %v1121 = vld [vmem:[#allocation2 + $0x4b0] sm:$0xff]
    %v1122 = vld [vmem:[#allocation2 + $0x4b8] sm:$0xff]
    %v1123 = vld [vmem:[#allocation2 + $0x4c0] sm:$0xff]
    %v1124 = vld [vmem:[#allocation2 + $0x4c8] sm:$0xff]
    %v1125 = vld [vmem:[#allocation2 + $0x4d0] sm:$0xff]
    %v1126 = vld [vmem:[#allocation2 + $0x4d8] sm:$0xff]
    %v1127 = vld [vmem:[#allocation2 + $0x4e0] sm:$0xff]
    %v1128 = vld [vmem:[#allocation2 + $0x4e8] sm:$0xff]
    %v1129 = vld [vmem:[#allocation2 + $0x4f0] sm:$0xff]
    %v1130 = vld [vmem:[#allocation2 + $0x4f8] sm:$0xff]
    %v1131 = vld [vmem:[#allocation2 + $0x500] sm:$0xff]
    %v1132 = vld [vmem:[#allocation2 + $0x508] sm:$0xff]
    %v1133 = vld [vmem:[#allocation2 + $0x510] sm:$0xff]
    %v1134 = vld [vmem:[#allocation2 + $0x518] sm:$0xff]
    %v1135 = vld [vmem:[#allocation2 + $0x520] sm:$0xff]
    %v1136 = vld [vmem:[#allocation2 + $0x528] sm:$0xff]
    %v1137 = vld [vmem:[#allocation2 + $0x530] sm:$0xff]
    %v1138 = vld [vmem:[#allocation2 + $0x538] sm:$0xff]
    %v1139 = vld [vmem:[#allocation2 + $0x540] sm:$0xff]
    %v1140 = vld [vmem:[#allocation2 + $0x548] sm:$0xff]
    %v1141 = vld [vmem:[#allocation2 + $0x550] sm:$0xff]
    %v1142 = vld [vmem:[#allocation2 + $0x558] sm:$0xff]
    %v1143 = vld [vmem:[#allocation2 + $0x560] sm:$0xff]
    %v1144 = vld [vmem:[#allocation2 + $0x568] sm:$0xff]
    %v1145 = vld [vmem:[#allocation2 + $0x570] sm:$0xff]
    %v1146 = vld [vmem:[#allocation2 + $0x578] sm:$0xff]
    %v1147 = vld [vmem:[#allocation2 + $0x580] sm:$0xff]
    %v1148 = vld [vmem:[#allocation2 + $0x588] sm:$0xff]
    %v1149 = vld [vmem:[#allocation2 + $0x590] sm:$0xff]
    %v1150 = vld [vmem:[#allocation2 + $0x598] sm:$0xff]
    %v1151 = vld [vmem:[#allocation2 + $0x5a0] sm:$0xff]
    %v1152 = vld [vmem:[#allocation2 + $0x5a8] sm:$0xff]
    %v1153 = vld [vmem:[#allocation2 + $0x5b0] sm:$0xff]
    %v1154 = vld [vmem:[#allocation2 + $0x5b8] sm:$0xff]
    %v1155 = vld [vmem:[#allocation2 + $0x5c0] sm:$0xff]
    %v1156 = vld [vmem:[#allocation2 + $0x5c8] sm:$0xff]
    %v1157 = vld [vmem:[#allocation2 + $0x5d0] sm:$0xff]
    %v1158 = vld [vmem:[#allocation2 + $0x5d8] sm:$0xff]
    %v1159 = vld [vmem:[#allocation2 + $0x5e0] sm:$0xff]
    %v1160 = vld [vmem:[#allocation2 + $0x5e8] sm:$0xff]
    %v1161 = vld [vmem:[#allocation2 + $0x5f0] sm:$0xff]
    %v1162 = vld [vmem:[#allocation2 + $0x5f8] sm:$0xff]
    %v1163 = vld [vmem:[#allocation2 + $0x600] sm:$0xff]
    %v1164 = vld [vmem:[#allocation2 + $0x608] sm:$0xff]
    %v1165 = vld [vmem:[#allocation2 + $0x610] sm:$0xff]
    %v1166 = vld [vmem:[#allocation2 + $0x618] sm:$0xff]
    %v1167 = vld [vmem:[#allocation2 + $0x620] sm:$0xff]
    %v1168 = vld [vmem:[#allocation2 + $0x628] sm:$0xff]
    %v1169 = vld [vmem:[#allocation2 + $0x630] sm:$0xff]
    %v1170 = vld [vmem:[#allocation2 + $0x638] sm:$0xff]
    %v1171 = vld [vmem:[#allocation2 + $0x640] sm:$0xff]
    %v1172 = vld [vmem:[#allocation2 + $0x648] sm:$0xff]
    %v1173 = vld [vmem:[#allocation2 + $0x650] sm:$0xff]
    %v1174 = vld [vmem:[#allocation2 + $0x658] sm:$0xff]
    %v1175 = vld [vmem:[#allocation2 + $0x660] sm:$0xff]
    %v1176 = vld [vmem:[#allocation2 + $0x668] sm:$0xff]
    %v1177 = vld [vmem:[#allocation2 + $0x670] sm:$0xff]
    %v1178 = vld [vmem:[#allocation2 + $0x678] sm:$0xff]
    %v1179 = vld [vmem:[#allocation2 + $0x680] sm:$0xff]
    %v1180 = vld [vmem:[#allocation2 + $0x688] sm:$0xff]
    %v1181 = vld [vmem:[#allocation2 + $0x690] sm:$0xff]
    %v1182 = vld [vmem:[#allocation2 + $0x698] sm:$0xff]
    %v1183 = vld [vmem:[#allocation2 + $0x6a0] sm:$0xff]
    %v1184 = vld [vmem:[#allocation2 + $0x6a8] sm:$0xff]
    %v1185 = vld [vmem:[#allocation2 + $0x6b0] sm:$0xff]
    %v1186 = vld [vmem:[#allocation2 + $0x6b8] sm:$0xff]
    %v1187 = vld [vmem:[#allocation2 + $0x6c0] sm:$0xff]
    %v1188 = vld [vmem:[#allocation2 + $0x6c8] sm:$0xff]
    %v1189 = vld [vmem:[#allocation2 + $0x6d0] sm:$0xff]
    %v1190 = vld [vmem:[#allocation2 + $0x6d8] sm:$0xff]
    %v1191 = vld [vmem:[#allocation2 + $0x6e0] sm:$0xff]
    %v1192 = vld [vmem:[#allocation2 + $0x6e8] sm:$0xff]
    %v1193 = vld [vmem:[#allocation2 + $0x6f0] sm:$0xff]
    %v1194 = vld [vmem:[#allocation2 + $0x6f8] sm:$0xff]
    %v1195 = vld [vmem:[#allocation2 + $0x700] sm:$0xff]
    %v1196 = vld [vmem:[#allocation2 + $0x708] sm:$0xff]
    %v1197 = vld [vmem:[#allocation2 + $0x710] sm:$0xff]
    %v1198 = vld [vmem:[#allocation2 + $0x718] sm:$0xff]
    %v1199 = vld [vmem:[#allocation2 + $0x720] sm:$0xff]
    %v1200 = vld [vmem:[#allocation2 + $0x728] sm:$0xff]
    %v1201 = vld [vmem:[#allocation2 + $0x730] sm:$0xff]
    %v1202 = vld [vmem:[#allocation2 + $0x738] sm:$0xff]
    %v1203 = vld [vmem:[#allocation2 + $0x740] sm:$0xff]
    %v1204 = vld [vmem:[#allocation2 + $0x748] sm:$0xff]
    %v1205 = vld [vmem:[#allocation2 + $0x750] sm:$0xff]
    %v1206 = vld [vmem:[#allocation2 + $0x758] sm:$0xff]
    %v1207 = vld [vmem:[#allocation2 + $0x760] sm:$0xff]
    %v1208 = vld [vmem:[#allocation2 + $0x768] sm:$0xff]
    %v1209 = vld [vmem:[#allocation2 + $0x770] sm:$0xff]
    %v1210 = vld [vmem:[#allocation2 + $0x778] sm:$0xff]
    %v1211 = vld [vmem:[#allocation2 + $0x780] sm:$0xff]
    %v1212 = vld [vmem:[#allocation2 + $0x788] sm:$0xff]
    %v1213 = vld [vmem:[#allocation2 + $0x790] sm:$0xff]
    %v1214 = vld [vmem:[#allocation2 + $0x798] sm:$0xff]
    %v1215 = vld [vmem:[#allocation2 + $0x7a0] sm:$0xff]
    %v1216 = vld [vmem:[#allocation2 + $0x7a8] sm:$0xff]
    %v1217 = vld [vmem:[#allocation2 + $0x7b0] sm:$0xff]
    %v1218 = vld [vmem:[#allocation2 + $0x7b8] sm:$0xff]
    %v1219 = vld [vmem:[#allocation2 + $0x7c0] sm:$0xff]
    %v1220 = vld [vmem:[#allocation2 + $0x7c8] sm:$0xff]
    %v1221 = vld [vmem:[#allocation2 + $0x7d0] sm:$0xff]
    %v1222 = vld [vmem:[#allocation2 + $0x7d8] sm:$0xff]
    %v1223 = vld [vmem:[#allocation2 + $0x7e0] sm:$0xff]
    %v1224 = vld [vmem:[#allocation2 + $0x7e8] sm:$0xff]
    %v1225 = vld [vmem:[#allocation2 + $0x7f0] sm:$0xff]
    %v1226 = vld [vmem:[#allocation2 + $0x7f8] sm:$0xff]
    %v1227 = vld [vmem:[#allocation2 + $0x800] sm:$0xff]
    %v1228 = vld [vmem:[#allocation2 + $0x808] sm:$0xff]
    %v1229 = vld [vmem:[#allocation2 + $0x810] sm:$0xff]
    %v1230 = vld [vmem:[#allocation2 + $0x818] sm:$0xff]
    %v1231 = vld [vmem:[#allocation2 + $0x820] sm:$0xff]
    %v1232 = vld [vmem:[#allocation2 + $0x828] sm:$0xff]
    %v1233 = vld [vmem:[#allocation2 + $0x830] sm:$0xff]
    %v1234 = vld [vmem:[#allocation2 + $0x838] sm:$0xff]
    %v1235 = vld [vmem:[#allocation2 + $0x840] sm:$0xff]
    %v1236 = vld [vmem:[#allocation2 + $0x848] sm:$0xff]
    %v1237 = vld [vmem:[#allocation2 + $0x850] sm:$0xff]
    %v1238 = vld [vmem:[#allocation2 + $0x858] sm:$0xff]
    %v1239 = vld [vmem:[#allocation2 + $0x860] sm:$0xff]
    %v1240 = vld [vmem:[#allocation2 + $0x868] sm:$0xff]
    %v1241 = vld [vmem:[#allocation2 + $0x870] sm:$0xff]
    %v1242 = vld [vmem:[#allocation2 + $0x878] sm:$0xff]
    %v1243 = vld [vmem:[#allocation2 + $0x880] sm:$0xff]
    %v1244 = vld [vmem:[#allocation2 + $0x888] sm:$0xff]
    %v1245 = vld [vmem:[#allocation2 + $0x890] sm:$0xff]
    %v1246 = vld [vmem:[#allocation2 + $0x898] sm:$0xff]
    %v1247 = vld [vmem:[#allocation2 + $0x8a0] sm:$0xff]
    %v1248 = vld [vmem:[#allocation2 + $0x8a8] sm:$0xff]
    %v1249 = vld [vmem:[#allocation2 + $0x8b0] sm:$0xff]
    %v1250 = vld [vmem:[#allocation2 + $0x8b8] sm:$0xff]
    %v1251 = vld [vmem:[#allocation2 + $0x8c0] sm:$0xff]
    %v1252 = vld [vmem:[#allocation2 + $0x8c8] sm:$0xff]
    %v1253 = vld [vmem:[#allocation2 + $0x8d0] sm:$0xff]
    %v1254 = vld [vmem:[#allocation2 + $0x8d8] sm:$0xff]
    %v1255 = vld [vmem:[#allocation2 + $0x8e0] sm:$0xff]
    %v1256 = vld [vmem:[#allocation2 + $0x8e8] sm:$0xff]
    %v1257 = vld [vmem:[#allocation2 + $0x8f0] sm:$0xff]
    %v1258 = vld [vmem:[#allocation2 + $0x8f8] sm:$0xff]
    %v1259 = vld [vmem:[#allocation2 + $0x900] sm:$0xff]
    %v1260 = vld [vmem:[#allocation2 + $0x908] sm:$0xff]
    %v1261 = vld [vmem:[#allocation2 + $0x910] sm:$0xff]
    %v1262 = vld [vmem:[#allocation2 + $0x918] sm:$0xff]
    %v1263 = vld [vmem:[#allocation2 + $0x920] sm:$0xff]
    %v1264 = vld [vmem:[#allocation2 + $0x928] sm:$0xff]
    %v1265 = vld [vmem:[#allocation2 + $0x930] sm:$0xff]
    %v1266 = vld [vmem:[#allocation2 + $0x938] sm:$0xff]
    %v1267 = vld [vmem:[#allocation2 + $0x940] sm:$0xff]
    %v1268 = vld [vmem:[#allocation2 + $0x948] sm:$0xff]
    %v1269 = vld [vmem:[#allocation2 + $0x950] sm:$0xff]
    %v1270 = vld [vmem:[#allocation2 + $0x958] sm:$0xff]
    %v1271 = vld [vmem:[#allocation2 + $0x960] sm:$0xff]
    %v1272 = vld [vmem:[#allocation2 + $0x968] sm:$0xff]
    %v1273 = vld [vmem:[#allocation2 + $0x970] sm:$0xff]
    %v1274 = vld [vmem:[#allocation2 + $0x978] sm:$0xff]
    %v1275 = vld [vmem:[#allocation2 + $0x980] sm:$0xff]
    %v1276 = vld [vmem:[#allocation2 + $0x988] sm:$0xff]
    %v1277 = vld [vmem:[#allocation2 + $0x990] sm:$0xff]
    %v1278 = vld [vmem:[#allocation2 + $0x998] sm:$0xff]
    %v1279 = vld [vmem:[#allocation2 + $0x9a0] sm:$0xff]
    %v1280 = vld [vmem:[#allocation2 + $0x9a8] sm:$0xff]
    %v1281 = vld [vmem:[#allocation2 + $0x9b0] sm:$0xff]
    %v1282 = vld [vmem:[#allocation2 + $0x9b8] sm:$0xff]
    %v1283 = vld [vmem:[#allocation2 + $0x9c0] sm:$0xff]
    %v1284 = vld [vmem:[#allocation2 + $0x9c8] sm:$0xff]
    %v1285 = vld [vmem:[#allocation2 + $0x9d0] sm:$0xff]
    %v1286 = vld [vmem:[#allocation2 + $0x9d8] sm:$0xff]
    %v1287 = vld [vmem:[#allocation2 + $0x9e0] sm:$0xff]
    %v1288 = vld [vmem:[#allocation2 + $0x9e8] sm:$0xff]
    %v1289 = vld [vmem:[#allocation2 + $0x9f0] sm:$0xff]
    %v1290 = vld [vmem:[#allocation2 + $0x9f8] sm:$0xff]
    %v1291 = vld [vmem:[#allocation2 + $0xa00] sm:$0xff]
    %v1292 = vld [vmem:[#allocation2 + $0xa08] sm:$0xff]
    %v1293 = vld [vmem:[#allocation2 + $0xa10] sm:$0xff]
    %v1294 = vld [vmem:[#allocation2 + $0xa18] sm:$0xff]
    %v1295 = vld [vmem:[#allocation2 + $0xa20] sm:$0xff]
    %v1296 = vld [vmem:[#allocation2 + $0xa28] sm:$0xff]
    %v1297 = vld [vmem:[#allocation2 + $0xa30] sm:$0xff]
    %v1298 = vld [vmem:[#allocation2 + $0xa38] sm:$0xff]
    %v1299 = vld [vmem:[#allocation2 + $0xa40] sm:$0xff]
    %v1300 = vld [vmem:[#allocation2 + $0xa48] sm:$0xff]
    %v1301 = vld [vmem:[#allocation2 + $0xa50] sm:$0xff]
    %v1302 = vld [vmem:[#allocation2 + $0xa58] sm:$0xff]
    %v1303 = vld [vmem:[#allocation2 + $0xa60] sm:$0xff]
    %v1304 = vld [vmem:[#allocation2 + $0xa68] sm:$0xff]
    %v1305 = vld [vmem:[#allocation2 + $0xa70] sm:$0xff]
    %v1306 = vld [vmem:[#allocation2 + $0xa78] sm:$0xff]
    %v1307 = vld [vmem:[#allocation2 + $0xa80] sm:$0xff]
    %v1308 = vld [vmem:[#allocation2 + $0xa88] sm:$0xff]
    %v1309 = vld [vmem:[#allocation2 + $0xa90] sm:$0xff]
    %v1310 = vld [vmem:[#allocation2 + $0xa98] sm:$0xff]
    %v1311 = vld [vmem:[#allocation2 + $0xaa0] sm:$0xff]
    %v1312 = vld [vmem:[#allocation2 + $0xaa8] sm:$0xff]
    %v1313 = vld [vmem:[#allocation2 + $0xab0] sm:$0xff]
    %v1314 = vld [vmem:[#allocation2 + $0xab8] sm:$0xff]
    %v1315 = vld [vmem:[#allocation2 + $0xac0] sm:$0xff]
    %v1316 = vld [vmem:[#allocation2 + $0xac8] sm:$0xff]
    %v1317 = vld [vmem:[#allocation2 + $0xad0] sm:$0xff]
    %v1318 = vld [vmem:[#allocation2 + $0xad8] sm:$0xff]
    %v1319 = vld [vmem:[#allocation2 + $0xae0] sm:$0xff]
    %v1320 = vld [vmem:[#allocation2 + $0xae8] sm:$0xff]
    %v1321 = vld [vmem:[#allocation2 + $0xaf0] sm:$0xff]
    %v1322 = vld [vmem:[#allocation2 + $0xaf8] sm:$0xff]
    %v1323 = vld [vmem:[#allocation2 + $0xb00] sm:$0xff]
    %v1324 = vld [vmem:[#allocation2 + $0xb08] sm:$0xff]
    %v1325 = vld [vmem:[#allocation2 + $0xb10] sm:$0xff]
    %v1326 = vld [vmem:[#allocation2 + $0xb18] sm:$0xff]
    %v1327 = vld [vmem:[#allocation2 + $0xb20] sm:$0xff]
    %v1328 = vld [vmem:[#allocation2 + $0xb28] sm:$0xff]
    %v1329 = vld [vmem:[#allocation2 + $0xb30] sm:$0xff]
    %v1330 = vld [vmem:[#allocation2 + $0xb38] sm:$0xff]
    %v1331 = vld [vmem:[#allocation2 + $0xb40] sm:$0xff]
    %v1332 = vld [vmem:[#allocation2 + $0xb48] sm:$0xff]
    %v1333 = vld [vmem:[#allocation2 + $0xb50] sm:$0xff]
    %v1334 = vld [vmem:[#allocation2 + $0xb58] sm:$0xff]
    %v1335 = vld [vmem:[#allocation2 + $0xb60] sm:$0xff]
    %v1336 = vld [vmem:[#allocation2 + $0xb68] sm:$0xff]
    %v1337 = vld [vmem:[#allocation2 + $0xb70] sm:$0xff]
    %v1338 = vld [vmem:[#allocation2 + $0xb78] sm:$0xff]
    %v1339 = vld [vmem:[#allocation2 + $0xb80] sm:$0xff]
    %v1340 = vld [vmem:[#allocation2 + $0xb88] sm:$0xff]
    %v1341 = vld [vmem:[#allocation2 + $0xb90] sm:$0xff]
    %v1342 = vld [vmem:[#allocation2 + $0xb98] sm:$0xff]
    %v1343 = vld [vmem:[#allocation2 + $0xba0] sm:$0xff]
    %v1344 = vld [vmem:[#allocation2 + $0xba8] sm:$0xff]
    %v1345 = vld [vmem:[#allocation2 + $0xbb0] sm:$0xff]
    %v1346 = vld [vmem:[#allocation2 + $0xbb8] sm:$0xff]
    %v1347 = vld [vmem:[#allocation2 + $0xbc0] sm:$0xff]
    %v1348 = vld [vmem:[#allocation2 + $0xbc8] sm:$0xff]
    %v1349 = vld [vmem:[#allocation2 + $0xbd0] sm:$0xff]
    %v1350 = vld [vmem:[#allocation2 + $0xbd8] sm:$0xff]
    %v1351 = vld [vmem:[#allocation2 + $0xbe0] sm:$0xff]
    %v1352 = vld [vmem:[#allocation2 + $0xbe8] sm:$0xff]
    %v1353 = vld [vmem:[#allocation2 + $0xbf0] sm:$0xff]
    %v1354 = vld [vmem:[#allocation2 + $0xbf8] sm:$0xff]
    %v1355 = vld [vmem:[#allocation2 + $0xc00] sm:$0xff]
    %v1356 = vld [vmem:[#allocation2 + $0xc08] sm:$0xff]
    %v1357 = vld [vmem:[#allocation2 + $0xc10] sm:$0xff]
    %v1358 = vld [vmem:[#allocation2 + $0xc18] sm:$0xff]
    %v1359 = vld [vmem:[#allocation2 + $0xc20] sm:$0xff]
    %v1360 = vld [vmem:[#allocation2 + $0xc28] sm:$0xff]
    %v1361 = vld [vmem:[#allocation2 + $0xc30] sm:$0xff]
    %v1362 = vld [vmem:[#allocation2 + $0xc38] sm:$0xff]
    %v1363 = vld [vmem:[#allocation2 + $0xc40] sm:$0xff]
    %v1364 = vld [vmem:[#allocation2 + $0xc48] sm:$0xff]
    %v1365 = vld [vmem:[#allocation2 + $0xc50] sm:$0xff]
    %v1366 = vld [vmem:[#allocation2 + $0xc58] sm:$0xff]
    %v1367 = vld [vmem:[#allocation2 + $0xc60] sm:$0xff]
    %v1368 = vld [vmem:[#allocation2 + $0xc68] sm:$0xff]
    %v1369 = vld [vmem:[#allocation2 + $0xc70] sm:$0xff]
    %v1370 = vld [vmem:[#allocation2 + $0xc78] sm:$0xff]
    %v1371 = vld [vmem:[#allocation2 + $0xc80] sm:$0xff]
    %v1372 = vld [vmem:[#allocation2 + $0xc88] sm:$0xff]
    %v1373 = vld [vmem:[#allocation2 + $0xc90] sm:$0xff]
    %v1374 = vld [vmem:[#allocation2 + $0xc98] sm:$0xff]
    %v1375 = vld [vmem:[#allocation2 + $0xca0] sm:$0xff]
    %v1376 = vld [vmem:[#allocation2 + $0xca8] sm:$0xff]
    %v1377 = vld [vmem:[#allocation2 + $0xcb0] sm:$0xff]
    %v1378 = vld [vmem:[#allocation2 + $0xcb8] sm:$0xff]
    %v1379 = vld [vmem:[#allocation2 + $0xcc0] sm:$0xff]
    %v1380 = vld [vmem:[#allocation2 + $0xcc8] sm:$0xff]
    %v1381 = vld [vmem:[#allocation2 + $0xcd0] sm:$0xff]
    %v1382 = vld [vmem:[#allocation2 + $0xcd8] sm:$0xff]
    %v1383 = vld [vmem:[#allocation2 + $0xce0] sm:$0xff]
    %v1384 = vld [vmem:[#allocation2 + $0xce8] sm:$0xff]
    %v1385 = vld [vmem:[#allocation2 + $0xcf0] sm:$0xff]
    %v1386 = vld [vmem:[#allocation2 + $0xcf8] sm:$0xff]
    %v1387 = vld [vmem:[#allocation2 + $0xd00] sm:$0xff]
    %v1388 = vld [vmem:[#allocation2 + $0xd08] sm:$0xff]
    %v1389 = vld [vmem:[#allocation2 + $0xd10] sm:$0xff]
    %v1390 = vld [vmem:[#allocation2 + $0xd18] sm:$0xff]
    %v1391 = vld [vmem:[#allocation2 + $0xd20] sm:$0xff]
    %v1392 = vld [vmem:[#allocation2 + $0xd28] sm:$0xff]
    %v1393 = vld [vmem:[#allocation2 + $0xd30] sm:$0xff]
    %v1394 = vld [vmem:[#allocation2 + $0xd38] sm:$0xff]
    %v1395 = vld [vmem:[#allocation2 + $0xd40] sm:$0xff]
    %v1396 = vld [vmem:[#allocation2 + $0xd48] sm:$0xff]
    %v1397 = vld [vmem:[#allocation2 + $0xd50] sm:$0xff]
    %v1398 = vld [vmem:[#allocation2 + $0xd58] sm:$0xff]
    %v1399 = vld [vmem:[#allocation2 + $0xd60] sm:$0xff]
    %v1400 = vld [vmem:[#allocation2 + $0xd68] sm:$0xff]
    %v1401 = vld [vmem:[#allocation2 + $0xd70] sm:$0xff]
    %v1402 = vld [vmem:[#allocation2 + $0xd78] sm:$0xff]
    %v1403 = vld [vmem:[#allocation2 + $0xd80] sm:$0xff]
    %v1404 = vld [vmem:[#allocation2 + $0xd88] sm:$0xff]
    %v1405 = vld [vmem:[#allocation2 + $0xd90] sm:$0xff]
    %v1406 = vld [vmem:[#allocation2 + $0xd98] sm:$0xff]
    %v1407 = vld [vmem:[#allocation2 + $0xda0] sm:$0xff]
    %v1408 = vld [vmem:[#allocation2 + $0xda8] sm:$0xff]
    %v1409 = vld [vmem:[#allocation2 + $0xdb0] sm:$0xff]
    %v1410 = vld [vmem:[#allocation2 + $0xdb8] sm:$0xff]
    %v1411 = vld [vmem:[#allocation2 + $0xdc0] sm:$0xff]
    %v1412 = vld [vmem:[#allocation2 + $0xdc8] sm:$0xff]
    %v1413 = vld [vmem:[#allocation2 + $0xdd0] sm:$0xff]
    %v1414 = vld [vmem:[#allocation2 + $0xdd8] sm:$0xff]
    %v1415 = vld [vmem:[#allocation2 + $0xde0] sm:$0xff]
    %v1416 = vld [vmem:[#allocation2 + $0xde8] sm:$0xff]
    %v1417 = vld [vmem:[#allocation2 + $0xdf0] sm:$0xff]
    %v1418 = vld [vmem:[#allocation2 + $0xdf8] sm:$0xff]
    %v1419 = vld [vmem:[#allocation2 + $0xe00] sm:$0xff]
    %v1420 = vld [vmem:[#allocation2 + $0xe08] sm:$0xff]
    %v1421 = vld [vmem:[#allocation2 + $0xe10] sm:$0xff]
    %v1422 = vld [vmem:[#allocation2 + $0xe18] sm:$0xff]
    %v1423 = vld [vmem:[#allocation2 + $0xe20] sm:$0xff]
    %v1424 = vld [vmem:[#allocation2 + $0xe28] sm:$0xff]
    %v1425 = vld [vmem:[#allocation2 + $0xe30] sm:$0xff]
    %v1426 = vld [vmem:[#allocation2 + $0xe38] sm:$0xff]
    %v1427 = vld [vmem:[#allocation2 + $0xe40] sm:$0xff]
    %v1428 = vld [vmem:[#allocation2 + $0xe48] sm:$0xff]
    %v1429 = vld [vmem:[#allocation2 + $0xe50] sm:$0xff]
    %v1430 = vld [vmem:[#allocation2 + $0xe58] sm:$0xff]
    %v1431 = vld [vmem:[#allocation2 + $0xe60] sm:$0xff]
    %v1432 = vld [vmem:[#allocation2 + $0xe68] sm:$0xff]
    %v1433 = vld [vmem:[#allocation2 + $0xe70] sm:$0xff]
    %v1434 = vld [vmem:[#allocation2 + $0xe78] sm:$0xff]
    %v1435 = vld [vmem:[#allocation2 + $0xe80] sm:$0xff]
    %v1436 = vld [vmem:[#allocation2 + $0xe88] sm:$0xff]
    %v1437 = vld [vmem:[#allocation2 + $0xe90] sm:$0xff]
    %v1438 = vld [vmem:[#allocation2 + $0xe98] sm:$0xff]
    %v1439 = vld [vmem:[#allocation2 + $0xea0] sm:$0xff]
    %v1440 = vld [vmem:[#allocation2 + $0xea8] sm:$0xff]
    %v1441 = vld [vmem:[#allocation2 + $0xeb0] sm:$0xff]
    %v1442 = vld [vmem:[#allocation2 + $0xeb8] sm:$0xff]
    %v1443 = vld [vmem:[#allocation2 + $0xec0] sm:$0xff]
    %v1444 = vld [vmem:[#allocation2 + $0xec8] sm:$0xff]
    %v1445 = vld [vmem:[#allocation2 + $0xed0] sm:$0xff]
    %v1446 = vld [vmem:[#allocation2 + $0xed8] sm:$0xff]
    %v1447 = vld [vmem:[#allocation2 + $0xee0] sm:$0xff]
    %v1448 = vld [vmem:[#allocation2 + $0xee8] sm:$0xff]
    %v1449 = vld [vmem:[#allocation2 + $0xef0] sm:$0xff]
    %v1450 = vld [vmem:[#allocation2 + $0xef8] sm:$0xff]
    %v1451 = vld [vmem:[#allocation2 + $0xf00] sm:$0xff]
    %v1452 = vld [vmem:[#allocation2 + $0xf08] sm:$0xff]
    %v1453 = vld [vmem:[#allocation2 + $0xf10] sm:$0xff]
    %v1454 = vld [vmem:[#allocation2 + $0xf18] sm:$0xff]
    %v1455 = vld [vmem:[#allocation2 + $0xf20] sm:$0xff]
    %v1456 = vld [vmem:[#allocation2 + $0xf28] sm:$0xff]
    %v1457 = vld [vmem:[#allocation2 + $0xf30] sm:$0xff]
    %v1458 = vld [vmem:[#allocation2 + $0xf38] sm:$0xff]
    %v1459 = vld [vmem:[#allocation2 + $0xf40] sm:$0xff]
    %v1460 = vld [vmem:[#allocation2 + $0xf48] sm:$0xff]
    %v1461 = vld [vmem:[#allocation2 + $0xf50] sm:$0xff]
    %v1462 = vld [vmem:[#allocation2 + $0xf58] sm:$0xff]
    %v1463 = vld [vmem:[#allocation2 + $0xf60] sm:$0xff]
    %v1464 = vld [vmem:[#allocation2 + $0xf68] sm:$0xff]
    %v1465 = vld [vmem:[#allocation2 + $0xf70] sm:$0xff]
    %v1466 = vld [vmem:[#allocation2 + $0xf78] sm:$0xff]
    %v1467 = vld [vmem:[#allocation2 + $0xf80] sm:$0xff]
    %v1468 = vld [vmem:[#allocation2 + $0xf88] sm:$0xff]
    %v1469 = vld [vmem:[#allocation2 + $0xf90] sm:$0xff]
    %v1470 = vld [vmem:[#allocation2 + $0xf98] sm:$0xff]
    %v1471 = vld [vmem:[#allocation2 + $0xfa0] sm:$0xff]
    %v1472 = vld [vmem:[#allocation2 + $0xfa8] sm:$0xff]
    %v1473 = vld [vmem:[#allocation2 + $0xfb0] sm:$0xff]
    %v1474 = vld [vmem:[#allocation2 + $0xfb8] sm:$0xff]
    %v1475 = vld [vmem:[#allocation2 + $0xfc0] sm:$0xff]
    %v1476 = vld [vmem:[#allocation2 + $0xfc8] sm:$0xff]
    %v1477 = vld [vmem:[#allocation2 + $0xfd0] sm:$0xff]
    %v1478 = vld [vmem:[#allocation2 + $0xfd8] sm:$0xff]
    %v1479 = vld [vmem:[#allocation2 + $0xfe0] sm:$0xff]
    %v1480 = vld [vmem:[#allocation2 + $0xfe8] sm:$0xff]
    %v1481 = vld [vmem:[#allocation2 + $0xff0] sm:$0xff]
    %v1482 = vld [vmem:[#allocation2 + $0xff8] sm:$0xff]
    %v1483 = vld [vmem:[#allocation6] sm:$0xfe]
    %v1484 = vld [vmem:[#allocation6 + $0x8] sm:$0xfe]
    %v1485 = vld [vmem:[#allocation6 + $0x10] sm:$0xfe]
    %v1486 = vld [vmem:[#allocation6 + $0x18] sm:$0xfe]
    %v1487 = vld [vmem:[#allocation6 + $0x20] sm:$0xfe]
    %v1488 = vld [vmem:[#allocation6 + $0x28] sm:$0xfe]
    %v1489 = vld [vmem:[#allocation6 + $0x30] sm:$0xfe]
    %v1490 = vld [vmem:[#allocation6 + $0x38] sm:$0xfe]
    %v1491 = vld [vmem:[#allocation6 + $0x40] sm:$0xff]
    %v1492 = vld [vmem:[#allocation6 + $0x48] sm:$0xff]
    %v1493 = vld [vmem:[#allocation6 + $0x50] sm:$0xff]
    %v1494 = vld [vmem:[#allocation6 + $0x58] sm:$0xff]
    %v1495 = vld [vmem:[#allocation6 + $0x60] sm:$0xff]
    %v1496 = vld [vmem:[#allocation6 + $0x68] sm:$0xff]
    %v1497 = vld [vmem:[#allocation6 + $0x70] sm:$0xff]
    %v1498 = vld [vmem:[#allocation6 + $0x78] sm:$0xff]
    %v1499 = vld [vmem:[#allocation6 + $0x80] sm:$0x1]
    %v1500 = vld [vmem:[#allocation6 + $0x88] sm:$0x1]
    %v1501 = vld [vmem:[#allocation6 + $0x90] sm:$0x1]
    %v1502 = vld [vmem:[#allocation6 + $0x98] sm:$0x1]
    %v1503 = vld [vmem:[#allocation6 + $0xa0] sm:$0x1]
    %v1504 = vld [vmem:[#allocation6 + $0xa8] sm:$0x1]
    %v1505 = vld [vmem:[#allocation6 + $0xb0] sm:$0x1]
    %v1506 = vld [vmem:[#allocation6 + $0xb8] sm:$0x1]
    %s1507 = scalar_lea.vmem [#allocation2], 4096
    %v1508 = vld [vmem:[%s1507] sm:$0xff]
    %v1509 = vld [vmem:[%s1507 + $0x8] sm:$0xff]
    %v1510 = vld [vmem:[%s1507 + $0x10] sm:$0xff]
    %v1511 = vld [vmem:[%s1507 + $0x18] sm:$0xff]
    %v1512 = vld [vmem:[%s1507 + $0x20] sm:$0xff]
    %v1513 = vld [vmem:[%s1507 + $0x28] sm:$0xff]
    %v1514 = vld [vmem:[%s1507 + $0x30] sm:$0xff]
    %v1515 = vld [vmem:[%s1507 + $0x38] sm:$0xff]
    %v1516 = vld [vmem:[%s1507 + $0x40] sm:$0xff]
    %v1517 = vld [vmem:[%s1507 + $0x48] sm:$0xff]
    %v1518 = vld [vmem:[%s1507 + $0x50] sm:$0xff]
    %v1519 = vld [vmem:[%s1507 + $0x58] sm:$0xff]
    %v1520 = vld [vmem:[%s1507 + $0x60] sm:$0xff]
    %v1521 = vld [vmem:[%s1507 + $0x68] sm:$0xff]
    %v1522 = vld [vmem:[%s1507 + $0x70] sm:$0xff]
    %v1523 = vld [vmem:[%s1507 + $0x78] sm:$0xff]
    %v1524 = vld [vmem:[%s1507 + $0x80] sm:$0xff]
    %v1525 = vld [vmem:[%s1507 + $0x88] sm:$0xff]
    %v1526 = vld [vmem:[%s1507 + $0x90] sm:$0xff]
    %v1527 = vld [vmem:[%s1507 + $0x98] sm:$0xff]
    %v1528 = vld [vmem:[%s1507 + $0xa0] sm:$0xff]
    %v1529 = vld [vmem:[%s1507 + $0xa8] sm:$0xff]
    %v1530 = vld [vmem:[%s1507 + $0xb0] sm:$0xff]
    %v1531 = vld [vmem:[%s1507 + $0xb8] sm:$0xff]
    %v1532 = vld [vmem:[%s1507 + $0xc0] sm:$0xff]
    %v1533 = vld [vmem:[%s1507 + $0xc8] sm:$0xff]
    %v1534 = vld [vmem:[%s1507 + $0xd0] sm:$0xff]
    %v1535 = vld [vmem:[%s1507 + $0xd8] sm:$0xff]
    %v1536 = vld [vmem:[%s1507 + $0xe0] sm:$0xff]
    %v1537 = vld [vmem:[%s1507 + $0xe8] sm:$0xff]
    %v1538 = vld [vmem:[%s1507 + $0xf0] sm:$0xff]
    %v1539 = vld [vmem:[%s1507 + $0xf8] sm:$0xff]
    %v1540 = vld [vmem:[%s1507 + $0x100] sm:$0xff]
    %v1541 = vld [vmem:[%s1507 + $0x108] sm:$0xff]
    %v1542 = vld [vmem:[%s1507 + $0x110] sm:$0xff]
    %v1543 = vld [vmem:[%s1507 + $0x118] sm:$0xff]
    %v1544 = vld [vmem:[%s1507 + $0x120] sm:$0xff]
    %v1545 = vld [vmem:[%s1507 + $0x128] sm:$0xff]
    %v1546 = vld [vmem:[%s1507 + $0x130] sm:$0xff]
    %v1547 = vld [vmem:[%s1507 + $0x138] sm:$0xff]
    %v1548 = vld [vmem:[%s1507 + $0x140] sm:$0xff]
    %v1549 = vld [vmem:[%s1507 + $0x148] sm:$0xff]
    %v1550 = vld [vmem:[%s1507 + $0x150] sm:$0xff]
    %v1551 = vld [vmem:[%s1507 + $0x158] sm:$0xff]
    %v1552 = vld [vmem:[%s1507 + $0x160] sm:$0xff]
    %v1553 = vld [vmem:[%s1507 + $0x168] sm:$0xff]
    %v1554 = vld [vmem:[%s1507 + $0x170] sm:$0xff]
    %v1555 = vld [vmem:[%s1507 + $0x178] sm:$0xff]
    %v1556 = vld [vmem:[%s1507 + $0x180] sm:$0xff]
    %v1557 = vld [vmem:[%s1507 + $0x188] sm:$0xff]
    %v1558 = vld [vmem:[%s1507 + $0x190] sm:$0xff]
    %v1559 = vld [vmem:[%s1507 + $0x198] sm:$0xff]
    %v1560 = vld [vmem:[%s1507 + $0x1a0] sm:$0xff]
    %v1561 = vld [vmem:[%s1507 + $0x1a8] sm:$0xff]
    %v1562 = vld [vmem:[%s1507 + $0x1b0] sm:$0xff]
    %v1563 = vld [vmem:[%s1507 + $0x1b8] sm:$0xff]
    %v1564 = vld [vmem:[%s1507 + $0x1c0] sm:$0xff]
    %v1565 = vld [vmem:[%s1507 + $0x1c8] sm:$0xff]
    %v1566 = vld [vmem:[%s1507 + $0x1d0] sm:$0xff]
    %v1567 = vld [vmem:[%s1507 + $0x1d8] sm:$0xff]
    %v1568 = vld [vmem:[%s1507 + $0x1e0] sm:$0xff]
    %v1569 = vld [vmem:[%s1507 + $0x1e8] sm:$0xff]
    %v1570 = vld [vmem:[%s1507 + $0x1f0] sm:$0xff]
    %v1571 = vld [vmem:[%s1507 + $0x1f8] sm:$0xff]
    %v1572 = vld [vmem:[%s1507 + $0x200] sm:$0xff]
    %v1573 = vld [vmem:[%s1507 + $0x208] sm:$0xff]
    %v1574 = vld [vmem:[%s1507 + $0x210] sm:$0xff]
    %v1575 = vld [vmem:[%s1507 + $0x218] sm:$0xff]
    %v1576 = vld [vmem:[%s1507 + $0x220] sm:$0xff]
    %v1577 = vld [vmem:[%s1507 + $0x228] sm:$0xff]
    %v1578 = vld [vmem:[%s1507 + $0x230] sm:$0xff]
    %v1579 = vld [vmem:[%s1507 + $0x238] sm:$0xff]
    %v1580 = vld [vmem:[%s1507 + $0x240] sm:$0xff]
    %v1581 = vld [vmem:[%s1507 + $0x248] sm:$0xff]
    %v1582 = vld [vmem:[%s1507 + $0x250] sm:$0xff]
    %v1583 = vld [vmem:[%s1507 + $0x258] sm:$0xff]
    %v1584 = vld [vmem:[%s1507 + $0x260] sm:$0xff]
    %v1585 = vld [vmem:[%s1507 + $0x268] sm:$0xff]
    %v1586 = vld [vmem:[%s1507 + $0x270] sm:$0xff]
    %v1587 = vld [vmem:[%s1507 + $0x278] sm:$0xff]
    %v1588 = vld [vmem:[%s1507 + $0x280] sm:$0xff]
    %v1589 = vld [vmem:[%s1507 + $0x288] sm:$0xff]
    %v1590 = vld [vmem:[%s1507 + $0x290] sm:$0xff]
    %v1591 = vld [vmem:[%s1507 + $0x298] sm:$0xff]
    %v1592 = vld [vmem:[%s1507 + $0x2a0] sm:$0xff]
    %v1593 = vld [vmem:[%s1507 + $0x2a8] sm:$0xff]
    %v1594 = vld [vmem:[%s1507 + $0x2b0] sm:$0xff]
    %v1595 = vld [vmem:[%s1507 + $0x2b8] sm:$0xff]
    %v1596 = vld [vmem:[%s1507 + $0x2c0] sm:$0xff]
    %v1597 = vld [vmem:[%s1507 + $0x2c8] sm:$0xff]
    %v1598 = vld [vmem:[%s1507 + $0x2d0] sm:$0xff]
    %v1599 = vld [vmem:[%s1507 + $0x2d8] sm:$0xff]
    %v1600 = vld [vmem:[%s1507 + $0x2e0] sm:$0xff]
    %v1601 = vld [vmem:[%s1507 + $0x2e8] sm:$0xff]
    %v1602 = vld [vmem:[%s1507 + $0x2f0] sm:$0xff]
    %v1603 = vld [vmem:[%s1507 + $0x2f8] sm:$0xff]
    %v1604 = vld [vmem:[%s1507 + $0x300] sm:$0xff]
    %v1605 = vld [vmem:[%s1507 + $0x308] sm:$0xff]
    %v1606 = vld [vmem:[%s1507 + $0x310] sm:$0xff]
    %v1607 = vld [vmem:[%s1507 + $0x318] sm:$0xff]
    %v1608 = vld [vmem:[%s1507 + $0x320] sm:$0xff]
    %v1609 = vld [vmem:[%s1507 + $0x328] sm:$0xff]
    %v1610 = vld [vmem:[%s1507 + $0x330] sm:$0xff]
    %v1611 = vld [vmem:[%s1507 + $0x338] sm:$0xff]
    %v1612 = vld [vmem:[%s1507 + $0x340] sm:$0xff]
    %v1613 = vld [vmem:[%s1507 + $0x348] sm:$0xff]
    %v1614 = vld [vmem:[%s1507 + $0x350] sm:$0xff]
    %v1615 = vld [vmem:[%s1507 + $0x358] sm:$0xff]
    %v1616 = vld [vmem:[%s1507 + $0x360] sm:$0xff]
    %v1617 = vld [vmem:[%s1507 + $0x368] sm:$0xff]
    %v1618 = vld [vmem:[%s1507 + $0x370] sm:$0xff]
    %v1619 = vld [vmem:[%s1507 + $0x378] sm:$0xff]
    %v1620 = vld [vmem:[%s1507 + $0x380] sm:$0xff]
    %v1621 = vld [vmem:[%s1507 + $0x388] sm:$0xff]
    %v1622 = vld [vmem:[%s1507 + $0x390] sm:$0xff]
    %v1623 = vld [vmem:[%s1507 + $0x398] sm:$0xff]
    %v1624 = vld [vmem:[%s1507 + $0x3a0] sm:$0xff]
    %v1625 = vld [vmem:[%s1507 + $0x3a8] sm:$0xff]
    %v1626 = vld [vmem:[%s1507 + $0x3b0] sm:$0xff]
    %v1627 = vld [vmem:[%s1507 + $0x3b8] sm:$0xff]
    %v1628 = vld [vmem:[%s1507 + $0x3c0] sm:$0xff]
    %v1629 = vld [vmem:[%s1507 + $0x3c8] sm:$0xff]
    %v1630 = vld [vmem:[%s1507 + $0x3d0] sm:$0xff]
    %v1631 = vld [vmem:[%s1507 + $0x3d8] sm:$0xff]
    %v1632 = vld [vmem:[%s1507 + $0x3e0] sm:$0xff]
    %v1633 = vld [vmem:[%s1507 + $0x3e8] sm:$0xff]
    %v1634 = vld [vmem:[%s1507 + $0x3f0] sm:$0xff]
    %v1635 = vld [vmem:[%s1507 + $0x3f8] sm:$0xff]
    %v1636 = vld [vmem:[%s1507 + $0x400] sm:$0xff]
    %v1637 = vld [vmem:[%s1507 + $0x408] sm:$0xff]
    %v1638 = vld [vmem:[%s1507 + $0x410] sm:$0xff]
    %v1639 = vld [vmem:[%s1507 + $0x418] sm:$0xff]
    %v1640 = vld [vmem:[%s1507 + $0x420] sm:$0xff]
    %v1641 = vld [vmem:[%s1507 + $0x428] sm:$0xff]
    %v1642 = vld [vmem:[%s1507 + $0x430] sm:$0xff]
    %v1643 = vld [vmem:[%s1507 + $0x438] sm:$0xff]
    %v1644 = vld [vmem:[%s1507 + $0x440] sm:$0xff]
    %v1645 = vld [vmem:[%s1507 + $0x448] sm:$0xff]
    %v1646 = vld [vmem:[%s1507 + $0x450] sm:$0xff]
    %v1647 = vld [vmem:[%s1507 + $0x458] sm:$0xff]
    %v1648 = vld [vmem:[%s1507 + $0x460] sm:$0xff]
    %v1649 = vld [vmem:[%s1507 + $0x468] sm:$0xff]
    %v1650 = vld [vmem:[%s1507 + $0x470] sm:$0xff]
    %v1651 = vld [vmem:[%s1507 + $0x478] sm:$0xff]
    %v1652 = vld [vmem:[%s1507 + $0x480] sm:$0xff]
    %v1653 = vld [vmem:[%s1507 + $0x488] sm:$0xff]
    %v1654 = vld [vmem:[%s1507 + $0x490] sm:$0xff]
    %v1655 = vld [vmem:[%s1507 + $0x498] sm:$0xff]
    %v1656 = vld [vmem:[%s1507 + $0x4a0] sm:$0xff]
    %v1657 = vld [vmem:[%s1507 + $0x4a8] sm:$0xff]
    %v1658 = vld [vmem:[%s1507 + $0x4b0] sm:$0xff]
    %v1659 = vld [vmem:[%s1507 + $0x4b8] sm:$0xff]
    %v1660 = vld [vmem:[%s1507 + $0x4c0] sm:$0xff]
    %v1661 = vld [vmem:[%s1507 + $0x4c8] sm:$0xff]
    %v1662 = vld [vmem:[%s1507 + $0x4d0] sm:$0xff]
    %v1663 = vld [vmem:[%s1507 + $0x4d8] sm:$0xff]
    %v1664 = vld [vmem:[%s1507 + $0x4e0] sm:$0xff]
    %v1665 = vld [vmem:[%s1507 + $0x4e8] sm:$0xff]
    %v1666 = vld [vmem:[%s1507 + $0x4f0] sm:$0xff]
    %v1667 = vld [vmem:[%s1507 + $0x4f8] sm:$0xff]
    %v1668 = vld [vmem:[%s1507 + $0x500] sm:$0xff]
    %v1669 = vld [vmem:[%s1507 + $0x508] sm:$0xff]
    %v1670 = vld [vmem:[%s1507 + $0x510] sm:$0xff]
    %v1671 = vld [vmem:[%s1507 + $0x518] sm:$0xff]
    %v1672 = vld [vmem:[%s1507 + $0x520] sm:$0xff]
    %v1673 = vld [vmem:[%s1507 + $0x528] sm:$0xff]
    %v1674 = vld [vmem:[%s1507 + $0x530] sm:$0xff]
    %v1675 = vld [vmem:[%s1507 + $0x538] sm:$0xff]
    %v1676 = vld [vmem:[%s1507 + $0x540] sm:$0xff]
    %v1677 = vld [vmem:[%s1507 + $0x548] sm:$0xff]
    %v1678 = vld [vmem:[%s1507 + $0x550] sm:$0xff]
    %v1679 = vld [vmem:[%s1507 + $0x558] sm:$0xff]
    %v1680 = vld [vmem:[%s1507 + $0x560] sm:$0xff]
    %v1681 = vld [vmem:[%s1507 + $0x568] sm:$0xff]
    %v1682 = vld [vmem:[%s1507 + $0x570] sm:$0xff]
    %v1683 = vld [vmem:[%s1507 + $0x578] sm:$0xff]
    %v1684 = vld [vmem:[%s1507 + $0x580] sm:$0xff]
    %v1685 = vld [vmem:[%s1507 + $0x588] sm:$0xff]
    %v1686 = vld [vmem:[%s1507 + $0x590] sm:$0xff]
    %v1687 = vld [vmem:[%s1507 + $0x598] sm:$0xff]
    %v1688 = vld [vmem:[%s1507 + $0x5a0] sm:$0xff]
    %v1689 = vld [vmem:[%s1507 + $0x5a8] sm:$0xff]
    %v1690 = vld [vmem:[%s1507 + $0x5b0] sm:$0xff]
    %v1691 = vld [vmem:[%s1507 + $0x5b8] sm:$0xff]
    %v1692 = vld [vmem:[%s1507 + $0x5c0] sm:$0xff]
    %v1693 = vld [vmem:[%s1507 + $0x5c8] sm:$0xff]
    %v1694 = vld [vmem:[%s1507 + $0x5d0] sm:$0xff]
    %v1695 = vld [vmem:[%s1507 + $0x5d8] sm:$0xff]
    %v1696 = vld [vmem:[%s1507 + $0x5e0] sm:$0xff]
    %v1697 = vld [vmem:[%s1507 + $0x5e8] sm:$0xff]
    %v1698 = vld [vmem:[%s1507 + $0x5f0] sm:$0xff]
    %v1699 = vld [vmem:[%s1507 + $0x5f8] sm:$0xff]
    %v1700 = vld [vmem:[%s1507 + $0x600] sm:$0xff]
    %v1701 = vld [vmem:[%s1507 + $0x608] sm:$0xff]
    %v1702 = vld [vmem:[%s1507 + $0x610] sm:$0xff]
    %v1703 = vld [vmem:[%s1507 + $0x618] sm:$0xff]
    %v1704 = vld [vmem:[%s1507 + $0x620] sm:$0xff]
    %v1705 = vld [vmem:[%s1507 + $0x628] sm:$0xff]
    %v1706 = vld [vmem:[%s1507 + $0x630] sm:$0xff]
    %v1707 = vld [vmem:[%s1507 + $0x638] sm:$0xff]
    %v1708 = vld [vmem:[%s1507 + $0x640] sm:$0xff]
    %v1709 = vld [vmem:[%s1507 + $0x648] sm:$0xff]
    %v1710 = vld [vmem:[%s1507 + $0x650] sm:$0xff]
    %v1711 = vld [vmem:[%s1507 + $0x658] sm:$0xff]
    %v1712 = vld [vmem:[%s1507 + $0x660] sm:$0xff]
    %v1713 = vld [vmem:[%s1507 + $0x668] sm:$0xff]
    %v1714 = vld [vmem:[%s1507 + $0x670] sm:$0xff]
    %v1715 = vld [vmem:[%s1507 + $0x678] sm:$0xff]
    %v1716 = vld [vmem:[%s1507 + $0x680] sm:$0xff]
    %v1717 = vld [vmem:[%s1507 + $0x688] sm:$0xff]
    %v1718 = vld [vmem:[%s1507 + $0x690] sm:$0xff]
    %v1719 = vld [vmem:[%s1507 + $0x698] sm:$0xff]
    %v1720 = vld [vmem:[%s1507 + $0x6a0] sm:$0xff]
    %v1721 = vld [vmem:[%s1507 + $0x6a8] sm:$0xff]
    %v1722 = vld [vmem:[%s1507 + $0x6b0] sm:$0xff]
    %v1723 = vld [vmem:[%s1507 + $0x6b8] sm:$0xff]
    %v1724 = vld [vmem:[%s1507 + $0x6c0] sm:$0xff]
    %v1725 = vld [vmem:[%s1507 + $0x6c8] sm:$0xff]
    %v1726 = vld [vmem:[%s1507 + $0x6d0] sm:$0xff]
    %v1727 = vld [vmem:[%s1507 + $0x6d8] sm:$0xff]
    %v1728 = vld [vmem:[%s1507 + $0x6e0] sm:$0xff]
    %v1729 = vld [vmem:[%s1507 + $0x6e8] sm:$0xff]
    %v1730 = vld [vmem:[%s1507 + $0x6f0] sm:$0xff]
    %v1731 = vld [vmem:[%s1507 + $0x6f8] sm:$0xff]
    %v1732 = vld [vmem:[%s1507 + $0x700] sm:$0xff]
    %v1733 = vld [vmem:[%s1507 + $0x708] sm:$0xff]
    %v1734 = vld [vmem:[%s1507 + $0x710] sm:$0xff]
    %v1735 = vld [vmem:[%s1507 + $0x718] sm:$0xff]
    %v1736 = vld [vmem:[%s1507 + $0x720] sm:$0xff]
    %v1737 = vld [vmem:[%s1507 + $0x728] sm:$0xff]
    %v1738 = vld [vmem:[%s1507 + $0x730] sm:$0xff]
    %v1739 = vld [vmem:[%s1507 + $0x738] sm:$0xff]
    %v1740 = vld [vmem:[%s1507 + $0x740] sm:$0xff]
    %v1741 = vld [vmem:[%s1507 + $0x748] sm:$0xff]
    %v1742 = vld [vmem:[%s1507 + $0x750] sm:$0xff]
    %v1743 = vld [vmem:[%s1507 + $0x758] sm:$0xff]
    %v1744 = vld [vmem:[%s1507 + $0x760] sm:$0xff]
    %v1745 = vld [vmem:[%s1507 + $0x768] sm:$0xff]
    %v1746 = vld [vmem:[%s1507 + $0x770] sm:$0xff]
    %v1747 = vld [vmem:[%s1507 + $0x778] sm:$0xff]
    %v1748 = vld [vmem:[%s1507 + $0x780] sm:$0xff]
    %v1749 = vld [vmem:[%s1507 + $0x788] sm:$0xff]
    %v1750 = vld [vmem:[%s1507 + $0x790] sm:$0xff]
    %v1751 = vld [vmem:[%s1507 + $0x798] sm:$0xff]
    %v1752 = vld [vmem:[%s1507 + $0x7a0] sm:$0xff]
    %v1753 = vld [vmem:[%s1507 + $0x7a8] sm:$0xff]
    %v1754 = vld [vmem:[%s1507 + $0x7b0] sm:$0xff]
    %v1755 = vld [vmem:[%s1507 + $0x7b8] sm:$0xff]
    %v1756 = vld [vmem:[%s1507 + $0x7c0] sm:$0xff]
    %v1757 = vld [vmem:[%s1507 + $0x7c8] sm:$0xff]
    %v1758 = vld [vmem:[%s1507 + $0x7d0] sm:$0xff]
    %v1759 = vld [vmem:[%s1507 + $0x7d8] sm:$0xff]
    %v1760 = vld [vmem:[%s1507 + $0x7e0] sm:$0xff]
    %v1761 = vld [vmem:[%s1507 + $0x7e8] sm:$0xff]
    %v1762 = vld [vmem:[%s1507 + $0x7f0] sm:$0xff]
    %v1763 = vld [vmem:[%s1507 + $0x7f8] sm:$0xff]
    %v1764 = vld [vmem:[%s1507 + $0x800] sm:$0xff]
    %v1765 = vld [vmem:[%s1507 + $0x808] sm:$0xff]
    %v1766 = vld [vmem:[%s1507 + $0x810] sm:$0xff]
    %v1767 = vld [vmem:[%s1507 + $0x818] sm:$0xff]
    %v1768 = vld [vmem:[%s1507 + $0x820] sm:$0xff]
    %v1769 = vld [vmem:[%s1507 + $0x828] sm:$0xff]
    %v1770 = vld [vmem:[%s1507 + $0x830] sm:$0xff]
    %v1771 = vld [vmem:[%s1507 + $0x838] sm:$0xff]
    %v1772 = vld [vmem:[%s1507 + $0x840] sm:$0xff]
    %v1773 = vld [vmem:[%s1507 + $0x848] sm:$0xff]
    %v1774 = vld [vmem:[%s1507 + $0x850] sm:$0xff]
    %v1775 = vld [vmem:[%s1507 + $0x858] sm:$0xff]
    %v1776 = vld [vmem:[%s1507 + $0x860] sm:$0xff]
    %v1777 = vld [vmem:[%s1507 + $0x868] sm:$0xff]
    %v1778 = vld [vmem:[%s1507 + $0x870] sm:$0xff]
    %v1779 = vld [vmem:[%s1507 + $0x878] sm:$0xff]
    %v1780 = vld [vmem:[%s1507 + $0x880] sm:$0xff]
    %v1781 = vld [vmem:[%s1507 + $0x888] sm:$0xff]
    %v1782 = vld [vmem:[%s1507 + $0x890] sm:$0xff]
    %v1783 = vld [vmem:[%s1507 + $0x898] sm:$0xff]
    %v1784 = vld [vmem:[%s1507 + $0x8a0] sm:$0xff]
    %v1785 = vld [vmem:[%s1507 + $0x8a8] sm:$0xff]
    %v1786 = vld [vmem:[%s1507 + $0x8b0] sm:$0xff]
    %v1787 = vld [vmem:[%s1507 + $0x8b8] sm:$0xff]
    %v1788 = vld [vmem:[%s1507 + $0x8c0] sm:$0xff]
    %v1789 = vld [vmem:[%s1507 + $0x8c8] sm:$0xff]
    %v1790 = vld [vmem:[%s1507 + $0x8d0] sm:$0xff]
    %v1791 = vld [vmem:[%s1507 + $0x8d8] sm:$0xff]
    %v1792 = vld [vmem:[%s1507 + $0x8e0] sm:$0xff]
    %v1793 = vld [vmem:[%s1507 + $0x8e8] sm:$0xff]
    %v1794 = vld [vmem:[%s1507 + $0x8f0] sm:$0xff]
    %v1795 = vld [vmem:[%s1507 + $0x8f8] sm:$0xff]
    %v1796 = vld [vmem:[%s1507 + $0x900] sm:$0xff]
    %v1797 = vld [vmem:[%s1507 + $0x908] sm:$0xff]
    %v1798 = vld [vmem:[%s1507 + $0x910] sm:$0xff]
    %v1799 = vld [vmem:[%s1507 + $0x918] sm:$0xff]
    %v1800 = vld [vmem:[%s1507 + $0x920] sm:$0xff]
    %v1801 = vld [vmem:[%s1507 + $0x928] sm:$0xff]
    %v1802 = vld [vmem:[%s1507 + $0x930] sm:$0xff]
    %v1803 = vld [vmem:[%s1507 + $0x938] sm:$0xff]
    %v1804 = vld [vmem:[%s1507 + $0x940] sm:$0xff]
    %v1805 = vld [vmem:[%s1507 + $0x948] sm:$0xff]
    %v1806 = vld [vmem:[%s1507 + $0x950] sm:$0xff]
    %v1807 = vld [vmem:[%s1507 + $0x958] sm:$0xff]
    %v1808 = vld [vmem:[%s1507 + $0x960] sm:$0xff]
    %v1809 = vld [vmem:[%s1507 + $0x968] sm:$0xff]
    %v1810 = vld [vmem:[%s1507 + $0x970] sm:$0xff]
    %v1811 = vld [vmem:[%s1507 + $0x978] sm:$0xff]
    %v1812 = vld [vmem:[%s1507 + $0x980] sm:$0xff]
    %v1813 = vld [vmem:[%s1507 + $0x988] sm:$0xff]
    %v1814 = vld [vmem:[%s1507 + $0x990] sm:$0xff]
    %v1815 = vld [vmem:[%s1507 + $0x998] sm:$0xff]
    %v1816 = vld [vmem:[%s1507 + $0x9a0] sm:$0xff]
    %v1817 = vld [vmem:[%s1507 + $0x9a8] sm:$0xff]
    %v1818 = vld [vmem:[%s1507 + $0x9b0] sm:$0xff]
    %v1819 = vld [vmem:[%s1507 + $0x9b8] sm:$0xff]
    %v1820 = vld [vmem:[%s1507 + $0x9c0] sm:$0xff]
    %v1821 = vld [vmem:[%s1507 + $0x9c8] sm:$0xff]
    %v1822 = vld [vmem:[%s1507 + $0x9d0] sm:$0xff]
    %v1823 = vld [vmem:[%s1507 + $0x9d8] sm:$0xff]
    %v1824 = vld [vmem:[%s1507 + $0x9e0] sm:$0xff]
    %v1825 = vld [vmem:[%s1507 + $0x9e8] sm:$0xff]
    %v1826 = vld [vmem:[%s1507 + $0x9f0] sm:$0xff]
    %v1827 = vld [vmem:[%s1507 + $0x9f8] sm:$0xff]
    %v1828 = vld [vmem:[%s1507 + $0xa00] sm:$0xff]
    %v1829 = vld [vmem:[%s1507 + $0xa08] sm:$0xff]
    %v1830 = vld [vmem:[%s1507 + $0xa10] sm:$0xff]
    %v1831 = vld [vmem:[%s1507 + $0xa18] sm:$0xff]
    %v1832 = vld [vmem:[%s1507 + $0xa20] sm:$0xff]
    %v1833 = vld [vmem:[%s1507 + $0xa28] sm:$0xff]
    %v1834 = vld [vmem:[%s1507 + $0xa30] sm:$0xff]
    %v1835 = vld [vmem:[%s1507 + $0xa38] sm:$0xff]
    %v1836 = vld [vmem:[%s1507 + $0xa40] sm:$0xff]
    %v1837 = vld [vmem:[%s1507 + $0xa48] sm:$0xff]
    %v1838 = vld [vmem:[%s1507 + $0xa50] sm:$0xff]
    %v1839 = vld [vmem:[%s1507 + $0xa58] sm:$0xff]
    %v1840 = vld [vmem:[%s1507 + $0xa60] sm:$0xff]
    %v1841 = vld [vmem:[%s1507 + $0xa68] sm:$0xff]
    %v1842 = vld [vmem:[%s1507 + $0xa70] sm:$0xff]
    %v1843 = vld [vmem:[%s1507 + $0xa78] sm:$0xff]
    %v1844 = vld [vmem:[%s1507 + $0xa80] sm:$0xff]
    %v1845 = vld [vmem:[%s1507 + $0xa88] sm:$0xff]
    %v1846 = vld [vmem:[%s1507 + $0xa90] sm:$0xff]
    %v1847 = vld [vmem:[%s1507 + $0xa98] sm:$0xff]
    %v1848 = vld [vmem:[%s1507 + $0xaa0] sm:$0xff]
    %v1849 = vld [vmem:[%s1507 + $0xaa8] sm:$0xff]
    %v1850 = vld [vmem:[%s1507 + $0xab0] sm:$0xff]
    %v1851 = vld [vmem:[%s1507 + $0xab8] sm:$0xff]
    %v1852 = vld [vmem:[%s1507 + $0xac0] sm:$0xff]
    %v1853 = vld [vmem:[%s1507 + $0xac8] sm:$0xff]
    %v1854 = vld [vmem:[%s1507 + $0xad0] sm:$0xff]
    %v1855 = vld [vmem:[%s1507 + $0xad8] sm:$0xff]
    %v1856 = vld [vmem:[%s1507 + $0xae0] sm:$0xff]
    %v1857 = vld [vmem:[%s1507 + $0xae8] sm:$0xff]
    %v1858 = vld [vmem:[%s1507 + $0xaf0] sm:$0xff]
    %v1859 = vld [vmem:[%s1507 + $0xaf8] sm:$0xff]
    %v1860 = vld [vmem:[%s1507 + $0xb00] sm:$0xff]
    %v1861 = vld [vmem:[%s1507 + $0xb08] sm:$0xff]
    %v1862 = vld [vmem:[%s1507 + $0xb10] sm:$0xff]
    %v1863 = vld [vmem:[%s1507 + $0xb18] sm:$0xff]
    %v1864 = vld [vmem:[%s1507 + $0xb20] sm:$0xff]
    %v1865 = vld [vmem:[%s1507 + $0xb28] sm:$0xff]
    %v1866 = vld [vmem:[%s1507 + $0xb30] sm:$0xff]
    %v1867 = vld [vmem:[%s1507 + $0xb38] sm:$0xff]
    %v1868 = vld [vmem:[%s1507 + $0xb40] sm:$0xff]
    %v1869 = vld [vmem:[%s1507 + $0xb48] sm:$0xff]
    %v1870 = vld [vmem:[%s1507 + $0xb50] sm:$0xff]
    %v1871 = vld [vmem:[%s1507 + $0xb58] sm:$0xff]
    %v1872 = vld [vmem:[%s1507 + $0xb60] sm:$0xff]
    %v1873 = vld [vmem:[%s1507 + $0xb68] sm:$0xff]
    %v1874 = vld [vmem:[%s1507 + $0xb70] sm:$0xff]
    %v1875 = vld [vmem:[%s1507 + $0xb78] sm:$0xff]
    %v1876 = vld [vmem:[%s1507 + $0xb80] sm:$0xff]
    %v1877 = vld [vmem:[%s1507 + $0xb88] sm:$0xff]
    %v1878 = vld [vmem:[%s1507 + $0xb90] sm:$0xff]
    %v1879 = vld [vmem:[%s1507 + $0xb98] sm:$0xff]
    %v1880 = vld [vmem:[%s1507 + $0xba0] sm:$0xff]
    %v1881 = vld [vmem:[%s1507 + $0xba8] sm:$0xff]
    %v1882 = vld [vmem:[%s1507 + $0xbb0] sm:$0xff]
    %v1883 = vld [vmem:[%s1507 + $0xbb8] sm:$0xff]
    %v1884 = vld [vmem:[%s1507 + $0xbc0] sm:$0xff]
    %v1885 = vld [vmem:[%s1507 + $0xbc8] sm:$0xff]
    %v1886 = vld [vmem:[%s1507 + $0xbd0] sm:$0xff]
    %v1887 = vld [vmem:[%s1507 + $0xbd8] sm:$0xff]
    %v1888 = vld [vmem:[%s1507 + $0xbe0] sm:$0xff]
    %v1889 = vld [vmem:[%s1507 + $0xbe8] sm:$0xff]
    %v1890 = vld [vmem:[%s1507 + $0xbf0] sm:$0xff]
    %v1891 = vld [vmem:[%s1507 + $0xbf8] sm:$0xff]
    %v1892 = vld [vmem:[%s1507 + $0xc00] sm:$0xff]
    %v1893 = vld [vmem:[%s1507 + $0xc08] sm:$0xff]
    %v1894 = vld [vmem:[%s1507 + $0xc10] sm:$0xff]
    %v1895 = vld [vmem:[%s1507 + $0xc18] sm:$0xff]
    %v1896 = vld [vmem:[%s1507 + $0xc20] sm:$0xff]
    %v1897 = vld [vmem:[%s1507 + $0xc28] sm:$0xff]
    %v1898 = vld [vmem:[%s1507 + $0xc30] sm:$0xff]
    %v1899 = vld [vmem:[%s1507 + $0xc38] sm:$0xff]
    %v1900 = vld [vmem:[%s1507 + $0xc40] sm:$0xff]
    %v1901 = vld [vmem:[%s1507 + $0xc48] sm:$0xff]
    %v1902 = vld [vmem:[%s1507 + $0xc50] sm:$0xff]
    %v1903 = vld [vmem:[%s1507 + $0xc58] sm:$0xff]
    %v1904 = vld [vmem:[%s1507 + $0xc60] sm:$0xff]
    %v1905 = vld [vmem:[%s1507 + $0xc68] sm:$0xff]
    %v1906 = vld [vmem:[%s1507 + $0xc70] sm:$0xff]
    %v1907 = vld [vmem:[%s1507 + $0xc78] sm:$0xff]
    %v1908 = vld [vmem:[%s1507 + $0xc80] sm:$0xff]
    %v1909 = vld [vmem:[%s1507 + $0xc88] sm:$0xff]
    %v1910 = vld [vmem:[%s1507 + $0xc90] sm:$0xff]
    %v1911 = vld [vmem:[%s1507 + $0xc98] sm:$0xff]
    %v1912 = vld [vmem:[%s1507 + $0xca0] sm:$0xff]
    %v1913 = vld [vmem:[%s1507 + $0xca8] sm:$0xff]
    %v1914 = vld [vmem:[%s1507 + $0xcb0] sm:$0xff]
    %v1915 = vld [vmem:[%s1507 + $0xcb8] sm:$0xff]
    %v1916 = vld [vmem:[%s1507 + $0xcc0] sm:$0xff]
    %v1917 = vld [vmem:[%s1507 + $0xcc8] sm:$0xff]
    %v1918 = vld [vmem:[%s1507 + $0xcd0] sm:$0xff]
    %v1919 = vld [vmem:[%s1507 + $0xcd8] sm:$0xff]
    %v1920 = vld [vmem:[%s1507 + $0xce0] sm:$0xff]
    %v1921 = vld [vmem:[%s1507 + $0xce8] sm:$0xff]
    %v1922 = vld [vmem:[%s1507 + $0xcf0] sm:$0xff]
    %v1923 = vld [vmem:[%s1507 + $0xcf8] sm:$0xff]
    %v1924 = vld [vmem:[%s1507 + $0xd00] sm:$0xff]
    %v1925 = vld [vmem:[%s1507 + $0xd08] sm:$0xff]
    %v1926 = vld [vmem:[%s1507 + $0xd10] sm:$0xff]
    %v1927 = vld [vmem:[%s1507 + $0xd18] sm:$0xff]
    %v1928 = vld [vmem:[%s1507 + $0xd20] sm:$0xff]
    %v1929 = vld [vmem:[%s1507 + $0xd28] sm:$0xff]
    %v1930 = vld [vmem:[%s1507 + $0xd30] sm:$0xff]
    %v1931 = vld [vmem:[%s1507 + $0xd38] sm:$0xff]
    %v1932 = vld [vmem:[%s1507 + $0xd40] sm:$0xff]
    %v1933 = vld [vmem:[%s1507 + $0xd48] sm:$0xff]
    %v1934 = vld [vmem:[%s1507 + $0xd50] sm:$0xff]
    %v1935 = vld [vmem:[%s1507 + $0xd58] sm:$0xff]
    %v1936 = vld [vmem:[%s1507 + $0xd60] sm:$0xff]
    %v1937 = vld [vmem:[%s1507 + $0xd68] sm:$0xff]
    %v1938 = vld [vmem:[%s1507 + $0xd70] sm:$0xff]
    %v1939 = vld [vmem:[%s1507 + $0xd78] sm:$0xff]
    %v1940 = vld [vmem:[%s1507 + $0xd80] sm:$0xff]
    %v1941 = vld [vmem:[%s1507 + $0xd88] sm:$0xff]
    %v1942 = vld [vmem:[%s1507 + $0xd90] sm:$0xff]
    %v1943 = vld [vmem:[%s1507 + $0xd98] sm:$0xff]
    %v1944 = vld [vmem:[%s1507 + $0xda0] sm:$0xff]
    %v1945 = vld [vmem:[%s1507 + $0xda8] sm:$0xff]
    %v1946 = vld [vmem:[%s1507 + $0xdb0] sm:$0xff]
    %v1947 = vld [vmem:[%s1507 + $0xdb8] sm:$0xff]
    %v1948 = vld [vmem:[%s1507 + $0xdc0] sm:$0xff]
    %v1949 = vld [vmem:[%s1507 + $0xdc8] sm:$0xff]
    %v1950 = vld [vmem:[%s1507 + $0xdd0] sm:$0xff]
    %v1951 = vld [vmem:[%s1507 + $0xdd8] sm:$0xff]
    %v1952 = vld [vmem:[%s1507 + $0xde0] sm:$0xff]
    %v1953 = vld [vmem:[%s1507 + $0xde8] sm:$0xff]
    %v1954 = vld [vmem:[%s1507 + $0xdf0] sm:$0xff]
    %v1955 = vld [vmem:[%s1507 + $0xdf8] sm:$0xff]
    %v1956 = vld [vmem:[%s1507 + $0xe00] sm:$0xff]
    %v1957 = vld [vmem:[%s1507 + $0xe08] sm:$0xff]
    %v1958 = vld [vmem:[%s1507 + $0xe10] sm:$0xff]
    %v1959 = vld [vmem:[%s1507 + $0xe18] sm:$0xff]
    %v1960 = vld [vmem:[%s1507 + $0xe20] sm:$0xff]
    %v1961 = vld [vmem:[%s1507 + $0xe28] sm:$0xff]
    %v1962 = vld [vmem:[%s1507 + $0xe30] sm:$0xff]
    %v1963 = vld [vmem:[%s1507 + $0xe38] sm:$0xff]
    %v1964 = vld [vmem:[%s1507 + $0xe40] sm:$0xff]
    %v1965 = vld [vmem:[%s1507 + $0xe48] sm:$0xff]
    %v1966 = vld [vmem:[%s1507 + $0xe50] sm:$0xff]
    %v1967 = vld [vmem:[%s1507 + $0xe58] sm:$0xff]
    %v1968 = vld [vmem:[%s1507 + $0xe60] sm:$0xff]
    %v1969 = vld [vmem:[%s1507 + $0xe68] sm:$0xff]
    %v1970 = vld [vmem:[%s1507 + $0xe70] sm:$0xff]
    %v1971 = vld [vmem:[%s1507 + $0xe78] sm:$0xff]
    %v1972 = vld [vmem:[%s1507 + $0xe80] sm:$0xff]
    %v1973 = vld [vmem:[%s1507 + $0xe88] sm:$0xff]
    %v1974 = vld [vmem:[%s1507 + $0xe90] sm:$0xff]
    %v1975 = vld [vmem:[%s1507 + $0xe98] sm:$0xff]
    %v1976 = vld [vmem:[%s1507 + $0xea0] sm:$0xff]
    %v1977 = vld [vmem:[%s1507 + $0xea8] sm:$0xff]
    %v1978 = vld [vmem:[%s1507 + $0xeb0] sm:$0xff]
    %v1979 = vld [vmem:[%s1507 + $0xeb8] sm:$0xff]
    %v1980 = vld [vmem:[%s1507 + $0xec0] sm:$0xff]
    %v1981 = vld [vmem:[%s1507 + $0xec8] sm:$0xff]
    %v1982 = vld [vmem:[%s1507 + $0xed0] sm:$0xff]
    %v1983 = vld [vmem:[%s1507 + $0xed8] sm:$0xff]
    %v1984 = vld [vmem:[%s1507 + $0xee0] sm:$0xff]
    %v1985 = vld [vmem:[%s1507 + $0xee8] sm:$0xff]
    %v1986 = vld [vmem:[%s1507 + $0xef0] sm:$0xff]
    %v1987 = vld [vmem:[%s1507 + $0xef8] sm:$0xff]
    %v1988 = vld [vmem:[%s1507 + $0xf00] sm:$0xff]
    %v1989 = vld [vmem:[%s1507 + $0xf08] sm:$0xff]
    %v1990 = vld [vmem:[%s1507 + $0xf10] sm:$0xff]
    %v1991 = vld [vmem:[%s1507 + $0xf18] sm:$0xff]
    %v1992 = vld [vmem:[%s1507 + $0xf20] sm:$0xff]
    %v1993 = vld [vmem:[%s1507 + $0xf28] sm:$0xff]
    %v1994 = vld [vmem:[%s1507 + $0xf30] sm:$0xff]
    %v1995 = vld [vmem:[%s1507 + $0xf38] sm:$0xff]
    %v1996 = vld [vmem:[%s1507 + $0xf40] sm:$0xff]
    %v1997 = vld [vmem:[%s1507 + $0xf48] sm:$0xff]
    %v1998 = vld [vmem:[%s1507 + $0xf50] sm:$0xff]
    %v1999 = vld [vmem:[%s1507 + $0xf58] sm:$0xff]
    %v2000 = vld [vmem:[%s1507 + $0xf60] sm:$0xff]
    %v2001 = vld [vmem:[%s1507 + $0xf68] sm:$0xff]
    %v2002 = vld [vmem:[%s1507 + $0xf70] sm:$0xff]
    %v2003 = vld [vmem:[%s1507 + $0xf78] sm:$0xff]
    %v2004 = vld [vmem:[%s1507 + $0xf80] sm:$0xff]
    %v2005 = vld [vmem:[%s1507 + $0xf88] sm:$0xff]
    %v2006 = vld [vmem:[%s1507 + $0xf90] sm:$0xff]
    %v2007 = vld [vmem:[%s1507 + $0xf98] sm:$0xff]
    %v2008 = vld [vmem:[%s1507 + $0xfa0] sm:$0xff]
    %v2009 = vld [vmem:[%s1507 + $0xfa8] sm:$0xff]
    %v2010 = vld [vmem:[%s1507 + $0xfb0] sm:$0xff]
    %v2011 = vld [vmem:[%s1507 + $0xfb8] sm:$0xff]
    %v2012 = vld [vmem:[%s1507 + $0xfc0] sm:$0xff]
    %v2013 = vld [vmem:[%s1507 + $0xfc8] sm:$0xff]
    %v2014 = vld [vmem:[%s1507 + $0xfd0] sm:$0xff]
    %v2015 = vld [vmem:[%s1507 + $0xfd8] sm:$0xff]
    %v2016 = vld [vmem:[%s1507 + $0xfe0] sm:$0xff]
    %v2017 = vld [vmem:[%s1507 + $0xfe8] sm:$0xff]
    %v2018 = vld [vmem:[%s1507 + $0xff0] sm:$0xff]
    %v2019 = vld [vmem:[%s1507 + $0xff8] sm:$0xff]
    %vm2044 = vcmask 1046528
    %v2045 = vrot.slane %v1483, 1
    %v2046 = vrot.slane %v1491, 1
    %v2047 = vsel %vm2044, %v2045, %v2046
    %v2048 = vrot.slane %v1484, 1
    %v2049 = vrot.slane %v1492, 1
    %v2050 = vsel %vm2044, %v2048, %v2049
    %v2051 = vrot.slane %v1485, 1
    %v2052 = vrot.slane %v1493, 1
    %v2053 = vsel %vm2044, %v2051, %v2052
    %v2054 = vrot.slane %v1486, 1
    %v2055 = vrot.slane %v1494, 1
    %v2056 = vsel %vm2044, %v2054, %v2055
    %v2057 = vrot.slane %v1487, 1
    %v2058 = vrot.slane %v1495, 1
    %v2059 = vsel %vm2044, %v2057, %v2058
    %v2060 = vrot.slane %v1488, 1
    %v2061 = vrot.slane %v1496, 1
    %v2062 = vsel %vm2044, %v2060, %v2061
    %v2063 = vrot.slane %v1489, 1
    %v2064 = vrot.slane %v1497, 1
    %v2065 = vsel %vm2044, %v2063, %v2064
    %v2066 = vrot.slane %v1490, 1
    %v2067 = vrot.slane %v1498, 1
    %v2068 = vsel %vm2044, %v2066, %v2067
    %v2069 = vrot.slane %v1499, 1
    %v2070 = vsel %vm2044, %v2046, %v2069
    %v2071 = vrot.slane %v1500, 1
    %v2072 = vsel %vm2044, %v2049, %v2071
    %v2073 = vrot.slane %v1501, 1
    %v2074 = vsel %vm2044, %v2052, %v2073
    %v2075 = vrot.slane %v1502, 1
    %v2076 = vsel %vm2044, %v2055, %v2075
    %v2077 = vrot.slane %v1503, 1
    %v2078 = vsel %vm2044, %v2058, %v2077
    %v2079 = vrot.slane %v1504, 1
    %v2080 = vsel %vm2044, %v2061, %v2079
    %v2081 = vrot.slane %v1505, 1
    %v2082 = vsel %vm2044, %v2064, %v2081
    %v2083 = vrot.slane %v1506, 1
    %v2084 = vsel %vm2044, %v2067, %v2083
    %2101 = vmatpush.msra.mxu0 %v1568
    %2102 = vmatpush.msra.mxu0 %v1564
    %2103 = vmatpush.msra.mxu0 %v1560
    %2104 = vmatpush.msra.mxu0 %v1556
    %2105 = vmatpush.msra.mxu0 %v1552
    %2106 = vmatpush.msra.mxu0 %v1548
    %2107 = vmatpush.msra.mxu0 %v1544
    %2108 = vmatpush.msra.mxu0 %v1540
    %2109 = vmatpush.msra.mxu0 %v1536
    %2110 = vmatpush.msra.mxu0 %v1532
    %2111 = vmatpush.msra.mxu0 %v1528
    %2112 = vmatpush.msra.mxu0 %v1524
    %2113 = vmatpush.msra.mxu0 %v1520
    %2114 = vmatpush.msra.mxu0 %v1516
    %2115 = vmatpush.msra.mxu0 %v1512
    %2116 = vmatpush.msra.mxu0 %v1508
    %2117 = vmatmul.f32.gmra.mxu0 %v2047
    %v2118 = vpop.f32.mrf.mxu0
    %v2119 = vadd.f32 0.0, %v2118
    %2120 = vmatmul.f32.gmra.mxu0 %v2070
    %v2121 = vpop.f32.mrf.mxu0
    %v2122 = vadd.f32 0.0, %v2121
    %2123 = vdwg.mxu0
    %2124 = vmatpush.msra.mxu0 %v1632
    %2125 = vmatpush.msra.mxu0 %v1628
    %2126 = vmatpush.msra.mxu0 %v1624
    %2127 = vmatpush.msra.mxu0 %v1620
    %2128 = vmatpush.msra.mxu0 %v1616
    %2129 = vmatpush.msra.mxu0 %v1612
    %2130 = vmatpush.msra.mxu0 %v1608
    %2131 = vmatpush.msra.mxu0 %v1604
    %2132 = vmatpush.msra.mxu0 %v1600
    %2133 = vmatpush.msra.mxu0 %v1596
    %2134 = vmatpush.msra.mxu0 %v1592
    %2135 = vmatpush.msra.mxu0 %v1588
    %2136 = vmatpush.msra.mxu0 %v1584
    %2137 = vmatpush.msra.mxu0 %v1580
    %2138 = vmatpush.msra.mxu0 %v1576
    %2139 = vmatpush.msra.mxu0 %v1572
    %2140 = vmatmul.f32.gmra.mxu0 %v2050
    %v2141 = vpop.f32.mrf.mxu0
    %v2142 = vadd.f32 %v2119, %v2141
    %2143 = vmatmul.f32.gmra.mxu0 %v2072
    %v2144 = vpop.f32.mrf.mxu0
    %v2145 = vadd.f32 %v2122, %v2144
    %2146 = vdwg.mxu0
    %2147 = vmatpush.msra.mxu0 %v1696
    %2148 = vmatpush.msra.mxu0 %v1692
    %2149 = vmatpush.msra.mxu0 %v1688
    %2150 = vmatpush.msra.mxu0 %v1684
    %2151 = vmatpush.msra.mxu0 %v1680
    %2152 = vmatpush.msra.mxu0 %v1676
    %2153 = vmatpush.msra.mxu0 %v1672
    %2154 = vmatpush.msra.mxu0 %v1668
    %2155 = vmatpush.msra.mxu0 %v1664
    %2156 = vmatpush.msra.mxu0 %v1660
    %2157 = vmatpush.msra.mxu0 %v1656
    %2158 = vmatpush.msra.mxu0 %v1652
    %2159 = vmatpush.msra.mxu0 %v1648
    %2160 = vmatpush.msra.mxu0 %v1644
    %2161 = vmatpush.msra.mxu0 %v1640
    %2162 = vmatpush.msra.mxu0 %v1636
    %2163 = vmatmul.f32.gmra.mxu0 %v2053
    %v2164 = vpop.f32.mrf.mxu0
    %v2165 = vadd.f32 %v2142, %v2164
    %2166 = vmatmul.f32.gmra.mxu0 %v2074
    %v2167 = vpop.f32.mrf.mxu0
    %v2168 = vadd.f32 %v2145, %v2167
    %2169 = vdwg.mxu0
    %2170 = vmatpush.msra.mxu0 %v1760
    %2171 = vmatpush.msra.mxu0 %v1756
    %2172 = vmatpush.msra.mxu0 %v1752
    %2173 = vmatpush.msra.mxu0 %v1748
    %2174 = vmatpush.msra.mxu0 %v1744
    %2175 = vmatpush.msra.mxu0 %v1740
    %2176 = vmatpush.msra.mxu0 %v1736
    %2177 = vmatpush.msra.mxu0 %v1732
    %2178 = vmatpush.msra.mxu0 %v1728
    %2179 = vmatpush.msra.mxu0 %v1724
    %2180 = vmatpush.msra.mxu0 %v1720
    %2181 = vmatpush.msra.mxu0 %v1716
    %2182 = vmatpush.msra.mxu0 %v1712
    %2183 = vmatpush.msra.mxu0 %v1708
    %2184 = vmatpush.msra.mxu0 %v1704
    %2185 = vmatpush.msra.mxu0 %v1700
    %2186 = vmatmul.f32.gmra.mxu0 %v2056
    %v2187 = vpop.f32.mrf.mxu0
    %v2188 = vadd.f32 %v2165, %v2187
    %2189 = vmatmul.f32.gmra.mxu0 %v2076
    %v2190 = vpop.f32.mrf.mxu0
    %v2191 = vadd.f32 %v2168, %v2190
    %2192 = vdwg.mxu0
    %2193 = vmatpush.msra.mxu0 %v1824
    %2194 = vmatpush.msra.mxu0 %v1820
    %2195 = vmatpush.msra.mxu0 %v1816
    %2196 = vmatpush.msra.mxu0 %v1812
    %2197 = vmatpush.msra.mxu0 %v1808
    %2198 = vmatpush.msra.mxu0 %v1804
    %2199 = vmatpush.msra.mxu0 %v1800
    %2200 = vmatpush.msra.mxu0 %v1796
    %2201 = vmatpush.msra.mxu0 %v1792
    %2202 = vmatpush.msra.mxu0 %v1788
    %2203 = vmatpush.msra.mxu0 %v1784
    %2204 = vmatpush.msra.mxu0 %v1780
    %2205 = vmatpush.msra.mxu0 %v1776
    %2206 = vmatpush.msra.mxu0 %v1772
    %2207 = vmatpush.msra.mxu0 %v1768
    %2208 = vmatpush.msra.mxu0 %v1764
    %2209 = vmatmul.f32.gmra.mxu0 %v2059
    %v2210 = vpop.f32.mrf.mxu0
    %v2211 = vadd.f32 %v2188, %v2210
    %2212 = vmatmul.f32.gmra.mxu0 %v2078
    %v2213 = vpop.f32.mrf.mxu0
    %v2214 = vadd.f32 %v2191, %v2213
    %2215 = vdwg.mxu0
    %2216 = vmatpush.msra.mxu0 %v1888
    %2217 = vmatpush.msra.mxu0 %v1884
    %2218 = vmatpush.msra.mxu0 %v1880
    %2219 = vmatpush.msra.mxu0 %v1876
    %2220 = vmatpush.msra.mxu0 %v1872
    %2221 = vmatpush.msra.mxu0 %v1868
    %2222 = vmatpush.msra.mxu0 %v1864
    %2223 = vmatpush.msra.mxu0 %v1860
    %2224 = vmatpush.msra.mxu0 %v1856
    %2225 = vmatpush.msra.mxu0 %v1852
    %2226 = vmatpush.msra.mxu0 %v1848
    %2227 = vmatpush.msra.mxu0 %v1844
    %2228 = vmatpush.msra.mxu0 %v1840
    %2229 = vmatpush.msra.mxu0 %v1836
    %2230 = vmatpush.msra.mxu0 %v1832
    %2231 = vmatpush.msra.mxu0 %v1828
    %2232 = vmatmul.f32.gmra.mxu0 %v2062
    %v2233 = vpop.f32.mrf.mxu0
    %v2234 = vadd.f32 %v2211, %v2233
    %2235 = vmatmul.f32.gmra.mxu0 %v2080
    %v2236 = vpop.f32.mrf.mxu0
    %v2237 = vadd.f32 %v2214, %v2236
    %2238 = vdwg.mxu0
    %2239 = vmatpush.msra.mxu0 %v1952
    %2240 = vmatpush.msra.mxu0 %v1948
    %2241 = vmatpush.msra.mxu0 %v1944
    %2242 = vmatpush.msra.mxu0 %v1940
    %2243 = vmatpush.msra.mxu0 %v1936
    %2244 = vmatpush.msra.mxu0 %v1932
    %2245 = vmatpush.msra.mxu0 %v1928
    %2246 = vmatpush.msra.mxu0 %v1924
    %2247 = vmatpush.msra.mxu0 %v1920
    %2248 = vmatpush.msra.mxu0 %v1916
    %2249 = vmatpush.msra.mxu0 %v1912
    %2250 = vmatpush.msra.mxu0 %v1908
    %2251 = vmatpush.msra.mxu0 %v1904
    %2252 = vmatpush.msra.mxu0 %v1900
    %2253 = vmatpush.msra.mxu0 %v1896
    %2254 = vmatpush.msra.mxu0 %v1892
    %2255 = vmatmul.f32.gmra.mxu0 %v2065
    %v2256 = vpop.f32.mrf.mxu0
    %v2257 = vadd.f32 %v2234, %v2256
    %2258 = vmatmul.f32.gmra.mxu0 %v2082
    %v2259 = vpop.f32.mrf.mxu0
    %v2260 = vadd.f32 %v2237, %v2259
    %2261 = vdwg.mxu0
    %2262 = vmatpush.msra.mxu0 %v2016
    %2263 = vmatpush.msra.mxu0 %v2012
    %2264 = vmatpush.msra.mxu0 %v2008
    %2265 = vmatpush.msra.mxu0 %v2004
    %2266 = vmatpush.msra.mxu0 %v2000
    %2267 = vmatpush.msra.mxu0 %v1996
    %2268 = vmatpush.msra.mxu0 %v1992
    %2269 = vmatpush.msra.mxu0 %v1988
    %2270 = vmatpush.msra.mxu0 %v1984
    %2271 = vmatpush.msra.mxu0 %v1980
    %2272 = vmatpush.msra.mxu0 %v1976
    %2273 = vmatpush.msra.mxu0 %v1972
    %2274 = vmatpush.msra.mxu0 %v1968
    %2275 = vmatpush.msra.mxu0 %v1964
    %2276 = vmatpush.msra.mxu0 %v1960
    %2277 = vmatpush.msra.mxu0 %v1956
    %2278 = vmatmul.f32.gmra.mxu0 %v2068
    %v2279 = vpop.f32.mrf.mxu0
    %v2280 = vadd.f32 %v2257, %v2279
    %2281 = vmatmul.f32.gmra.mxu0 %v2084
    %v2282 = vpop.f32.mrf.mxu0
    %v2283 = vadd.f32 %v2260, %v2282
    %2284 = vdwg.mxu0
    %2285 = vmatpush.msra.mxu0 %v1569
    %2286 = vmatpush.msra.mxu0 %v1565
    %2287 = vmatpush.msra.mxu0 %v1561
    %2288 = vmatpush.msra.mxu0 %v1557
    %2289 = vmatpush.msra.mxu0 %v1553
    %2290 = vmatpush.msra.mxu0 %v1549
    %2291 = vmatpush.msra.mxu0 %v1545
    %2292 = vmatpush.msra.mxu0 %v1541
    %2293 = vmatpush.msra.mxu0 %v1537
    %2294 = vmatpush.msra.mxu0 %v1533
    %2295 = vmatpush.msra.mxu0 %v1529
    %2296 = vmatpush.msra.mxu0 %v1525
    %2297 = vmatpush.msra.mxu0 %v1521
    %2298 = vmatpush.msra.mxu0 %v1517
    %2299 = vmatpush.msra.mxu0 %v1513
    %2300 = vmatpush.msra.mxu0 %v1509
    %2301 = vmatmul.f32.gmra.mxu0 %v2047
    %v2302 = vpop.f32.mrf.mxu0
    %v2303 = vadd.f32 0.0, %v2302
    %2304 = vmatmul.f32.gmra.mxu0 %v2070
    %v2305 = vpop.f32.mrf.mxu0
    %v2306 = vadd.f32 0.0, %v2305
    %2307 = vdwg.mxu0
    %2308 = vmatpush.msra.mxu0 %v1633
    %2309 = vmatpush.msra.mxu0 %v1629
    %2310 = vmatpush.msra.mxu0 %v1625
    %2311 = vmatpush.msra.mxu0 %v1621
    %2312 = vmatpush.msra.mxu0 %v1617
    %2313 = vmatpush.msra.mxu0 %v1613
    %2314 = vmatpush.msra.mxu0 %v1609
    %2315 = vmatpush.msra.mxu0 %v1605
    %2316 = vmatpush.msra.mxu0 %v1601
    %2317 = vmatpush.msra.mxu0 %v1597
    %2318 = vmatpush.msra.mxu0 %v1593
    %2319 = vmatpush.msra.mxu0 %v1589
    %2320 = vmatpush.msra.mxu0 %v1585
    %2321 = vmatpush.msra.mxu0 %v1581
    %2322 = vmatpush.msra.mxu0 %v1577
    %2323 = vmatpush.msra.mxu0 %v1573
    %2324 = vmatmul.f32.gmra.mxu0 %v2050
    %v2325 = vpop.f32.mrf.mxu0
    %v2326 = vadd.f32 %v2303, %v2325
    %2327 = vmatmul.f32.gmra.mxu0 %v2072
    %v2328 = vpop.f32.mrf.mxu0
    %v2329 = vadd.f32 %v2306, %v2328
    %2330 = vdwg.mxu0
    %2331 = vmatpush.msra.mxu0 %v1697
    %2332 = vmatpush.msra.mxu0 %v1693
    %2333 = vmatpush.msra.mxu0 %v1689
    %2334 = vmatpush.msra.mxu0 %v1685
    %2335 = vmatpush.msra.mxu0 %v1681
    %2336 = vmatpush.msra.mxu0 %v1677
    %2337 = vmatpush.msra.mxu0 %v1673
    %2338 = vmatpush.msra.mxu0 %v1669
    %2339 = vmatpush.msra.mxu0 %v1665
    %2340 = vmatpush.msra.mxu0 %v1661
    %2341 = vmatpush.msra.mxu0 %v1657
    %2342 = vmatpush.msra.mxu0 %v1653
    %2343 = vmatpush.msra.mxu0 %v1649
    %2344 = vmatpush.msra.mxu0 %v1645
    %2345 = vmatpush.msra.mxu0 %v1641
    %2346 = vmatpush.msra.mxu0 %v1637
    %2347 = vmatmul.f32.gmra.mxu0 %v2053
    %v2348 = vpop.f32.mrf.mxu0
    %v2349 = vadd.f32 %v2326, %v2348
    %2350 = vmatmul.f32.gmra.mxu0 %v2074
    %v2351 = vpop.f32.mrf.mxu0
    %v2352 = vadd.f32 %v2329, %v2351
    %2353 = vdwg.mxu0
    %2354 = vmatpush.msra.mxu0 %v1761
    %2355 = vmatpush.msra.mxu0 %v1757
    %2356 = vmatpush.msra.mxu0 %v1753
    %2357 = vmatpush.msra.mxu0 %v1749
    %2358 = vmatpush.msra.mxu0 %v1745
    %2359 = vmatpush.msra.mxu0 %v1741
    %2360 = vmatpush.msra.mxu0 %v1737
    %2361 = vmatpush.msra.mxu0 %v1733
    %2362 = vmatpush.msra.mxu0 %v1729
    %2363 = vmatpush.msra.mxu0 %v1725
    %2364 = vmatpush.msra.mxu0 %v1721
    %2365 = vmatpush.msra.mxu0 %v1717
    %2366 = vmatpush.msra.mxu0 %v1713
    %2367 = vmatpush.msra.mxu0 %v1709
    %2368 = vmatpush.msra.mxu0 %v1705
    %2369 = vmatpush.msra.mxu0 %v1701
    %2370 = vmatmul.f32.gmra.mxu0 %v2056
    %v2371 = vpop.f32.mrf.mxu0
    %v2372 = vadd.f32 %v2349, %v2371
    %2373 = vmatmul.f32.gmra.mxu0 %v2076
    %v2374 = vpop.f32.mrf.mxu0
    %v2375 = vadd.f32 %v2352, %v2374
    %2376 = vdwg.mxu0
    %2377 = vmatpush.msra.mxu0 %v1825
    %2378 = vmatpush.msra.mxu0 %v1821
    %2379 = vmatpush.msra.mxu0 %v1817
    %2380 = vmatpush.msra.mxu0 %v1813
    %2381 = vmatpush.msra.mxu0 %v1809
    %2382 = vmatpush.msra.mxu0 %v1805
    %2383 = vmatpush.msra.mxu0 %v1801
    %2384 = vmatpush.msra.mxu0 %v1797
    %2385 = vmatpush.msra.mxu0 %v1793
    %2386 = vmatpush.msra.mxu0 %v1789
    %2387 = vmatpush.msra.mxu0 %v1785
    %2388 = vmatpush.msra.mxu0 %v1781
    %2389 = vmatpush.msra.mxu0 %v1777
    %2390 = vmatpush.msra.mxu0 %v1773
    %2391 = vmatpush.msra.mxu0 %v1769
    %2392 = vmatpush.msra.mxu0 %v1765
    %2393 = vmatmul.f32.gmra.mxu0 %v2059
    %v2394 = vpop.f32.mrf.mxu0
    %v2395 = vadd.f32 %v2372, %v2394
    %2396 = vmatmul.f32.gmra.mxu0 %v2078
    %v2397 = vpop.f32.mrf.mxu0
    %v2398 = vadd.f32 %v2375, %v2397
    %2399 = vdwg.mxu0
    %2400 = vmatpush.msra.mxu0 %v1889
    %2401 = vmatpush.msra.mxu0 %v1885
    %2402 = vmatpush.msra.mxu0 %v1881
    %2403 = vmatpush.msra.mxu0 %v1877
    %2404 = vmatpush.msra.mxu0 %v1873
    %2405 = vmatpush.msra.mxu0 %v1869
    %2406 = vmatpush.msra.mxu0 %v1865
    %2407 = vmatpush.msra.mxu0 %v1861
    %2408 = vmatpush.msra.mxu0 %v1857
    %2409 = vmatpush.msra.mxu0 %v1853
    %2410 = vmatpush.msra.mxu0 %v1849
    %2411 = vmatpush.msra.mxu0 %v1845
    %2412 = vmatpush.msra.mxu0 %v1841
    %2413 = vmatpush.msra.mxu0 %v1837
    %2414 = vmatpush.msra.mxu0 %v1833
    %2415 = vmatpush.msra.mxu0 %v1829
    %2416 = vmatmul.f32.gmra.mxu0 %v2062
    %v2417 = vpop.f32.mrf.mxu0
    %v2418 = vadd.f32 %v2395, %v2417
    %2419 = vmatmul.f32.gmra.mxu0 %v2080
    %v2420 = vpop.f32.mrf.mxu0
    %v2421 = vadd.f32 %v2398, %v2420
    %2422 = vdwg.mxu0
    %2423 = vmatpush.msra.mxu0 %v1953
    %2424 = vmatpush.msra.mxu0 %v1949
    %2425 = vmatpush.msra.mxu0 %v1945
    %2426 = vmatpush.msra.mxu0 %v1941
    %2427 = vmatpush.msra.mxu0 %v1937
    %2428 = vmatpush.msra.mxu0 %v1933
    %2429 = vmatpush.msra.mxu0 %v1929
    %2430 = vmatpush.msra.mxu0 %v1925
    %2431 = vmatpush.msra.mxu0 %v1921
    %2432 = vmatpush.msra.mxu0 %v1917
    %2433 = vmatpush.msra.mxu0 %v1913
    %2434 = vmatpush.msra.mxu0 %v1909
    %2435 = vmatpush.msra.mxu0 %v1905
    %2436 = vmatpush.msra.mxu0 %v1901
    %2437 = vmatpush.msra.mxu0 %v1897
    %2438 = vmatpush.msra.mxu0 %v1893
    %2439 = vmatmul.f32.gmra.mxu0 %v2065
    %v2440 = vpop.f32.mrf.mxu0
    %v2441 = vadd.f32 %v2418, %v2440
    %2442 = vmatmul.f32.gmra.mxu0 %v2082
    %v2443 = vpop.f32.mrf.mxu0
    %v2444 = vadd.f32 %v2421, %v2443
    %2445 = vdwg.mxu0
    %2446 = vmatpush.msra.mxu0 %v2017
    %2447 = vmatpush.msra.mxu0 %v2013
    %2448 = vmatpush.msra.mxu0 %v2009
    %2449 = vmatpush.msra.mxu0 %v2005
    %2450 = vmatpush.msra.mxu0 %v2001
    %2451 = vmatpush.msra.mxu0 %v1997
    %2452 = vmatpush.msra.mxu0 %v1993
    %2453 = vmatpush.msra.mxu0 %v1989
    %2454 = vmatpush.msra.mxu0 %v1985
    %2455 = vmatpush.msra.mxu0 %v1981
    %2456 = vmatpush.msra.mxu0 %v1977
    %2457 = vmatpush.msra.mxu0 %v1973
    %2458 = vmatpush.msra.mxu0 %v1969
    %2459 = vmatpush.msra.mxu0 %v1965
    %2460 = vmatpush.msra.mxu0 %v1961
    %2461 = vmatpush.msra.mxu0 %v1957
    %2462 = vmatmul.f32.gmra.mxu0 %v2068
    %v2463 = vpop.f32.mrf.mxu0
    %v2464 = vadd.f32 %v2441, %v2463
    %2465 = vmatmul.f32.gmra.mxu0 %v2084
    %v2466 = vpop.f32.mrf.mxu0
    %v2467 = vadd.f32 %v2444, %v2466
    %2468 = vdwg.mxu0
    %2469 = vmatpush.msra.mxu0 %v1570
    %2470 = vmatpush.msra.mxu0 %v1566
    %2471 = vmatpush.msra.mxu0 %v1562
    %2472 = vmatpush.msra.mxu0 %v1558
    %2473 = vmatpush.msra.mxu0 %v1554
    %2474 = vmatpush.msra.mxu0 %v1550
    %2475 = vmatpush.msra.mxu0 %v1546
    %2476 = vmatpush.msra.mxu0 %v1542
    %2477 = vmatpush.msra.mxu0 %v1538
    %2478 = vmatpush.msra.mxu0 %v1534
    %2479 = vmatpush.msra.mxu0 %v1530
    %2480 = vmatpush.msra.mxu0 %v1526
    %2481 = vmatpush.msra.mxu0 %v1522
    %2482 = vmatpush.msra.mxu0 %v1518
    %2483 = vmatpush.msra.mxu0 %v1514
    %2484 = vmatpush.msra.mxu0 %v1510
    %2485 = vmatmul.f32.gmra.mxu0 %v2047
    %v2486 = vpop.f32.mrf.mxu0
    %v2487 = vadd.f32 0.0, %v2486
    %2488 = vmatmul.f32.gmra.mxu0 %v2070
    %v2489 = vpop.f32.mrf.mxu0
    %v2490 = vadd.f32 0.0, %v2489
    %2491 = vdwg.mxu0
    %2492 = vmatpush.msra.mxu0 %v1634
    %2493 = vmatpush.msra.mxu0 %v1630
    %2494 = vmatpush.msra.mxu0 %v1626
    %2495 = vmatpush.msra.mxu0 %v1622
    %2496 = vmatpush.msra.mxu0 %v1618
    %2497 = vmatpush.msra.mxu0 %v1614
    %2498 = vmatpush.msra.mxu0 %v1610
    %2499 = vmatpush.msra.mxu0 %v1606
    %2500 = vmatpush.msra.mxu0 %v1602
    %2501 = vmatpush.msra.mxu0 %v1598
    %2502 = vmatpush.msra.mxu0 %v1594
    %2503 = vmatpush.msra.mxu0 %v1590
    %2504 = vmatpush.msra.mxu0 %v1586
    %2505 = vmatpush.msra.mxu0 %v1582
    %2506 = vmatpush.msra.mxu0 %v1578
    %2507 = vmatpush.msra.mxu0 %v1574
    %2508 = vmatmul.f32.gmra.mxu0 %v2050
    %v2509 = vpop.f32.mrf.mxu0
    %v2510 = vadd.f32 %v2487, %v2509
    %2511 = vmatmul.f32.gmra.mxu0 %v2072
    %v2512 = vpop.f32.mrf.mxu0
    %v2513 = vadd.f32 %v2490, %v2512
    %2514 = vdwg.mxu0
    %2515 = vmatpush.msra.mxu0 %v1698
    %2516 = vmatpush.msra.mxu0 %v1694
    %2517 = vmatpush.msra.mxu0 %v1690
    %2518 = vmatpush.msra.mxu0 %v1686
    %2519 = vmatpush.msra.mxu0 %v1682
    %2520 = vmatpush.msra.mxu0 %v1678
    %2521 = vmatpush.msra.mxu0 %v1674
    %2522 = vmatpush.msra.mxu0 %v1670
    %2523 = vmatpush.msra.mxu0 %v1666
    %2524 = vmatpush.msra.mxu0 %v1662
    %2525 = vmatpush.msra.mxu0 %v1658
    %2526 = vmatpush.msra.mxu0 %v1654
    %2527 = vmatpush.msra.mxu0 %v1650
    %2528 = vmatpush.msra.mxu0 %v1646
    %2529 = vmatpush.msra.mxu0 %v1642
    %2530 = vmatpush.msra.mxu0 %v1638
    %2531 = vmatmul.f32.gmra.mxu0 %v2053
    %v2532 = vpop.f32.mrf.mxu0
    %v2533 = vadd.f32 %v2510, %v2532
    %2534 = vmatmul.f32.gmra.mxu0 %v2074
    %v2535 = vpop.f32.mrf.mxu0
    %v2536 = vadd.f32 %v2513, %v2535
    %2537 = vdwg.mxu0
    %2538 = vmatpush.msra.mxu0 %v1762
    %2539 = vmatpush.msra.mxu0 %v1758
    %2540 = vmatpush.msra.mxu0 %v1754
    %2541 = vmatpush.msra.mxu0 %v1750
    %2542 = vmatpush.msra.mxu0 %v1746
    %2543 = vmatpush.msra.mxu0 %v1742
    %2544 = vmatpush.msra.mxu0 %v1738
    %2545 = vmatpush.msra.mxu0 %v1734
    %2546 = vmatpush.msra.mxu0 %v1730
    %2547 = vmatpush.msra.mxu0 %v1726
    %2548 = vmatpush.msra.mxu0 %v1722
    %2549 = vmatpush.msra.mxu0 %v1718
    %2550 = vmatpush.msra.mxu0 %v1714
    %2551 = vmatpush.msra.mxu0 %v1710
    %2552 = vmatpush.msra.mxu0 %v1706
    %2553 = vmatpush.msra.mxu0 %v1702
    %2554 = vmatmul.f32.gmra.mxu0 %v2056
    %v2555 = vpop.f32.mrf.mxu0
    %v2556 = vadd.f32 %v2533, %v2555
    %2557 = vmatmul.f32.gmra.mxu0 %v2076
    %v2558 = vpop.f32.mrf.mxu0
    %v2559 = vadd.f32 %v2536, %v2558
    %2560 = vdwg.mxu0
    %2561 = vmatpush.msra.mxu0 %v1826
    %2562 = vmatpush.msra.mxu0 %v1822
    %2563 = vmatpush.msra.mxu0 %v1818
    %2564 = vmatpush.msra.mxu0 %v1814
    %2565 = vmatpush.msra.mxu0 %v1810
    %2566 = vmatpush.msra.mxu0 %v1806
    %2567 = vmatpush.msra.mxu0 %v1802
    %2568 = vmatpush.msra.mxu0 %v1798
    %2569 = vmatpush.msra.mxu0 %v1794
    %2570 = vmatpush.msra.mxu0 %v1790
    %2571 = vmatpush.msra.mxu0 %v1786
    %2572 = vmatpush.msra.mxu0 %v1782
    %2573 = vmatpush.msra.mxu0 %v1778
    %2574 = vmatpush.msra.mxu0 %v1774
    %2575 = vmatpush.msra.mxu0 %v1770
    %2576 = vmatpush.msra.mxu0 %v1766
    %2577 = vmatmul.f32.gmra.mxu0 %v2059
    %v2578 = vpop.f32.mrf.mxu0
    %v2579 = vadd.f32 %v2556, %v2578
    %2580 = vmatmul.f32.gmra.mxu0 %v2078
    %v2581 = vpop.f32.mrf.mxu0
    %v2582 = vadd.f32 %v2559, %v2581
    %2583 = vdwg.mxu0
    %2584 = vmatpush.msra.mxu0 %v1890
    %2585 = vmatpush.msra.mxu0 %v1886
    %2586 = vmatpush.msra.mxu0 %v1882
    %2587 = vmatpush.msra.mxu0 %v1878
    %2588 = vmatpush.msra.mxu0 %v1874
    %2589 = vmatpush.msra.mxu0 %v1870
    %2590 = vmatpush.msra.mxu0 %v1866
    %2591 = vmatpush.msra.mxu0 %v1862
    %2592 = vmatpush.msra.mxu0 %v1858
    %2593 = vmatpush.msra.mxu0 %v1854
    %2594 = vmatpush.msra.mxu0 %v1850
    %2595 = vmatpush.msra.mxu0 %v1846
    %2596 = vmatpush.msra.mxu0 %v1842
    %2597 = vmatpush.msra.mxu0 %v1838
    %2598 = vmatpush.msra.mxu0 %v1834
    %2599 = vmatpush.msra.mxu0 %v1830
    %2600 = vmatmul.f32.gmra.mxu0 %v2062
    %v2601 = vpop.f32.mrf.mxu0
    %v2602 = vadd.f32 %v2579, %v2601
    %2603 = vmatmul.f32.gmra.mxu0 %v2080
    %v2604 = vpop.f32.mrf.mxu0
    %v2605 = vadd.f32 %v2582, %v2604
    %2606 = vdwg.mxu0
    %2607 = vmatpush.msra.mxu0 %v1954
    %2608 = vmatpush.msra.mxu0 %v1950
    %2609 = vmatpush.msra.mxu0 %v1946
    %2610 = vmatpush.msra.mxu0 %v1942
    %2611 = vmatpush.msra.mxu0 %v1938
    %2612 = vmatpush.msra.mxu0 %v1934
    %2613 = vmatpush.msra.mxu0 %v1930
    %2614 = vmatpush.msra.mxu0 %v1926
    %2615 = vmatpush.msra.mxu0 %v1922
    %2616 = vmatpush.msra.mxu0 %v1918
    %2617 = vmatpush.msra.mxu0 %v1914
    %2618 = vmatpush.msra.mxu0 %v1910
    %2619 = vmatpush.msra.mxu0 %v1906
    %2620 = vmatpush.msra.mxu0 %v1902
    %2621 = vmatpush.msra.mxu0 %v1898
    %2622 = vmatpush.msra.mxu0 %v1894
    %2623 = vmatmul.f32.gmra.mxu0 %v2065
    %v2624 = vpop.f32.mrf.mxu0
    %v2625 = vadd.f32 %v2602, %v2624
    %2626 = vmatmul.f32.gmra.mxu0 %v2082
    %v2627 = vpop.f32.mrf.mxu0
    %v2628 = vadd.f32 %v2605, %v2627
    %2629 = vdwg.mxu0
    %2630 = vmatpush.msra.mxu0 %v2018
    %2631 = vmatpush.msra.mxu0 %v2014
    %2632 = vmatpush.msra.mxu0 %v2010
    %2633 = vmatpush.msra.mxu0 %v2006
    %2634 = vmatpush.msra.mxu0 %v2002
    %2635 = vmatpush.msra.mxu0 %v1998
    %2636 = vmatpush.msra.mxu0 %v1994
    %2637 = vmatpush.msra.mxu0 %v1990
    %2638 = vmatpush.msra.mxu0 %v1986
    %2639 = vmatpush.msra.mxu0 %v1982
    %2640 = vmatpush.msra.mxu0 %v1978
    %2641 = vmatpush.msra.mxu0 %v1974
    %2642 = vmatpush.msra.mxu0 %v1970
    %2643 = vmatpush.msra.mxu0 %v1966
    %2644 = vmatpush.msra.mxu0 %v1962
    %2645 = vmatpush.msra.mxu0 %v1958
    %2646 = vmatmul.f32.gmra.mxu0 %v2068
    %v2647 = vpop.f32.mrf.mxu0
    %v2648 = vadd.f32 %v2625, %v2647
    %2649 = vmatmul.f32.gmra.mxu0 %v2084
    %v2650 = vpop.f32.mrf.mxu0
    %v2651 = vadd.f32 %v2628, %v2650
    %2652 = vdwg.mxu0
    %2653 = vmatpush.msra.mxu0 %v1571
    %2654 = vmatpush.msra.mxu0 %v1567
    %2655 = vmatpush.msra.mxu0 %v1563
    %2656 = vmatpush.msra.mxu0 %v1559
    %2657 = vmatpush.msra.mxu0 %v1555
    %2658 = vmatpush.msra.mxu0 %v1551
    %2659 = vmatpush.msra.mxu0 %v1547
    %2660 = vmatpush.msra.mxu0 %v1543
    %2661 = vmatpush.msra.mxu0 %v1539
    %2662 = vmatpush.msra.mxu0 %v1535
    %2663 = vmatpush.msra.mxu0 %v1531
    %2664 = vmatpush.msra.mxu0 %v1527
    %2665 = vmatpush.msra.mxu0 %v1523
    %2666 = vmatpush.msra.mxu0 %v1519
    %2667 = vmatpush.msra.mxu0 %v1515
    %2668 = vmatpush.msra.mxu0 %v1511
    %2669 = vmatmul.f32.gmra.mxu0 %v2047
    %v2670 = vpop.f32.mrf.mxu0
    %v2671 = vadd.f32 0.0, %v2670
    %2672 = vmatmul.f32.gmra.mxu0 %v2070
    %v2673 = vpop.f32.mrf.mxu0
    %v2674 = vadd.f32 0.0, %v2673
    %2675 = vdwg.mxu0
    %2676 = vmatpush.msra.mxu0 %v1635
    %2677 = vmatpush.msra.mxu0 %v1631
    %2678 = vmatpush.msra.mxu0 %v1627
    %2679 = vmatpush.msra.mxu0 %v1623
    %2680 = vmatpush.msra.mxu0 %v1619
    %2681 = vmatpush.msra.mxu0 %v1615
    %2682 = vmatpush.msra.mxu0 %v1611
    %2683 = vmatpush.msra.mxu0 %v1607
    %2684 = vmatpush.msra.mxu0 %v1603
    %2685 = vmatpush.msra.mxu0 %v1599
    %2686 = vmatpush.msra.mxu0 %v1595
    %2687 = vmatpush.msra.mxu0 %v1591
    %2688 = vmatpush.msra.mxu0 %v1587
    %2689 = vmatpush.msra.mxu0 %v1583
    %2690 = vmatpush.msra.mxu0 %v1579
    %2691 = vmatpush.msra.mxu0 %v1575
    %2692 = vmatmul.f32.gmra.mxu0 %v2050
    %v2693 = vpop.f32.mrf.mxu0
    %v2694 = vadd.f32 %v2671, %v2693
    %2695 = vmatmul.f32.gmra.mxu0 %v2072
    %v2696 = vpop.f32.mrf.mxu0
    %v2697 = vadd.f32 %v2674, %v2696
    %2698 = vdwg.mxu0
    %2699 = vmatpush.msra.mxu0 %v1699
    %2700 = vmatpush.msra.mxu0 %v1695
    %2701 = vmatpush.msra.mxu0 %v1691
    %2702 = vmatpush.msra.mxu0 %v1687
    %2703 = vmatpush.msra.mxu0 %v1683
    %2704 = vmatpush.msra.mxu0 %v1679
    %2705 = vmatpush.msra.mxu0 %v1675
    %2706 = vmatpush.msra.mxu0 %v1671
    %2707 = vmatpush.msra.mxu0 %v1667
    %2708 = vmatpush.msra.mxu0 %v1663
    %2709 = vmatpush.msra.mxu0 %v1659
    %2710 = vmatpush.msra.mxu0 %v1655
    %2711 = vmatpush.msra.mxu0 %v1651
    %2712 = vmatpush.msra.mxu0 %v1647
    %2713 = vmatpush.msra.mxu0 %v1643
    %2714 = vmatpush.msra.mxu0 %v1639
    %2715 = vmatmul.f32.gmra.mxu0 %v2053
    %v2716 = vpop.f32.mrf.mxu0
    %v2717 = vadd.f32 %v2694, %v2716
    %2718 = vmatmul.f32.gmra.mxu0 %v2074
    %v2719 = vpop.f32.mrf.mxu0
    %v2720 = vadd.f32 %v2697, %v2719
    %2721 = vdwg.mxu0
    %2722 = vmatpush.msra.mxu0 %v1763
    %2723 = vmatpush.msra.mxu0 %v1759
    %2724 = vmatpush.msra.mxu0 %v1755
    %2725 = vmatpush.msra.mxu0 %v1751
    %2726 = vmatpush.msra.mxu0 %v1747
    %2727 = vmatpush.msra.mxu0 %v1743
    %2728 = vmatpush.msra.mxu0 %v1739
    %2729 = vmatpush.msra.mxu0 %v1735
    %2730 = vmatpush.msra.mxu0 %v1731
    %2731 = vmatpush.msra.mxu0 %v1727
    %2732 = vmatpush.msra.mxu0 %v1723
    %2733 = vmatpush.msra.mxu0 %v1719
    %2734 = vmatpush.msra.mxu0 %v1715
    %2735 = vmatpush.msra.mxu0 %v1711
    %2736 = vmatpush.msra.mxu0 %v1707
    %2737 = vmatpush.msra.mxu0 %v1703
    %2738 = vmatmul.f32.gmra.mxu0 %v2056
    %v2739 = vpop.f32.mrf.mxu0
    %v2740 = vadd.f32 %v2717, %v2739
    %2741 = vmatmul.f32.gmra.mxu0 %v2076
    %v2742 = vpop.f32.mrf.mxu0
    %v2743 = vadd.f32 %v2720, %v2742
    %2744 = vdwg.mxu0
    %2745 = vmatpush.msra.mxu0 %v1827
    %2746 = vmatpush.msra.mxu0 %v1823
    %2747 = vmatpush.msra.mxu0 %v1819
    %2748 = vmatpush.msra.mxu0 %v1815
    %2749 = vmatpush.msra.mxu0 %v1811
    %2750 = vmatpush.msra.mxu0 %v1807
    %2751 = vmatpush.msra.mxu0 %v1803
    %2752 = vmatpush.msra.mxu0 %v1799
    %2753 = vmatpush.msra.mxu0 %v1795
    %2754 = vmatpush.msra.mxu0 %v1791
    %2755 = vmatpush.msra.mxu0 %v1787
    %2756 = vmatpush.msra.mxu0 %v1783
    %2757 = vmatpush.msra.mxu0 %v1779
    %2758 = vmatpush.msra.mxu0 %v1775
    %2759 = vmatpush.msra.mxu0 %v1771
    %2760 = vmatpush.msra.mxu0 %v1767
    %2761 = vmatmul.f32.gmra.mxu0 %v2059
    %v2762 = vpop.f32.mrf.mxu0
    %v2763 = vadd.f32 %v2740, %v2762
    %2764 = vmatmul.f32.gmra.mxu0 %v2078
    %v2765 = vpop.f32.mrf.mxu0
    %v2766 = vadd.f32 %v2743, %v2765
    %2767 = vdwg.mxu0
    %2768 = vmatpush.msra.mxu0 %v1891
    %2769 = vmatpush.msra.mxu0 %v1887
    %2770 = vmatpush.msra.mxu0 %v1883
    %2771 = vmatpush.msra.mxu0 %v1879
    %2772 = vmatpush.msra.mxu0 %v1875
    %2773 = vmatpush.msra.mxu0 %v1871
    %2774 = vmatpush.msra.mxu0 %v1867
    %2775 = vmatpush.msra.mxu0 %v1863
    %2776 = vmatpush.msra.mxu0 %v1859
    %2777 = vmatpush.msra.mxu0 %v1855
    %2778 = vmatpush.msra.mxu0 %v1851
    %2779 = vmatpush.msra.mxu0 %v1847
    %2780 = vmatpush.msra.mxu0 %v1843
    %2781 = vmatpush.msra.mxu0 %v1839
    %2782 = vmatpush.msra.mxu0 %v1835
    %2783 = vmatpush.msra.mxu0 %v1831
    %2784 = vmatmul.f32.gmra.mxu0 %v2062
    %v2785 = vpop.f32.mrf.mxu0
    %v2786 = vadd.f32 %v2763, %v2785
    %2787 = vmatmul.f32.gmra.mxu0 %v2080
    %v2788 = vpop.f32.mrf.mxu0
    %v2789 = vadd.f32 %v2766, %v2788
    %2790 = vdwg.mxu0
    %2791 = vmatpush.msra.mxu0 %v1955
    %2792 = vmatpush.msra.mxu0 %v1951
    %2793 = vmatpush.msra.mxu0 %v1947
    %2794 = vmatpush.msra.mxu0 %v1943
    %2795 = vmatpush.msra.mxu0 %v1939
    %2796 = vmatpush.msra.mxu0 %v1935
    %2797 = vmatpush.msra.mxu0 %v1931
    %2798 = vmatpush.msra.mxu0 %v1927
    %2799 = vmatpush.msra.mxu0 %v1923
    %2800 = vmatpush.msra.mxu0 %v1919
    %2801 = vmatpush.msra.mxu0 %v1915
    %2802 = vmatpush.msra.mxu0 %v1911
    %2803 = vmatpush.msra.mxu0 %v1907
    %2804 = vmatpush.msra.mxu0 %v1903
    %2805 = vmatpush.msra.mxu0 %v1899
    %2806 = vmatpush.msra.mxu0 %v1895
    %2807 = vmatmul.f32.gmra.mxu0 %v2065
    %v2808 = vpop.f32.mrf.mxu0
    %v2809 = vadd.f32 %v2786, %v2808
    %2810 = vmatmul.f32.gmra.mxu0 %v2082
    %v2811 = vpop.f32.mrf.mxu0
    %v2812 = vadd.f32 %v2789, %v2811
    %2813 = vdwg.mxu0
    %2814 = vmatpush.msra.mxu0 %v2019
    %2815 = vmatpush.msra.mxu0 %v2015
    %2816 = vmatpush.msra.mxu0 %v2011
    %2817 = vmatpush.msra.mxu0 %v2007
    %2818 = vmatpush.msra.mxu0 %v2003
    %2819 = vmatpush.msra.mxu0 %v1999
    %2820 = vmatpush.msra.mxu0 %v1995
    %2821 = vmatpush.msra.mxu0 %v1991
    %2822 = vmatpush.msra.mxu0 %v1987
    %2823 = vmatpush.msra.mxu0 %v1983
    %2824 = vmatpush.msra.mxu0 %v1979
    %2825 = vmatpush.msra.mxu0 %v1975
    %2826 = vmatpush.msra.mxu0 %v1971
    %2827 = vmatpush.msra.mxu0 %v1967
    %2828 = vmatpush.msra.mxu0 %v1963
    %2829 = vmatpush.msra.mxu0 %v1959
    %2830 = vmatmul.f32.gmra.mxu0 %v2068
    %v2831 = vpop.f32.mrf.mxu0
    %v2832 = vadd.f32 %v2809, %v2831
    %2833 = vmatmul.f32.gmra.mxu0 %v2084
    %v2834 = vpop.f32.mrf.mxu0
    %v2835 = vadd.f32 %v2812, %v2834
    %2836 = vdwg.mxu0
    %2837 = vmatpush.msra.mxu0 %v1031
    %2838 = vmatpush.msra.mxu0 %v1027
    %2839 = vmatpush.msra.mxu0 %v1023
    %2840 = vmatpush.msra.mxu0 %v1019
    %2841 = vmatpush.msra.mxu0 %v1015
    %2842 = vmatpush.msra.mxu0 %v1011
    %2843 = vmatpush.msra.mxu0 %v1007
    %2844 = vmatpush.msra.mxu0 %v1003
    %2845 = vmatpush.msra.mxu0 %v999
    %2846 = vmatpush.msra.mxu0 %v995
    %2847 = vmatpush.msra.mxu0 %v991
    %2848 = vmatpush.msra.mxu0 %v987
    %2849 = vmatpush.msra.mxu0 %v983
    %2850 = vmatpush.msra.mxu0 %v979
    %2851 = vmatpush.msra.mxu0 %v975
    %2852 = vmatpush.msra.mxu0 %v971
    %2853 = vmatmul.f32.gmra.mxu0 %v955
    %v2854 = vpop.f32.mrf.mxu0
    %v2855 = vadd.f32 %v2280, %v2854
    %2856 = vmatmul.f32.gmra.mxu0 %v963
    %v2857 = vpop.f32.mrf.mxu0
    %v2858 = vadd.f32 %v2283, %v2857
    %2859 = vdwg.mxu0
    %2860 = vmatpush.msra.mxu0 %v1095
    %2861 = vmatpush.msra.mxu0 %v1091
    %2862 = vmatpush.msra.mxu0 %v1087
    %2863 = vmatpush.msra.mxu0 %v1083
    %2864 = vmatpush.msra.mxu0 %v1079
    %2865 = vmatpush.msra.mxu0 %v1075
    %2866 = vmatpush.msra.mxu0 %v1071
    %2867 = vmatpush.msra.mxu0 %v1067
    %2868 = vmatpush.msra.mxu0 %v1063
    %2869 = vmatpush.msra.mxu0 %v1059
    %2870 = vmatpush.msra.mxu0 %v1055
    %2871 = vmatpush.msra.mxu0 %v1051
    %2872 = vmatpush.msra.mxu0 %v1047
    %2873 = vmatpush.msra.mxu0 %v1043
    %2874 = vmatpush.msra.mxu0 %v1039
    %2875 = vmatpush.msra.mxu0 %v1035
    %2876 = vmatmul.f32.gmra.mxu0 %v956
    %v2877 = vpop.f32.mrf.mxu0
    %v2878 = vadd.f32 %v2855, %v2877
    %2879 = vmatmul.f32.gmra.mxu0 %v964
    %v2880 = vpop.f32.mrf.mxu0
    %v2881 = vadd.f32 %v2858, %v2880
    %2882 = vdwg.mxu0
    %2883 = vmatpush.msra.mxu0 %v1159
    %2884 = vmatpush.msra.mxu0 %v1155
    %2885 = vmatpush.msra.mxu0 %v1151
    %2886 = vmatpush.msra.mxu0 %v1147
    %2887 = vmatpush.msra.mxu0 %v1143
    %2888 = vmatpush.msra.mxu0 %v1139
    %2889 = vmatpush.msra.mxu0 %v1135
    %2890 = vmatpush.msra.mxu0 %v1131
    %2891 = vmatpush.msra.mxu0 %v1127
    %2892 = vmatpush.msra.mxu0 %v1123
    %2893 = vmatpush.msra.mxu0 %v1119
    %2894 = vmatpush.msra.mxu0 %v1115
    %2895 = vmatpush.msra.mxu0 %v1111
    %2896 = vmatpush.msra.mxu0 %v1107
    %2897 = vmatpush.msra.mxu0 %v1103
    %2898 = vmatpush.msra.mxu0 %v1099
    %2899 = vmatmul.f32.gmra.mxu0 %v957
    %v2900 = vpop.f32.mrf.mxu0
    %v2901 = vadd.f32 %v2878, %v2900
    %2902 = vmatmul.f32.gmra.mxu0 %v965
    %v2903 = vpop.f32.mrf.mxu0
    %v2904 = vadd.f32 %v2881, %v2903
    %2905 = vdwg.mxu0
    %2906 = vmatpush.msra.mxu0 %v1223
    %2907 = vmatpush.msra.mxu0 %v1219
    %2908 = vmatpush.msra.mxu0 %v1215
    %2909 = vmatpush.msra.mxu0 %v1211
    %2910 = vmatpush.msra.mxu0 %v1207
    %2911 = vmatpush.msra.mxu0 %v1203
    %2912 = vmatpush.msra.mxu0 %v1199
    %2913 = vmatpush.msra.mxu0 %v1195
    %2914 = vmatpush.msra.mxu0 %v1191
    %2915 = vmatpush.msra.mxu0 %v1187
    %2916 = vmatpush.msra.mxu0 %v1183
    %2917 = vmatpush.msra.mxu0 %v1179
    %2918 = vmatpush.msra.mxu0 %v1175
    %2919 = vmatpush.msra.mxu0 %v1171
    %2920 = vmatpush.msra.mxu0 %v1167
    %2921 = vmatpush.msra.mxu0 %v1163
    %2922 = vmatmul.f32.gmra.mxu0 %v958
    %v2923 = vpop.f32.mrf.mxu0
    %v2924 = vadd.f32 %v2901, %v2923
    %2925 = vmatmul.f32.gmra.mxu0 %v966
    %v2926 = vpop.f32.mrf.mxu0
    %v2927 = vadd.f32 %v2904, %v2926
    %2928 = vdwg.mxu0
    %2929 = vmatpush.msra.mxu0 %v1287
    %2930 = vmatpush.msra.mxu0 %v1283
    %2931 = vmatpush.msra.mxu0 %v1279
    %2932 = vmatpush.msra.mxu0 %v1275
    %2933 = vmatpush.msra.mxu0 %v1271
    %2934 = vmatpush.msra.mxu0 %v1267
    %2935 = vmatpush.msra.mxu0 %v1263
    %2936 = vmatpush.msra.mxu0 %v1259
    %2937 = vmatpush.msra.mxu0 %v1255
    %2938 = vmatpush.msra.mxu0 %v1251
    %2939 = vmatpush.msra.mxu0 %v1247
    %2940 = vmatpush.msra.mxu0 %v1243
    %2941 = vmatpush.msra.mxu0 %v1239
    %2942 = vmatpush.msra.mxu0 %v1235
    %2943 = vmatpush.msra.mxu0 %v1231
    %2944 = vmatpush.msra.mxu0 %v1227
    %2945 = vmatmul.f32.gmra.mxu0 %v959
    %v2946 = vpop.f32.mrf.mxu0
    %v2947 = vadd.f32 %v2924, %v2946
    %2948 = vmatmul.f32.gmra.mxu0 %v967
    %v2949 = vpop.f32.mrf.mxu0
    %v2950 = vadd.f32 %v2927, %v2949
    %2951 = vdwg.mxu0
    %2952 = vmatpush.msra.mxu0 %v1351
    %2953 = vmatpush.msra.mxu0 %v1347
    %2954 = vmatpush.msra.mxu0 %v1343
    %2955 = vmatpush.msra.mxu0 %v1339
    %2956 = vmatpush.msra.mxu0 %v1335
    %2957 = vmatpush.msra.mxu0 %v1331
    %2958 = vmatpush.msra.mxu0 %v1327
    %2959 = vmatpush.msra.mxu0 %v1323
    %2960 = vmatpush.msra.mxu0 %v1319
    %2961 = vmatpush.msra.mxu0 %v1315
    %2962 = vmatpush.msra.mxu0 %v1311
    %2963 = vmatpush.msra.mxu0 %v1307
    %2964 = vmatpush.msra.mxu0 %v1303
    %2965 = vmatpush.msra.mxu0 %v1299
    %2966 = vmatpush.msra.mxu0 %v1295
    %2967 = vmatpush.msra.mxu0 %v1291
    %2968 = vmatmul.f32.gmra.mxu0 %v960
    %v2969 = vpop.f32.mrf.mxu0
    %v2970 = vadd.f32 %v2947, %v2969
    %2971 = vmatmul.f32.gmra.mxu0 %v968
    %v2972 = vpop.f32.mrf.mxu0
    %v2973 = vadd.f32 %v2950, %v2972
    %2974 = vdwg.mxu0
    %2975 = vmatpush.msra.mxu0 %v1415
    %2976 = vmatpush.msra.mxu0 %v1411
    %2977 = vmatpush.msra.mxu0 %v1407
    %2978 = vmatpush.msra.mxu0 %v1403
    %2979 = vmatpush.msra.mxu0 %v1399
    %2980 = vmatpush.msra.mxu0 %v1395
    %2981 = vmatpush.msra.mxu0 %v1391
    %2982 = vmatpush.msra.mxu0 %v1387
    %2983 = vmatpush.msra.mxu0 %v1383
    %2984 = vmatpush.msra.mxu0 %v1379
    %2985 = vmatpush.msra.mxu0 %v1375
    %2986 = vmatpush.msra.mxu0 %v1371
    %2987 = vmatpush.msra.mxu0 %v1367
    %2988 = vmatpush.msra.mxu0 %v1363
    %2989 = vmatpush.msra.mxu0 %v1359
    %2990 = vmatpush.msra.mxu0 %v1355
    %2991 = vmatmul.f32.gmra.mxu0 %v961
    %v2992 = vpop.f32.mrf.mxu0
    %v2993 = vadd.f32 %v2970, %v2992
    %2994 = vmatmul.f32.gmra.mxu0 %v969
    %v2995 = vpop.f32.mrf.mxu0
    %v2996 = vadd.f32 %v2973, %v2995
    %2997 = vdwg.mxu0
    %2998 = vmatpush.msra.mxu0 %v1479
    %2999 = vmatpush.msra.mxu0 %v1475
    %3000 = vmatpush.msra.mxu0 %v1471
    %3001 = vmatpush.msra.mxu0 %v1467
    %3002 = vmatpush.msra.mxu0 %v1463
    %3003 = vmatpush.msra.mxu0 %v1459
    %3004 = vmatpush.msra.mxu0 %v1455
    %3005 = vmatpush.msra.mxu0 %v1451
    %3006 = vmatpush.msra.mxu0 %v1447
    %3007 = vmatpush.msra.mxu0 %v1443
    %3008 = vmatpush.msra.mxu0 %v1439
    %3009 = vmatpush.msra.mxu0 %v1435
    %3010 = vmatpush.msra.mxu0 %v1431
    %3011 = vmatpush.msra.mxu0 %v1427
    %3012 = vmatpush.msra.mxu0 %v1423
    %3013 = vmatpush.msra.mxu0 %v1419
    %3014 = vmatmul.f32.gmra.mxu0 %v962
    %v3015 = vpop.f32.mrf.mxu0
    %v3016 = vadd.f32 %v2993, %v3015
    %3017 = vmatmul.f32.gmra.mxu0 %v970
    %v3018 = vpop.f32.mrf.mxu0
    %v3019 = vadd.f32 %v2996, %v3018
    %3020 = vdwg.mxu0
    %3021 = vmatpush.msra.mxu0 %v1032
    %3022 = vmatpush.msra.mxu0 %v1028
    %3023 = vmatpush.msra.mxu0 %v1024
    %3024 = vmatpush.msra.mxu0 %v1020
    %3025 = vmatpush.msra.mxu0 %v1016
    %3026 = vmatpush.msra.mxu0 %v1012
    %3027 = vmatpush.msra.mxu0 %v1008
    %3028 = vmatpush.msra.mxu0 %v1004
    %3029 = vmatpush.msra.mxu0 %v1000
    %3030 = vmatpush.msra.mxu0 %v996
    %3031 = vmatpush.msra.mxu0 %v992
    %3032 = vmatpush.msra.mxu0 %v988
    %3033 = vmatpush.msra.mxu0 %v984
    %3034 = vmatpush.msra.mxu0 %v980
    %3035 = vmatpush.msra.mxu0 %v976
    %3036 = vmatpush.msra.mxu0 %v972
    %3037 = vmatmul.f32.gmra.mxu0 %v955
    %v3038 = vpop.f32.mrf.mxu0
    %v3039 = vadd.f32 %v2464, %v3038
    %3040 = vmatmul.f32.gmra.mxu0 %v963
    %v3041 = vpop.f32.mrf.mxu0
    %v3042 = vadd.f32 %v2467, %v3041
    %3043 = vdwg.mxu0
    %3044 = vmatpush.msra.mxu0 %v1096
    %3045 = vmatpush.msra.mxu0 %v1092
    %3046 = vmatpush.msra.mxu0 %v1088
    %3047 = vmatpush.msra.mxu0 %v1084
    %3048 = vmatpush.msra.mxu0 %v1080
    %3049 = vmatpush.msra.mxu0 %v1076
    %3050 = vmatpush.msra.mxu0 %v1072
    %3051 = vmatpush.msra.mxu0 %v1068
    %3052 = vmatpush.msra.mxu0 %v1064
    %3053 = vmatpush.msra.mxu0 %v1060
    %3054 = vmatpush.msra.mxu0 %v1056
    %3055 = vmatpush.msra.mxu0 %v1052
    %3056 = vmatpush.msra.mxu0 %v1048
    %3057 = vmatpush.msra.mxu0 %v1044
    %3058 = vmatpush.msra.mxu0 %v1040
    %3059 = vmatpush.msra.mxu0 %v1036
    %3060 = vmatmul.f32.gmra.mxu0 %v956
    %v3061 = vpop.f32.mrf.mxu0
    %v3062 = vadd.f32 %v3039, %v3061
    %3063 = vmatmul.f32.gmra.mxu0 %v964
    %v3064 = vpop.f32.mrf.mxu0
    %v3065 = vadd.f32 %v3042, %v3064
    %3066 = vdwg.mxu0
    %3067 = vmatpush.msra.mxu0 %v1160
    %3068 = vmatpush.msra.mxu0 %v1156
    %3069 = vmatpush.msra.mxu0 %v1152
    %3070 = vmatpush.msra.mxu0 %v1148
    %3071 = vmatpush.msra.mxu0 %v1144
    %3072 = vmatpush.msra.mxu0 %v1140
    %3073 = vmatpush.msra.mxu0 %v1136
    %3074 = vmatpush.msra.mxu0 %v1132
    %3075 = vmatpush.msra.mxu0 %v1128
    %3076 = vmatpush.msra.mxu0 %v1124
    %3077 = vmatpush.msra.mxu0 %v1120
    %3078 = vmatpush.msra.mxu0 %v1116
    %3079 = vmatpush.msra.mxu0 %v1112
    %3080 = vmatpush.msra.mxu0 %v1108
    %3081 = vmatpush.msra.mxu0 %v1104
    %3082 = vmatpush.msra.mxu0 %v1100
    %3083 = vmatmul.f32.gmra.mxu0 %v957
    %v3084 = vpop.f32.mrf.mxu0
    %v3085 = vadd.f32 %v3062, %v3084
    %3086 = vmatmul.f32.gmra.mxu0 %v965
    %v3087 = vpop.f32.mrf.mxu0
    %v3088 = vadd.f32 %v3065, %v3087
    %3089 = vdwg.mxu0
    %3090 = vmatpush.msra.mxu0 %v1224
    %3091 = vmatpush.msra.mxu0 %v1220
    %3092 = vmatpush.msra.mxu0 %v1216
    %3093 = vmatpush.msra.mxu0 %v1212
    %3094 = vmatpush.msra.mxu0 %v1208
    %3095 = vmatpush.msra.mxu0 %v1204
    %3096 = vmatpush.msra.mxu0 %v1200
    %3097 = vmatpush.msra.mxu0 %v1196
    %3098 = vmatpush.msra.mxu0 %v1192
    %3099 = vmatpush.msra.mxu0 %v1188
    %3100 = vmatpush.msra.mxu0 %v1184
    %3101 = vmatpush.msra.mxu0 %v1180
    %3102 = vmatpush.msra.mxu0 %v1176
    %3103 = vmatpush.msra.mxu0 %v1172
    %3104 = vmatpush.msra.mxu0 %v1168
    %3105 = vmatpush.msra.mxu0 %v1164
    %3106 = vmatmul.f32.gmra.mxu0 %v958
    %v3107 = vpop.f32.mrf.mxu0
    %v3108 = vadd.f32 %v3085, %v3107
    %3109 = vmatmul.f32.gmra.mxu0 %v966
    %v3110 = vpop.f32.mrf.mxu0
    %v3111 = vadd.f32 %v3088, %v3110
    %3112 = vdwg.mxu0
    %3113 = vmatpush.msra.mxu0 %v1288
    %3114 = vmatpush.msra.mxu0 %v1284
    %3115 = vmatpush.msra.mxu0 %v1280
    %3116 = vmatpush.msra.mxu0 %v1276
    %3117 = vmatpush.msra.mxu0 %v1272
    %3118 = vmatpush.msra.mxu0 %v1268
    %3119 = vmatpush.msra.mxu0 %v1264
    %3120 = vmatpush.msra.mxu0 %v1260
    %3121 = vmatpush.msra.mxu0 %v1256
    %3122 = vmatpush.msra.mxu0 %v1252
    %3123 = vmatpush.msra.mxu0 %v1248
    %3124 = vmatpush.msra.mxu0 %v1244
    %3125 = vmatpush.msra.mxu0 %v1240
    %3126 = vmatpush.msra.mxu0 %v1236
    %3127 = vmatpush.msra.mxu0 %v1232
    %3128 = vmatpush.msra.mxu0 %v1228
    %3129 = vmatmul.f32.gmra.mxu0 %v959
    %v3130 = vpop.f32.mrf.mxu0
    %v3131 = vadd.f32 %v3108, %v3130
    %3132 = vmatmul.f32.gmra.mxu0 %v967
    %v3133 = vpop.f32.mrf.mxu0
    %v3134 = vadd.f32 %v3111, %v3133
    %3135 = vdwg.mxu0
    %3136 = vmatpush.msra.mxu0 %v1352
    %3137 = vmatpush.msra.mxu0 %v1348
    %3138 = vmatpush.msra.mxu0 %v1344
    %3139 = vmatpush.msra.mxu0 %v1340
    %3140 = vmatpush.msra.mxu0 %v1336
    %3141 = vmatpush.msra.mxu0 %v1332
    %3142 = vmatpush.msra.mxu0 %v1328
    %3143 = vmatpush.msra.mxu0 %v1324
    %3144 = vmatpush.msra.mxu0 %v1320
    %3145 = vmatpush.msra.mxu0 %v1316
    %3146 = vmatpush.msra.mxu0 %v1312
    %3147 = vmatpush.msra.mxu0 %v1308
    %3148 = vmatpush.msra.mxu0 %v1304
    %3149 = vmatpush.msra.mxu0 %v1300
    %3150 = vmatpush.msra.mxu0 %v1296
    %3151 = vmatpush.msra.mxu0 %v1292
    %3152 = vmatmul.f32.gmra.mxu0 %v960
    %v3153 = vpop.f32.mrf.mxu0
    %v3154 = vadd.f32 %v3131, %v3153
    %3155 = vmatmul.f32.gmra.mxu0 %v968
    %v3156 = vpop.f32.mrf.mxu0
    %v3157 = vadd.f32 %v3134, %v3156
    %3158 = vdwg.mxu0
    %3159 = vmatpush.msra.mxu0 %v1416
    %3160 = vmatpush.msra.mxu0 %v1412
    %3161 = vmatpush.msra.mxu0 %v1408
    %3162 = vmatpush.msra.mxu0 %v1404
    %3163 = vmatpush.msra.mxu0 %v1400
    %3164 = vmatpush.msra.mxu0 %v1396
    %3165 = vmatpush.msra.mxu0 %v1392
    %3166 = vmatpush.msra.mxu0 %v1388
    %3167 = vmatpush.msra.mxu0 %v1384
    %3168 = vmatpush.msra.mxu0 %v1380
    %3169 = vmatpush.msra.mxu0 %v1376
    %3170 = vmatpush.msra.mxu0 %v1372
    %3171 = vmatpush.msra.mxu0 %v1368
    %3172 = vmatpush.msra.mxu0 %v1364
    %3173 = vmatpush.msra.mxu0 %v1360
    %3174 = vmatpush.msra.mxu0 %v1356
    %3175 = vmatmul.f32.gmra.mxu0 %v961
    %v3176 = vpop.f32.mrf.mxu0
    %v3177 = vadd.f32 %v3154, %v3176
    %3178 = vmatmul.f32.gmra.mxu0 %v969
    %v3179 = vpop.f32.mrf.mxu0
    %v3180 = vadd.f32 %v3157, %v3179
    %3181 = vdwg.mxu0
    %3182 = vmatpush.msra.mxu0 %v1480
    %3183 = vmatpush.msra.mxu0 %v1476
    %3184 = vmatpush.msra.mxu0 %v1472
    %3185 = vmatpush.msra.mxu0 %v1468
    %3186 = vmatpush.msra.mxu0 %v1464
    %3187 = vmatpush.msra.mxu0 %v1460
    %3188 = vmatpush.msra.mxu0 %v1456
    %3189 = vmatpush.msra.mxu0 %v1452
    %3190 = vmatpush.msra.mxu0 %v1448
    %3191 = vmatpush.msra.mxu0 %v1444
    %3192 = vmatpush.msra.mxu0 %v1440
    %3193 = vmatpush.msra.mxu0 %v1436
    %3194 = vmatpush.msra.mxu0 %v1432
    %3195 = vmatpush.msra.mxu0 %v1428
    %3196 = vmatpush.msra.mxu0 %v1424
    %3197 = vmatpush.msra.mxu0 %v1420
    %3198 = vmatmul.f32.gmra.mxu0 %v962
    %v3199 = vpop.f32.mrf.mxu0
    %v3200 = vadd.f32 %v3177, %v3199
    %3201 = vmatmul.f32.gmra.mxu0 %v970
    %v3202 = vpop.f32.mrf.mxu0
    %v3203 = vadd.f32 %v3180, %v3202
    %3204 = vdwg.mxu0
    %3205 = vmatpush.msra.mxu0 %v1033
    %3206 = vmatpush.msra.mxu0 %v1029
    %3207 = vmatpush.msra.mxu0 %v1025
    %3208 = vmatpush.msra.mxu0 %v1021
    %3209 = vmatpush.msra.mxu0 %v1017
    %3210 = vmatpush.msra.mxu0 %v1013
    %3211 = vmatpush.msra.mxu0 %v1009
    %3212 = vmatpush.msra.mxu0 %v1005
    %3213 = vmatpush.msra.mxu0 %v1001
    %3214 = vmatpush.msra.mxu0 %v997
    %3215 = vmatpush.msra.mxu0 %v993
    %3216 = vmatpush.msra.mxu0 %v989
    %3217 = vmatpush.msra.mxu0 %v985
    %3218 = vmatpush.msra.mxu0 %v981
    %3219 = vmatpush.msra.mxu0 %v977
    %3220 = vmatpush.msra.mxu0 %v973
    %3221 = vmatmul.f32.gmra.mxu0 %v955
    %v3222 = vpop.f32.mrf.mxu0
    %v3223 = vadd.f32 %v2648, %v3222
    %3224 = vmatmul.f32.gmra.mxu0 %v963
    %v3225 = vpop.f32.mrf.mxu0
    %v3226 = vadd.f32 %v2651, %v3225
    %3227 = vdwg.mxu0
    %3228 = vmatpush.msra.mxu0 %v1097
    %3229 = vmatpush.msra.mxu0 %v1093
    %3230 = vmatpush.msra.mxu0 %v1089
    %3231 = vmatpush.msra.mxu0 %v1085
    %3232 = vmatpush.msra.mxu0 %v1081
    %3233 = vmatpush.msra.mxu0 %v1077
    %3234 = vmatpush.msra.mxu0 %v1073
    %3235 = vmatpush.msra.mxu0 %v1069
    %3236 = vmatpush.msra.mxu0 %v1065
    %3237 = vmatpush.msra.mxu0 %v1061
    %3238 = vmatpush.msra.mxu0 %v1057
    %3239 = vmatpush.msra.mxu0 %v1053
    %3240 = vmatpush.msra.mxu0 %v1049
    %3241 = vmatpush.msra.mxu0 %v1045
    %3242 = vmatpush.msra.mxu0 %v1041
    %3243 = vmatpush.msra.mxu0 %v1037
    %3244 = vmatmul.f32.gmra.mxu0 %v956
    %v3245 = vpop.f32.mrf.mxu0
    %v3246 = vadd.f32 %v3223, %v3245
    %3247 = vmatmul.f32.gmra.mxu0 %v964
    %v3248 = vpop.f32.mrf.mxu0
    %v3249 = vadd.f32 %v3226, %v3248
    %3250 = vdwg.mxu0
    %3251 = vmatpush.msra.mxu0 %v1161
    %3252 = vmatpush.msra.mxu0 %v1157
    %3253 = vmatpush.msra.mxu0 %v1153
    %3254 = vmatpush.msra.mxu0 %v1149
    %3255 = vmatpush.msra.mxu0 %v1145
    %3256 = vmatpush.msra.mxu0 %v1141
    %3257 = vmatpush.msra.mxu0 %v1137
    %3258 = vmatpush.msra.mxu0 %v1133
    %3259 = vmatpush.msra.mxu0 %v1129
    %3260 = vmatpush.msra.mxu0 %v1125
    %3261 = vmatpush.msra.mxu0 %v1121
    %3262 = vmatpush.msra.mxu0 %v1117
    %3263 = vmatpush.msra.mxu0 %v1113
    %3264 = vmatpush.msra.mxu0 %v1109
    %3265 = vmatpush.msra.mxu0 %v1105
    %3266 = vmatpush.msra.mxu0 %v1101
    %3267 = vmatmul.f32.gmra.mxu0 %v957
    %v3268 = vpop.f32.mrf.mxu0
    %v3269 = vadd.f32 %v3246, %v3268
    %3270 = vmatmul.f32.gmra.mxu0 %v965
    %v3271 = vpop.f32.mrf.mxu0
    %v3272 = vadd.f32 %v3249, %v3271
    %3273 = vdwg.mxu0
    %3274 = vmatpush.msra.mxu0 %v1225
    %3275 = vmatpush.msra.mxu0 %v1221
    %3276 = vmatpush.msra.mxu0 %v1217
    %3277 = vmatpush.msra.mxu0 %v1213
    %3278 = vmatpush.msra.mxu0 %v1209
    %3279 = vmatpush.msra.mxu0 %v1205
    %3280 = vmatpush.msra.mxu0 %v1201
    %3281 = vmatpush.msra.mxu0 %v1197
    %3282 = vmatpush.msra.mxu0 %v1193
    %3283 = vmatpush.msra.mxu0 %v1189
    %3284 = vmatpush.msra.mxu0 %v1185
    %3285 = vmatpush.msra.mxu0 %v1181
    %3286 = vmatpush.msra.mxu0 %v1177
    %3287 = vmatpush.msra.mxu0 %v1173
    %3288 = vmatpush.msra.mxu0 %v1169
    %3289 = vmatpush.msra.mxu0 %v1165
    %3290 = vmatmul.f32.gmra.mxu0 %v958
    %v3291 = vpop.f32.mrf.mxu0
    %v3292 = vadd.f32 %v3269, %v3291
    %3293 = vmatmul.f32.gmra.mxu0 %v966
    %v3294 = vpop.f32.mrf.mxu0
    %v3295 = vadd.f32 %v3272, %v3294
    %3296 = vdwg.mxu0
    %3297 = vmatpush.msra.mxu0 %v1289
    %3298 = vmatpush.msra.mxu0 %v1285
    %3299 = vmatpush.msra.mxu0 %v1281
    %3300 = vmatpush.msra.mxu0 %v1277
    %3301 = vmatpush.msra.mxu0 %v1273
    %3302 = vmatpush.msra.mxu0 %v1269
    %3303 = vmatpush.msra.mxu0 %v1265
    %3304 = vmatpush.msra.mxu0 %v1261
    %3305 = vmatpush.msra.mxu0 %v1257
    %3306 = vmatpush.msra.mxu0 %v1253
    %3307 = vmatpush.msra.mxu0 %v1249
    %3308 = vmatpush.msra.mxu0 %v1245
    %3309 = vmatpush.msra.mxu0 %v1241
    %3310 = vmatpush.msra.mxu0 %v1237
    %3311 = vmatpush.msra.mxu0 %v1233
    %3312 = vmatpush.msra.mxu0 %v1229
    %3313 = vmatmul.f32.gmra.mxu0 %v959
    %v3314 = vpop.f32.mrf.mxu0
    %v3315 = vadd.f32 %v3292, %v3314
    %3316 = vmatmul.f32.gmra.mxu0 %v967
    %v3317 = vpop.f32.mrf.mxu0
    %v3318 = vadd.f32 %v3295, %v3317
    %3319 = vdwg.mxu0
    %3320 = vmatpush.msra.mxu0 %v1353
    %3321 = vmatpush.msra.mxu0 %v1349
    %3322 = vmatpush.msra.mxu0 %v1345
    %3323 = vmatpush.msra.mxu0 %v1341
    %3324 = vmatpush.msra.mxu0 %v1337
    %3325 = vmatpush.msra.mxu0 %v1333
    %3326 = vmatpush.msra.mxu0 %v1329
    %3327 = vmatpush.msra.mxu0 %v1325
    %3328 = vmatpush.msra.mxu0 %v1321
    %3329 = vmatpush.msra.mxu0 %v1317
    %3330 = vmatpush.msra.mxu0 %v1313
    %3331 = vmatpush.msra.mxu0 %v1309
    %3332 = vmatpush.msra.mxu0 %v1305
    %3333 = vmatpush.msra.mxu0 %v1301
    %3334 = vmatpush.msra.mxu0 %v1297
    %3335 = vmatpush.msra.mxu0 %v1293
    %3336 = vmatmul.f32.gmra.mxu0 %v960
    %v3337 = vpop.f32.mrf.mxu0
    %v3338 = vadd.f32 %v3315, %v3337
    %3339 = vmatmul.f32.gmra.mxu0 %v968
    %v3340 = vpop.f32.mrf.mxu0
    %v3341 = vadd.f32 %v3318, %v3340
    %3342 = vdwg.mxu0
    %3343 = vmatpush.msra.mxu0 %v1417
    %3344 = vmatpush.msra.mxu0 %v1413
    %3345 = vmatpush.msra.mxu0 %v1409
    %3346 = vmatpush.msra.mxu0 %v1405
    %3347 = vmatpush.msra.mxu0 %v1401
    %3348 = vmatpush.msra.mxu0 %v1397
    %3349 = vmatpush.msra.mxu0 %v1393
    %3350 = vmatpush.msra.mxu0 %v1389
    %3351 = vmatpush.msra.mxu0 %v1385
    %3352 = vmatpush.msra.mxu0 %v1381
    %3353 = vmatpush.msra.mxu0 %v1377
    %3354 = vmatpush.msra.mxu0 %v1373
    %3355 = vmatpush.msra.mxu0 %v1369
    %3356 = vmatpush.msra.mxu0 %v1365
    %3357 = vmatpush.msra.mxu0 %v1361
    %3358 = vmatpush.msra.mxu0 %v1357
    %3359 = vmatmul.f32.gmra.mxu0 %v961
    %v3360 = vpop.f32.mrf.mxu0
    %v3361 = vadd.f32 %v3338, %v3360
    %3362 = vmatmul.f32.gmra.mxu0 %v969
    %v3363 = vpop.f32.mrf.mxu0
    %v3364 = vadd.f32 %v3341, %v3363
    %3365 = vdwg.mxu0
    %3366 = vmatpush.msra.mxu0 %v1481
    %3367 = vmatpush.msra.mxu0 %v1477
    %3368 = vmatpush.msra.mxu0 %v1473
    %3369 = vmatpush.msra.mxu0 %v1469
    %3370 = vmatpush.msra.mxu0 %v1465
    %3371 = vmatpush.msra.mxu0 %v1461
    %3372 = vmatpush.msra.mxu0 %v1457
    %3373 = vmatpush.msra.mxu0 %v1453
    %3374 = vmatpush.msra.mxu0 %v1449
    %3375 = vmatpush.msra.mxu0 %v1445
    %3376 = vmatpush.msra.mxu0 %v1441
    %3377 = vmatpush.msra.mxu0 %v1437
    %3378 = vmatpush.msra.mxu0 %v1433
    %3379 = vmatpush.msra.mxu0 %v1429
    %3380 = vmatpush.msra.mxu0 %v1425
    %3381 = vmatpush.msra.mxu0 %v1421
    %3382 = vmatmul.f32.gmra.mxu0 %v962
    %v3383 = vpop.f32.mrf.mxu0
    %v3384 = vadd.f32 %v3361, %v3383
    %3385 = vmatmul.f32.gmra.mxu0 %v970
    %v3386 = vpop.f32.mrf.mxu0
    %v3387 = vadd.f32 %v3364, %v3386
    %3388 = vdwg.mxu0
    %3389 = vmatpush.msra.mxu0 %v1034
    %3390 = vmatpush.msra.mxu0 %v1030
    %3391 = vmatpush.msra.mxu0 %v1026
    %3392 = vmatpush.msra.mxu0 %v1022
    %3393 = vmatpush.msra.mxu0 %v1018
    %3394 = vmatpush.msra.mxu0 %v1014
    %3395 = vmatpush.msra.mxu0 %v1010
    %3396 = vmatpush.msra.mxu0 %v1006
    %3397 = vmatpush.msra.mxu0 %v1002
    %3398 = vmatpush.msra.mxu0 %v998
    %3399 = vmatpush.msra.mxu0 %v994
    %3400 = vmatpush.msra.mxu0 %v990
    %3401 = vmatpush.msra.mxu0 %v986
    %3402 = vmatpush.msra.mxu0 %v982
    %3403 = vmatpush.msra.mxu0 %v978
    %3404 = vmatpush.msra.mxu0 %v974
    %3405 = vmatmul.f32.gmra.mxu0 %v955
    %v3406 = vpop.f32.mrf.mxu0
    %v3407 = vadd.f32 %v2832, %v3406
    %3408 = vmatmul.f32.gmra.mxu0 %v963
    %v3409 = vpop.f32.mrf.mxu0
    %v3410 = vadd.f32 %v2835, %v3409
    %3411 = vdwg.mxu0
    %3412 = vmatpush.msra.mxu0 %v1098
    %3413 = vmatpush.msra.mxu0 %v1094
    %3414 = vmatpush.msra.mxu0 %v1090
    %3415 = vmatpush.msra.mxu0 %v1086
    %3416 = vmatpush.msra.mxu0 %v1082
    %3417 = vmatpush.msra.mxu0 %v1078
    %3418 = vmatpush.msra.mxu0 %v1074
    %3419 = vmatpush.msra.mxu0 %v1070
    %3420 = vmatpush.msra.mxu0 %v1066
    %3421 = vmatpush.msra.mxu0 %v1062
    %3422 = vmatpush.msra.mxu0 %v1058
    %3423 = vmatpush.msra.mxu0 %v1054
    %3424 = vmatpush.msra.mxu0 %v1050
    %3425 = vmatpush.msra.mxu0 %v1046
    %3426 = vmatpush.msra.mxu0 %v1042
    %3427 = vmatpush.msra.mxu0 %v1038
    %3428 = vmatmul.f32.gmra.mxu0 %v956
    %v3429 = vpop.f32.mrf.mxu0
    %v3430 = vadd.f32 %v3407, %v3429
    %3431 = vmatmul.f32.gmra.mxu0 %v964
    %v3432 = vpop.f32.mrf.mxu0
    %v3433 = vadd.f32 %v3410, %v3432
    %3434 = vdwg.mxu0
    %3435 = vmatpush.msra.mxu0 %v1162
    %3436 = vmatpush.msra.mxu0 %v1158
    %3437 = vmatpush.msra.mxu0 %v1154
    %3438 = vmatpush.msra.mxu0 %v1150
    %3439 = vmatpush.msra.mxu0 %v1146
    %3440 = vmatpush.msra.mxu0 %v1142
    %3441 = vmatpush.msra.mxu0 %v1138
    %3442 = vmatpush.msra.mxu0 %v1134
    %3443 = vmatpush.msra.mxu0 %v1130
    %3444 = vmatpush.msra.mxu0 %v1126
    %3445 = vmatpush.msra.mxu0 %v1122
    %3446 = vmatpush.msra.mxu0 %v1118
    %3447 = vmatpush.msra.mxu0 %v1114
    %3448 = vmatpush.msra.mxu0 %v1110
    %3449 = vmatpush.msra.mxu0 %v1106
    %3450 = vmatpush.msra.mxu0 %v1102
    %3451 = vmatmul.f32.gmra.mxu0 %v957
    %v3452 = vpop.f32.mrf.mxu0
    %v3453 = vadd.f32 %v3430, %v3452
    %3454 = vmatmul.f32.gmra.mxu0 %v965
    %v3455 = vpop.f32.mrf.mxu0
    %v3456 = vadd.f32 %v3433, %v3455
    %3457 = vdwg.mxu0
    %3458 = vmatpush.msra.mxu0 %v1226
    %3459 = vmatpush.msra.mxu0 %v1222
    %3460 = vmatpush.msra.mxu0 %v1218
    %3461 = vmatpush.msra.mxu0 %v1214
    %3462 = vmatpush.msra.mxu0 %v1210
    %3463 = vmatpush.msra.mxu0 %v1206
    %3464 = vmatpush.msra.mxu0 %v1202
    %3465 = vmatpush.msra.mxu0 %v1198
    %3466 = vmatpush.msra.mxu0 %v1194
    %3467 = vmatpush.msra.mxu0 %v1190
    %3468 = vmatpush.msra.mxu0 %v1186
    %3469 = vmatpush.msra.mxu0 %v1182
    %3470 = vmatpush.msra.mxu0 %v1178
    %3471 = vmatpush.msra.mxu0 %v1174
    %3472 = vmatpush.msra.mxu0 %v1170
    %3473 = vmatpush.msra.mxu0 %v1166
    %3474 = vmatmul.f32.gmra.mxu0 %v958
    %v3475 = vpop.f32.mrf.mxu0
    %v3476 = vadd.f32 %v3453, %v3475
    %3477 = vmatmul.f32.gmra.mxu0 %v966
    %v3478 = vpop.f32.mrf.mxu0
    %v3479 = vadd.f32 %v3456, %v3478
    %3480 = vdwg.mxu0
    %3481 = vmatpush.msra.mxu0 %v1290
    %3482 = vmatpush.msra.mxu0 %v1286
    %3483 = vmatpush.msra.mxu0 %v1282
    %3484 = vmatpush.msra.mxu0 %v1278
    %3485 = vmatpush.msra.mxu0 %v1274
    %3486 = vmatpush.msra.mxu0 %v1270
    %3487 = vmatpush.msra.mxu0 %v1266
    %3488 = vmatpush.msra.mxu0 %v1262
    %3489 = vmatpush.msra.mxu0 %v1258
    %3490 = vmatpush.msra.mxu0 %v1254
    %3491 = vmatpush.msra.mxu0 %v1250
    %3492 = vmatpush.msra.mxu0 %v1246
    %3493 = vmatpush.msra.mxu0 %v1242
    %3494 = vmatpush.msra.mxu0 %v1238
    %3495 = vmatpush.msra.mxu0 %v1234
    %3496 = vmatpush.msra.mxu0 %v1230
    %3497 = vmatmul.f32.gmra.mxu0 %v959
    %v3498 = vpop.f32.mrf.mxu0
    %v3499 = vadd.f32 %v3476, %v3498
    %3500 = vmatmul.f32.gmra.mxu0 %v967
    %v3501 = vpop.f32.mrf.mxu0
    %v3502 = vadd.f32 %v3479, %v3501
    %3503 = vdwg.mxu0
    %3504 = vmatpush.msra.mxu0 %v1354
    %3505 = vmatpush.msra.mxu0 %v1350
    %3506 = vmatpush.msra.mxu0 %v1346
    %3507 = vmatpush.msra.mxu0 %v1342
    %3508 = vmatpush.msra.mxu0 %v1338
    %3509 = vmatpush.msra.mxu0 %v1334
    %3510 = vmatpush.msra.mxu0 %v1330
    %3511 = vmatpush.msra.mxu0 %v1326
    %3512 = vmatpush.msra.mxu0 %v1322
    %3513 = vmatpush.msra.mxu0 %v1318
    %3514 = vmatpush.msra.mxu0 %v1314
    %3515 = vmatpush.msra.mxu0 %v1310
    %3516 = vmatpush.msra.mxu0 %v1306
    %3517 = vmatpush.msra.mxu0 %v1302
    %3518 = vmatpush.msra.mxu0 %v1298
    %3519 = vmatpush.msra.mxu0 %v1294
    %3520 = vmatmul.f32.gmra.mxu0 %v960
    %v3521 = vpop.f32.mrf.mxu0
    %v3522 = vadd.f32 %v3499, %v3521
    %3523 = vmatmul.f32.gmra.mxu0 %v968
    %v3524 = vpop.f32.mrf.mxu0
    %v3525 = vadd.f32 %v3502, %v3524
    %3526 = vdwg.mxu0
    %3527 = vmatpush.msra.mxu0 %v1418
    %3528 = vmatpush.msra.mxu0 %v1414
    %3529 = vmatpush.msra.mxu0 %v1410
    %3530 = vmatpush.msra.mxu0 %v1406
    %3531 = vmatpush.msra.mxu0 %v1402
    %3532 = vmatpush.msra.mxu0 %v1398
    %3533 = vmatpush.msra.mxu0 %v1394
    %3534 = vmatpush.msra.mxu0 %v1390
    %3535 = vmatpush.msra.mxu0 %v1386
    %3536 = vmatpush.msra.mxu0 %v1382
    %3537 = vmatpush.msra.mxu0 %v1378
    %3538 = vmatpush.msra.mxu0 %v1374
    %3539 = vmatpush.msra.mxu0 %v1370
    %3540 = vmatpush.msra.mxu0 %v1366
    %3541 = vmatpush.msra.mxu0 %v1362
    %3542 = vmatpush.msra.mxu0 %v1358
    %3543 = vmatmul.f32.gmra.mxu0 %v961
    %v3544 = vpop.f32.mrf.mxu0
    %v3545 = vadd.f32 %v3522, %v3544
    %3546 = vmatmul.f32.gmra.mxu0 %v969
    %v3547 = vpop.f32.mrf.mxu0
    %v3548 = vadd.f32 %v3525, %v3547
    %3549 = vdwg.mxu0
    %3550 = vmatpush.msra.mxu0 %v1482
    %3551 = vmatpush.msra.mxu0 %v1478
    %3552 = vmatpush.msra.mxu0 %v1474
    %3553 = vmatpush.msra.mxu0 %v1470
    %3554 = vmatpush.msra.mxu0 %v1466
    %3555 = vmatpush.msra.mxu0 %v1462
    %3556 = vmatpush.msra.mxu0 %v1458
    %3557 = vmatpush.msra.mxu0 %v1454
    %3558 = vmatpush.msra.mxu0 %v1450
    %3559 = vmatpush.msra.mxu0 %v1446
    %3560 = vmatpush.msra.mxu0 %v1442
    %3561 = vmatpush.msra.mxu0 %v1438
    %3562 = vmatpush.msra.mxu0 %v1434
    %3563 = vmatpush.msra.mxu0 %v1430
    %3564 = vmatpush.msra.mxu0 %v1426
    %3565 = vmatpush.msra.mxu0 %v1422
    %3566 = vmatmul.f32.gmra.mxu0 %v962
    %v3567 = vpop.f32.mrf.mxu0
    %v3568 = vadd.f32 %v3545, %v3567
    %3569 = vmatmul.f32.gmra.mxu0 %v970
    %v3570 = vpop.f32.mrf.mxu0
    %v3571 = vadd.f32 %v3548, %v3570
    %3572 = vdwg.mxu0
    %v3573 = vld [vmem:[#allocation6] sm:$0xfc]
    %v3574 = vld [vmem:[#allocation6 + $0x8] sm:$0xfc]
    %v3575 = vld [vmem:[#allocation6 + $0x10] sm:$0xfc]
    %v3576 = vld [vmem:[#allocation6 + $0x18] sm:$0xfc]
    %v3577 = vld [vmem:[#allocation6 + $0x20] sm:$0xfc]
    %v3578 = vld [vmem:[#allocation6 + $0x28] sm:$0xfc]
    %v3579 = vld [vmem:[#allocation6 + $0x30] sm:$0xfc]
    %v3580 = vld [vmem:[#allocation6 + $0x38] sm:$0xfc]
    %v3581 = vld [vmem:[#allocation6 + $0x80] sm:$0x3]
    %v3582 = vld [vmem:[#allocation6 + $0x88] sm:$0x3]
    %v3583 = vld [vmem:[#allocation6 + $0x90] sm:$0x3]
    %v3584 = vld [vmem:[#allocation6 + $0x98] sm:$0x3]
    %v3585 = vld [vmem:[#allocation6 + $0xa0] sm:$0x3]
    %v3586 = vld [vmem:[#allocation6 + $0xa8] sm:$0x3]
    %v3587 = vld [vmem:[#allocation6 + $0xb0] sm:$0x3]
    %v3588 = vld [vmem:[#allocation6 + $0xb8] sm:$0x3]
    %s3589 = scalar_lea.vmem [#allocation2], 8192
    %v3590 = vld [vmem:[%s3589] sm:$0xff]
    %v3591 = vld [vmem:[%s3589 + $0x8] sm:$0xff]
    %v3592 = vld [vmem:[%s3589 + $0x10] sm:$0xff]
    %v3593 = vld [vmem:[%s3589 + $0x18] sm:$0xff]
    %v3594 = vld [vmem:[%s3589 + $0x20] sm:$0xff]
    %v3595 = vld [vmem:[%s3589 + $0x28] sm:$0xff]
    %v3596 = vld [vmem:[%s3589 + $0x30] sm:$0xff]
    %v3597 = vld [vmem:[%s3589 + $0x38] sm:$0xff]
    %v3598 = vld [vmem:[%s3589 + $0x40] sm:$0xff]
    %v3599 = vld [vmem:[%s3589 + $0x48] sm:$0xff]
    %v3600 = vld [vmem:[%s3589 + $0x50] sm:$0xff]
    %v3601 = vld [vmem:[%s3589 + $0x58] sm:$0xff]
    %v3602 = vld [vmem:[%s3589 + $0x60] sm:$0xff]
    %v3603 = vld [vmem:[%s3589 + $0x68] sm:$0xff]
    %v3604 = vld [vmem:[%s3589 + $0x70] sm:$0xff]
    %v3605 = vld [vmem:[%s3589 + $0x78] sm:$0xff]
    %v3606 = vld [vmem:[%s3589 + $0x80] sm:$0xff]
    %v3607 = vld [vmem:[%s3589 + $0x88] sm:$0xff]
    %v3608 = vld [vmem:[%s3589 + $0x90] sm:$0xff]
    %v3609 = vld [vmem:[%s3589 + $0x98] sm:$0xff]
    %v3610 = vld [vmem:[%s3589 + $0xa0] sm:$0xff]
    %v3611 = vld [vmem:[%s3589 + $0xa8] sm:$0xff]
    %v3612 = vld [vmem:[%s3589 + $0xb0] sm:$0xff]
    %v3613 = vld [vmem:[%s3589 + $0xb8] sm:$0xff]
    %v3614 = vld [vmem:[%s3589 + $0xc0] sm:$0xff]
    %v3615 = vld [vmem:[%s3589 + $0xc8] sm:$0xff]
    %v3616 = vld [vmem:[%s3589 + $0xd0] sm:$0xff]
    %v3617 = vld [vmem:[%s3589 + $0xd8] sm:$0xff]
    %v3618 = vld [vmem:[%s3589 + $0xe0] sm:$0xff]
    %v3619 = vld [vmem:[%s3589 + $0xe8] sm:$0xff]
    %v3620 = vld [vmem:[%s3589 + $0xf0] sm:$0xff]
    %v3621 = vld [vmem:[%s3589 + $0xf8] sm:$0xff]
    %v3622 = vld [vmem:[%s3589 + $0x100] sm:$0xff]
    %v3623 = vld [vmem:[%s3589 + $0x108] sm:$0xff]
    %v3624 = vld [vmem:[%s3589 + $0x110] sm:$0xff]
    %v3625 = vld [vmem:[%s3589 + $0x118] sm:$0xff]
    %v3626 = vld [vmem:[%s3589 + $0x120] sm:$0xff]
    %v3627 = vld [vmem:[%s3589 + $0x128] sm:$0xff]
    %v3628 = vld [vmem:[%s3589 + $0x130] sm:$0xff]
    %v3629 = vld [vmem:[%s3589 + $0x138] sm:$0xff]
    %v3630 = vld [vmem:[%s3589 + $0x140] sm:$0xff]
    %v3631 = vld [vmem:[%s3589 + $0x148] sm:$0xff]
    %v3632 = vld [vmem:[%s3589 + $0x150] sm:$0xff]
    %v3633 = vld [vmem:[%s3589 + $0x158] sm:$0xff]
    %v3634 = vld [vmem:[%s3589 + $0x160] sm:$0xff]
    %v3635 = vld [vmem:[%s3589 + $0x168] sm:$0xff]
    %v3636 = vld [vmem:[%s3589 + $0x170] sm:$0xff]
    %v3637 = vld [vmem:[%s3589 + $0x178] sm:$0xff]
    %v3638 = vld [vmem:[%s3589 + $0x180] sm:$0xff]
    %v3639 = vld [vmem:[%s3589 + $0x188] sm:$0xff]
    %v3640 = vld [vmem:[%s3589 + $0x190] sm:$0xff]
    %v3641 = vld [vmem:[%s3589 + $0x198] sm:$0xff]
    %v3642 = vld [vmem:[%s3589 + $0x1a0] sm:$0xff]
    %v3643 = vld [vmem:[%s3589 + $0x1a8] sm:$0xff]
    %v3644 = vld [vmem:[%s3589 + $0x1b0] sm:$0xff]
    %v3645 = vld [vmem:[%s3589 + $0x1b8] sm:$0xff]
    %v3646 = vld [vmem:[%s3589 + $0x1c0] sm:$0xff]
    %v3647 = vld [vmem:[%s3589 + $0x1c8] sm:$0xff]
    %v3648 = vld [vmem:[%s3589 + $0x1d0] sm:$0xff]
    %v3649 = vld [vmem:[%s3589 + $0x1d8] sm:$0xff]
    %v3650 = vld [vmem:[%s3589 + $0x1e0] sm:$0xff]
    %v3651 = vld [vmem:[%s3589 + $0x1e8] sm:$0xff]
    %v3652 = vld [vmem:[%s3589 + $0x1f0] sm:$0xff]
    %v3653 = vld [vmem:[%s3589 + $0x1f8] sm:$0xff]
    %v3654 = vld [vmem:[%s3589 + $0x200] sm:$0xff]
    %v3655 = vld [vmem:[%s3589 + $0x208] sm:$0xff]
    %v3656 = vld [vmem:[%s3589 + $0x210] sm:$0xff]
    %v3657 = vld [vmem:[%s3589 + $0x218] sm:$0xff]
    %v3658 = vld [vmem:[%s3589 + $0x220] sm:$0xff]
    %v3659 = vld [vmem:[%s3589 + $0x228] sm:$0xff]
    %v3660 = vld [vmem:[%s3589 + $0x230] sm:$0xff]
    %v3661 = vld [vmem:[%s3589 + $0x238] sm:$0xff]
    %v3662 = vld [vmem:[%s3589 + $0x240] sm:$0xff]
    %v3663 = vld [vmem:[%s3589 + $0x248] sm:$0xff]
    %v3664 = vld [vmem:[%s3589 + $0x250] sm:$0xff]
    %v3665 = vld [vmem:[%s3589 + $0x258] sm:$0xff]
    %v3666 = vld [vmem:[%s3589 + $0x260] sm:$0xff]
    %v3667 = vld [vmem:[%s3589 + $0x268] sm:$0xff]
    %v3668 = vld [vmem:[%s3589 + $0x270] sm:$0xff]
    %v3669 = vld [vmem:[%s3589 + $0x278] sm:$0xff]
    %v3670 = vld [vmem:[%s3589 + $0x280] sm:$0xff]
    %v3671 = vld [vmem:[%s3589 + $0x288] sm:$0xff]
    %v3672 = vld [vmem:[%s3589 + $0x290] sm:$0xff]
    %v3673 = vld [vmem:[%s3589 + $0x298] sm:$0xff]
    %v3674 = vld [vmem:[%s3589 + $0x2a0] sm:$0xff]
    %v3675 = vld [vmem:[%s3589 + $0x2a8] sm:$0xff]
    %v3676 = vld [vmem:[%s3589 + $0x2b0] sm:$0xff]
    %v3677 = vld [vmem:[%s3589 + $0x2b8] sm:$0xff]
    %v3678 = vld [vmem:[%s3589 + $0x2c0] sm:$0xff]
    %v3679 = vld [vmem:[%s3589 + $0x2c8] sm:$0xff]
    %v3680 = vld [vmem:[%s3589 + $0x2d0] sm:$0xff]
    %v3681 = vld [vmem:[%s3589 + $0x2d8] sm:$0xff]
    %v3682 = vld [vmem:[%s3589 + $0x2e0] sm:$0xff]
    %v3683 = vld [vmem:[%s3589 + $0x2e8] sm:$0xff]
    %v3684 = vld [vmem:[%s3589 + $0x2f0] sm:$0xff]
    %v3685 = vld [vmem:[%s3589 + $0x2f8] sm:$0xff]
    %v3686 = vld [vmem:[%s3589 + $0x300] sm:$0xff]
    %v3687 = vld [vmem:[%s3589 + $0x308] sm:$0xff]
    %v3688 = vld [vmem:[%s3589 + $0x310] sm:$0xff]
    %v3689 = vld [vmem:[%s3589 + $0x318] sm:$0xff]
    %v3690 = vld [vmem:[%s3589 + $0x320] sm:$0xff]
    %v3691 = vld [vmem:[%s3589 + $0x328] sm:$0xff]
    %v3692 = vld [vmem:[%s3589 + $0x330] sm:$0xff]
    %v3693 = vld [vmem:[%s3589 + $0x338] sm:$0xff]
    %v3694 = vld [vmem:[%s3589 + $0x340] sm:$0xff]
    %v3695 = vld [vmem:[%s3589 + $0x348] sm:$0xff]
    %v3696 = vld [vmem:[%s3589 + $0x350] sm:$0xff]
    %v3697 = vld [vmem:[%s3589 + $0x358] sm:$0xff]
    %v3698 = vld [vmem:[%s3589 + $0x360] sm:$0xff]
    %v3699 = vld [vmem:[%s3589 + $0x368] sm:$0xff]
    %v3700 = vld [vmem:[%s3589 + $0x370] sm:$0xff]
    %v3701 = vld [vmem:[%s3589 + $0x378] sm:$0xff]
    %v3702 = vld [vmem:[%s3589 + $0x380] sm:$0xff]
    %v3703 = vld [vmem:[%s3589 + $0x388] sm:$0xff]
    %v3704 = vld [vmem:[%s3589 + $0x390] sm:$0xff]
    %v3705 = vld [vmem:[%s3589 + $0x398] sm:$0xff]
    %v3706 = vld [vmem:[%s3589 + $0x3a0] sm:$0xff]
    %v3707 = vld [vmem:[%s3589 + $0x3a8] sm:$0xff]
    %v3708 = vld [vmem:[%s3589 + $0x3b0] sm:$0xff]
    %v3709 = vld [vmem:[%s3589 + $0x3b8] sm:$0xff]
    %v3710 = vld [vmem:[%s3589 + $0x3c0] sm:$0xff]
    %v3711 = vld [vmem:[%s3589 + $0x3c8] sm:$0xff]
    %v3712 = vld [vmem:[%s3589 + $0x3d0] sm:$0xff]
    %v3713 = vld [vmem:[%s3589 + $0x3d8] sm:$0xff]
    %v3714 = vld [vmem:[%s3589 + $0x3e0] sm:$0xff]
    %v3715 = vld [vmem:[%s3589 + $0x3e8] sm:$0xff]
    %v3716 = vld [vmem:[%s3589 + $0x3f0] sm:$0xff]
    %v3717 = vld [vmem:[%s3589 + $0x3f8] sm:$0xff]
    %v3718 = vld [vmem:[%s3589 + $0x400] sm:$0xff]
    %v3719 = vld [vmem:[%s3589 + $0x408] sm:$0xff]
    %v3720 = vld [vmem:[%s3589 + $0x410] sm:$0xff]
    %v3721 = vld [vmem:[%s3589 + $0x418] sm:$0xff]
    %v3722 = vld [vmem:[%s3589 + $0x420] sm:$0xff]
    %v3723 = vld [vmem:[%s3589 + $0x428] sm:$0xff]
    %v3724 = vld [vmem:[%s3589 + $0x430] sm:$0xff]
    %v3725 = vld [vmem:[%s3589 + $0x438] sm:$0xff]
    %v3726 = vld [vmem:[%s3589 + $0x440] sm:$0xff]
    %v3727 = vld [vmem:[%s3589 + $0x448] sm:$0xff]
    %v3728 = vld [vmem:[%s3589 + $0x450] sm:$0xff]
    %v3729 = vld [vmem:[%s3589 + $0x458] sm:$0xff]
    %v3730 = vld [vmem:[%s3589 + $0x460] sm:$0xff]
    %v3731 = vld [vmem:[%s3589 + $0x468] sm:$0xff]
    %v3732 = vld [vmem:[%s3589 + $0x470] sm:$0xff]
    %v3733 = vld [vmem:[%s3589 + $0x478] sm:$0xff]
    %v3734 = vld [vmem:[%s3589 + $0x480] sm:$0xff]
    %v3735 = vld [vmem:[%s3589 + $0x488] sm:$0xff]
    %v3736 = vld [vmem:[%s3589 + $0x490] sm:$0xff]
    %v3737 = vld [vmem:[%s3589 + $0x498] sm:$0xff]
    %v3738 = vld [vmem:[%s3589 + $0x4a0] sm:$0xff]
    %v3739 = vld [vmem:[%s3589 + $0x4a8] sm:$0xff]
    %v3740 = vld [vmem:[%s3589 + $0x4b0] sm:$0xff]
    %v3741 = vld [vmem:[%s3589 + $0x4b8] sm:$0xff]
    %v3742 = vld [vmem:[%s3589 + $0x4c0] sm:$0xff]
    %v3743 = vld [vmem:[%s3589 + $0x4c8] sm:$0xff]
    %v3744 = vld [vmem:[%s3589 + $0x4d0] sm:$0xff]
    %v3745 = vld [vmem:[%s3589 + $0x4d8] sm:$0xff]
    %v3746 = vld [vmem:[%s3589 + $0x4e0] sm:$0xff]
    %v3747 = vld [vmem:[%s3589 + $0x4e8] sm:$0xff]
    %v3748 = vld [vmem:[%s3589 + $0x4f0] sm:$0xff]
    %v3749 = vld [vmem:[%s3589 + $0x4f8] sm:$0xff]
    %v3750 = vld [vmem:[%s3589 + $0x500] sm:$0xff]
    %v3751 = vld [vmem:[%s3589 + $0x508] sm:$0xff]
    %v3752 = vld [vmem:[%s3589 + $0x510] sm:$0xff]
    %v3753 = vld [vmem:[%s3589 + $0x518] sm:$0xff]
    %v3754 = vld [vmem:[%s3589 + $0x520] sm:$0xff]
    %v3755 = vld [vmem:[%s3589 + $0x528] sm:$0xff]
    %v3756 = vld [vmem:[%s3589 + $0x530] sm:$0xff]
    %v3757 = vld [vmem:[%s3589 + $0x538] sm:$0xff]
    %v3758 = vld [vmem:[%s3589 + $0x540] sm:$0xff]
    %v3759 = vld [vmem:[%s3589 + $0x548] sm:$0xff]
    %v3760 = vld [vmem:[%s3589 + $0x550] sm:$0xff]
    %v3761 = vld [vmem:[%s3589 + $0x558] sm:$0xff]
    %v3762 = vld [vmem:[%s3589 + $0x560] sm:$0xff]
    %v3763 = vld [vmem:[%s3589 + $0x568] sm:$0xff]
    %v3764 = vld [vmem:[%s3589 + $0x570] sm:$0xff]
    %v3765 = vld [vmem:[%s3589 + $0x578] sm:$0xff]
    %v3766 = vld [vmem:[%s3589 + $0x580] sm:$0xff]
    %v3767 = vld [vmem:[%s3589 + $0x588] sm:$0xff]
    %v3768 = vld [vmem:[%s3589 + $0x590] sm:$0xff]
    %v3769 = vld [vmem:[%s3589 + $0x598] sm:$0xff]
    %v3770 = vld [vmem:[%s3589 + $0x5a0] sm:$0xff]
    %v3771 = vld [vmem:[%s3589 + $0x5a8] sm:$0xff]
    %v3772 = vld [vmem:[%s3589 + $0x5b0] sm:$0xff]
    %v3773 = vld [vmem:[%s3589 + $0x5b8] sm:$0xff]
    %v3774 = vld [vmem:[%s3589 + $0x5c0] sm:$0xff]
    %v3775 = vld [vmem:[%s3589 + $0x5c8] sm:$0xff]
    %v3776 = vld [vmem:[%s3589 + $0x5d0] sm:$0xff]
    %v3777 = vld [vmem:[%s3589 + $0x5d8] sm:$0xff]
    %v3778 = vld [vmem:[%s3589 + $0x5e0] sm:$0xff]
    %v3779 = vld [vmem:[%s3589 + $0x5e8] sm:$0xff]
    %v3780 = vld [vmem:[%s3589 + $0x5f0] sm:$0xff]
    %v3781 = vld [vmem:[%s3589 + $0x5f8] sm:$0xff]
    %v3782 = vld [vmem:[%s3589 + $0x600] sm:$0xff]
    %v3783 = vld [vmem:[%s3589 + $0x608] sm:$0xff]
    %v3784 = vld [vmem:[%s3589 + $0x610] sm:$0xff]
    %v3785 = vld [vmem:[%s3589 + $0x618] sm:$0xff]
    %v3786 = vld [vmem:[%s3589 + $0x620] sm:$0xff]
    %v3787 = vld [vmem:[%s3589 + $0x628] sm:$0xff]
    %v3788 = vld [vmem:[%s3589 + $0x630] sm:$0xff]
    %v3789 = vld [vmem:[%s3589 + $0x638] sm:$0xff]
    %v3790 = vld [vmem:[%s3589 + $0x640] sm:$0xff]
    %v3791 = vld [vmem:[%s3589 + $0x648] sm:$0xff]
    %v3792 = vld [vmem:[%s3589 + $0x650] sm:$0xff]
    %v3793 = vld [vmem:[%s3589 + $0x658] sm:$0xff]
    %v3794 = vld [vmem:[%s3589 + $0x660] sm:$0xff]
    %v3795 = vld [vmem:[%s3589 + $0x668] sm:$0xff]
    %v3796 = vld [vmem:[%s3589 + $0x670] sm:$0xff]
    %v3797 = vld [vmem:[%s3589 + $0x678] sm:$0xff]
    %v3798 = vld [vmem:[%s3589 + $0x680] sm:$0xff]
    %v3799 = vld [vmem:[%s3589 + $0x688] sm:$0xff]
    %v3800 = vld [vmem:[%s3589 + $0x690] sm:$0xff]
    %v3801 = vld [vmem:[%s3589 + $0x698] sm:$0xff]
    %v3802 = vld [vmem:[%s3589 + $0x6a0] sm:$0xff]
    %v3803 = vld [vmem:[%s3589 + $0x6a8] sm:$0xff]
    %v3804 = vld [vmem:[%s3589 + $0x6b0] sm:$0xff]
    %v3805 = vld [vmem:[%s3589 + $0x6b8] sm:$0xff]
    %v3806 = vld [vmem:[%s3589 + $0x6c0] sm:$0xff]
    %v3807 = vld [vmem:[%s3589 + $0x6c8] sm:$0xff]
    %v3808 = vld [vmem:[%s3589 + $0x6d0] sm:$0xff]
    %v3809 = vld [vmem:[%s3589 + $0x6d8] sm:$0xff]
    %v3810 = vld [vmem:[%s3589 + $0x6e0] sm:$0xff]
    %v3811 = vld [vmem:[%s3589 + $0x6e8] sm:$0xff]
    %v3812 = vld [vmem:[%s3589 + $0x6f0] sm:$0xff]
    %v3813 = vld [vmem:[%s3589 + $0x6f8] sm:$0xff]
    %v3814 = vld [vmem:[%s3589 + $0x700] sm:$0xff]
    %v3815 = vld [vmem:[%s3589 + $0x708] sm:$0xff]
    %v3816 = vld [vmem:[%s3589 + $0x710] sm:$0xff]
    %v3817 = vld [vmem:[%s3589 + $0x718] sm:$0xff]
    %v3818 = vld [vmem:[%s3589 + $0x720] sm:$0xff]
    %v3819 = vld [vmem:[%s3589 + $0x728] sm:$0xff]
    %v3820 = vld [vmem:[%s3589 + $0x730] sm:$0xff]
    %v3821 = vld [vmem:[%s3589 + $0x738] sm:$0xff]
    %v3822 = vld [vmem:[%s3589 + $0x740] sm:$0xff]
    %v3823 = vld [vmem:[%s3589 + $0x748] sm:$0xff]
    %v3824 = vld [vmem:[%s3589 + $0x750] sm:$0xff]
    %v3825 = vld [vmem:[%s3589 + $0x758] sm:$0xff]
    %v3826 = vld [vmem:[%s3589 + $0x760] sm:$0xff]
    %v3827 = vld [vmem:[%s3589 + $0x768] sm:$0xff]
    %v3828 = vld [vmem:[%s3589 + $0x770] sm:$0xff]
    %v3829 = vld [vmem:[%s3589 + $0x778] sm:$0xff]
    %v3830 = vld [vmem:[%s3589 + $0x780] sm:$0xff]
    %v3831 = vld [vmem:[%s3589 + $0x788] sm:$0xff]
    %v3832 = vld [vmem:[%s3589 + $0x790] sm:$0xff]
    %v3833 = vld [vmem:[%s3589 + $0x798] sm:$0xff]
    %v3834 = vld [vmem:[%s3589 + $0x7a0] sm:$0xff]
    %v3835 = vld [vmem:[%s3589 + $0x7a8] sm:$0xff]
    %v3836 = vld [vmem:[%s3589 + $0x7b0] sm:$0xff]
    %v3837 = vld [vmem:[%s3589 + $0x7b8] sm:$0xff]
    %v3838 = vld [vmem:[%s3589 + $0x7c0] sm:$0xff]
    %v3839 = vld [vmem:[%s3589 + $0x7c8] sm:$0xff]
    %v3840 = vld [vmem:[%s3589 + $0x7d0] sm:$0xff]
    %v3841 = vld [vmem:[%s3589 + $0x7d8] sm:$0xff]
    %v3842 = vld [vmem:[%s3589 + $0x7e0] sm:$0xff]
    %v3843 = vld [vmem:[%s3589 + $0x7e8] sm:$0xff]
    %v3844 = vld [vmem:[%s3589 + $0x7f0] sm:$0xff]
    %v3845 = vld [vmem:[%s3589 + $0x7f8] sm:$0xff]
    %v3846 = vld [vmem:[%s3589 + $0x800] sm:$0xff]
    %v3847 = vld [vmem:[%s3589 + $0x808] sm:$0xff]
    %v3848 = vld [vmem:[%s3589 + $0x810] sm:$0xff]
    %v3849 = vld [vmem:[%s3589 + $0x818] sm:$0xff]
    %v3850 = vld [vmem:[%s3589 + $0x820] sm:$0xff]
    %v3851 = vld [vmem:[%s3589 + $0x828] sm:$0xff]
    %v3852 = vld [vmem:[%s3589 + $0x830] sm:$0xff]
    %v3853 = vld [vmem:[%s3589 + $0x838] sm:$0xff]
    %v3854 = vld [vmem:[%s3589 + $0x840] sm:$0xff]
    %v3855 = vld [vmem:[%s3589 + $0x848] sm:$0xff]
    %v3856 = vld [vmem:[%s3589 + $0x850] sm:$0xff]
    %v3857 = vld [vmem:[%s3589 + $0x858] sm:$0xff]
    %v3858 = vld [vmem:[%s3589 + $0x860] sm:$0xff]
    %v3859 = vld [vmem:[%s3589 + $0x868] sm:$0xff]
    %v3860 = vld [vmem:[%s3589 + $0x870] sm:$0xff]
    %v3861 = vld [vmem:[%s3589 + $0x878] sm:$0xff]
    %v3862 = vld [vmem:[%s3589 + $0x880] sm:$0xff]
    %v3863 = vld [vmem:[%s3589 + $0x888] sm:$0xff]
    %v3864 = vld [vmem:[%s3589 + $0x890] sm:$0xff]
    %v3865 = vld [vmem:[%s3589 + $0x898] sm:$0xff]
    %v3866 = vld [vmem:[%s3589 + $0x8a0] sm:$0xff]
    %v3867 = vld [vmem:[%s3589 + $0x8a8] sm:$0xff]
    %v3868 = vld [vmem:[%s3589 + $0x8b0] sm:$0xff]
    %v3869 = vld [vmem:[%s3589 + $0x8b8] sm:$0xff]
    %v3870 = vld [vmem:[%s3589 + $0x8c0] sm:$0xff]
    %v3871 = vld [vmem:[%s3589 + $0x8c8] sm:$0xff]
    %v3872 = vld [vmem:[%s3589 + $0x8d0] sm:$0xff]
    %v3873 = vld [vmem:[%s3589 + $0x8d8] sm:$0xff]
    %v3874 = vld [vmem:[%s3589 + $0x8e0] sm:$0xff]
    %v3875 = vld [vmem:[%s3589 + $0x8e8] sm:$0xff]
    %v3876 = vld [vmem:[%s3589 + $0x8f0] sm:$0xff]
    %v3877 = vld [vmem:[%s3589 + $0x8f8] sm:$0xff]
    %v3878 = vld [vmem:[%s3589 + $0x900] sm:$0xff]
    %v3879 = vld [vmem:[%s3589 + $0x908] sm:$0xff]
    %v3880 = vld [vmem:[%s3589 + $0x910] sm:$0xff]
    %v3881 = vld [vmem:[%s3589 + $0x918] sm:$0xff]
    %v3882 = vld [vmem:[%s3589 + $0x920] sm:$0xff]
    %v3883 = vld [vmem:[%s3589 + $0x928] sm:$0xff]
    %v3884 = vld [vmem:[%s3589 + $0x930] sm:$0xff]
    %v3885 = vld [vmem:[%s3589 + $0x938] sm:$0xff]
    %v3886 = vld [vmem:[%s3589 + $0x940] sm:$0xff]
    %v3887 = vld [vmem:[%s3589 + $0x948] sm:$0xff]
    %v3888 = vld [vmem:[%s3589 + $0x950] sm:$0xff]
    %v3889 = vld [vmem:[%s3589 + $0x958] sm:$0xff]
    %v3890 = vld [vmem:[%s3589 + $0x960] sm:$0xff]
    %v3891 = vld [vmem:[%s3589 + $0x968] sm:$0xff]
    %v3892 = vld [vmem:[%s3589 + $0x970] sm:$0xff]
    %v3893 = vld [vmem:[%s3589 + $0x978] sm:$0xff]
    %v3894 = vld [vmem:[%s3589 + $0x980] sm:$0xff]
    %v3895 = vld [vmem:[%s3589 + $0x988] sm:$0xff]
    %v3896 = vld [vmem:[%s3589 + $0x990] sm:$0xff]
    %v3897 = vld [vmem:[%s3589 + $0x998] sm:$0xff]
    %v3898 = vld [vmem:[%s3589 + $0x9a0] sm:$0xff]
    %v3899 = vld [vmem:[%s3589 + $0x9a8] sm:$0xff]
    %v3900 = vld [vmem:[%s3589 + $0x9b0] sm:$0xff]
    %v3901 = vld [vmem:[%s3589 + $0x9b8] sm:$0xff]
    %v3902 = vld [vmem:[%s3589 + $0x9c0] sm:$0xff]
    %v3903 = vld [vmem:[%s3589 + $0x9c8] sm:$0xff]
    %v3904 = vld [vmem:[%s3589 + $0x9d0] sm:$0xff]
    %v3905 = vld [vmem:[%s3589 + $0x9d8] sm:$0xff]
    %v3906 = vld [vmem:[%s3589 + $0x9e0] sm:$0xff]
    %v3907 = vld [vmem:[%s3589 + $0x9e8] sm:$0xff]
    %v3908 = vld [vmem:[%s3589 + $0x9f0] sm:$0xff]
    %v3909 = vld [vmem:[%s3589 + $0x9f8] sm:$0xff]
    %v3910 = vld [vmem:[%s3589 + $0xa00] sm:$0xff]
    %v3911 = vld [vmem:[%s3589 + $0xa08] sm:$0xff]
    %v3912 = vld [vmem:[%s3589 + $0xa10] sm:$0xff]
    %v3913 = vld [vmem:[%s3589 + $0xa18] sm:$0xff]
    %v3914 = vld [vmem:[%s3589 + $0xa20] sm:$0xff]
    %v3915 = vld [vmem:[%s3589 + $0xa28] sm:$0xff]
    %v3916 = vld [vmem:[%s3589 + $0xa30] sm:$0xff]
    %v3917 = vld [vmem:[%s3589 + $0xa38] sm:$0xff]
    %v3918 = vld [vmem:[%s3589 + $0xa40] sm:$0xff]
    %v3919 = vld [vmem:[%s3589 + $0xa48] sm:$0xff]
    %v3920 = vld [vmem:[%s3589 + $0xa50] sm:$0xff]
    %v3921 = vld [vmem:[%s3589 + $0xa58] sm:$0xff]
    %v3922 = vld [vmem:[%s3589 + $0xa60] sm:$0xff]
    %v3923 = vld [vmem:[%s3589 + $0xa68] sm:$0xff]
    %v3924 = vld [vmem:[%s3589 + $0xa70] sm:$0xff]
    %v3925 = vld [vmem:[%s3589 + $0xa78] sm:$0xff]
    %v3926 = vld [vmem:[%s3589 + $0xa80] sm:$0xff]
    %v3927 = vld [vmem:[%s3589 + $0xa88] sm:$0xff]
    %v3928 = vld [vmem:[%s3589 + $0xa90] sm:$0xff]
    %v3929 = vld [vmem:[%s3589 + $0xa98] sm:$0xff]
    %v3930 = vld [vmem:[%s3589 + $0xaa0] sm:$0xff]
    %v3931 = vld [vmem:[%s3589 + $0xaa8] sm:$0xff]
    %v3932 = vld [vmem:[%s3589 + $0xab0] sm:$0xff]
    %v3933 = vld [vmem:[%s3589 + $0xab8] sm:$0xff]
    %v3934 = vld [vmem:[%s3589 + $0xac0] sm:$0xff]
    %v3935 = vld [vmem:[%s3589 + $0xac8] sm:$0xff]
    %v3936 = vld [vmem:[%s3589 + $0xad0] sm:$0xff]
    %v3937 = vld [vmem:[%s3589 + $0xad8] sm:$0xff]
    %v3938 = vld [vmem:[%s3589 + $0xae0] sm:$0xff]
    %v3939 = vld [vmem:[%s3589 + $0xae8] sm:$0xff]
    %v3940 = vld [vmem:[%s3589 + $0xaf0] sm:$0xff]
    %v3941 = vld [vmem:[%s3589 + $0xaf8] sm:$0xff]
    %v3942 = vld [vmem:[%s3589 + $0xb00] sm:$0xff]
    %v3943 = vld [vmem:[%s3589 + $0xb08] sm:$0xff]
    %v3944 = vld [vmem:[%s3589 + $0xb10] sm:$0xff]
    %v3945 = vld [vmem:[%s3589 + $0xb18] sm:$0xff]
    %v3946 = vld [vmem:[%s3589 + $0xb20] sm:$0xff]
    %v3947 = vld [vmem:[%s3589 + $0xb28] sm:$0xff]
    %v3948 = vld [vmem:[%s3589 + $0xb30] sm:$0xff]
    %v3949 = vld [vmem:[%s3589 + $0xb38] sm:$0xff]
    %v3950 = vld [vmem:[%s3589 + $0xb40] sm:$0xff]
    %v3951 = vld [vmem:[%s3589 + $0xb48] sm:$0xff]
    %v3952 = vld [vmem:[%s3589 + $0xb50] sm:$0xff]
    %v3953 = vld [vmem:[%s3589 + $0xb58] sm:$0xff]
    %v3954 = vld [vmem:[%s3589 + $0xb60] sm:$0xff]
    %v3955 = vld [vmem:[%s3589 + $0xb68] sm:$0xff]
    %v3956 = vld [vmem:[%s3589 + $0xb70] sm:$0xff]
    %v3957 = vld [vmem:[%s3589 + $0xb78] sm:$0xff]
    %v3958 = vld [vmem:[%s3589 + $0xb80] sm:$0xff]
    %v3959 = vld [vmem:[%s3589 + $0xb88] sm:$0xff]
    %v3960 = vld [vmem:[%s3589 + $0xb90] sm:$0xff]
    %v3961 = vld [vmem:[%s3589 + $0xb98] sm:$0xff]
    %v3962 = vld [vmem:[%s3589 + $0xba0] sm:$0xff]
    %v3963 = vld [vmem:[%s3589 + $0xba8] sm:$0xff]
    %v3964 = vld [vmem:[%s3589 + $0xbb0] sm:$0xff]
    %v3965 = vld [vmem:[%s3589 + $0xbb8] sm:$0xff]
    %v3966 = vld [vmem:[%s3589 + $0xbc0] sm:$0xff]
    %v3967 = vld [vmem:[%s3589 + $0xbc8] sm:$0xff]
    %v3968 = vld [vmem:[%s3589 + $0xbd0] sm:$0xff]
    %v3969 = vld [vmem:[%s3589 + $0xbd8] sm:$0xff]
    %v3970 = vld [vmem:[%s3589 + $0xbe0] sm:$0xff]
    %v3971 = vld [vmem:[%s3589 + $0xbe8] sm:$0xff]
    %v3972 = vld [vmem:[%s3589 + $0xbf0] sm:$0xff]
    %v3973 = vld [vmem:[%s3589 + $0xbf8] sm:$0xff]
    %v3974 = vld [vmem:[%s3589 + $0xc00] sm:$0xff]
    %v3975 = vld [vmem:[%s3589 + $0xc08] sm:$0xff]
    %v3976 = vld [vmem:[%s3589 + $0xc10] sm:$0xff]
    %v3977 = vld [vmem:[%s3589 + $0xc18] sm:$0xff]
    %v3978 = vld [vmem:[%s3589 + $0xc20] sm:$0xff]
    %v3979 = vld [vmem:[%s3589 + $0xc28] sm:$0xff]
    %v3980 = vld [vmem:[%s3589 + $0xc30] sm:$0xff]
    %v3981 = vld [vmem:[%s3589 + $0xc38] sm:$0xff]
    %v3982 = vld [vmem:[%s3589 + $0xc40] sm:$0xff]
    %v3983 = vld [vmem:[%s3589 + $0xc48] sm:$0xff]
    %v3984 = vld [vmem:[%s3589 + $0xc50] sm:$0xff]
    %v3985 = vld [vmem:[%s3589 + $0xc58] sm:$0xff]
    %v3986 = vld [vmem:[%s3589 + $0xc60] sm:$0xff]
    %v3987 = vld [vmem:[%s3589 + $0xc68] sm:$0xff]
    %v3988 = vld [vmem:[%s3589 + $0xc70] sm:$0xff]
    %v3989 = vld [vmem:[%s3589 + $0xc78] sm:$0xff]
    %v3990 = vld [vmem:[%s3589 + $0xc80] sm:$0xff]
    %v3991 = vld [vmem:[%s3589 + $0xc88] sm:$0xff]
    %v3992 = vld [vmem:[%s3589 + $0xc90] sm:$0xff]
    %v3993 = vld [vmem:[%s3589 + $0xc98] sm:$0xff]
    %v3994 = vld [vmem:[%s3589 + $0xca0] sm:$0xff]
    %v3995 = vld [vmem:[%s3589 + $0xca8] sm:$0xff]
    %v3996 = vld [vmem:[%s3589 + $0xcb0] sm:$0xff]
    %v3997 = vld [vmem:[%s3589 + $0xcb8] sm:$0xff]
    %v3998 = vld [vmem:[%s3589 + $0xcc0] sm:$0xff]
    %v3999 = vld [vmem:[%s3589 + $0xcc8] sm:$0xff]
    %v4000 = vld [vmem:[%s3589 + $0xcd0] sm:$0xff]
    %v4001 = vld [vmem:[%s3589 + $0xcd8] sm:$0xff]
    %v4002 = vld [vmem:[%s3589 + $0xce0] sm:$0xff]
    %v4003 = vld [vmem:[%s3589 + $0xce8] sm:$0xff]
    %v4004 = vld [vmem:[%s3589 + $0xcf0] sm:$0xff]
    %v4005 = vld [vmem:[%s3589 + $0xcf8] sm:$0xff]
    %v4006 = vld [vmem:[%s3589 + $0xd00] sm:$0xff]
    %v4007 = vld [vmem:[%s3589 + $0xd08] sm:$0xff]
    %v4008 = vld [vmem:[%s3589 + $0xd10] sm:$0xff]
    %v4009 = vld [vmem:[%s3589 + $0xd18] sm:$0xff]
    %v4010 = vld [vmem:[%s3589 + $0xd20] sm:$0xff]
    %v4011 = vld [vmem:[%s3589 + $0xd28] sm:$0xff]
    %v4012 = vld [vmem:[%s3589 + $0xd30] sm:$0xff]
    %v4013 = vld [vmem:[%s3589 + $0xd38] sm:$0xff]
    %v4014 = vld [vmem:[%s3589 + $0xd40] sm:$0xff]
    %v4015 = vld [vmem:[%s3589 + $0xd48] sm:$0xff]
    %v4016 = vld [vmem:[%s3589 + $0xd50] sm:$0xff]
    %v4017 = vld [vmem:[%s3589 + $0xd58] sm:$0xff]
    %v4018 = vld [vmem:[%s3589 + $0xd60] sm:$0xff]
    %v4019 = vld [vmem:[%s3589 + $0xd68] sm:$0xff]
    %v4020 = vld [vmem:[%s3589 + $0xd70] sm:$0xff]
    %v4021 = vld [vmem:[%s3589 + $0xd78] sm:$0xff]
    %v4022 = vld [vmem:[%s3589 + $0xd80] sm:$0xff]
    %v4023 = vld [vmem:[%s3589 + $0xd88] sm:$0xff]
    %v4024 = vld [vmem:[%s3589 + $0xd90] sm:$0xff]
    %v4025 = vld [vmem:[%s3589 + $0xd98] sm:$0xff]
    %v4026 = vld [vmem:[%s3589 + $0xda0] sm:$0xff]
    %v4027 = vld [vmem:[%s3589 + $0xda8] sm:$0xff]
    %v4028 = vld [vmem:[%s3589 + $0xdb0] sm:$0xff]
    %v4029 = vld [vmem:[%s3589 + $0xdb8] sm:$0xff]
    %v4030 = vld [vmem:[%s3589 + $0xdc0] sm:$0xff]
    %v4031 = vld [vmem:[%s3589 + $0xdc8] sm:$0xff]
    %v4032 = vld [vmem:[%s3589 + $0xdd0] sm:$0xff]
    %v4033 = vld [vmem:[%s3589 + $0xdd8] sm:$0xff]
    %v4034 = vld [vmem:[%s3589 + $0xde0] sm:$0xff]
    %v4035 = vld [vmem:[%s3589 + $0xde8] sm:$0xff]
    %v4036 = vld [vmem:[%s3589 + $0xdf0] sm:$0xff]
    %v4037 = vld [vmem:[%s3589 + $0xdf8] sm:$0xff]
    %v4038 = vld [vmem:[%s3589 + $0xe00] sm:$0xff]
    %v4039 = vld [vmem:[%s3589 + $0xe08] sm:$0xff]
    %v4040 = vld [vmem:[%s3589 + $0xe10] sm:$0xff]
    %v4041 = vld [vmem:[%s3589 + $0xe18] sm:$0xff]
    %v4042 = vld [vmem:[%s3589 + $0xe20] sm:$0xff]
    %v4043 = vld [vmem:[%s3589 + $0xe28] sm:$0xff]
    %v4044 = vld [vmem:[%s3589 + $0xe30] sm:$0xff]
    %v4045 = vld [vmem:[%s3589 + $0xe38] sm:$0xff]
    %v4046 = vld [vmem:[%s3589 + $0xe40] sm:$0xff]
    %v4047 = vld [vmem:[%s3589 + $0xe48] sm:$0xff]
    %v4048 = vld [vmem:[%s3589 + $0xe50] sm:$0xff]
    %v4049 = vld [vmem:[%s3589 + $0xe58] sm:$0xff]
    %v4050 = vld [vmem:[%s3589 + $0xe60] sm:$0xff]
    %v4051 = vld [vmem:[%s3589 + $0xe68] sm:$0xff]
    %v4052 = vld [vmem:[%s3589 + $0xe70] sm:$0xff]
    %v4053 = vld [vmem:[%s3589 + $0xe78] sm:$0xff]
    %v4054 = vld [vmem:[%s3589 + $0xe80] sm:$0xff]
    %v4055 = vld [vmem:[%s3589 + $0xe88] sm:$0xff]
    %v4056 = vld [vmem:[%s3589 + $0xe90] sm:$0xff]
    %v4057 = vld [vmem:[%s3589 + $0xe98] sm:$0xff]
    %v4058 = vld [vmem:[%s3589 + $0xea0] sm:$0xff]
    %v4059 = vld [vmem:[%s3589 + $0xea8] sm:$0xff]
    %v4060 = vld [vmem:[%s3589 + $0xeb0] sm:$0xff]
    %v4061 = vld [vmem:[%s3589 + $0xeb8] sm:$0xff]
    %v4062 = vld [vmem:[%s3589 + $0xec0] sm:$0xff]
    %v4063 = vld [vmem:[%s3589 + $0xec8] sm:$0xff]
    %v4064 = vld [vmem:[%s3589 + $0xed0] sm:$0xff]
    %v4065 = vld [vmem:[%s3589 + $0xed8] sm:$0xff]
    %v4066 = vld [vmem:[%s3589 + $0xee0] sm:$0xff]
    %v4067 = vld [vmem:[%s3589 + $0xee8] sm:$0xff]
    %v4068 = vld [vmem:[%s3589 + $0xef0] sm:$0xff]
    %v4069 = vld [vmem:[%s3589 + $0xef8] sm:$0xff]
    %v4070 = vld [vmem:[%s3589 + $0xf00] sm:$0xff]
    %v4071 = vld [vmem:[%s3589 + $0xf08] sm:$0xff]
    %v4072 = vld [vmem:[%s3589 + $0xf10] sm:$0xff]
    %v4073 = vld [vmem:[%s3589 + $0xf18] sm:$0xff]
    %v4074 = vld [vmem:[%s3589 + $0xf20] sm:$0xff]
    %v4075 = vld [vmem:[%s3589 + $0xf28] sm:$0xff]
    %v4076 = vld [vmem:[%s3589 + $0xf30] sm:$0xff]
    %v4077 = vld [vmem:[%s3589 + $0xf38] sm:$0xff]
    %v4078 = vld [vmem:[%s3589 + $0xf40] sm:$0xff]
    %v4079 = vld [vmem:[%s3589 + $0xf48] sm:$0xff]
    %v4080 = vld [vmem:[%s3589 + $0xf50] sm:$0xff]
    %v4081 = vld [vmem:[%s3589 + $0xf58] sm:$0xff]
    %v4082 = vld [vmem:[%s3589 + $0xf60] sm:$0xff]
    %v4083 = vld [vmem:[%s3589 + $0xf68] sm:$0xff]
    %v4084 = vld [vmem:[%s3589 + $0xf70] sm:$0xff]
    %v4085 = vld [vmem:[%s3589 + $0xf78] sm:$0xff]
    %v4086 = vld [vmem:[%s3589 + $0xf80] sm:$0xff]
    %v4087 = vld [vmem:[%s3589 + $0xf88] sm:$0xff]
    %v4088 = vld [vmem:[%s3589 + $0xf90] sm:$0xff]
    %v4089 = vld [vmem:[%s3589 + $0xf98] sm:$0xff]
    %v4090 = vld [vmem:[%s3589 + $0xfa0] sm:$0xff]
    %v4091 = vld [vmem:[%s3589 + $0xfa8] sm:$0xff]
    %v4092 = vld [vmem:[%s3589 + $0xfb0] sm:$0xff]
    %v4093 = vld [vmem:[%s3589 + $0xfb8] sm:$0xff]
    %v4094 = vld [vmem:[%s3589 + $0xfc0] sm:$0xff]
    %v4095 = vld [vmem:[%s3589 + $0xfc8] sm:$0xff]
    %v4096 = vld [vmem:[%s3589 + $0xfd0] sm:$0xff]
    %v4097 = vld [vmem:[%s3589 + $0xfd8] sm:$0xff]
    %v4098 = vld [vmem:[%s3589 + $0xfe0] sm:$0xff]
    %v4099 = vld [vmem:[%s3589 + $0xfe8] sm:$0xff]
    %v4100 = vld [vmem:[%s3589 + $0xff0] sm:$0xff]
    %v4101 = vld [vmem:[%s3589 + $0xff8] sm:$0xff]
    %vm4118 = vcmask 1045504
    %v4119 = vrot.slane %v3573, 2
    %v4120 = vrot.slane %v1491, 2
    %v4121 = vsel %vm4118, %v4119, %v4120
    %v4122 = vrot.slane %v3574, 2
    %v4123 = vrot.slane %v1492, 2
    %v4124 = vsel %vm4118, %v4122, %v4123
    %v4125 = vrot.slane %v3575, 2
    %v4126 = vrot.slane %v1493, 2
    %v4127 = vsel %vm4118, %v4125, %v4126
    %v4128 = vrot.slane %v3576, 2
    %v4129 = vrot.slane %v1494, 2
    %v4130 = vsel %vm4118, %v4128, %v4129
    %v4131 = vrot.slane %v3577, 2
    %v4132 = vrot.slane %v1495, 2
    %v4133 = vsel %vm4118, %v4131, %v4132
    %v4134 = vrot.slane %v3578, 2
    %v4135 = vrot.slane %v1496, 2
    %v4136 = vsel %vm4118, %v4134, %v4135
    %v4137 = vrot.slane %v3579, 2
    %v4138 = vrot.slane %v1497, 2
    %v4139 = vsel %vm4118, %v4137, %v4138
    %v4140 = vrot.slane %v3580, 2
    %v4141 = vrot.slane %v1498, 2
    %v4142 = vsel %vm4118, %v4140, %v4141
    %v4143 = vrot.slane %v3581, 2
    %v4144 = vsel %vm4118, %v4120, %v4143
    %v4145 = vrot.slane %v3582, 2
    %v4146 = vsel %vm4118, %v4123, %v4145
    %v4147 = vrot.slane %v3583, 2
    %v4148 = vsel %vm4118, %v4126, %v4147
    %v4149 = vrot.slane %v3584, 2
    %v4150 = vsel %vm4118, %v4129, %v4149
    %v4151 = vrot.slane %v3585, 2
    %v4152 = vsel %vm4118, %v4132, %v4151
    %v4153 = vrot.slane %v3586, 2
    %v4154 = vsel %vm4118, %v4135, %v4153
    %v4155 = vrot.slane %v3587, 2
    %v4156 = vsel %vm4118, %v4138, %v4155
    %v4157 = vrot.slane %v3588, 2
    %v4158 = vsel %vm4118, %v4141, %v4157
    %4175 = vmatpush.msra.mxu0 %v3650
    %4176 = vmatpush.msra.mxu0 %v3646
    %4177 = vmatpush.msra.mxu0 %v3642
    %4178 = vmatpush.msra.mxu0 %v3638
    %4179 = vmatpush.msra.mxu0 %v3634
    %4180 = vmatpush.msra.mxu0 %v3630
    %4181 = vmatpush.msra.mxu0 %v3626
    %4182 = vmatpush.msra.mxu0 %v3622
    %4183 = vmatpush.msra.mxu0 %v3618
    %4184 = vmatpush.msra.mxu0 %v3614
    %4185 = vmatpush.msra.mxu0 %v3610
    %4186 = vmatpush.msra.mxu0 %v3606
    %4187 = vmatpush.msra.mxu0 %v3602
    %4188 = vmatpush.msra.mxu0 %v3598
    %4189 = vmatpush.msra.mxu0 %v3594
    %4190 = vmatpush.msra.mxu0 %v3590
    %4191 = vmatmul.f32.gmra.mxu0 %v4121
    %v4192 = vpop.f32.mrf.mxu0
    %v4193 = vadd.f32 0.0, %v4192
    %4194 = vmatmul.f32.gmra.mxu0 %v4144
    %v4195 = vpop.f32.mrf.mxu0
    %v4196 = vadd.f32 0.0, %v4195
    %4197 = vdwg.mxu0
    %4198 = vmatpush.msra.mxu0 %v3714
    %4199 = vmatpush.msra.mxu0 %v3710
    %4200 = vmatpush.msra.mxu0 %v3706
    %4201 = vmatpush.msra.mxu0 %v3702
    %4202 = vmatpush.msra.mxu0 %v3698
    %4203 = vmatpush.msra.mxu0 %v3694
    %4204 = vmatpush.msra.mxu0 %v3690
    %4205 = vmatpush.msra.mxu0 %v3686
    %4206 = vmatpush.msra.mxu0 %v3682
    %4207 = vmatpush.msra.mxu0 %v3678
    %4208 = vmatpush.msra.mxu0 %v3674
    %4209 = vmatpush.msra.mxu0 %v3670
    %4210 = vmatpush.msra.mxu0 %v3666
    %4211 = vmatpush.msra.mxu0 %v3662
    %4212 = vmatpush.msra.mxu0 %v3658
    %4213 = vmatpush.msra.mxu0 %v3654
    %4214 = vmatmul.f32.gmra.mxu0 %v4124
    %v4215 = vpop.f32.mrf.mxu0
    %v4216 = vadd.f32 %v4193, %v4215
    %4217 = vmatmul.f32.gmra.mxu0 %v4146
    %v4218 = vpop.f32.mrf.mxu0
    %v4219 = vadd.f32 %v4196, %v4218
    %4220 = vdwg.mxu0
    %4221 = vmatpush.msra.mxu0 %v3778
    %4222 = vmatpush.msra.mxu0 %v3774
    %4223 = vmatpush.msra.mxu0 %v3770
    %4224 = vmatpush.msra.mxu0 %v3766
    %4225 = vmatpush.msra.mxu0 %v3762
    %4226 = vmatpush.msra.mxu0 %v3758
    %4227 = vmatpush.msra.mxu0 %v3754
    %4228 = vmatpush.msra.mxu0 %v3750
    %4229 = vmatpush.msra.mxu0 %v3746
    %4230 = vmatpush.msra.mxu0 %v3742
    %4231 = vmatpush.msra.mxu0 %v3738
    %4232 = vmatpush.msra.mxu0 %v3734
    %4233 = vmatpush.msra.mxu0 %v3730
    %4234 = vmatpush.msra.mxu0 %v3726
    %4235 = vmatpush.msra.mxu0 %v3722
    %4236 = vmatpush.msra.mxu0 %v3718
    %4237 = vmatmul.f32.gmra.mxu0 %v4127
    %v4238 = vpop.f32.mrf.mxu0
    %v4239 = vadd.f32 %v4216, %v4238
    %4240 = vmatmul.f32.gmra.mxu0 %v4148
    %v4241 = vpop.f32.mrf.mxu0
    %v4242 = vadd.f32 %v4219, %v4241
    %4243 = vdwg.mxu0
    %4244 = vmatpush.msra.mxu0 %v3842
    %4245 = vmatpush.msra.mxu0 %v3838
    %4246 = vmatpush.msra.mxu0 %v3834
    %4247 = vmatpush.msra.mxu0 %v3830
    %4248 = vmatpush.msra.mxu0 %v3826
    %4249 = vmatpush.msra.mxu0 %v3822
    %4250 = vmatpush.msra.mxu0 %v3818
    %4251 = vmatpush.msra.mxu0 %v3814
    %4252 = vmatpush.msra.mxu0 %v3810
    %4253 = vmatpush.msra.mxu0 %v3806
    %4254 = vmatpush.msra.mxu0 %v3802
    %4255 = vmatpush.msra.mxu0 %v3798
    %4256 = vmatpush.msra.mxu0 %v3794
    %4257 = vmatpush.msra.mxu0 %v3790
    %4258 = vmatpush.msra.mxu0 %v3786
    %4259 = vmatpush.msra.mxu0 %v3782
    %4260 = vmatmul.f32.gmra.mxu0 %v4130
    %v4261 = vpop.f32.mrf.mxu0
    %v4262 = vadd.f32 %v4239, %v4261
    %4263 = vmatmul.f32.gmra.mxu0 %v4150
    %v4264 = vpop.f32.mrf.mxu0
    %v4265 = vadd.f32 %v4242, %v4264
    %4266 = vdwg.mxu0
    %4267 = vmatpush.msra.mxu0 %v3906
    %4268 = vmatpush.msra.mxu0 %v3902
    %4269 = vmatpush.msra.mxu0 %v3898
    %4270 = vmatpush.msra.mxu0 %v3894
    %4271 = vmatpush.msra.mxu0 %v3890
    %4272 = vmatpush.msra.mxu0 %v3886
    %4273 = vmatpush.msra.mxu0 %v3882
    %4274 = vmatpush.msra.mxu0 %v3878
    %4275 = vmatpush.msra.mxu0 %v3874
    %4276 = vmatpush.msra.mxu0 %v3870
    %4277 = vmatpush.msra.mxu0 %v3866
    %4278 = vmatpush.msra.mxu0 %v3862
    %4279 = vmatpush.msra.mxu0 %v3858
    %4280 = vmatpush.msra.mxu0 %v3854
    %4281 = vmatpush.msra.mxu0 %v3850
    %4282 = vmatpush.msra.mxu0 %v3846
    %4283 = vmatmul.f32.gmra.mxu0 %v4133
    %v4284 = vpop.f32.mrf.mxu0
    %v4285 = vadd.f32 %v4262, %v4284
    %4286 = vmatmul.f32.gmra.mxu0 %v4152
    %v4287 = vpop.f32.mrf.mxu0
    %v4288 = vadd.f32 %v4265, %v4287
    %4289 = vdwg.mxu0
    %4290 = vmatpush.msra.mxu0 %v3970
    %4291 = vmatpush.msra.mxu0 %v3966
    %4292 = vmatpush.msra.mxu0 %v3962
    %4293 = vmatpush.msra.mxu0 %v3958
    %4294 = vmatpush.msra.mxu0 %v3954
    %4295 = vmatpush.msra.mxu0 %v3950
    %4296 = vmatpush.msra.mxu0 %v3946
    %4297 = vmatpush.msra.mxu0 %v3942
    %4298 = vmatpush.msra.mxu0 %v3938
    %4299 = vmatpush.msra.mxu0 %v3934
    %4300 = vmatpush.msra.mxu0 %v3930
    %4301 = vmatpush.msra.mxu0 %v3926
    %4302 = vmatpush.msra.mxu0 %v3922
    %4303 = vmatpush.msra.mxu0 %v3918
    %4304 = vmatpush.msra.mxu0 %v3914
    %4305 = vmatpush.msra.mxu0 %v3910
    %4306 = vmatmul.f32.gmra.mxu0 %v4136
    %v4307 = vpop.f32.mrf.mxu0
    %v4308 = vadd.f32 %v4285, %v4307
    %4309 = vmatmul.f32.gmra.mxu0 %v4154
    %v4310 = vpop.f32.mrf.mxu0
    %v4311 = vadd.f32 %v4288, %v4310
    %4312 = vdwg.mxu0
    %4313 = vmatpush.msra.mxu0 %v4034
    %4314 = vmatpush.msra.mxu0 %v4030
    %4315 = vmatpush.msra.mxu0 %v4026
    %4316 = vmatpush.msra.mxu0 %v4022
    %4317 = vmatpush.msra.mxu0 %v4018
    %4318 = vmatpush.msra.mxu0 %v4014
    %4319 = vmatpush.msra.mxu0 %v4010
    %4320 = vmatpush.msra.mxu0 %v4006
    %4321 = vmatpush.msra.mxu0 %v4002
    %4322 = vmatpush.msra.mxu0 %v3998
    %4323 = vmatpush.msra.mxu0 %v3994
    %4324 = vmatpush.msra.mxu0 %v3990
    %4325 = vmatpush.msra.mxu0 %v3986
    %4326 = vmatpush.msra.mxu0 %v3982
    %4327 = vmatpush.msra.mxu0 %v3978
    %4328 = vmatpush.msra.mxu0 %v3974
    %4329 = vmatmul.f32.gmra.mxu0 %v4139
    %v4330 = vpop.f32.mrf.mxu0
    %v4331 = vadd.f32 %v4308, %v4330
    %4332 = vmatmul.f32.gmra.mxu0 %v4156
    %v4333 = vpop.f32.mrf.mxu0
    %v4334 = vadd.f32 %v4311, %v4333
    %4335 = vdwg.mxu0
    %4336 = vmatpush.msra.mxu0 %v4098
    %4337 = vmatpush.msra.mxu0 %v4094
    %4338 = vmatpush.msra.mxu0 %v4090
    %4339 = vmatpush.msra.mxu0 %v4086
    %4340 = vmatpush.msra.mxu0 %v4082
    %4341 = vmatpush.msra.mxu0 %v4078
    %4342 = vmatpush.msra.mxu0 %v4074
    %4343 = vmatpush.msra.mxu0 %v4070
    %4344 = vmatpush.msra.mxu0 %v4066
    %4345 = vmatpush.msra.mxu0 %v4062
    %4346 = vmatpush.msra.mxu0 %v4058
    %4347 = vmatpush.msra.mxu0 %v4054
    %4348 = vmatpush.msra.mxu0 %v4050
    %4349 = vmatpush.msra.mxu0 %v4046
    %4350 = vmatpush.msra.mxu0 %v4042
    %4351 = vmatpush.msra.mxu0 %v4038
    %4352 = vmatmul.f32.gmra.mxu0 %v4142
    %v4353 = vpop.f32.mrf.mxu0
    %v4354 = vadd.f32 %v4331, %v4353
    %4355 = vmatmul.f32.gmra.mxu0 %v4158
    %v4356 = vpop.f32.mrf.mxu0
    %v4357 = vadd.f32 %v4334, %v4356
    %4358 = vdwg.mxu0
    %4359 = vmatpush.msra.mxu0 %v3651
    %4360 = vmatpush.msra.mxu0 %v3647
    %4361 = vmatpush.msra.mxu0 %v3643
    %4362 = vmatpush.msra.mxu0 %v3639
    %4363 = vmatpush.msra.mxu0 %v3635
    %4364 = vmatpush.msra.mxu0 %v3631
    %4365 = vmatpush.msra.mxu0 %v3627
    %4366 = vmatpush.msra.mxu0 %v3623
    %4367 = vmatpush.msra.mxu0 %v3619
    %4368 = vmatpush.msra.mxu0 %v3615
    %4369 = vmatpush.msra.mxu0 %v3611
    %4370 = vmatpush.msra.mxu0 %v3607
    %4371 = vmatpush.msra.mxu0 %v3603
    %4372 = vmatpush.msra.mxu0 %v3599
    %4373 = vmatpush.msra.mxu0 %v3595
    %4374 = vmatpush.msra.mxu0 %v3591
    %4375 = vmatmul.f32.gmra.mxu0 %v4121
    %v4376 = vpop.f32.mrf.mxu0
    %v4377 = vadd.f32 0.0, %v4376
    %4378 = vmatmul.f32.gmra.mxu0 %v4144
    %v4379 = vpop.f32.mrf.mxu0
    %v4380 = vadd.f32 0.0, %v4379
    %4381 = vdwg.mxu0
    %4382 = vmatpush.msra.mxu0 %v3715
    %4383 = vmatpush.msra.mxu0 %v3711
    %4384 = vmatpush.msra.mxu0 %v3707
    %4385 = vmatpush.msra.mxu0 %v3703
    %4386 = vmatpush.msra.mxu0 %v3699
    %4387 = vmatpush.msra.mxu0 %v3695
    %4388 = vmatpush.msra.mxu0 %v3691
    %4389 = vmatpush.msra.mxu0 %v3687
    %4390 = vmatpush.msra.mxu0 %v3683
    %4391 = vmatpush.msra.mxu0 %v3679
    %4392 = vmatpush.msra.mxu0 %v3675
    %4393 = vmatpush.msra.mxu0 %v3671
    %4394 = vmatpush.msra.mxu0 %v3667
    %4395 = vmatpush.msra.mxu0 %v3663
    %4396 = vmatpush.msra.mxu0 %v3659
    %4397 = vmatpush.msra.mxu0 %v3655
    %4398 = vmatmul.f32.gmra.mxu0 %v4124
    %v4399 = vpop.f32.mrf.mxu0
    %v4400 = vadd.f32 %v4377, %v4399
    %4401 = vmatmul.f32.gmra.mxu0 %v4146
    %v4402 = vpop.f32.mrf.mxu0
    %v4403 = vadd.f32 %v4380, %v4402
    %4404 = vdwg.mxu0
    %4405 = vmatpush.msra.mxu0 %v3779
    %4406 = vmatpush.msra.mxu0 %v3775
    %4407 = vmatpush.msra.mxu0 %v3771
    %4408 = vmatpush.msra.mxu0 %v3767
    %4409 = vmatpush.msra.mxu0 %v3763
    %4410 = vmatpush.msra.mxu0 %v3759
    %4411 = vmatpush.msra.mxu0 %v3755
    %4412 = vmatpush.msra.mxu0 %v3751
    %4413 = vmatpush.msra.mxu0 %v3747
    %4414 = vmatpush.msra.mxu0 %v3743
    %4415 = vmatpush.msra.mxu0 %v3739
    %4416 = vmatpush.msra.mxu0 %v3735
    %4417 = vmatpush.msra.mxu0 %v3731
    %4418 = vmatpush.msra.mxu0 %v3727
    %4419 = vmatpush.msra.mxu0 %v3723
    %4420 = vmatpush.msra.mxu0 %v3719
    %4421 = vmatmul.f32.gmra.mxu0 %v4127
    %v4422 = vpop.f32.mrf.mxu0
    %v4423 = vadd.f32 %v4400, %v4422
    %4424 = vmatmul.f32.gmra.mxu0 %v4148
    %v4425 = vpop.f32.mrf.mxu0
    %v4426 = vadd.f32 %v4403, %v4425
    %4427 = vdwg.mxu0
    %4428 = vmatpush.msra.mxu0 %v3843
    %4429 = vmatpush.msra.mxu0 %v3839
    %4430 = vmatpush.msra.mxu0 %v3835
    %4431 = vmatpush.msra.mxu0 %v3831
    %4432 = vmatpush.msra.mxu0 %v3827
    %4433 = vmatpush.msra.mxu0 %v3823
    %4434 = vmatpush.msra.mxu0 %v3819
    %4435 = vmatpush.msra.mxu0 %v3815
    %4436 = vmatpush.msra.mxu0 %v3811
    %4437 = vmatpush.msra.mxu0 %v3807
    %4438 = vmatpush.msra.mxu0 %v3803
    %4439 = vmatpush.msra.mxu0 %v3799
    %4440 = vmatpush.msra.mxu0 %v3795
    %4441 = vmatpush.msra.mxu0 %v3791
    %4442 = vmatpush.msra.mxu0 %v3787
    %4443 = vmatpush.msra.mxu0 %v3783
    %4444 = vmatmul.f32.gmra.mxu0 %v4130
    %v4445 = vpop.f32.mrf.mxu0
    %v4446 = vadd.f32 %v4423, %v4445
    %4447 = vmatmul.f32.gmra.mxu0 %v4150
    %v4448 = vpop.f32.mrf.mxu0
    %v4449 = vadd.f32 %v4426, %v4448
    %4450 = vdwg.mxu0
    %4451 = vmatpush.msra.mxu0 %v3907
    %4452 = vmatpush.msra.mxu0 %v3903
    %4453 = vmatpush.msra.mxu0 %v3899
    %4454 = vmatpush.msra.mxu0 %v3895
    %4455 = vmatpush.msra.mxu0 %v3891
    %4456 = vmatpush.msra.mxu0 %v3887
    %4457 = vmatpush.msra.mxu0 %v3883
    %4458 = vmatpush.msra.mxu0 %v3879
    %4459 = vmatpush.msra.mxu0 %v3875
    %4460 = vmatpush.msra.mxu0 %v3871
    %4461 = vmatpush.msra.mxu0 %v3867
    %4462 = vmatpush.msra.mxu0 %v3863
    %4463 = vmatpush.msra.mxu0 %v3859
    %4464 = vmatpush.msra.mxu0 %v3855
    %4465 = vmatpush.msra.mxu0 %v3851
    %4466 = vmatpush.msra.mxu0 %v3847
    %4467 = vmatmul.f32.gmra.mxu0 %v4133
    %v4468 = vpop.f32.mrf.mxu0
    %v4469 = vadd.f32 %v4446, %v4468
    %4470 = vmatmul.f32.gmra.mxu0 %v4152
    %v4471 = vpop.f32.mrf.mxu0
    %v4472 = vadd.f32 %v4449, %v4471
    %4473 = vdwg.mxu0
    %4474 = vmatpush.msra.mxu0 %v3971
    %4475 = vmatpush.msra.mxu0 %v3967
    %4476 = vmatpush.msra.mxu0 %v3963
    %4477 = vmatpush.msra.mxu0 %v3959
    %4478 = vmatpush.msra.mxu0 %v3955
    %4479 = vmatpush.msra.mxu0 %v3951
    %4480 = vmatpush.msra.mxu0 %v3947
    %4481 = vmatpush.msra.mxu0 %v3943
    %4482 = vmatpush.msra.mxu0 %v3939
    %4483 = vmatpush.msra.mxu0 %v3935
    %4484 = vmatpush.msra.mxu0 %v3931
    %4485 = vmatpush.msra.mxu0 %v3927
    %4486 = vmatpush.msra.mxu0 %v3923
    %4487 = vmatpush.msra.mxu0 %v3919
    %4488 = vmatpush.msra.mxu0 %v3915
    %4489 = vmatpush.msra.mxu0 %v3911
    %4490 = vmatmul.f32.gmra.mxu0 %v4136
    %v4491 = vpop.f32.mrf.mxu0
    %v4492 = vadd.f32 %v4469, %v4491
    %4493 = vmatmul.f32.gmra.mxu0 %v4154
    %v4494 = vpop.f32.mrf.mxu0
    %v4495 = vadd.f32 %v4472, %v4494
    %4496 = vdwg.mxu0
    %4497 = vmatpush.msra.mxu0 %v4035
    %4498 = vmatpush.msra.mxu0 %v4031
    %4499 = vmatpush.msra.mxu0 %v4027
    %4500 = vmatpush.msra.mxu0 %v4023
    %4501 = vmatpush.msra.mxu0 %v4019
    %4502 = vmatpush.msra.mxu0 %v4015
    %4503 = vmatpush.msra.mxu0 %v4011
    %4504 = vmatpush.msra.mxu0 %v4007
    %4505 = vmatpush.msra.mxu0 %v4003
    %4506 = vmatpush.msra.mxu0 %v3999
    %4507 = vmatpush.msra.mxu0 %v3995
    %4508 = vmatpush.msra.mxu0 %v3991
    %4509 = vmatpush.msra.mxu0 %v3987
    %4510 = vmatpush.msra.mxu0 %v3983
    %4511 = vmatpush.msra.mxu0 %v3979
    %4512 = vmatpush.msra.mxu0 %v3975
    %4513 = vmatmul.f32.gmra.mxu0 %v4139
    %v4514 = vpop.f32.mrf.mxu0
    %v4515 = vadd.f32 %v4492, %v4514
    %4516 = vmatmul.f32.gmra.mxu0 %v4156
    %v4517 = vpop.f32.mrf.mxu0
    %v4518 = vadd.f32 %v4495, %v4517
    %4519 = vdwg.mxu0
    %4520 = vmatpush.msra.mxu0 %v4099
    %4521 = vmatpush.msra.mxu0 %v4095
    %4522 = vmatpush.msra.mxu0 %v4091
    %4523 = vmatpush.msra.mxu0 %v4087
    %4524 = vmatpush.msra.mxu0 %v4083
    %4525 = vmatpush.msra.mxu0 %v4079
    %4526 = vmatpush.msra.mxu0 %v4075
    %4527 = vmatpush.msra.mxu0 %v4071
    %4528 = vmatpush.msra.mxu0 %v4067
    %4529 = vmatpush.msra.mxu0 %v4063
    %4530 = vmatpush.msra.mxu0 %v4059
    %4531 = vmatpush.msra.mxu0 %v4055
    %4532 = vmatpush.msra.mxu0 %v4051
    %4533 = vmatpush.msra.mxu0 %v4047
    %4534 = vmatpush.msra.mxu0 %v4043
    %4535 = vmatpush.msra.mxu0 %v4039
    %4536 = vmatmul.f32.gmra.mxu0 %v4142
    %v4537 = vpop.f32.mrf.mxu0
    %v4538 = vadd.f32 %v4515, %v4537
    %4539 = vmatmul.f32.gmra.mxu0 %v4158
    %v4540 = vpop.f32.mrf.mxu0
    %v4541 = vadd.f32 %v4518, %v4540
    %4542 = vdwg.mxu0
    %4543 = vmatpush.msra.mxu0 %v3652
    %4544 = vmatpush.msra.mxu0 %v3648
    %4545 = vmatpush.msra.mxu0 %v3644
    %4546 = vmatpush.msra.mxu0 %v3640
    %4547 = vmatpush.msra.mxu0 %v3636
    %4548 = vmatpush.msra.mxu0 %v3632
    %4549 = vmatpush.msra.mxu0 %v3628
    %4550 = vmatpush.msra.mxu0 %v3624
    %4551 = vmatpush.msra.mxu0 %v3620
    %4552 = vmatpush.msra.mxu0 %v3616
    %4553 = vmatpush.msra.mxu0 %v3612
    %4554 = vmatpush.msra.mxu0 %v3608
    %4555 = vmatpush.msra.mxu0 %v3604
    %4556 = vmatpush.msra.mxu0 %v3600
    %4557 = vmatpush.msra.mxu0 %v3596
    %4558 = vmatpush.msra.mxu0 %v3592
    %4559 = vmatmul.f32.gmra.mxu0 %v4121
    %v4560 = vpop.f32.mrf.mxu0
    %v4561 = vadd.f32 0.0, %v4560
    %4562 = vmatmul.f32.gmra.mxu0 %v4144
    %v4563 = vpop.f32.mrf.mxu0
    %v4564 = vadd.f32 0.0, %v4563
    %4565 = vdwg.mxu0
    %4566 = vmatpush.msra.mxu0 %v3716
    %4567 = vmatpush.msra.mxu0 %v3712
    %4568 = vmatpush.msra.mxu0 %v3708
    %4569 = vmatpush.msra.mxu0 %v3704
    %4570 = vmatpush.msra.mxu0 %v3700
    %4571 = vmatpush.msra.mxu0 %v3696
    %4572 = vmatpush.msra.mxu0 %v3692
    %4573 = vmatpush.msra.mxu0 %v3688
    %4574 = vmatpush.msra.mxu0 %v3684
    %4575 = vmatpush.msra.mxu0 %v3680
    %4576 = vmatpush.msra.mxu0 %v3676
    %4577 = vmatpush.msra.mxu0 %v3672
    %4578 = vmatpush.msra.mxu0 %v3668
    %4579 = vmatpush.msra.mxu0 %v3664
    %4580 = vmatpush.msra.mxu0 %v3660
    %4581 = vmatpush.msra.mxu0 %v3656
    %4582 = vmatmul.f32.gmra.mxu0 %v4124
    %v4583 = vpop.f32.mrf.mxu0
    %v4584 = vadd.f32 %v4561, %v4583
    %4585 = vmatmul.f32.gmra.mxu0 %v4146
    %v4586 = vpop.f32.mrf.mxu0
    %v4587 = vadd.f32 %v4564, %v4586
    %4588 = vdwg.mxu0
    %4589 = vmatpush.msra.mxu0 %v3780
    %4590 = vmatpush.msra.mxu0 %v3776
    %4591 = vmatpush.msra.mxu0 %v3772
    %4592 = vmatpush.msra.mxu0 %v3768
    %4593 = vmatpush.msra.mxu0 %v3764
    %4594 = vmatpush.msra.mxu0 %v3760
    %4595 = vmatpush.msra.mxu0 %v3756
    %4596 = vmatpush.msra.mxu0 %v3752
    %4597 = vmatpush.msra.mxu0 %v3748
    %4598 = vmatpush.msra.mxu0 %v3744
    %4599 = vmatpush.msra.mxu0 %v3740
    %4600 = vmatpush.msra.mxu0 %v3736
    %4601 = vmatpush.msra.mxu0 %v3732
    %4602 = vmatpush.msra.mxu0 %v3728
    %4603 = vmatpush.msra.mxu0 %v3724
    %4604 = vmatpush.msra.mxu0 %v3720
    %4605 = vmatmul.f32.gmra.mxu0 %v4127
    %v4606 = vpop.f32.mrf.mxu0
    %v4607 = vadd.f32 %v4584, %v4606
    %4608 = vmatmul.f32.gmra.mxu0 %v4148
    %v4609 = vpop.f32.mrf.mxu0
    %v4610 = vadd.f32 %v4587, %v4609
    %4611 = vdwg.mxu0
    %4612 = vmatpush.msra.mxu0 %v3844
    %4613 = vmatpush.msra.mxu0 %v3840
    %4614 = vmatpush.msra.mxu0 %v3836
    %4615 = vmatpush.msra.mxu0 %v3832
    %4616 = vmatpush.msra.mxu0 %v3828
    %4617 = vmatpush.msra.mxu0 %v3824
    %4618 = vmatpush.msra.mxu0 %v3820
    %4619 = vmatpush.msra.mxu0 %v3816
    %4620 = vmatpush.msra.mxu0 %v3812
    %4621 = vmatpush.msra.mxu0 %v3808
    %4622 = vmatpush.msra.mxu0 %v3804
    %4623 = vmatpush.msra.mxu0 %v3800
    %4624 = vmatpush.msra.mxu0 %v3796
    %4625 = vmatpush.msra.mxu0 %v3792
    %4626 = vmatpush.msra.mxu0 %v3788
    %4627 = vmatpush.msra.mxu0 %v3784
    %4628 = vmatmul.f32.gmra.mxu0 %v4130
    %v4629 = vpop.f32.mrf.mxu0
    %v4630 = vadd.f32 %v4607, %v4629
    %4631 = vmatmul.f32.gmra.mxu0 %v4150
    %v4632 = vpop.f32.mrf.mxu0
    %v4633 = vadd.f32 %v4610, %v4632
    %4634 = vdwg.mxu0
    %4635 = vmatpush.msra.mxu0 %v3908
    %4636 = vmatpush.msra.mxu0 %v3904
    %4637 = vmatpush.msra.mxu0 %v3900
    %4638 = vmatpush.msra.mxu0 %v3896
    %4639 = vmatpush.msra.mxu0 %v3892
    %4640 = vmatpush.msra.mxu0 %v3888
    %4641 = vmatpush.msra.mxu0 %v3884
    %4642 = vmatpush.msra.mxu0 %v3880
    %4643 = vmatpush.msra.mxu0 %v3876
    %4644 = vmatpush.msra.mxu0 %v3872
    %4645 = vmatpush.msra.mxu0 %v3868
    %4646 = vmatpush.msra.mxu0 %v3864
    %4647 = vmatpush.msra.mxu0 %v3860
    %4648 = vmatpush.msra.mxu0 %v3856
    %4649 = vmatpush.msra.mxu0 %v3852
    %4650 = vmatpush.msra.mxu0 %v3848
    %4651 = vmatmul.f32.gmra.mxu0 %v4133
    %v4652 = vpop.f32.mrf.mxu0
    %v4653 = vadd.f32 %v4630, %v4652
    %4654 = vmatmul.f32.gmra.mxu0 %v4152
    %v4655 = vpop.f32.mrf.mxu0
    %v4656 = vadd.f32 %v4633, %v4655
    %4657 = vdwg.mxu0
    %4658 = vmatpush.msra.mxu0 %v3972
    %4659 = vmatpush.msra.mxu0 %v3968
    %4660 = vmatpush.msra.mxu0 %v3964
    %4661 = vmatpush.msra.mxu0 %v3960
    %4662 = vmatpush.msra.mxu0 %v3956
    %4663 = vmatpush.msra.mxu0 %v3952
    %4664 = vmatpush.msra.mxu0 %v3948
    %4665 = vmatpush.msra.mxu0 %v3944
    %4666 = vmatpush.msra.mxu0 %v3940
    %4667 = vmatpush.msra.mxu0 %v3936
    %4668 = vmatpush.msra.mxu0 %v3932
    %4669 = vmatpush.msra.mxu0 %v3928
    %4670 = vmatpush.msra.mxu0 %v3924
    %4671 = vmatpush.msra.mxu0 %v3920
    %4672 = vmatpush.msra.mxu0 %v3916
    %4673 = vmatpush.msra.mxu0 %v3912
    %4674 = vmatmul.f32.gmra.mxu0 %v4136
    %v4675 = vpop.f32.mrf.mxu0
    %v4676 = vadd.f32 %v4653, %v4675
    %4677 = vmatmul.f32.gmra.mxu0 %v4154
    %v4678 = vpop.f32.mrf.mxu0
    %v4679 = vadd.f32 %v4656, %v4678
    %4680 = vdwg.mxu0
    %4681 = vmatpush.msra.mxu0 %v4036
    %4682 = vmatpush.msra.mxu0 %v4032
    %4683 = vmatpush.msra.mxu0 %v4028
    %4684 = vmatpush.msra.mxu0 %v4024
    %4685 = vmatpush.msra.mxu0 %v4020
    %4686 = vmatpush.msra.mxu0 %v4016
    %4687 = vmatpush.msra.mxu0 %v4012
    %4688 = vmatpush.msra.mxu0 %v4008
    %4689 = vmatpush.msra.mxu0 %v4004
    %4690 = vmatpush.msra.mxu0 %v4000
    %4691 = vmatpush.msra.mxu0 %v3996
    %4692 = vmatpush.msra.mxu0 %v3992
    %4693 = vmatpush.msra.mxu0 %v3988
    %4694 = vmatpush.msra.mxu0 %v3984
    %4695 = vmatpush.msra.mxu0 %v3980
    %4696 = vmatpush.msra.mxu0 %v3976
    %4697 = vmatmul.f32.gmra.mxu0 %v4139
    %v4698 = vpop.f32.mrf.mxu0
    %v4699 = vadd.f32 %v4676, %v4698
    %4700 = vmatmul.f32.gmra.mxu0 %v4156
    %v4701 = vpop.f32.mrf.mxu0
    %v4702 = vadd.f32 %v4679, %v4701
    %4703 = vdwg.mxu0
    %4704 = vmatpush.msra.mxu0 %v4100
    %4705 = vmatpush.msra.mxu0 %v4096
    %4706 = vmatpush.msra.mxu0 %v4092
    %4707 = vmatpush.msra.mxu0 %v4088
    %4708 = vmatpush.msra.mxu0 %v4084
    %4709 = vmatpush.msra.mxu0 %v4080
    %4710 = vmatpush.msra.mxu0 %v4076
    %4711 = vmatpush.msra.mxu0 %v4072
    %4712 = vmatpush.msra.mxu0 %v4068
    %4713 = vmatpush.msra.mxu0 %v4064
    %4714 = vmatpush.msra.mxu0 %v4060
    %4715 = vmatpush.msra.mxu0 %v4056
    %4716 = vmatpush.msra.mxu0 %v4052
    %4717 = vmatpush.msra.mxu0 %v4048
    %4718 = vmatpush.msra.mxu0 %v4044
    %4719 = vmatpush.msra.mxu0 %v4040
    %4720 = vmatmul.f32.gmra.mxu0 %v4142
    %v4721 = vpop.f32.mrf.mxu0
    %v4722 = vadd.f32 %v4699, %v4721
    %4723 = vmatmul.f32.gmra.mxu0 %v4158
    %v4724 = vpop.f32.mrf.mxu0
    %v4725 = vadd.f32 %v4702, %v4724
    %4726 = vdwg.mxu0
    %4727 = vmatpush.msra.mxu0 %v3653
    %4728 = vmatpush.msra.mxu0 %v3649
    %4729 = vmatpush.msra.mxu0 %v3645
    %4730 = vmatpush.msra.mxu0 %v3641
    %4731 = vmatpush.msra.mxu0 %v3637
    %4732 = vmatpush.msra.mxu0 %v3633
    %4733 = vmatpush.msra.mxu0 %v3629
    %4734 = vmatpush.msra.mxu0 %v3625
    %4735 = vmatpush.msra.mxu0 %v3621
    %4736 = vmatpush.msra.mxu0 %v3617
    %4737 = vmatpush.msra.mxu0 %v3613
    %4738 = vmatpush.msra.mxu0 %v3609
    %4739 = vmatpush.msra.mxu0 %v3605
    %4740 = vmatpush.msra.mxu0 %v3601
    %4741 = vmatpush.msra.mxu0 %v3597
    %4742 = vmatpush.msra.mxu0 %v3593
    %4743 = vmatmul.f32.gmra.mxu0 %v4121
    %v4744 = vpop.f32.mrf.mxu0
    %v4745 = vadd.f32 0.0, %v4744
    %4746 = vmatmul.f32.gmra.mxu0 %v4144
    %v4747 = vpop.f32.mrf.mxu0
    %v4748 = vadd.f32 0.0, %v4747
    %4749 = vdwg.mxu0
    %4750 = vmatpush.msra.mxu0 %v3717
    %4751 = vmatpush.msra.mxu0 %v3713
    %4752 = vmatpush.msra.mxu0 %v3709
    %4753 = vmatpush.msra.mxu0 %v3705
    %4754 = vmatpush.msra.mxu0 %v3701
    %4755 = vmatpush.msra.mxu0 %v3697
    %4756 = vmatpush.msra.mxu0 %v3693
    %4757 = vmatpush.msra.mxu0 %v3689
    %4758 = vmatpush.msra.mxu0 %v3685
    %4759 = vmatpush.msra.mxu0 %v3681
    %4760 = vmatpush.msra.mxu0 %v3677
    %4761 = vmatpush.msra.mxu0 %v3673
    %4762 = vmatpush.msra.mxu0 %v3669
    %4763 = vmatpush.msra.mxu0 %v3665
    %4764 = vmatpush.msra.mxu0 %v3661
    %4765 = vmatpush.msra.mxu0 %v3657
    %4766 = vmatmul.f32.gmra.mxu0 %v4124
    %v4767 = vpop.f32.mrf.mxu0
    %v4768 = vadd.f32 %v4745, %v4767
    %4769 = vmatmul.f32.gmra.mxu0 %v4146
    %v4770 = vpop.f32.mrf.mxu0
    %v4771 = vadd.f32 %v4748, %v4770
    %4772 = vdwg.mxu0
    %4773 = vmatpush.msra.mxu0 %v3781
    %4774 = vmatpush.msra.mxu0 %v3777
    %4775 = vmatpush.msra.mxu0 %v3773
    %4776 = vmatpush.msra.mxu0 %v3769
    %4777 = vmatpush.msra.mxu0 %v3765
    %4778 = vmatpush.msra.mxu0 %v3761
    %4779 = vmatpush.msra.mxu0 %v3757
    %4780 = vmatpush.msra.mxu0 %v3753
    %4781 = vmatpush.msra.mxu0 %v3749
    %4782 = vmatpush.msra.mxu0 %v3745
    %4783 = vmatpush.msra.mxu0 %v3741
    %4784 = vmatpush.msra.mxu0 %v3737
    %4785 = vmatpush.msra.mxu0 %v3733
    %4786 = vmatpush.msra.mxu0 %v3729
    %4787 = vmatpush.msra.mxu0 %v3725
    %4788 = vmatpush.msra.mxu0 %v3721
    %4789 = vmatmul.f32.gmra.mxu0 %v4127
    %v4790 = vpop.f32.mrf.mxu0
    %v4791 = vadd.f32 %v4768, %v4790
    %4792 = vmatmul.f32.gmra.mxu0 %v4148
    %v4793 = vpop.f32.mrf.mxu0
    %v4794 = vadd.f32 %v4771, %v4793
    %4795 = vdwg.mxu0
    %4796 = vmatpush.msra.mxu0 %v3845
    %4797 = vmatpush.msra.mxu0 %v3841
    %4798 = vmatpush.msra.mxu0 %v3837
    %4799 = vmatpush.msra.mxu0 %v3833
    %4800 = vmatpush.msra.mxu0 %v3829
    %4801 = vmatpush.msra.mxu0 %v3825
    %4802 = vmatpush.msra.mxu0 %v3821
    %4803 = vmatpush.msra.mxu0 %v3817
    %4804 = vmatpush.msra.mxu0 %v3813
    %4805 = vmatpush.msra.mxu0 %v3809
    %4806 = vmatpush.msra.mxu0 %v3805
    %4807 = vmatpush.msra.mxu0 %v3801
    %4808 = vmatpush.msra.mxu0 %v3797
    %4809 = vmatpush.msra.mxu0 %v3793
    %4810 = vmatpush.msra.mxu0 %v3789
    %4811 = vmatpush.msra.mxu0 %v3785
    %4812 = vmatmul.f32.gmra.mxu0 %v4130
    %v4813 = vpop.f32.mrf.mxu0
    %v4814 = vadd.f32 %v4791, %v4813
    %4815 = vmatmul.f32.gmra.mxu0 %v4150
    %v4816 = vpop.f32.mrf.mxu0
    %v4817 = vadd.f32 %v4794, %v4816
    %4818 = vdwg.mxu0
    %4819 = vmatpush.msra.mxu0 %v3909
    %4820 = vmatpush.msra.mxu0 %v3905
    %4821 = vmatpush.msra.mxu0 %v3901
    %4822 = vmatpush.msra.mxu0 %v3897
    %4823 = vmatpush.msra.mxu0 %v3893
    %4824 = vmatpush.msra.mxu0 %v3889
    %4825 = vmatpush.msra.mxu0 %v3885
    %4826 = vmatpush.msra.mxu0 %v3881
    %4827 = vmatpush.msra.mxu0 %v3877
    %4828 = vmatpush.msra.mxu0 %v3873
    %4829 = vmatpush.msra.mxu0 %v3869
    %4830 = vmatpush.msra.mxu0 %v3865
    %4831 = vmatpush.msra.mxu0 %v3861
    %4832 = vmatpush.msra.mxu0 %v3857
    %4833 = vmatpush.msra.mxu0 %v3853
    %4834 = vmatpush.msra.mxu0 %v3849
    %4835 = vmatmul.f32.gmra.mxu0 %v4133
    %v4836 = vpop.f32.mrf.mxu0
    %v4837 = vadd.f32 %v4814, %v4836
    %4838 = vmatmul.f32.gmra.mxu0 %v4152
    %v4839 = vpop.f32.mrf.mxu0
    %v4840 = vadd.f32 %v4817, %v4839
    %4841 = vdwg.mxu0
    %4842 = vmatpush.msra.mxu0 %v3973
    %4843 = vmatpush.msra.mxu0 %v3969
    %4844 = vmatpush.msra.mxu0 %v3965
    %4845 = vmatpush.msra.mxu0 %v3961
    %4846 = vmatpush.msra.mxu0 %v3957
    %4847 = vmatpush.msra.mxu0 %v3953
    %4848 = vmatpush.msra.mxu0 %v3949
    %4849 = vmatpush.msra.mxu0 %v3945
    %4850 = vmatpush.msra.mxu0 %v3941
    %4851 = vmatpush.msra.mxu0 %v3937
    %4852 = vmatpush.msra.mxu0 %v3933
    %4853 = vmatpush.msra.mxu0 %v3929
    %4854 = vmatpush.msra.mxu0 %v3925
    %4855 = vmatpush.msra.mxu0 %v3921
    %4856 = vmatpush.msra.mxu0 %v3917
    %4857 = vmatpush.msra.mxu0 %v3913
    %4858 = vmatmul.f32.gmra.mxu0 %v4136
    %v4859 = vpop.f32.mrf.mxu0
    %v4860 = vadd.f32 %v4837, %v4859
    %4861 = vmatmul.f32.gmra.mxu0 %v4154
    %v4862 = vpop.f32.mrf.mxu0
    %v4863 = vadd.f32 %v4840, %v4862
    %4864 = vdwg.mxu0
    %4865 = vmatpush.msra.mxu0 %v4037
    %4866 = vmatpush.msra.mxu0 %v4033
    %4867 = vmatpush.msra.mxu0 %v4029
    %4868 = vmatpush.msra.mxu0 %v4025
    %4869 = vmatpush.msra.mxu0 %v4021
    %4870 = vmatpush.msra.mxu0 %v4017
    %4871 = vmatpush.msra.mxu0 %v4013
    %4872 = vmatpush.msra.mxu0 %v4009
    %4873 = vmatpush.msra.mxu0 %v4005
    %4874 = vmatpush.msra.mxu0 %v4001
    %4875 = vmatpush.msra.mxu0 %v3997
    %4876 = vmatpush.msra.mxu0 %v3993
    %4877 = vmatpush.msra.mxu0 %v3989
    %4878 = vmatpush.msra.mxu0 %v3985
    %4879 = vmatpush.msra.mxu0 %v3981
    %4880 = vmatpush.msra.mxu0 %v3977
    %4881 = vmatmul.f32.gmra.mxu0 %v4139
    %v4882 = vpop.f32.mrf.mxu0
    %v4883 = vadd.f32 %v4860, %v4882
    %4884 = vmatmul.f32.gmra.mxu0 %v4156
    %v4885 = vpop.f32.mrf.mxu0
    %v4886 = vadd.f32 %v4863, %v4885
    %4887 = vdwg.mxu0
    %4888 = vmatpush.msra.mxu0 %v4101
    %4889 = vmatpush.msra.mxu0 %v4097
    %4890 = vmatpush.msra.mxu0 %v4093
    %4891 = vmatpush.msra.mxu0 %v4089
    %4892 = vmatpush.msra.mxu0 %v4085
    %4893 = vmatpush.msra.mxu0 %v4081
    %4894 = vmatpush.msra.mxu0 %v4077
    %4895 = vmatpush.msra.mxu0 %v4073
    %4896 = vmatpush.msra.mxu0 %v4069
    %4897 = vmatpush.msra.mxu0 %v4065
    %4898 = vmatpush.msra.mxu0 %v4061
    %4899 = vmatpush.msra.mxu0 %v4057
    %4900 = vmatpush.msra.mxu0 %v4053
    %4901 = vmatpush.msra.mxu0 %v4049
    %4902 = vmatpush.msra.mxu0 %v4045
    %4903 = vmatpush.msra.mxu0 %v4041
    %4904 = vmatmul.f32.gmra.mxu0 %v4142
    %v4905 = vpop.f32.mrf.mxu0
    %v4906 = vadd.f32 %v4883, %v4905
    %4907 = vmatmul.f32.gmra.mxu0 %v4158
    %v4908 = vpop.f32.mrf.mxu0
    %v4909 = vadd.f32 %v4886, %v4908
    %4910 = vdwg.mxu0
    %v4911 = vadd.f32 %v3016, %v4354
    %v4912 = vadd.f32 %v3200, %v4538
    %v4913 = vadd.f32 %v3384, %v4722
    %v4914 = vadd.f32 %v3568, %v4906
    %v4915 = vadd.f32 %v3019, %v4357
    %v4916 = vadd.f32 %v3203, %v4541
    %v4917 = vadd.f32 %v3387, %v4725
    %v4918 = vadd.f32 %v3571, %v4909
    %v4919 = vld [vmem:[%s2] sm:$0xff]
    %v4920 = vld [vmem:[%s2 + $0x8] sm:$0xff]
    %v4921 = vld [vmem:[#allocation15] sm:$0xf]
    %v4922 = vld [vmem:[#allocation21] sm:$0xf]
    %4924 = vset.pattern.permute.xlu0 0
    %4925 = vperm.xlu0 %4924, %v4919
    %v4926 = vpop.permute.xlu0 %4925
    %4929 = vset.pattern.permute.xlu0 0
    %4930 = vperm.xlu0 %4929, %v4920
    %v4931 = vpop.permute.xlu0 %4930
    %v4933 = vmul.f32 %v4911, %v4926
    %v4934 = vmul.f32 %v4912, %v4926
    %v4935 = vmul.f32 %v4913, %v4926
    %v4936 = vmul.f32 %v4914, %v4926
    %v4937 = vmul.f32 %v4915, %v4931
    %v4938 = vmul.f32 %v4916, %v4931
    %v4939 = vmul.f32 %v4917, %v4931
    %v4940 = vmul.f32 %v4918, %v4931
    %v4941 = vadd.f32 %v4933, %v4937
    %v4942 = vrot.slane %v4941, 4
    %v4943 = vadd.f32 %v4941, %v4942
    %v4944 = vrot.slane %v4943, 2
    %v4945 = vadd.f32 %v4943, %v4944
    %v4946 = vrot.slane %v4945, 1
    %v4947 = vadd.f32 %v4945, %v4946
    %v4948 = vadd.f32 %v4934, %v4938
    %v4949 = vrot.slane %v4948, 4
    %v4950 = vadd.f32 %v4948, %v4949
    %v4951 = vrot.slane %v4950, 2
    %v4952 = vadd.f32 %v4950, %v4951
    %v4953 = vrot.slane %v4952, 1
    %v4954 = vadd.f32 %v4952, %v4953
    %v4955 = vadd.f32 %v4935, %v4939
    %v4956 = vrot.slane %v4955, 4
    %v4957 = vadd.f32 %v4955, %v4956
    %v4958 = vrot.slane %v4957, 2
    %v4959 = vadd.f32 %v4957, %v4958
    %v4960 = vrot.slane %v4959, 1
    %v4961 = vadd.f32 %v4959, %v4960
    %v4962 = vadd.f32 %v4936, %v4940
    %v4963 = vrot.slane %v4962, 4
    %v4964 = vadd.f32 %v4962, %v4963
    %v4965 = vrot.slane %v4964, 2
    %v4966 = vadd.f32 %v4964, %v4965
    %v4967 = vrot.slane %v4966, 1
    %v4968 = vadd.f32 %v4966, %v4967
    %v4969 = vmul.f32 %v4933, %v4911
    %v4970 = vmul.f32 %v4934, %v4912
    %v4971 = vmul.f32 %v4935, %v4913
    %v4972 = vmul.f32 %v4936, %v4914
    %v4973 = vmul.f32 %v4937, %v4915
    %v4974 = vmul.f32 %v4938, %v4916
    %v4975 = vmul.f32 %v4939, %v4917
    %v4976 = vmul.f32 %v4940, %v4918
    %v4977 = vadd.f32 %v4969, %v4973
    %v4978 = vrot.slane %v4977, 4
    %v4979 = vadd.f32 %v4977, %v4978
    %v4980 = vrot.slane %v4979, 2
    %v4981 = vadd.f32 %v4979, %v4980
    %v4982 = vrot.slane %v4981, 1
    %v4983 = vadd.f32 %v4981, %v4982
    %v4984 = vadd.f32 %v4970, %v4974
    %v4985 = vrot.slane %v4984, 4
    %v4986 = vadd.f32 %v4984, %v4985
    %v4987 = vrot.slane %v4986, 2
    %v4988 = vadd.f32 %v4986, %v4987
    %v4989 = vrot.slane %v4988, 1
    %v4990 = vadd.f32 %v4988, %v4989
    %v4991 = vadd.f32 %v4971, %v4975
    %v4992 = vrot.slane %v4991, 4
    %v4993 = vadd.f32 %v4991, %v4992
    %v4994 = vrot.slane %v4993, 2
    %v4995 = vadd.f32 %v4993, %v4994
    %v4996 = vrot.slane %v4995, 1
    %v4997 = vadd.f32 %v4995, %v4996
    %v4998 = vadd.f32 %v4972, %v4976
    %v4999 = vrot.slane %v4998, 4
    %v5000 = vadd.f32 %v4998, %v4999
    %v5001 = vrot.slane %v5000, 2
    %v5002 = vadd.f32 %v5000, %v5001
    %v5003 = vrot.slane %v5002, 1
    %v5004 = vadd.f32 %v5002, %v5003
    %v5005 = vmul.f32 %v4947, 0.125
    %v5006 = vmul.f32 %v4954, 0.125
    %v5007 = vmul.f32 %v4961, 0.125
    %v5008 = vmul.f32 %v4968, 0.125
    %v5009 = vmul.f32 %v4983, 0.125
    %v5010 = vmul.f32 %v4990, 0.125
    %v5011 = vmul.f32 %v4997, 0.125
    %v5012 = vmul.f32 %v5004, 0.125
    %v5013 = vmul.f32 %v5005, %v5005
    %v5014 = vmul.f32 %v5006, %v5006
    %v5015 = vmul.f32 %v5007, %v5007
    %v5016 = vmul.f32 %v5008, %v5008
    %v5017 = vsub.f32 %v5009, %v5013
    %v5018 = vsub.f32 %v5010, %v5014
    %v5019 = vsub.f32 %v5011, %v5015
    %v5020 = vsub.f32 %v5012, %v5016
    %v5021 = vmax.f32 %v5017, 0.0
    %v5022 = vmax.f32 %v5018, 0.0
    %v5023 = vmax.f32 %v5019, 0.0
    %v5024 = vmax.f32 %v5020, 0.0
    %v5025 = vadd.f32 %v5021, 1e-05
    %v5026 = vadd.f32 %v5022, 1e-05
    %v5027 = vadd.f32 %v5023, 1e-05
    %v5028 = vadd.f32 %v5024, 1e-05
    %v5029 = vrsqrt.pop %v5025
    %v5030 = vmul.f32 %v5029, %v5025
    %v5031 = vmul.f32 %v5030, %v5029
    %v5032 = vmul.f32 0.5, %v5031
    %v5033 = vsub.f32 1.5, %v5032
    %v5034 = vmul.f32 %v5029, %v5033
    %vm5035 = vweird.f32 %v5025
    %vm5036 = vweird.f32 %v5029
    %vm5037 = vmor %vm5035, %vm5036
    %v5038 = vsel %vm5037, %v5029, %v5034
    %v5039 = vrsqrt.pop %v5026
    %v5040 = vmul.f32 %v5039, %v5026
    %v5041 = vmul.f32 %v5040, %v5039
    %v5042 = vmul.f32 0.5, %v5041
    %v5043 = vsub.f32 1.5, %v5042
    %v5044 = vmul.f32 %v5039, %v5043
    %vm5045 = vweird.f32 %v5026
    %vm5046 = vweird.f32 %v5039
    %vm5047 = vmor %vm5045, %vm5046
    %v5048 = vsel %vm5047, %v5039, %v5044
    %v5049 = vrsqrt.pop %v5027
    %v5050 = vmul.f32 %v5049, %v5027
    %v5051 = vmul.f32 %v5050, %v5049
    %v5052 = vmul.f32 0.5, %v5051
    %v5053 = vsub.f32 1.5, %v5052
    %v5054 = vmul.f32 %v5049, %v5053
    %vm5055 = vweird.f32 %v5027
    %vm5056 = vweird.f32 %v5049
    %vm5057 = vmor %vm5055, %vm5056
    %v5058 = vsel %vm5057, %v5049, %v5054
    %v5059 = vrsqrt.pop %v5028
    %v5060 = vmul.f32 %v5059, %v5028
    %v5061 = vmul.f32 %v5060, %v5059
    %v5062 = vmul.f32 0.5, %v5061
    %v5063 = vsub.f32 1.5, %v5062
    %v5064 = vmul.f32 %v5059, %v5063
    %vm5065 = vweird.f32 %v5028
    %vm5066 = vweird.f32 %v5059
    %vm5067 = vmor %vm5065, %vm5066
    %v5068 = vsel %vm5067, %v5059, %v5064
    %v5073 = vrot.slane %v5048, 7
    %v5074 = vrot.slane %v5058, 6
    %v5075 = vrot.slane %v5068, 5
    %v5076 = vsel %vm788, %v5038, %v5073
    %v5077 = vsel %vm790, %v5074, %v5075
    %v5078 = vsel %vm792, %v5076, %v5077
    %v5080 = vmul.f32 %v4921, %v5078
    %v5082 = vperm.slane %v5080, 0
    %v5083 = vperm.slane %v5080, 1
    %v5084 = vperm.slane %v5080, 2
    %v5085 = vperm.slane %v5080, 3
    %v5090 = vmul.f32 %v5005, %v5082
    %v5091 = vmul.f32 %v5006, %v5083
    %v5092 = vmul.f32 %v5007, %v5084
    %v5093 = vmul.f32 %v5008, %v5085
    %v5098 = vrot.slane %v5091, 7
    %v5099 = vrot.slane %v5092, 6
    %v5100 = vrot.slane %v5093, 5
    %v5101 = vsel %vm788, %v5090, %v5098
    %v5102 = vsel %vm790, %v5099, %v5100
    %v5103 = vsel %vm792, %v5101, %v5102
    %v5105 = vsub.f32 %v4922, %v5103
    %v5106 = vmul.f32 %v4911, %v5082
    %v5107 = vmul.f32 %v4912, %v5083
    %v5108 = vmul.f32 %v4913, %v5084
    %v5109 = vmul.f32 %v4914, %v5085
    %v5110 = vmul.f32 %v4915, %v5082
    %v5111 = vmul.f32 %v4916, %v5083
    %v5112 = vmul.f32 %v4917, %v5084
    %v5113 = vmul.f32 %v4918, %v5085
    %v5115 = vperm.slane %v5105, 0
    %v5116 = vperm.slane %v5105, 1
    %v5117 = vperm.slane %v5105, 2
    %v5118 = vperm.slane %v5105, 3
    %v5123 = vadd.f32 %v5106, %v5115
    %v5124 = vadd.f32 %v5107, %v5116
    %v5125 = vadd.f32 %v5108, %v5117
    %v5126 = vadd.f32 %v5109, %v5118
    %v5127 = vadd.f32 %v5110, %v5115
    %v5128 = vadd.f32 %v5111, %v5116
    %v5129 = vadd.f32 %v5112, %v5117
    %v5130 = vadd.f32 %v5113, %v5118
    %v5131 = vmax.f32 %v5123, 0.0
    %v5132 = vmax.f32 %v5124, 0.0
    %v5133 = vmax.f32 %v5125, 0.0
    %v5134 = vmax.f32 %v5126, 0.0
    %v5135 = vmax.f32 %v5127, 0.0
    %v5136 = vmax.f32 %v5128, 0.0
    %v5137 = vmax.f32 %v5129, 0.0
    %v5138 = vmax.f32 %v5130, 0.0
    %v5139 = vmul.f32 %v5131, %v4926
    %v5140 = vmul.f32 %v5132, %v4926
    %v5141 = vmul.f32 %v5133, %v4926
    %v5142 = vmul.f32 %v5134, %v4926
    %v5143 = vmul.f32 %v5135, %v4931
    %v5144 = vmul.f32 %v5136, %v4931
    %v5145 = vmul.f32 %v5137, %v4931
    %v5146 = vmul.f32 %v5138, %v4931
    %5147 = vst [vmem:[#allocation7] sm:$0xff] %v5139
    %5148 = vst [vmem:[#allocation7 + $0x8] sm:$0xff] %v5140
    %5149 = vst [vmem:[#allocation7 + $0x10] sm:$0xff] %v5141
    %5150 = vst [vmem:[#allocation7 + $0x18] sm:$0xff] %v5142
    %5151 = vst [vmem:[#allocation7 + $0x20] sm:$0xff] %v5143
    %5152 = vst [vmem:[#allocation7 + $0x28] sm:$0xff] %v5144
    %5153 = vst [vmem:[#allocation7 + $0x30] sm:$0xff] %v5145
    %5154 = vst [vmem:[#allocation7 + $0x38] sm:$0xff] %v5146
    %s5155 = smul.u32 3, 512
    %s5156 = smul.u32 %s5155, 1
    %s5157 = sshll.u32 %s5156, 4
    %5158 = dma.done %s204, %s5157
    %v5159 = vld [vmem:[#allocation7] sm:$0xff]
    %v5160 = vld [vmem:[#allocation7 + $0x8] sm:$0xff]
    %v5161 = vld [vmem:[#allocation7 + $0x10] sm:$0xff]
    %v5162 = vld [vmem:[#allocation7 + $0x18] sm:$0xff]
    %v5163 = vld [vmem:[#allocation7 + $0x20] sm:$0xff]
    %v5164 = vld [vmem:[#allocation7 + $0x28] sm:$0xff]
    %v5165 = vld [vmem:[#allocation7 + $0x30] sm:$0xff]
    %v5166 = vld [vmem:[#allocation7 + $0x38] sm:$0xff]
    %v5167 = vld [vmem:[#allocation3] sm:$0xff]
    %v5168 = vld [vmem:[#allocation3 + $0x8] sm:$0xff]
    %v5169 = vld [vmem:[#allocation3 + $0x10] sm:$0xff]
    %v5170 = vld [vmem:[#allocation3 + $0x18] sm:$0xff]
    %v5171 = vld [vmem:[#allocation3 + $0x20] sm:$0xff]
    %v5172 = vld [vmem:[#allocation3 + $0x28] sm:$0xff]
    %v5173 = vld [vmem:[#allocation3 + $0x30] sm:$0xff]
    %v5174 = vld [vmem:[#allocation3 + $0x38] sm:$0xff]
    %v5175 = vld [vmem:[#allocation3 + $0x40] sm:$0xff]
    %v5176 = vld [vmem:[#allocation3 + $0x48] sm:$0xff]
    %v5177 = vld [vmem:[#allocation3 + $0x50] sm:$0xff]
    %v5178 = vld [vmem:[#allocation3 + $0x58] sm:$0xff]
    %v5179 = vld [vmem:[#allocation3 + $0x60] sm:$0xff]
    %v5180 = vld [vmem:[#allocation3 + $0x68] sm:$0xff]
    %v5181 = vld [vmem:[#allocation3 + $0x70] sm:$0xff]
    %v5182 = vld [vmem:[#allocation3 + $0x78] sm:$0xff]
    %v5183 = vld [vmem:[#allocation3 + $0x80] sm:$0xff]
    %v5184 = vld [vmem:[#allocation3 + $0x88] sm:$0xff]
    %v5185 = vld [vmem:[#allocation3 + $0x90] sm:$0xff]
    %v5186 = vld [vmem:[#allocation3 + $0x98] sm:$0xff]
    %v5187 = vld [vmem:[#allocation3 + $0xa0] sm:$0xff]
    %v5188 = vld [vmem:[#allocation3 + $0xa8] sm:$0xff]
    %v5189 = vld [vmem:[#allocation3 + $0xb0] sm:$0xff]
    %v5190 = vld [vmem:[#allocation3 + $0xb8] sm:$0xff]
    %v5191 = vld [vmem:[#allocation3 + $0xc0] sm:$0xff]
    %v5192 = vld [vmem:[#allocation3 + $0xc8] sm:$0xff]
    %v5193 = vld [vmem:[#allocation3 + $0xd0] sm:$0xff]
    %v5194 = vld [vmem:[#allocation3 + $0xd8] sm:$0xff]
    %v5195 = vld [vmem:[#allocation3 + $0xe0] sm:$0xff]
    %v5196 = vld [vmem:[#allocation3 + $0xe8] sm:$0xff]
    %v5197 = vld [vmem:[#allocation3 + $0xf0] sm:$0xff]
    %v5198 = vld [vmem:[#allocation3 + $0xf8] sm:$0xff]
    %v5199 = vld [vmem:[#allocation3 + $0x100] sm:$0xff]
    %v5200 = vld [vmem:[#allocation3 + $0x108] sm:$0xff]
    %v5201 = vld [vmem:[#allocation3 + $0x110] sm:$0xff]
    %v5202 = vld [vmem:[#allocation3 + $0x118] sm:$0xff]
    %v5203 = vld [vmem:[#allocation3 + $0x120] sm:$0xff]
    %v5204 = vld [vmem:[#allocation3 + $0x128] sm:$0xff]
    %v5205 = vld [vmem:[#allocation3 + $0x130] sm:$0xff]
    %v5206 = vld [vmem:[#allocation3 + $0x138] sm:$0xff]
    %v5207 = vld [vmem:[#allocation3 + $0x140] sm:$0xff]
    %v5208 = vld [vmem:[#allocation3 + $0x148] sm:$0xff]
    %v5209 = vld [vmem:[#allocation3 + $0x150] sm:$0xff]
    %v5210 = vld [vmem:[#allocation3 + $0x158] sm:$0xff]
    %v5211 = vld [vmem:[#allocation3 + $0x160] sm:$0xff]
    %v5212 = vld [vmem:[#allocation3 + $0x168] sm:$0xff]
    %v5213 = vld [vmem:[#allocation3 + $0x170] sm:$0xff]
    %v5214 = vld [vmem:[#allocation3 + $0x178] sm:$0xff]
    %v5215 = vld [vmem:[#allocation3 + $0x180] sm:$0xff]
    %v5216 = vld [vmem:[#allocation3 + $0x188] sm:$0xff]
    %v5217 = vld [vmem:[#allocation3 + $0x190] sm:$0xff]
    %v5218 = vld [vmem:[#allocation3 + $0x198] sm:$0xff]
    %v5219 = vld [vmem:[#allocation3 + $0x1a0] sm:$0xff]
    %v5220 = vld [vmem:[#allocation3 + $0x1a8] sm:$0xff]
    %v5221 = vld [vmem:[#allocation3 + $0x1b0] sm:$0xff]
    %v5222 = vld [vmem:[#allocation3 + $0x1b8] sm:$0xff]
    %v5223 = vld [vmem:[#allocation3 + $0x1c0] sm:$0xff]
    %v5224 = vld [vmem:[#allocation3 + $0x1c8] sm:$0xff]
    %v5225 = vld [vmem:[#allocation3 + $0x1d0] sm:$0xff]
    %v5226 = vld [vmem:[#allocation3 + $0x1d8] sm:$0xff]
    %v5227 = vld [vmem:[#allocation3 + $0x1e0] sm:$0xff]
    %v5228 = vld [vmem:[#allocation3 + $0x1e8] sm:$0xff]
    %v5229 = vld [vmem:[#allocation3 + $0x1f0] sm:$0xff]
    %v5230 = vld [vmem:[#allocation3 + $0x1f8] sm:$0xff]
    %v5231 = vld [vmem:[#allocation7] sm:$0xfe]
    %v5232 = vld [vmem:[#allocation7 + $0x8] sm:$0xfe]
    %v5233 = vld [vmem:[#allocation7 + $0x10] sm:$0xfe]
    %v5234 = vld [vmem:[#allocation7 + $0x18] sm:$0xfe]
    %v5235 = vld [vmem:[#allocation7 + $0x20] sm:$0xff]
    %v5236 = vld [vmem:[#allocation7 + $0x28] sm:$0xff]
    %v5237 = vld [vmem:[#allocation7 + $0x30] sm:$0xff]
    %v5238 = vld [vmem:[#allocation7 + $0x38] sm:$0xff]
    %v5239 = vld [vmem:[#allocation7 + $0x40] sm:$0x1]
    %v5240 = vld [vmem:[#allocation7 + $0x48] sm:$0x1]
    %v5241 = vld [vmem:[#allocation7 + $0x50] sm:$0x1]
    %v5242 = vld [vmem:[#allocation7 + $0x58] sm:$0x1]
    %s5243 = scalar_lea.vmem [#allocation3], 512
    %v5244 = vld [vmem:[%s5243] sm:$0xff]
    %v5245 = vld [vmem:[%s5243 + $0x8] sm:$0xff]
    %v5246 = vld [vmem:[%s5243 + $0x10] sm:$0xff]
    %v5247 = vld [vmem:[%s5243 + $0x18] sm:$0xff]
    %v5248 = vld [vmem:[%s5243 + $0x20] sm:$0xff]
    %v5249 = vld [vmem:[%s5243 + $0x28] sm:$0xff]
    %v5250 = vld [vmem:[%s5243 + $0x30] sm:$0xff]
    %v5251 = vld [vmem:[%s5243 + $0x38] sm:$0xff]
    %v5252 = vld [vmem:[%s5243 + $0x40] sm:$0xff]
    %v5253 = vld [vmem:[%s5243 + $0x48] sm:$0xff]
    %v5254 = vld [vmem:[%s5243 + $0x50] sm:$0xff]
    %v5255 = vld [vmem:[%s5243 + $0x58] sm:$0xff]
    %v5256 = vld [vmem:[%s5243 + $0x60] sm:$0xff]
    %v5257 = vld [vmem:[%s5243 + $0x68] sm:$0xff]
    %v5258 = vld [vmem:[%s5243 + $0x70] sm:$0xff]
    %v5259 = vld [vmem:[%s5243 + $0x78] sm:$0xff]
    %v5260 = vld [vmem:[%s5243 + $0x80] sm:$0xff]
    %v5261 = vld [vmem:[%s5243 + $0x88] sm:$0xff]
    %v5262 = vld [vmem:[%s5243 + $0x90] sm:$0xff]
    %v5263 = vld [vmem:[%s5243 + $0x98] sm:$0xff]
    %v5264 = vld [vmem:[%s5243 + $0xa0] sm:$0xff]
    %v5265 = vld [vmem:[%s5243 + $0xa8] sm:$0xff]
    %v5266 = vld [vmem:[%s5243 + $0xb0] sm:$0xff]
    %v5267 = vld [vmem:[%s5243 + $0xb8] sm:$0xff]
    %v5268 = vld [vmem:[%s5243 + $0xc0] sm:$0xff]
    %v5269 = vld [vmem:[%s5243 + $0xc8] sm:$0xff]
    %v5270 = vld [vmem:[%s5243 + $0xd0] sm:$0xff]
    %v5271 = vld [vmem:[%s5243 + $0xd8] sm:$0xff]
    %v5272 = vld [vmem:[%s5243 + $0xe0] sm:$0xff]
    %v5273 = vld [vmem:[%s5243 + $0xe8] sm:$0xff]
    %v5274 = vld [vmem:[%s5243 + $0xf0] sm:$0xff]
    %v5275 = vld [vmem:[%s5243 + $0xf8] sm:$0xff]
    %v5276 = vld [vmem:[%s5243 + $0x100] sm:$0xff]
    %v5277 = vld [vmem:[%s5243 + $0x108] sm:$0xff]
    %v5278 = vld [vmem:[%s5243 + $0x110] sm:$0xff]
    %v5279 = vld [vmem:[%s5243 + $0x118] sm:$0xff]
    %v5280 = vld [vmem:[%s5243 + $0x120] sm:$0xff]
    %v5281 = vld [vmem:[%s5243 + $0x128] sm:$0xff]
    %v5282 = vld [vmem:[%s5243 + $0x130] sm:$0xff]
    %v5283 = vld [vmem:[%s5243 + $0x138] sm:$0xff]
    %v5284 = vld [vmem:[%s5243 + $0x140] sm:$0xff]
    %v5285 = vld [vmem:[%s5243 + $0x148] sm:$0xff]
    %v5286 = vld [vmem:[%s5243 + $0x150] sm:$0xff]
    %v5287 = vld [vmem:[%s5243 + $0x158] sm:$0xff]
    %v5288 = vld [vmem:[%s5243 + $0x160] sm:$0xff]
    %v5289 = vld [vmem:[%s5243 + $0x168] sm:$0xff]
    %v5290 = vld [vmem:[%s5243 + $0x170] sm:$0xff]
    %v5291 = vld [vmem:[%s5243 + $0x178] sm:$0xff]
    %v5292 = vld [vmem:[%s5243 + $0x180] sm:$0xff]
    %v5293 = vld [vmem:[%s5243 + $0x188] sm:$0xff]
    %v5294 = vld [vmem:[%s5243 + $0x190] sm:$0xff]
    %v5295 = vld [vmem:[%s5243 + $0x198] sm:$0xff]
    %v5296 = vld [vmem:[%s5243 + $0x1a0] sm:$0xff]
    %v5297 = vld [vmem:[%s5243 + $0x1a8] sm:$0xff]
    %v5298 = vld [vmem:[%s5243 + $0x1b0] sm:$0xff]
    %v5299 = vld [vmem:[%s5243 + $0x1b8] sm:$0xff]
    %v5300 = vld [vmem:[%s5243 + $0x1c0] sm:$0xff]
    %v5301 = vld [vmem:[%s5243 + $0x1c8] sm:$0xff]
    %v5302 = vld [vmem:[%s5243 + $0x1d0] sm:$0xff]
    %v5303 = vld [vmem:[%s5243 + $0x1d8] sm:$0xff]
    %v5304 = vld [vmem:[%s5243 + $0x1e0] sm:$0xff]
    %v5305 = vld [vmem:[%s5243 + $0x1e8] sm:$0xff]
    %v5306 = vld [vmem:[%s5243 + $0x1f0] sm:$0xff]
    %v5307 = vld [vmem:[%s5243 + $0x1f8] sm:$0xff]
    %v5320 = vrot.slane %v5231, 1
    %v5321 = vrot.slane %v5235, 1
    %v5322 = vsel %vm2044, %v5320, %v5321
    %v5323 = vrot.slane %v5232, 1
    %v5324 = vrot.slane %v5236, 1
    %v5325 = vsel %vm2044, %v5323, %v5324
    %v5326 = vrot.slane %v5233, 1
    %v5327 = vrot.slane %v5237, 1
    %v5328 = vsel %vm2044, %v5326, %v5327
    %v5329 = vrot.slane %v5234, 1
    %v5330 = vrot.slane %v5238, 1
    %v5331 = vsel %vm2044, %v5329, %v5330
    %v5332 = vrot.slane %v5239, 1
    %v5333 = vsel %vm2044, %v5321, %v5332
    %v5334 = vrot.slane %v5240, 1
    %v5335 = vsel %vm2044, %v5324, %v5334
    %v5336 = vrot.slane %v5241, 1
    %v5337 = vsel %vm2044, %v5327, %v5336
    %v5338 = vrot.slane %v5242, 1
    %v5339 = vsel %vm2044, %v5330, %v5338
    %5348 = vmatpush.msra.mxu0 %v5259
    %5349 = vmatpush.msra.mxu0 %v5258
    %5350 = vmatpush.msra.mxu0 %v5257
    %5351 = vmatpush.msra.mxu0 %v5256
    %5352 = vmatpush.msra.mxu0 %v5255
    %5353 = vmatpush.msra.mxu0 %v5254
    %5354 = vmatpush.msra.mxu0 %v5253
    %5355 = vmatpush.msra.mxu0 %v5252
    %5356 = vmatpush.msra.mxu0 %v5251
    %5357 = vmatpush.msra.mxu0 %v5250
    %5358 = vmatpush.msra.mxu0 %v5249
    %5359 = vmatpush.msra.mxu0 %v5248
    %5360 = vmatpush.msra.mxu0 %v5247
    %5361 = vmatpush.msra.mxu0 %v5246
    %5362 = vmatpush.msra.mxu0 %v5245
    %5363 = vmatpush.msra.mxu0 %v5244
    %5364 = vmatmul.f32.gmra.mxu0 %v5322
    %v5365 = vpop.f32.mrf.mxu0
    %v5366 = vadd.f32 0.0, %v5365
    %5367 = vmatmul.f32.gmra.mxu0 %v5333
    %v5368 = vpop.f32.mrf.mxu0
    %v5369 = vadd.f32 0.0, %v5368
    %5370 = vdwg.mxu0
    %5371 = vmatpush.msra.mxu0 %v5275
    %5372 = vmatpush.msra.mxu0 %v5274
    %5373 = vmatpush.msra.mxu0 %v5273
    %5374 = vmatpush.msra.mxu0 %v5272
    %5375 = vmatpush.msra.mxu0 %v5271
    %5376 = vmatpush.msra.mxu0 %v5270
    %5377 = vmatpush.msra.mxu0 %v5269
    %5378 = vmatpush.msra.mxu0 %v5268
    %5379 = vmatpush.msra.mxu0 %v5267
    %5380 = vmatpush.msra.mxu0 %v5266
    %5381 = vmatpush.msra.mxu0 %v5265
    %5382 = vmatpush.msra.mxu0 %v5264
    %5383 = vmatpush.msra.mxu0 %v5263
    %5384 = vmatpush.msra.mxu0 %v5262
    %5385 = vmatpush.msra.mxu0 %v5261
    %5386 = vmatpush.msra.mxu0 %v5260
    %5387 = vmatmul.f32.gmra.mxu0 %v5325
    %v5388 = vpop.f32.mrf.mxu0
    %v5389 = vadd.f32 %v5366, %v5388
    %5390 = vmatmul.f32.gmra.mxu0 %v5335
    %v5391 = vpop.f32.mrf.mxu0
    %v5392 = vadd.f32 %v5369, %v5391
    %5393 = vdwg.mxu0
    %5394 = vmatpush.msra.mxu0 %v5291
    %5395 = vmatpush.msra.mxu0 %v5290
    %5396 = vmatpush.msra.mxu0 %v5289
    %5397 = vmatpush.msra.mxu0 %v5288
    %5398 = vmatpush.msra.mxu0 %v5287
    %5399 = vmatpush.msra.mxu0 %v5286
    %5400 = vmatpush.msra.mxu0 %v5285
    %5401 = vmatpush.msra.mxu0 %v5284
    %5402 = vmatpush.msra.mxu0 %v5283
    %5403 = vmatpush.msra.mxu0 %v5282
    %5404 = vmatpush.msra.mxu0 %v5281
    %5405 = vmatpush.msra.mxu0 %v5280
    %5406 = vmatpush.msra.mxu0 %v5279
    %5407 = vmatpush.msra.mxu0 %v5278
    %5408 = vmatpush.msra.mxu0 %v5277
    %5409 = vmatpush.msra.mxu0 %v5276
    %5410 = vmatmul.f32.gmra.mxu0 %v5328
    %v5411 = vpop.f32.mrf.mxu0
    %v5412 = vadd.f32 %v5389, %v5411
    %5413 = vmatmul.f32.gmra.mxu0 %v5337
    %v5414 = vpop.f32.mrf.mxu0
    %v5415 = vadd.f32 %v5392, %v5414
    %5416 = vdwg.mxu0
    %5417 = vmatpush.msra.mxu0 %v5307
    %5418 = vmatpush.msra.mxu0 %v5306
    %5419 = vmatpush.msra.mxu0 %v5305
    %5420 = vmatpush.msra.mxu0 %v5304
    %5421 = vmatpush.msra.mxu0 %v5303
    %5422 = vmatpush.msra.mxu0 %v5302
    %5423 = vmatpush.msra.mxu0 %v5301
    %5424 = vmatpush.msra.mxu0 %v5300
    %5425 = vmatpush.msra.mxu0 %v5299
    %5426 = vmatpush.msra.mxu0 %v5298
    %5427 = vmatpush.msra.mxu0 %v5297
    %5428 = vmatpush.msra.mxu0 %v5296
    %5429 = vmatpush.msra.mxu0 %v5295
    %5430 = vmatpush.msra.mxu0 %v5294
    %5431 = vmatpush.msra.mxu0 %v5293
    %5432 = vmatpush.msra.mxu0 %v5292
    %5433 = vmatmul.f32.gmra.mxu0 %v5331
    %v5434 = vpop.f32.mrf.mxu0
    %v5435 = vadd.f32 %v5412, %v5434
    %5436 = vmatmul.f32.gmra.mxu0 %v5339
    %v5437 = vpop.f32.mrf.mxu0
    %v5438 = vadd.f32 %v5415, %v5437
    %5439 = vdwg.mxu0
    %5440 = vmatpush.msra.mxu0 %v5182
    %5441 = vmatpush.msra.mxu0 %v5181
    %5442 = vmatpush.msra.mxu0 %v5180
    %5443 = vmatpush.msra.mxu0 %v5179
    %5444 = vmatpush.msra.mxu0 %v5178
    %5445 = vmatpush.msra.mxu0 %v5177
    %5446 = vmatpush.msra.mxu0 %v5176
    %5447 = vmatpush.msra.mxu0 %v5175
    %5448 = vmatpush.msra.mxu0 %v5174
    %5449 = vmatpush.msra.mxu0 %v5173
    %5450 = vmatpush.msra.mxu0 %v5172
    %5451 = vmatpush.msra.mxu0 %v5171
    %5452 = vmatpush.msra.mxu0 %v5170
    %5453 = vmatpush.msra.mxu0 %v5169
    %5454 = vmatpush.msra.mxu0 %v5168
    %5455 = vmatpush.msra.mxu0 %v5167
    %5456 = vmatmul.f32.gmra.mxu0 %v5159
    %v5457 = vpop.f32.mrf.mxu0
    %v5458 = vadd.f32 %v5435, %v5457
    %5459 = vmatmul.f32.gmra.mxu0 %v5163
    %v5460 = vpop.f32.mrf.mxu0
    %v5461 = vadd.f32 %v5438, %v5460
    %5462 = vdwg.mxu0
    %5463 = vmatpush.msra.mxu0 %v5198
    %5464 = vmatpush.msra.mxu0 %v5197
    %5465 = vmatpush.msra.mxu0 %v5196
    %5466 = vmatpush.msra.mxu0 %v5195
    %5467 = vmatpush.msra.mxu0 %v5194
    %5468 = vmatpush.msra.mxu0 %v5193
    %5469 = vmatpush.msra.mxu0 %v5192
    %5470 = vmatpush.msra.mxu0 %v5191
    %5471 = vmatpush.msra.mxu0 %v5190
    %5472 = vmatpush.msra.mxu0 %v5189
    %5473 = vmatpush.msra.mxu0 %v5188
    %5474 = vmatpush.msra.mxu0 %v5187
    %5475 = vmatpush.msra.mxu0 %v5186
    %5476 = vmatpush.msra.mxu0 %v5185
    %5477 = vmatpush.msra.mxu0 %v5184
    %5478 = vmatpush.msra.mxu0 %v5183
    %5479 = vmatmul.f32.gmra.mxu0 %v5160
    %v5480 = vpop.f32.mrf.mxu0
    %v5481 = vadd.f32 %v5458, %v5480
    %5482 = vmatmul.f32.gmra.mxu0 %v5164
    %v5483 = vpop.f32.mrf.mxu0
    %v5484 = vadd.f32 %v5461, %v5483
    %5485 = vdwg.mxu0
    %5486 = vmatpush.msra.mxu0 %v5214
    %5487 = vmatpush.msra.mxu0 %v5213
    %5488 = vmatpush.msra.mxu0 %v5212
    %5489 = vmatpush.msra.mxu0 %v5211
    %5490 = vmatpush.msra.mxu0 %v5210
    %5491 = vmatpush.msra.mxu0 %v5209
    %5492 = vmatpush.msra.mxu0 %v5208
    %5493 = vmatpush.msra.mxu0 %v5207
    %5494 = vmatpush.msra.mxu0 %v5206
    %5495 = vmatpush.msra.mxu0 %v5205
    %5496 = vmatpush.msra.mxu0 %v5204
    %5497 = vmatpush.msra.mxu0 %v5203
    %5498 = vmatpush.msra.mxu0 %v5202
    %5499 = vmatpush.msra.mxu0 %v5201
    %5500 = vmatpush.msra.mxu0 %v5200
    %5501 = vmatpush.msra.mxu0 %v5199
    %5502 = vmatmul.f32.gmra.mxu0 %v5161
    %v5503 = vpop.f32.mrf.mxu0
    %v5504 = vadd.f32 %v5481, %v5503
    %5505 = vmatmul.f32.gmra.mxu0 %v5165
    %v5506 = vpop.f32.mrf.mxu0
    %v5507 = vadd.f32 %v5484, %v5506
    %5508 = vdwg.mxu0
    %5509 = vmatpush.msra.mxu0 %v5230
    %5510 = vmatpush.msra.mxu0 %v5229
    %5511 = vmatpush.msra.mxu0 %v5228
    %5512 = vmatpush.msra.mxu0 %v5227
    %5513 = vmatpush.msra.mxu0 %v5226
    %5514 = vmatpush.msra.mxu0 %v5225
    %5515 = vmatpush.msra.mxu0 %v5224
    %5516 = vmatpush.msra.mxu0 %v5223
    %5517 = vmatpush.msra.mxu0 %v5222
    %5518 = vmatpush.msra.mxu0 %v5221
    %5519 = vmatpush.msra.mxu0 %v5220
    %5520 = vmatpush.msra.mxu0 %v5219
    %5521 = vmatpush.msra.mxu0 %v5218
    %5522 = vmatpush.msra.mxu0 %v5217
    %5523 = vmatpush.msra.mxu0 %v5216
    %5524 = vmatpush.msra.mxu0 %v5215
    %5525 = vmatmul.f32.gmra.mxu0 %v5162
    %v5526 = vpop.f32.mrf.mxu0
    %v5527 = vadd.f32 %v5504, %v5526
    %5528 = vmatmul.f32.gmra.mxu0 %v5166
    %v5529 = vpop.f32.mrf.mxu0
    %v5530 = vadd.f32 %v5507, %v5529
    %5531 = vdwg.mxu0
    %v5532 = vld [vmem:[#allocation7] sm:$0xfc]
    %v5533 = vld [vmem:[#allocation7 + $0x8] sm:$0xfc]
    %v5534 = vld [vmem:[#allocation7 + $0x10] sm:$0xfc]
    %v5535 = vld [vmem:[#allocation7 + $0x18] sm:$0xfc]
    %v5536 = vld [vmem:[#allocation7 + $0x40] sm:$0x3]
    %v5537 = vld [vmem:[#allocation7 + $0x48] sm:$0x3]
    %v5538 = vld [vmem:[#allocation7 + $0x50] sm:$0x3]
    %v5539 = vld [vmem:[#allocation7 + $0x58] sm:$0x3]
    %s5540 = scalar_lea.vmem [#allocation3], 1024
    %v5541 = vld [vmem:[%s5540] sm:$0xff]
    %v5542 = vld [vmem:[%s5540 + $0x8] sm:$0xff]
    %v5543 = vld [vmem:[%s5540 + $0x10] sm:$0xff]
    %v5544 = vld [vmem:[%s5540 + $0x18] sm:$0xff]
    %v5545 = vld [vmem:[%s5540 + $0x20] sm:$0xff]
    %v5546 = vld [vmem:[%s5540 + $0x28] sm:$0xff]
    %v5547 = vld [vmem:[%s5540 + $0x30] sm:$0xff]
    %v5548 = vld [vmem:[%s5540 + $0x38] sm:$0xff]
    %v5549 = vld [vmem:[%s5540 + $0x40] sm:$0xff]
    %v5550 = vld [vmem:[%s5540 + $0x48] sm:$0xff]
    %v5551 = vld [vmem:[%s5540 + $0x50] sm:$0xff]
    %v5552 = vld [vmem:[%s5540 + $0x58] sm:$0xff]
    %v5553 = vld [vmem:[%s5540 + $0x60] sm:$0xff]
    %v5554 = vld [vmem:[%s5540 + $0x68] sm:$0xff]
    %v5555 = vld [vmem:[%s5540 + $0x70] sm:$0xff]
    %v5556 = vld [vmem:[%s5540 + $0x78] sm:$0xff]
    %v5557 = vld [vmem:[%s5540 + $0x80] sm:$0xff]
    %v5558 = vld [vmem:[%s5540 + $0x88] sm:$0xff]
    %v5559 = vld [vmem:[%s5540 + $0x90] sm:$0xff]
    %v5560 = vld [vmem:[%s5540 + $0x98] sm:$0xff]
    %v5561 = vld [vmem:[%s5540 + $0xa0] sm:$0xff]
    %v5562 = vld [vmem:[%s5540 + $0xa8] sm:$0xff]
    %v5563 = vld [vmem:[%s5540 + $0xb0] sm:$0xff]
    %v5564 = vld [vmem:[%s5540 + $0xb8] sm:$0xff]
    %v5565 = vld [vmem:[%s5540 + $0xc0] sm:$0xff]
    %v5566 = vld [vmem:[%s5540 + $0xc8] sm:$0xff]
    %v5567 = vld [vmem:[%s5540 + $0xd0] sm:$0xff]
    %v5568 = vld [vmem:[%s5540 + $0xd8] sm:$0xff]
    %v5569 = vld [vmem:[%s5540 + $0xe0] sm:$0xff]
    %v5570 = vld [vmem:[%s5540 + $0xe8] sm:$0xff]
    %v5571 = vld [vmem:[%s5540 + $0xf0] sm:$0xff]
    %v5572 = vld [vmem:[%s5540 + $0xf8] sm:$0xff]
    %v5573 = vld [vmem:[%s5540 + $0x100] sm:$0xff]
    %v5574 = vld [vmem:[%s5540 + $0x108] sm:$0xff]
    %v5575 = vld [vmem:[%s5540 + $0x110] sm:$0xff]
    %v5576 = vld [vmem:[%s5540 + $0x118] sm:$0xff]
    %v5577 = vld [vmem:[%s5540 + $0x120] sm:$0xff]
    %v5578 = vld [vmem:[%s5540 + $0x128] sm:$0xff]
    %v5579 = vld [vmem:[%s5540 + $0x130] sm:$0xff]
    %v5580 = vld [vmem:[%s5540 + $0x138] sm:$0xff]
    %v5581 = vld [vmem:[%s5540 + $0x140] sm:$0xff]
    %v5582 = vld [vmem:[%s5540 + $0x148] sm:$0xff]
    %v5583 = vld [vmem:[%s5540 + $0x150] sm:$0xff]
    %v5584 = vld [vmem:[%s5540 + $0x158] sm:$0xff]
    %v5585 = vld [vmem:[%s5540 + $0x160] sm:$0xff]
    %v5586 = vld [vmem:[%s5540 + $0x168] sm:$0xff]
    %v5587 = vld [vmem:[%s5540 + $0x170] sm:$0xff]
    %v5588 = vld [vmem:[%s5540 + $0x178] sm:$0xff]
    %v5589 = vld [vmem:[%s5540 + $0x180] sm:$0xff]
    %v5590 = vld [vmem:[%s5540 + $0x188] sm:$0xff]
    %v5591 = vld [vmem:[%s5540 + $0x190] sm:$0xff]
    %v5592 = vld [vmem:[%s5540 + $0x198] sm:$0xff]
    %v5593 = vld [vmem:[%s5540 + $0x1a0] sm:$0xff]
    %v5594 = vld [vmem:[%s5540 + $0x1a8] sm:$0xff]
    %v5595 = vld [vmem:[%s5540 + $0x1b0] sm:$0xff]
    %v5596 = vld [vmem:[%s5540 + $0x1b8] sm:$0xff]
    %v5597 = vld [vmem:[%s5540 + $0x1c0] sm:$0xff]
    %v5598 = vld [vmem:[%s5540 + $0x1c8] sm:$0xff]
    %v5599 = vld [vmem:[%s5540 + $0x1d0] sm:$0xff]
    %v5600 = vld [vmem:[%s5540 + $0x1d8] sm:$0xff]
    %v5601 = vld [vmem:[%s5540 + $0x1e0] sm:$0xff]
    %v5602 = vld [vmem:[%s5540 + $0x1e8] sm:$0xff]
    %v5603 = vld [vmem:[%s5540 + $0x1f0] sm:$0xff]
    %v5604 = vld [vmem:[%s5540 + $0x1f8] sm:$0xff]
    %v5613 = vrot.slane %v5532, 2
    %v5614 = vrot.slane %v5235, 2
    %v5615 = vsel %vm4118, %v5613, %v5614
    %v5616 = vrot.slane %v5533, 2
    %v5617 = vrot.slane %v5236, 2
    %v5618 = vsel %vm4118, %v5616, %v5617
    %v5619 = vrot.slane %v5534, 2
    %v5620 = vrot.slane %v5237, 2
    %v5621 = vsel %vm4118, %v5619, %v5620
    %v5622 = vrot.slane %v5535, 2
    %v5623 = vrot.slane %v5238, 2
    %v5624 = vsel %vm4118, %v5622, %v5623
    %v5625 = vrot.slane %v5536, 2
    %v5626 = vsel %vm4118, %v5614, %v5625
    %v5627 = vrot.slane %v5537, 2
    %v5628 = vsel %vm4118, %v5617, %v5627
    %v5629 = vrot.slane %v5538, 2
    %v5630 = vsel %vm4118, %v5620, %v5629
    %v5631 = vrot.slane %v5539, 2
    %v5632 = vsel %vm4118, %v5623, %v5631
    %5641 = vmatpush.msra.mxu0 %v5556
    %5642 = vmatpush.msra.mxu0 %v5555
    %5643 = vmatpush.msra.mxu0 %v5554
    %5644 = vmatpush.msra.mxu0 %v5553
    %5645 = vmatpush.msra.mxu0 %v5552
    %5646 = vmatpush.msra.mxu0 %v5551
    %5647 = vmatpush.msra.mxu0 %v5550
    %5648 = vmatpush.msra.mxu0 %v5549
    %5649 = vmatpush.msra.mxu0 %v5548
    %5650 = vmatpush.msra.mxu0 %v5547
    %5651 = vmatpush.msra.mxu0 %v5546
    %5652 = vmatpush.msra.mxu0 %v5545
    %5653 = vmatpush.msra.mxu0 %v5544
    %5654 = vmatpush.msra.mxu0 %v5543
    %5655 = vmatpush.msra.mxu0 %v5542
    %5656 = vmatpush.msra.mxu0 %v5541
    %5657 = vmatmul.f32.gmra.mxu0 %v5615
    %v5658 = vpop.f32.mrf.mxu0
    %v5659 = vadd.f32 0.0, %v5658
    %5660 = vmatmul.f32.gmra.mxu0 %v5626
    %v5661 = vpop.f32.mrf.mxu0
    %v5662 = vadd.f32 0.0, %v5661
    %5663 = vdwg.mxu0
    %5664 = vmatpush.msra.mxu0 %v5572
    %5665 = vmatpush.msra.mxu0 %v5571
    %5666 = vmatpush.msra.mxu0 %v5570
    %5667 = vmatpush.msra.mxu0 %v5569
    %5668 = vmatpush.msra.mxu0 %v5568
    %5669 = vmatpush.msra.mxu0 %v5567
    %5670 = vmatpush.msra.mxu0 %v5566
    %5671 = vmatpush.msra.mxu0 %v5565
    %5672 = vmatpush.msra.mxu0 %v5564
    %5673 = vmatpush.msra.mxu0 %v5563
    %5674 = vmatpush.msra.mxu0 %v5562
    %5675 = vmatpush.msra.mxu0 %v5561
    %5676 = vmatpush.msra.mxu0 %v5560
    %5677 = vmatpush.msra.mxu0 %v5559
    %5678 = vmatpush.msra.mxu0 %v5558
    %5679 = vmatpush.msra.mxu0 %v5557
    %5680 = vmatmul.f32.gmra.mxu0 %v5618
    %v5681 = vpop.f32.mrf.mxu0
    %v5682 = vadd.f32 %v5659, %v5681
    %5683 = vmatmul.f32.gmra.mxu0 %v5628
    %v5684 = vpop.f32.mrf.mxu0
    %v5685 = vadd.f32 %v5662, %v5684
    %5686 = vdwg.mxu0
    %5687 = vmatpush.msra.mxu0 %v5588
    %5688 = vmatpush.msra.mxu0 %v5587
    %5689 = vmatpush.msra.mxu0 %v5586
    %5690 = vmatpush.msra.mxu0 %v5585
    %5691 = vmatpush.msra.mxu0 %v5584
    %5692 = vmatpush.msra.mxu0 %v5583
    %5693 = vmatpush.msra.mxu0 %v5582
    %5694 = vmatpush.msra.mxu0 %v5581
    %5695 = vmatpush.msra.mxu0 %v5580
    %5696 = vmatpush.msra.mxu0 %v5579
    %5697 = vmatpush.msra.mxu0 %v5578
    %5698 = vmatpush.msra.mxu0 %v5577
    %5699 = vmatpush.msra.mxu0 %v5576
    %5700 = vmatpush.msra.mxu0 %v5575
    %5701 = vmatpush.msra.mxu0 %v5574
    %5702 = vmatpush.msra.mxu0 %v5573
    %5703 = vmatmul.f32.gmra.mxu0 %v5621
    %v5704 = vpop.f32.mrf.mxu0
    %v5705 = vadd.f32 %v5682, %v5704
    %5706 = vmatmul.f32.gmra.mxu0 %v5630
    %v5707 = vpop.f32.mrf.mxu0
    %v5708 = vadd.f32 %v5685, %v5707
    %5709 = vdwg.mxu0
    %5710 = vmatpush.msra.mxu0 %v5604
    %5711 = vmatpush.msra.mxu0 %v5603
    %5712 = vmatpush.msra.mxu0 %v5602
    %5713 = vmatpush.msra.mxu0 %v5601
    %5714 = vmatpush.msra.mxu0 %v5600
    %5715 = vmatpush.msra.mxu0 %v5599
    %5716 = vmatpush.msra.mxu0 %v5598
    %5717 = vmatpush.msra.mxu0 %v5597
    %5718 = vmatpush.msra.mxu0 %v5596
    %5719 = vmatpush.msra.mxu0 %v5595
    %5720 = vmatpush.msra.mxu0 %v5594
    %5721 = vmatpush.msra.mxu0 %v5593
    %5722 = vmatpush.msra.mxu0 %v5592
    %5723 = vmatpush.msra.mxu0 %v5591
    %5724 = vmatpush.msra.mxu0 %v5590
    %5725 = vmatpush.msra.mxu0 %v5589
    %5726 = vmatmul.f32.gmra.mxu0 %v5624
    %v5727 = vpop.f32.mrf.mxu0
    %v5728 = vadd.f32 %v5705, %v5727
    %5729 = vmatmul.f32.gmra.mxu0 %v5632
    %v5730 = vpop.f32.mrf.mxu0
    %v5731 = vadd.f32 %v5708, %v5730
    %5732 = vdwg.mxu0
    %v5733 = vadd.f32 %v5527, %v5728
    %v5734 = vadd.f32 %v5530, %v5731
    %v5735 = vld [vmem:[%s3] sm:$0xff]
    %v5736 = vld [vmem:[%s3 + $0x8] sm:$0xff]
    %v5737 = vld [vmem:[#allocation17] sm:$0x1]
    %v5738 = vld [vmem:[#allocation23] sm:$0x1]
    %5740 = vset.pattern.permute.xlu0 0
    %5741 = vperm.xlu0 %5740, %v5735
    %v5742 = vpop.permute.xlu0 %5741
    %5745 = vset.pattern.permute.xlu0 0
    %5746 = vperm.xlu0 %5745, %v5736
    %v5747 = vpop.permute.xlu0 %5746
    %v5749 = vmul.f32 %v5733, %v5742
    %v5750 = vmul.f32 %v5734, %v5747
    %v5751 = vadd.f32 %v5749, %v5750
    %v5752 = vrot.slane %v5751, 4
    %v5753 = vadd.f32 %v5751, %v5752
    %v5754 = vrot.slane %v5753, 2
    %v5755 = vadd.f32 %v5753, %v5754
    %v5756 = vrot.slane %v5755, 1
    %v5757 = vadd.f32 %v5755, %v5756
    %v5758 = vmul.f32 %v5749, %v5733
    %v5759 = vmul.f32 %v5750, %v5734
    %v5760 = vadd.f32 %v5758, %v5759
    %v5761 = vrot.slane %v5760, 4
    %v5762 = vadd.f32 %v5760, %v5761
    %v5763 = vrot.slane %v5762, 2
    %v5764 = vadd.f32 %v5762, %v5763
    %v5765 = vrot.slane %v5764, 1
    %v5766 = vadd.f32 %v5764, %v5765
    %v5767 = vmul.f32 %v5757, 0.25
    %v5768 = vmul.f32 %v5766, 0.25
    %v5769 = vmul.f32 %v5767, %v5767
    %v5770 = vsub.f32 %v5768, %v5769
    %v5771 = vmax.f32 %v5770, 0.0
    %v5772 = vadd.f32 %v5771, 1e-05
    %v5773 = vrsqrt.pop %v5772
    %v5774 = vmul.f32 %v5773, %v5772
    %v5775 = vmul.f32 %v5774, %v5773
    %v5776 = vmul.f32 0.5, %v5775
    %v5777 = vsub.f32 1.5, %v5776
    %v5778 = vmul.f32 %v5773, %v5777
    %vm5779 = vweird.f32 %v5772
    %vm5780 = vweird.f32 %v5773
    %vm5781 = vmor %vm5779, %vm5780
    %v5782 = vsel %vm5781, %v5773, %v5778
    %v5783 = vmul.f32 %v5737, %v5782
    %v5784 = vmul.f32 %v5767, %v5783
    %v5785 = vsub.f32 %v5738, %v5784
    %v5787 = vperm.slane %v5783, 0
    %v5789 = vmul.f32 %v5733, %v5787
    %v5790 = vmul.f32 %v5734, %v5787
    %v5792 = vperm.slane %v5785, 0
    %v5794 = vadd.f32 %v5789, %v5792
    %v5795 = vadd.f32 %v5790, %v5792
    %v5796 = vmax.f32 %v5794, 0.0
    %v5797 = vmax.f32 %v5795, 0.0
    %v5798 = vmul.f32 %v5796, %v5742
    %v5799 = vmul.f32 %v5797, %v5747
    %5800 = vst [vmem:[#allocation8] sm:$0xff] %v5798
    %5801 = vst [vmem:[#allocation8 + $0x8] sm:$0xff] %v5799
    %s5802 = smul.u32 2, 128
    %s5803 = smul.u32 %s5802, 1
    %s5804 = sshll.u32 %s5803, 4
    %5805 = dma.done %s218, %s5804
    %v5806 = vld [vmem:[#allocation8] sm:$0xff]
    %v5807 = vld [vmem:[#allocation8 + $0x8] sm:$0xff]
    %v5808 = vld [vmem:[#allocation4] sm:$0xff]
    %v5809 = vld [vmem:[#allocation4 + $0x8] sm:$0xff]
    %v5810 = vld [vmem:[#allocation4 + $0x10] sm:$0xff]
    %v5811 = vld [vmem:[#allocation4 + $0x18] sm:$0xff]
    %v5812 = vld [vmem:[#allocation4 + $0x20] sm:$0xff]
    %v5813 = vld [vmem:[#allocation4 + $0x28] sm:$0xff]
    %v5814 = vld [vmem:[#allocation4 + $0x30] sm:$0xff]
    %v5815 = vld [vmem:[#allocation4 + $0x38] sm:$0xff]
    %v5816 = vld [vmem:[#allocation4 + $0x40] sm:$0xff]
    %v5817 = vld [vmem:[#allocation4 + $0x48] sm:$0xff]
    %v5818 = vld [vmem:[#allocation4 + $0x50] sm:$0xff]
    %v5819 = vld [vmem:[#allocation4 + $0x58] sm:$0xff]
    %v5820 = vld [vmem:[#allocation4 + $0x60] sm:$0xff]
    %v5821 = vld [vmem:[#allocation4 + $0x68] sm:$0xff]
    %v5822 = vld [vmem:[#allocation4 + $0x70] sm:$0xff]
    %v5823 = vld [vmem:[#allocation4 + $0x78] sm:$0xff]
    %v5824 = vld [vmem:[#allocation8 + $0x1] sm:$0xff]
    %v5825 = vld [vmem:[#allocation8 + $0x9] sm:$0xff]
    %s5826 = scalar_lea.vmem [#allocation4], 128
    %v5827 = vld [vmem:[%s5826] sm:$0xff]
    %v5828 = vld [vmem:[%s5826 + $0x8] sm:$0xff]
    %v5829 = vld [vmem:[%s5826 + $0x10] sm:$0xff]
    %v5830 = vld [vmem:[%s5826 + $0x18] sm:$0xff]
    %v5831 = vld [vmem:[%s5826 + $0x20] sm:$0xff]
    %v5832 = vld [vmem:[%s5826 + $0x28] sm:$0xff]
    %v5833 = vld [vmem:[%s5826 + $0x30] sm:$0xff]
    %v5834 = vld [vmem:[%s5826 + $0x38] sm:$0xff]
    %v5835 = vld [vmem:[%s5826 + $0x40] sm:$0xff]
    %v5836 = vld [vmem:[%s5826 + $0x48] sm:$0xff]
    %v5837 = vld [vmem:[%s5826 + $0x50] sm:$0xff]
    %v5838 = vld [vmem:[%s5826 + $0x58] sm:$0xff]
    %v5839 = vld [vmem:[%s5826 + $0x60] sm:$0xff]
    %v5840 = vld [vmem:[%s5826 + $0x68] sm:$0xff]
    %v5841 = vld [vmem:[%s5826 + $0x70] sm:$0xff]
    %v5842 = vld [vmem:[%s5826 + $0x78] sm:$0xff]
    %5843 = vmatpush.msra.mxu0 %v5842
    %5844 = vmatpush.msra.mxu0 %v5841
    %5845 = vmatpush.msra.mxu0 %v5840
    %5846 = vmatpush.msra.mxu0 %v5839
    %5847 = vmatpush.msra.mxu0 %v5838
    %5848 = vmatpush.msra.mxu0 %v5837
    %5849 = vmatpush.msra.mxu0 %v5836
    %5850 = vmatpush.msra.mxu0 %v5835
    %5851 = vmatpush.msra.mxu0 %v5834
    %5852 = vmatpush.msra.mxu0 %v5833
    %5853 = vmatpush.msra.mxu0 %v5832
    %5854 = vmatpush.msra.mxu0 %v5831
    %5855 = vmatpush.msra.mxu0 %v5830
    %5856 = vmatpush.msra.mxu0 %v5829
    %5857 = vmatpush.msra.mxu0 %v5828
    %5858 = vmatpush.msra.mxu0 %v5827
    %5859 = vmatmul.f32.gmra.mxu0 %v5824
    %v5860 = vpop.f32.mrf.mxu0
    %v5861 = vadd.f32 0.0, %v5860
    %5862 = vmatmul.f32.gmra.mxu0 %v5825
    %v5863 = vpop.f32.mrf.mxu0
    %v5864 = vadd.f32 0.0, %v5863
    %5865 = vdwg.mxu0
    %5866 = vmatpush.msra.mxu0 %v5823
    %5867 = vmatpush.msra.mxu0 %v5822
    %5868 = vmatpush.msra.mxu0 %v5821
    %5869 = vmatpush.msra.mxu0 %v5820
    %5870 = vmatpush.msra.mxu0 %v5819
    %5871 = vmatpush.msra.mxu0 %v5818
    %5872 = vmatpush.msra.mxu0 %v5817
    %5873 = vmatpush.msra.mxu0 %v5816
    %5874 = vmatpush.msra.mxu0 %v5815
    %5875 = vmatpush.msra.mxu0 %v5814
    %5876 = vmatpush.msra.mxu0 %v5813
    %5877 = vmatpush.msra.mxu0 %v5812
    %5878 = vmatpush.msra.mxu0 %v5811
    %5879 = vmatpush.msra.mxu0 %v5810
    %5880 = vmatpush.msra.mxu0 %v5809
    %5881 = vmatpush.msra.mxu0 %v5808
    %5882 = vmatmul.f32.gmra.mxu0 %v5806
    %v5883 = vpop.f32.mrf.mxu0
    %v5884 = vadd.f32 %v5861, %v5883
    %5885 = vmatmul.f32.gmra.mxu0 %v5807
    %v5886 = vpop.f32.mrf.mxu0
    %v5887 = vadd.f32 %v5864, %v5886
    %5888 = vdwg.mxu0
    %v5889 = vld [vmem:[%s4] sm:$0xff]
    %v5890 = vld [vmem:[%s4 + $0x8] sm:$0xff]
    %v5891 = vld [vmem:[#allocation18] sm:$0x1]
    %v5892 = vld [vmem:[#allocation24] sm:$0x1]
    %5894 = vset.pattern.permute.xlu0 0
    %5895 = vperm.xlu0 %5894, %v5889
    %v5896 = vpop.permute.xlu0 %5895
    %5899 = vset.pattern.permute.xlu0 0
    %5900 = vperm.xlu0 %5899, %v5890
    %v5901 = vpop.permute.xlu0 %5900
    %v5903 = vmul.f32 %v5884, %v5896
    %v5904 = vmul.f32 %v5887, %v5901
    %v5905 = vadd.f32 %v5903, %v5904
    %v5906 = vrot.slane %v5905, 4
    %v5907 = vadd.f32 %v5905, %v5906
    %v5908 = vrot.slane %v5907, 2
    %v5909 = vadd.f32 %v5907, %v5908
    %v5910 = vrot.slane %v5909, 1
    %v5911 = vadd.f32 %v5909, %v5910
    %v5912 = vmul.f32 %v5903, %v5884
    %v5913 = vmul.f32 %v5904, %v5887
    %v5914 = vadd.f32 %v5912, %v5913
    %v5915 = vrot.slane %v5914, 4
    %v5916 = vadd.f32 %v5914, %v5915
    %v5917 = vrot.slane %v5916, 2
    %v5918 = vadd.f32 %v5916, %v5917
    %v5919 = vrot.slane %v5918, 1
    %v5920 = vadd.f32 %v5918, %v5919
    %v5921 = vmul.f32 %v5911, 0.5
    %v5922 = vmul.f32 %v5920, 0.5
    %v5923 = vmul.f32 %v5921, %v5921
    %v5924 = vsub.f32 %v5922, %v5923
    %v5925 = vmax.f32 %v5924, 0.0
    %v5926 = vadd.f32 %v5925, 1e-05
    %v5927 = vrsqrt.pop %v5926
    %v5928 = vmul.f32 %v5927, %v5926
    %v5929 = vmul.f32 %v5928, %v5927
    %v5930 = vmul.f32 0.5, %v5929
    %v5931 = vsub.f32 1.5, %v5930
    %v5932 = vmul.f32 %v5927, %v5931
    %vm5933 = vweird.f32 %v5926
    %vm5934 = vweird.f32 %v5927
    %vm5935 = vmor %vm5933, %vm5934
    %v5936 = vsel %vm5935, %v5927, %v5932
    %v5937 = vmul.f32 %v5891, %v5936
    %v5938 = vmul.f32 %v5921, %v5937
    %v5939 = vsub.f32 %v5892, %v5938
    %v5941 = vperm.slane %v5937, 0
    %v5943 = vmul.f32 %v5884, %v5941
    %v5944 = vmul.f32 %v5887, %v5941
    %v5946 = vperm.slane %v5939, 0
    %v5948 = vadd.f32 %v5943, %v5946
    %v5949 = vadd.f32 %v5944, %v5946
    %v5950 = vmax.f32 %v5948, 0.0
    %v5951 = vmax.f32 %v5949, 0.0
    %v5952 = vmul.f32 %v5950, %v5896
    %v5953 = vmul.f32 %v5951, %v5901
    %5954 = vst [vmem:[#allocation26] sm:$0xff] %v5952
    %5955 = vst [vmem:[#allocation26 + $0x8] sm:$0xff] %v5953
    // Predicated region
    $region110: #{tpu_custom_call.1} parent=1 // pred_check
      _
    $region111: #{tpu_custom_call.1} parent=1 // pred_check_branch
      %5957 = sbr.rel (0) target = $region113
    $region112: #{tpu_custom_call.1} parent=1 // pred_region
      %5959 = vsyncadd [#allocation11], 0
      %s5960 = sshll.u32 [#allocation26], 4
      %s5961 = int_to_ptr.vmem [resolvable:$true] %s5960
      %s5962 = sshll.u32 %s17, 4
      %s5963 = int_to_ptr.hbm [resolvable:$true] %s5962
      %5968 = dma.vmem_to_hbm [thread:$0]  %s5961, 256, %s5963, [#allocation11], 128, 128, 8
    $region113: #{tpu_custom_call.1} parent=1 // pred_fallthru
      _
    // Predicated region
    $region114: #{tpu_custom_call.1} parent=1 // pred_check
      _
    $region115: #{tpu_custom_call.1} parent=1 // pred_check_branch
      %5970 = sbr.rel (0) target = $region117
    $region116: #{tpu_custom_call.1} parent=1 // pred_region
      %5972 = dma.done [#allocation11], 256
    $region117: #{tpu_custom_call.1} parent=1 // pred_fallthru
      _
    %5973 = vsyncpa [#allocation10], 1
    %5974 = vsyncpa [#allocation13], 1
    %5975 = vsyncpa [#allocation16], 1
    %5976 = vsyncpa [#allocation19], 1
    %5977 = vsyncpa [#allocation22], 1
    %5978 = vsyncpa [#allocation25], 1
    %5979 = vsyncpa [#allocation11], 1
  %5980 = vsyncmov [#allocation5]
  %s5981 = vpop.sfrf %5980
  %p5982 = scmp.eq.s32.totalorder %s5981, 0
  %p5983 = pneg %p5982
  %5985 = shalt.err (%p5983)
  %s5986 = scalar_lea.sflag [#allocation5], 1
  %5987 = vsyncmov %s5986
  %s5988 = vpop.sfrf %5987
  %p5989 = scmp.eq.s32.totalorder %s5988, 0
  %p5990 = pneg %p5989
  %5992 = shalt.err (%p5990)
  %s5993 = scalar_lea.sflag [#allocation5], 2
  %5994 = vsyncmov %s5993
  %s5995 = vpop.sfrf %5994
  %p5996 = scmp.eq.s32.totalorder %s5995, 0
  %p5997 = pneg %p5996
  %5999 = shalt.err (%p5997)

</llo_original>
